<compile_context>
chip_gen: v5e
topology: v5e:2x2
jax: 0.10.0
libtpu: 0.0.40
codegen_flags: <defaults>
</compile_context>

<pallas_src>
import numpy as np
import jax
import jax.numpy as jnp
from jax.experimental import pallas as pl
from jax.experimental.pallas import tpu as pltpu


# ---------------- fused conv GEMM kernel ----------------

def _make_fused_kernel(*, mxu, norm_act, has_residual, groups, eps=1e-5):
    """Kernel: GEMM(+bias) [+InstanceNorm +PReLU] [+residual add], one image per step."""

    def kernel(*refs):
        a_ref, w_ref, b_ref = refs[0], refs[1], refs[2]
        idx = 3
        if norm_act:
            alpha_ref = refs[idx]
            idx += 1
        if has_residual:
            res_ref = refs[idx]
            idx += 1
        o_ref = refs[idx]

        if mxu:
            y = jnp.dot(a_ref[...], w_ref[...], preferred_element_type=jnp.float32)
        else:
            # Narrow-output path (Cout*groups < 8): VPU broadcast-multiply + lane reduce.
            a = a_ref[...].astype(jnp.float32)
            n_out = w_ref.shape[0]
            cols = [jnp.sum(a * w_ref[g:g + 1, :], axis=1, keepdims=True)
                    for g in range(n_out)]
            y = cols[0] if n_out == 1 else jnp.concatenate(cols, axis=1)
        y = y + b_ref[...]

        if norm_act:
            gc = y.shape[1]
            c = gc // groups

            def group_reduce(col_stats):
                # (1, groups*C) per-column stats -> per-channel stats, re-broadcast.
                if groups == 1:
                    return col_stats
                acc = col_stats[:, 0:c]
                for g in range(1, groups):
                    acc = acc + col_stats[:, g * c:(g + 1) * c]
                acc = acc * (1.0 / groups)
                return jnp.concatenate([acc] * groups, axis=1)

            mean = group_reduce(jnp.mean(y, axis=0, keepdims=True))
            yc = y - mean
            var = group_reduce(jnp.mean(yc * yc, axis=0, keepdims=True))
            y = yc * jax.lax.rsqrt(var + eps)          # InstanceNorm(affine=False, eps=1e-5)
            a_p = alpha_ref[0]                          # scalar PReLU
            y = jnp.where(y >= 0.0, y, a_p * y)

        if has_residual:
            y = y + res_ref[...]

        o_ref[...] = y

    return kernel


def _fused_conv_gemm(patches, weights, bias, *, m_per_img, n_img, mxu,
                     norm_act, alpha, residual, groups):
    """patches:(n_img*m_per_img, K)  weights:(K,N) [mxu] or (N,K) [vpu]  bias:(1,N)."""
    M, K = patches.shape
    ncols = int(bias.shape[1])
    assert M == m_per_img * n_img
    assert m_per_img % (16 if patches.dtype == jnp.bfloat16 else 8) == 0

    has_res = residual is not None
    kernel = _make_fused_kernel(mxu=mxu, norm_act=norm_act,
                                has_residual=has_res, groups=groups)

    in_specs = [
        pl.BlockSpec((m_per_img, K), lambda n: (n, 0)),
        pl.BlockSpec(tuple(weights.shape), lambda n: (0, 0)),
        pl.BlockSpec((1, ncols), lambda n: (0, 0)),
    ]
    args = [patches, weights, bias]
    if norm_act:
        in_specs.append(pl.BlockSpec(memory_space=pltpu.MemorySpace.SMEM))
        args.append(alpha.astype(jnp.float32))
    if has_res:
        in_specs.append(pl.BlockSpec((m_per_img, ncols), lambda n: (n, 0)))
        args.append(residual)

    nbytes = sum(int(a.size) * a.dtype.itemsize for a in args) + M * ncols * 4
    cost = pl.CostEstimate(flops=2 * M * K * ncols,
                           transcendentals=(n_img * ncols) if norm_act else 0,
                           bytes_accessed=int(nbytes))

    return pl.pallas_call(
        kernel,
        out_shape=jax.ShapeDtypeStruct((M, ncols), jnp.float32),
        grid=(n_img,),
        in_specs=in_specs,
        out_specs=pl.BlockSpec((m_per_img, ncols), lambda n: (n, 0)),
        compiler_params=pltpu.CompilerParams(dimension_semantics=("parallel",)),
        cost_estimate=cost,
    )(*args)


# ---------------- conv wrappers (NHWC, (N*H*W, C) activations) ----------------

def _conv3x3(x2d, shp, w_oihw, b, *, stride=1, norm_act=False, alpha=None, residual=None):
    """PyTorch Conv2d(k=3, padding=1) on a (N*H*W, Cin) channels-last activation."""
    N, H, W, Cin = shp
    Cout = int(w_oihw.shape[0])
    Ho = (H + 2 - 3) // stride + 1
    Wo = (W + 2 - 3) // stride + 1
    use_mxu = Cout >= 8
    dt = jnp.bfloat16 if use_mxu else jnp.float32

    x4 = x2d.reshape(N, H, W, Cin)
    xp = jnp.pad(x4, ((0, 0), (1, 1), (1, 1), (0, 0)))
    taps = [
        xp[:, kh:kh + (Ho - 1) * stride + 1:stride,
              kw:kw + (Wo - 1) * stride + 1:stride, :].astype(dt)
        for kh in range(3) for kw in range(3)
    ]
    k_eff = 9 * Cin
    pad_k = ((-k_eff) % 16) if use_mxu else 0          # bf16 sublane granule only
    if pad_k:
        taps.append(jnp.zeros((N, Ho, Wo, pad_k), dt))
    patches = jnp.concatenate(taps, axis=-1).reshape(N * Ho * Wo, k_eff + pad_k)

    w2d = w_oihw.transpose(2, 3, 1, 0).reshape(k_eff, Cout)   # (kh,kw,ci) rows -> co cols
    if pad_k:
        w2d = jnp.pad(w2d, ((0, pad_k), (0, 0)))
    weights = w2d.astype(jnp.bfloat16) if use_mxu else w2d.T.astype(jnp.float32)
    bias = b.reshape(1, Cout).astype(jnp.float32)

    out = _fused_conv_gemm(patches, weights, bias, m_per_img=Ho * Wo, n_img=N,
                           mxu=use_mxu, norm_act=norm_act, alpha=alpha,
                           residual=residual, groups=1)
    return out, (N, Ho, Wo, Cout)


def _conv1x1(x2d, shp, w_oihw, b):
    """1x1 conv (residual projection): no im2col at all, the activation is the GEMM input."""
    N, H, W, Cin = shp
    Cout = int(w_oihw.shape[0])
    use_mxu = Cout >= 8
    w2d = w_oihw.reshape(Cout, Cin)
    if use_mxu:
        patches = x2d.astype(jnp.bfloat16)
        weights = w2d.T.astype(jnp.bfloat16)
    else:
        patches = x2d
        weights = w2d.astype(jnp.float32)
    bias = b.reshape(1, Cout).astype(jnp.float32)
    out = _fused_conv_gemm(patches, weights, bias, m_per_img=H * W, n_img=N,
                           mxu=use_mxu, norm_act=False, alpha=None,
                           residual=None, groups=1)
    return out, (N, H, W, Cout)


_CONVT_TAP_TABLE = {
    # output phase g = ry*2+rx  ->  [(tap t = dy*2+dx, ky, kx), ...]  of the ConvT weight
    0: [(0, 1, 1)],
    1: [(0, 1, 2), (1, 1, 0)],
    2: [(0, 2, 1), (2, 0, 1)],
    3: [(0, 2, 2), (1, 2, 0), (2, 0, 2), (3, 0, 0)],
}


def _convT_weight_matrix(w_t):
    """ConvTranspose2d weight (Cin, Cout, 3, 3) -> (4*Cin, 4*Cout) subpixel GEMM weight."""
    cin, cout = int(w_t.shape[0]), int(w_t.shape[1])
    w4 = jnp.zeros((4 * cin, 4 * cout), jnp.float32)
    for g, entries in _CONVT_TAP_TABLE.items():
        for (t, ky, kx) in entries:
            w4 = w4.at[t * cin:(t + 1) * cin, g * cout:(g + 1) * cout].set(w_t[:, :, ky, kx])
    return w4


def _conv_transpose2x(x2d, shp, w_t, b, alpha):
    """ConvTranspose2d(k=3, s=2, p=1, output_padding=1) + InstanceNorm + PReLU, fused.

    Subpixel decomposition: a single GEMM with K=4*Cin, N=4*Cout over the un-dilated
    input (4 spatial taps), then depth-to-space.  IN statistics are group-reduced
    across the 4 output phases inside the kernel.
    """
    N, H, W, Cin = shp
    Cout = int(w_t.shape[1])
    ncols = 4 * Cout
    use_mxu = ncols >= 8
    dt = jnp.bfloat16 if use_mxu else jnp.float32

    x4 = x2d.reshape(N, H, W, Cin)
    xp = jnp.pad(x4, ((0, 0), (0, 1), (0, 1), (0, 0)))          # bottom/right halo
    taps = [xp[:, :H, :W, :], xp[:, :H, 1:, :], xp[:, 1:, :W, :], xp[:, 1:, 1:, :]]
    patches = jnp.concatenate([t.astype(dt) for t in taps],
                              axis=-1).reshape(N * H * W, 4 * Cin)

    w4 = _convT_weight_matrix(w_t)
    weights = w4.astype(jnp.bfloat16) if use_mxu else w4.T.astype(jnp.float32)
    bias4 = jnp.tile(b.reshape(1, Cout), (1, 4)).astype(jnp.float32)

    out = _fused_conv_gemm(patches, weights, bias4, m_per_img=H * W, n_img=N,
                           mxu=use_mxu, norm_act=True, alpha=alpha,
                           residual=None, groups=4)
    out = (out.reshape(N, H, W, 2, 2, Cout)
              .transpose(0, 1, 3, 2, 4, 5)
              .reshape(N * 2 * H * 2 * W, Cout))
    return out, (N, 2 * H, 2 * W, Cout)


# ---------------- residual unit ----------------

def _residual_unit(x2d, shp, p, *, stride, subunits, res_kernel):
    """monai ResidualUnit: `subunits` x (conv->IN->PReLU) + residual branch, add fused."""
    if res_kernel is None:
        res = x2d                                               # identity residual
    elif res_kernel == 1:
        res, _ = _conv1x1(x2d, shp, p["res"]["w"], p["res"]["b"])
    else:
        res, _ = _conv3x3(x2d, shp, p["res"]["w"], p["res"]["b"],
                          stride=stride, norm_act=False)

    h, hs, s = x2d, shp, stride
    names = ["u0", "u1"][:subunits]
    for i, name in enumerate(names):
        u = p[name]
        last = i == len(names) - 1
        h, hs = _conv3x3(h, hs, u["w"], u["b"], stride=s, norm_act=True, alpha=u["a"],
                         residual=res if last else None)
        s = 1
    return h, hs


# ---------------- parameters (deterministic, synthetic) ----------------

PRELU_INIT = jnp.array([0.25], jnp.float32)


def _conv_params(key, cout, cin, k):
    k1, k2 = jax.random.split(key)
    bound = 1.0 / np.sqrt(cin * k * k)
    return {"w": jax.random.uniform(k1, (cout, cin, k, k), jnp.float32, -bound, bound),
            "b": jax.random.uniform(k2, (cout,), jnp.float32, -bound, bound)}


def _convT_params(key, cin, cout, k):
    k1, k2 = jax.random.split(key)
    bound = 1.0 / np.sqrt(cout * k * k)
    return {"w": jax.random.uniform(k1, (cin, cout, k, k), jnp.float32, -bound, bound),
            "b": jax.random.uniform(k2, (cout,), jnp.float32, -bound, bound)}


def init_reconstruction_params(key, n_features, latent_dim, n_filters=16):
    in_ch = n_features + latent_dim
    c0, c1, c2 = n_filters, n_filters * 2, n_filters * 4
    ks = jax.random.split(key, 13)
    P = PRELU_INIT
    return {
        "d1": {"u0": {**_conv_params(ks[0], c0, in_ch, 3), "a": P},
               "u1": {**_conv_params(ks[1], c0, c0, 3), "a": P},
               "res": _conv_params(ks[2], c0, in_ch, 3)},
        "d2": {"u0": {**_conv_params(ks[3], c1, c0, 3), "a": P},
               "u1": {**_conv_params(ks[4], c1, c1, 3), "a": P},
               "res": _conv_params(ks[5], c1, c0, 3)},
        "bt": {"u0": {**_conv_params(ks[6], c2, c1, 3), "a": P},
               "u1": {**_conv_params(ks[7], c2, c2, 3), "a": P},
               "res": _conv_params(ks[8], c2, c1, 1)},                 # 1x1 residual conv
        # monai UNet recursion uses upc = c*2, so the inner up layer outputs c0 channels.
        "u2_tc": {**_convT_params(ks[9], c1 + c2, c0, 3), "a": P},     # ConvT 96 -> 16
        "u2_ru": {"u0": {**_conv_params(ks[10], c0, c0, 3), "a": P}},
        "u1_tc": {**_convT_params(ks[11], c0 + c0, 1, 3), "a": P},     # ConvT 32 -> 1
        "u1_ru": _conv_params(ks[12], 1, 1, 3),
    }


# ---------------- forward ----------------

def reconstruction_forward(params, x, z=None):
    # type == 'UNet': the PyTorch forward ignores z and calls self.recon(x).
    N, C, H, W = x.shape
    h0 = x.transpose(0, 2, 3, 1).reshape(N * H * W, C)     # NCHW -> (N*H*W, C), once
    s0 = (N, H, W, C)

    d1, s1 = _residual_unit(h0, s0, params["d1"], stride=2, subunits=2, res_kernel=3)
    d2, s2 = _residual_unit(d1, s1, params["d2"], stride=2, subunits=2, res_kernel=3)
    bt, sb = _residual_unit(d2, s2, params["bt"], stride=1, subunits=2, res_kernel=1)

    cat2 = jnp.concatenate([d2, bt], axis=1)                # skip connection (channel cat)
    sc2 = (s2[0], s2[1], s2[2], s2[3] + sb[3])
    u2, su2 = _conv_transpose2x(cat2, sc2, params["u2_tc"]["w"], params["u2_tc"]["b"],
                                params["u2_tc"]["a"])
    u2, su2 = _residual_unit(u2, su2, params["u2_ru"], stride=1, subunits=1, res_kernel=None)

    cat1 = jnp.concatenate([d1, u2], axis=1)                # skip connection
    sc1 = (s1[0], s1[1], s1[2], s1[3] + su2[3])
    u1, su1 = _conv_transpose2x(cat1, sc1, params["u1_tc"]["w"], params["u1_tc"]["b"],
                                params["u1_tc"]["a"])

    # top ResidualUnit(1->1): single conv-only subunit + identity residual (add fused)
    out, so = _conv3x3(u1, su1, params["u1_ru"]["w"], params["u1_ru"]["b"],
                       stride=1, norm_act=False, residual=u1)
    Nn, Ho, Wo, Co = so
    return out.reshape(Nn, Ho, Wo, Co).transpose(0, 3, 1, 2)   # back to NCHW


if __name__ == "__main__":
    n_features, latent_dim, n_filters = 3, 1, 16
    N, H, W = 2, 16, 16
    key = jax.random.PRNGKey(0)
    kx, kp = jax.random.split(key)
    x = jax.random.normal(kx, (N, n_features + latent_dim, H, W), jnp.float32)
    params = init_reconstruction_params(kp, n_features, latent_dim, n_filters)

    fwd = jax.jit(reconstruction_forward)
    out = jax.block_until_ready(fwd(params, x))

    assert out.shape == (N, 1, H, W), out.shape
    assert bool(jnp.all(jnp.isfinite(out)))
    # TODO(synk): 'film' / 'adain' branches reference classes (Reconstruct, SDNet.Decoder)
    # not defined in the provided source, so only the default 'UNet' branch is implemented.
    print("KERNEL_OK")
</pallas_src>

<mosaic_0001>
module attributes {stable_mosaic.version = 11 : i64} {
  func.func @kernel(%arg0: i32, %arg1: memref<64x48xbf16, #tpu.memory_space<vmem>>, %arg2: memref<48x16xbf16, #tpu.memory_space<vmem>>, %arg3: memref<1x16xf32, #tpu.memory_space<vmem>>, %arg4: memref<1xf32, #tpu.memory_space<smem>>, %arg5: memref<64x16xf32, #tpu.memory_space<vmem>>) attributes {dimension_semantics = [#tpu.dimension_semantics<parallel>], iteration_bounds = array<i64: 2>, scalar_prefetch = 0 : i64, scratch_operands = 0 : i64, tpu.core_type = #tpu.core_type<tc>, window_params = [{transform_indices = @transform_0, window_bounds = array<i64: 64, 48>}, {pipeline_mode = #tpu.pipeline_mode<synchronous>, transform_indices = @transform_1, window_bounds = array<i64: 48, 16>}, {pipeline_mode = #tpu.pipeline_mode<synchronous>, transform_indices = @transform_2, window_bounds = array<i64: 1, 16>}, {transform_indices = @transform_3, window_bounds = array<i64: 1>}, {transform_indices = @transform_4, window_bounds = array<i64: 64, 16>}]} {
    %c0 = arith.constant 0 : index
    %c0_0 = arith.constant 0 : index
    %0 = vector.load %arg1[%c0, %c0_0] : memref<64x48xbf16, #tpu.memory_space<vmem>>, vector<64x48xbf16>
    %c0_1 = arith.constant 0 : index
    %c0_2 = arith.constant 0 : index
    %1 = vector.load %arg2[%c0_1, %c0_2] : memref<48x16xbf16, #tpu.memory_space<vmem>>, vector<48x16xbf16>
    %cst = arith.constant dense<0.000000e+00> : vector<64x16xf32>
    %2 = tpu.matmul %0, %1, %cst {dimension_numbers = #tpu.dot_dimension_numbers<[1], [0], [0], [1], [0, 0, 1, 1], [], []>} : vector<64x48xbf16>, vector<48x16xbf16>, vector<64x16xf32> -> vector<64x16xf32>
    %c0_3 = arith.constant 0 : index
    %c0_4 = arith.constant 0 : index
    %3 = vector.load %arg3[%c0_3, %c0_4] : memref<1x16xf32, #tpu.memory_space<vmem>>, vector<1x16xf32>
    %4 = vector.broadcast %3 : vector<1x16xf32> to vector<64x16xf32>
    %5 = arith.addf %2, %4 : vector<64x16xf32>
    %cst_5 = arith.constant dense<0.000000e+00> : vector<16xf32>
    %6 = vector.multi_reduction <add>, %5, %cst_5 [0] : vector<64x16xf32> to vector<16xf32>
    %7 = vector.shape_cast %6 : vector<16xf32> to vector<1x16xf32>
    %cst_6 = arith.constant 6.400000e+01 : f32
    %8 = vector.broadcast %cst_6 : f32 to vector<1x16xf32>
    %9 = arith.divf %7, %8 : vector<1x16xf32>
    %10 = vector.broadcast %9 : vector<1x16xf32> to vector<64x16xf32>
    %11 = arith.subf %5, %10 : vector<64x16xf32>
    %12 = arith.mulf %11, %11 : vector<64x16xf32>
    %cst_7 = arith.constant dense<0.000000e+00> : vector<16xf32>
    %13 = vector.multi_reduction <add>, %12, %cst_7 [0] : vector<64x16xf32> to vector<16xf32>
    %14 = vector.shape_cast %13 : vector<16xf32> to vector<1x16xf32>
    %cst_8 = arith.constant 6.400000e+01 : f32
    %15 = vector.broadcast %cst_8 : f32 to vector<1x16xf32>
    %16 = arith.divf %14, %15 : vector<1x16xf32>
    %cst_9 = arith.constant 9.99999974E-6 : f32
    %17 = vector.broadcast %cst_9 : f32 to vector<1x16xf32>
    %18 = arith.addf %16, %17 : vector<1x16xf32>
    %19 = math.rsqrt %18 : vector<1x16xf32>
    %20 = vector.broadcast %19 : vector<1x16xf32> to vector<64x16xf32>
    %21 = arith.mulf %11, %20 : vector<64x16xf32>
    %c0_10 = arith.constant 0 : index
    %22 = memref.load %arg4[%c0_10] : memref<1xf32, #tpu.memory_space<smem>>
    %cst_11 = arith.constant 0.000000e+00 : f32
    %23 = vector.broadcast %cst_11 : f32 to vector<64x16xf32>
    %24 = arith.cmpf oge, %21, %23 : vector<64x16xf32>
    %25 = vector.broadcast %22 : f32 to vector<64x16xf32>
    %26 = arith.mulf %25, %21 : vector<64x16xf32>
    %27 = arith.select %24, %21, %26 : vector<64x16xi1>, vector<64x16xf32>
    %c0_12 = arith.constant 0 : index
    %c0_13 = arith.constant 0 : index
    %28 = vector.load %arg5[%c0_12, %c0_13] : memref<64x16xf32, #tpu.memory_space<vmem>>, vector<64x16xf32>
    tpu.vector_store %arg5[%c0_12, %c0_13], %27 {strides = array<i32>} : memref<64x16xf32, #tpu.memory_space<vmem>>, vector<64x16xf32>,
    return
  }
  func.func @transform_0(%arg0: i32) -> (i32, i32) {
    %c0_i32 = arith.constant 0 : i32
    %c0_i32_0 = arith.constant 0 : i32
    return %arg0, %c0_i32 : i32, i32
  }
  func.func @transform_1(%arg0: i32) -> (i32, i32) {
    %c0_i32 = arith.constant 0 : i32
    %c0_i32_0 = arith.constant 0 : i32
    %c0_i32_1 = arith.constant 0 : i32
    return %c0_i32, %c0_i32_0 : i32, i32
  }
  func.func @transform_2(%arg0: i32) -> (i32, i32) {
    %c0_i32 = arith.constant 0 : i32
    %c0_i32_0 = arith.constant 0 : i32
    %c0_i32_1 = arith.constant 0 : i32
    return %c0_i32, %c0_i32_0 : i32, i32
  }
  func.func @transform_3(%arg0: i32) -> i32 {
    %c0_i32 = arith.constant 0 : i32
    %c0_i32_0 = arith.constant 0 : i32
    return %c0_i32 : i32
  }
  func.func @transform_4(%arg0: i32) -> (i32, i32) {
    %c0_i32 = arith.constant 0 : i32
    %c0_i32_0 = arith.constant 0 : i32
    return %arg0, %c0_i32 : i32, i32
  }
}

module attributes {stable_mosaic.version = 11 : i64} {
  func.func @kernel(%arg0: i32, %arg1: memref<64x48xbf16, #tpu.memory_space<vmem>>, %arg2: memref<48x16xbf16, #tpu.memory_space<vmem>>, %arg3: memref<1x16xf32, #tpu.memory_space<vmem>>, %arg4: memref<64x16xf32, #tpu.memory_space<vmem>>) attributes {dimension_semantics = [#tpu.dimension_semantics<parallel>], iteration_bounds = array<i64: 2>, scalar_prefetch = 0 : i64, scratch_operands = 0 : i64, tpu.core_type = #tpu.core_type<tc>, window_params = [{transform_indices = @transform_0, window_bounds = array<i64: 64, 48>}, {pipeline_mode = #tpu.pipeline_mode<synchronous>, transform_indices = @transform_1, window_bounds = array<i64: 48, 16>}, {pipeline_mode = #tpu.pipeline_mode<synchronous>, transform_indices = @transform_2, window_bounds = array<i64: 1, 16>}, {transform_indices = @transform_3, window_bounds = array<i64: 64, 16>}]} {
    %c0 = arith.constant 0 : index
    %c0_0 = arith.constant 0 : index
    %0 = vector.load %arg1[%c0, %c0_0] : memref<64x48xbf16, #tpu.memory_space<vmem>>, vector<64x48xbf16>
    %c0_1 = arith.constant 0 : index
    %c0_2 = arith.constant 0 : index
    %1 = vector.load %arg2[%c0_1, %c0_2] : memref<48x16xbf16, #tpu.memory_space<vmem>>, vector<48x16xbf16>
    %cst = arith.constant dense<0.000000e+00> : vector<64x16xf32>
    %2 = tpu.matmul %0, %1, %cst {dimension_numbers = #tpu.dot_dimension_numbers<[1], [0], [0], [1], [0, 0, 1, 1], [], []>} : vector<64x48xbf16>, vector<48x16xbf16>, vector<64x16xf32> -> vector<64x16xf32>
    %c0_3 = arith.constant 0 : index
    %c0_4 = arith.constant 0 : index
    %3 = vector.load %arg3[%c0_3, %c0_4] : memref<1x16xf32, #tpu.memory_space<vmem>>, vector<1x16xf32>
    %4 = vector.broadcast %3 : vector<1x16xf32> to vector<64x16xf32>
    %5 = arith.addf %2, %4 : vector<64x16xf32>
    %c0_5 = arith.constant 0 : index
    %c0_6 = arith.constant 0 : index
    %6 = vector.load %arg4[%c0_5, %c0_6] : memref<64x16xf32, #tpu.memory_space<vmem>>, vector<64x16xf32>
    tpu.vector_store %arg4[%c0_5, %c0_6], %5 {strides = array<i32>} : memref<64x16xf32, #tpu.memory_space<vmem>>, vector<64x16xf32>,
    return
  }
  func.func @transform_0(%arg0: i32) -> (i32, i32) {
    %c0_i32 = arith.constant 0 : i32
    %c0_i32_0 = arith.constant 0 : i32
    return %arg0, %c0_i32 : i32, i32
  }
  func.func @transform_1(%arg0: i32) -> (i32, i32) {
    %c0_i32 = arith.constant 0 : i32
    %c0_i32_0 = arith.constant 0 : i32
    %c0_i32_1 = arith.constant 0 : i32
    return %c0_i32, %c0_i32_0 : i32, i32
  }
  func.func @transform_2(%arg0: i32) -> (i32, i32) {
    %c0_i32 = arith.constant 0 : i32
    %c0_i32_0 = arith.constant 0 : i32
    %c0_i32_1 = arith.constant 0 : i32
    return %c0_i32, %c0_i32_0 : i32, i32
  }
  func.func @transform_3(%arg0: i32) -> (i32, i32) {
    %c0_i32 = arith.constant 0 : i32
    %c0_i32_0 = arith.constant 0 : i32
    return %arg0, %c0_i32 : i32, i32
  }
}

module attributes {stable_mosaic.version = 11 : i64} {
  func.func @kernel(%arg0: i32, %arg1: memref<64x144xbf16, #tpu.memory_space<vmem>>, %arg2: memref<144x16xbf16, #tpu.memory_space<vmem>>, %arg3: memref<1x16xf32, #tpu.memory_space<vmem>>, %arg4: memref<1xf32, #tpu.memory_space<smem>>, %arg5: memref<64x16xf32, #tpu.memory_space<vmem>>, %arg6: memref<64x16xf32, #tpu.memory_space<vmem>>) attributes {dimension_semantics = [#tpu.dimension_semantics<parallel>], iteration_bounds = array<i64: 2>, scalar_prefetch = 0 : i64, scratch_operands = 0 : i64, tpu.core_type = #tpu.core_type<tc>, window_params = [{transform_indices = @transform_0, window_bounds = array<i64: 64, 144>}, {pipeline_mode = #tpu.pipeline_mode<synchronous>, transform_indices = @transform_1, window_bounds = array<i64: 144, 16>}, {pipeline_mode = #tpu.pipeline_mode<synchronous>, transform_indices = @transform_2, window_bounds = array<i64: 1, 16>}, {transform_indices = @transform_3, window_bounds = array<i64: 1>}, {transform_indices = @transform_4, window_bounds = array<i64: 64, 16>}, {transform_indices = @transform_5, window_bounds = array<i64: 64, 16>}]} {
    %c0 = arith.constant 0 : index
    %c0_0 = arith.constant 0 : index
    %0 = vector.load %arg1[%c0, %c0_0] : memref<64x144xbf16, #tpu.memory_space<vmem>>, vector<64x144xbf16>
    %c0_1 = arith.constant 0 : index
    %c0_2 = arith.constant 0 : index
    %1 = vector.load %arg2[%c0_1, %c0_2] : memref<144x16xbf16, #tpu.memory_space<vmem>>, vector<144x16xbf16>
    %cst = arith.constant dense<0.000000e+00> : vector<64x16xf32>
    %2 = tpu.matmul %0, %1, %cst {dimension_numbers = #tpu.dot_dimension_numbers<[1], [0], [0], [1], [0, 0, 1, 1], [], []>} : vector<64x144xbf16>, vector<144x16xbf16>, vector<64x16xf32> -> vector<64x16xf32>
    %c0_3 = arith.constant 0 : index
    %c0_4 = arith.constant 0 : index
    %3 = vector.load %arg3[%c0_3, %c0_4] : memref<1x16xf32, #tpu.memory_space<vmem>>, vector<1x16xf32>
    %4 = vector.broadcast %3 : vector<1x16xf32> to vector<64x16xf32>
    %5 = arith.addf %2, %4 : vector<64x16xf32>
    %cst_5 = arith.constant dense<0.000000e+00> : vector<16xf32>
    %6 = vector.multi_reduction <add>, %5, %cst_5 [0] : vector<64x16xf32> to vector<16xf32>
    %7 = vector.shape_cast %6 : vector<16xf32> to vector<1x16xf32>
    %cst_6 = arith.constant 6.400000e+01 : f32
    %8 = vector.broadcast %cst_6 : f32 to vector<1x16xf32>
    %9 = arith.divf %7, %8 : vector<1x16xf32>
    %10 = vector.broadcast %9 : vector<1x16xf32> to vector<64x16xf32>
    %11 = arith.subf %5, %10 : vector<64x16xf32>
    %12 = arith.mulf %11, %11 : vector<64x16xf32>
    %cst_7 = arith.constant dense<0.000000e+00> : vector<16xf32>
    %13 = vector.multi_reduction <add>, %12, %cst_7 [0] : vector<64x16xf32> to vector<16xf32>
    %14 = vector.shape_cast %13 : vector<16xf32> to vector<1x16xf32>
    %cst_8 = arith.constant 6.400000e+01 : f32
    %15 = vector.broadcast %cst_8 : f32 to vector<1x16xf32>
    %16 = arith.divf %14, %15 : vector<1x16xf32>
    %cst_9 = arith.constant 9.99999974E-6 : f32
    %17 = vector.broadcast %cst_9 : f32 to vector<1x16xf32>
    %18 = arith.addf %16, %17 : vector<1x16xf32>
    %19 = math.rsqrt %18 : vector<1x16xf32>
    %20 = vector.broadcast %19 : vector<1x16xf32> to vector<64x16xf32>
    %21 = arith.mulf %11, %20 : vector<64x16xf32>
    %c0_10 = arith.constant 0 : index
    %22 = memref.load %arg4[%c0_10] : memref<1xf32, #tpu.memory_space<smem>>
    %cst_11 = arith.constant 0.000000e+00 : f32
    %23 = vector.broadcast %cst_11 : f32 to vector<64x16xf32>
    %24 = arith.cmpf oge, %21, %23 : vector<64x16xf32>
    %25 = vector.broadcast %22 : f32 to vector<64x16xf32>
    %26 = arith.mulf %25, %21 : vector<64x16xf32>
    %27 = arith.select %24, %21, %26 : vector<64x16xi1>, vector<64x16xf32>
    %c0_12 = arith.constant 0 : index
    %c0_13 = arith.constant 0 : index
    %28 = vector.load %arg5[%c0_12, %c0_13] : memref<64x16xf32, #tpu.memory_space<vmem>>, vector<64x16xf32>
    %29 = arith.addf %27, %28 : vector<64x16xf32>
    %c0_14 = arith.constant 0 : index
    %c0_15 = arith.constant 0 : index
    %30 = vector.load %arg6[%c0_14, %c0_15] : memref<64x16xf32, #tpu.memory_space<vmem>>, vector<64x16xf32>
    tpu.vector_store %arg6[%c0_14, %c0_15], %29 {strides = array<i32>} : memref<64x16xf32, #tpu.memory_space<vmem>>, vector<64x16xf32>,
    return
  }
  func.func @transform_0(%arg0: i32) -> (i32, i32) {
    %c0_i32 = arith.constant 0 : i32
    %c0_i32_0 = arith.constant 0 : i32
    return %arg0, %c0_i32 : i32, i32
  }
  func.func @transform_1(%arg0: i32) -> (i32, i32) {
    %c0_i32 = arith.constant 0 : i32
    %c0_i32_0 = arith.constant 0 : i32
    %c0_i32_1 = arith.constant 0 : i32
    return %c0_i32, %c0_i32_0 : i32, i32
  }
  func.func @transform_2(%arg0: i32) -> (i32, i32) {
    %c0_i32 = arith.constant 0 : i32
    %c0_i32_0 = arith.constant 0 : i32
    %c0_i32_1 = arith.constant 0 : i32
    return %c0_i32, %c0_i32_0 : i32, i32
  }
  func.func @transform_3(%arg0: i32) -> i32 {
    %c0_i32 = arith.constant 0 : i32
    %c0_i32_0 = arith.constant 0 : i32
    return %c0_i32 : i32
  }
  func.func @transform_4(%arg0: i32) -> (i32, i32) {
    %c0_i32 = arith.constant 0 : i32
    %c0_i32_0 = arith.constant 0 : i32
    return %arg0, %c0_i32 : i32, i32
  }
  func.func @transform_5(%arg0: i32) -> (i32, i32) {
    %c0_i32 = arith.constant 0 : i32
    %c0_i32_0 = arith.constant 0 : i32
    return %arg0, %c0_i32 : i32, i32
  }
}

module attributes {stable_mosaic.version = 11 : i64} {
  func.func @kernel(%arg0: i32, %arg1: memref<16x144xbf16, #tpu.memory_space<vmem>>, %arg2: memref<144x32xbf16, #tpu.memory_space<vmem>>, %arg3: memref<1x32xf32, #tpu.memory_space<vmem>>, %arg4: memref<1xf32, #tpu.memory_space<smem>>, %arg5: memref<16x32xf32, #tpu.memory_space<vmem>>) attributes {dimension_semantics = [#tpu.dimension_semantics<parallel>], iteration_bounds = array<i64: 2>, scalar_prefetch = 0 : i64, scratch_operands = 0 : i64, tpu.core_type = #tpu.core_type<tc>, window_params = [{transform_indices = @transform_0, window_bounds = array<i64: 16, 144>}, {pipeline_mode = #tpu.pipeline_mode<synchronous>, transform_indices = @transform_1, window_bounds = array<i64: 144, 32>}, {pipeline_mode = #tpu.pipeline_mode<synchronous>, transform_indices = @transform_2, window_bounds = array<i64: 1, 32>}, {transform_indices = @transform_3, window_bounds = array<i64: 1>}, {transform_indices = @transform_4, window_bounds = array<i64: 16, 32>}]} {
    %c0 = arith.constant 0 : index
    %c0_0 = arith.constant 0 : index
    %0 = vector.load %arg1[%c0, %c0_0] : memref<16x144xbf16, #tpu.memory_space<vmem>>, vector<16x144xbf16>
    %c0_1 = arith.constant 0 : index
    %c0_2 = arith.constant 0 : index
    %1 = vector.load %arg2[%c0_1, %c0_2] : memref<144x32xbf16, #tpu.memory_space<vmem>>, vector<144x32xbf16>
    %cst = arith.constant dense<0.000000e+00> : vector<16x32xf32>
    %2 = tpu.matmul %0, %1, %cst {dimension_numbers = #tpu.dot_dimension_numbers<[1], [0], [0], [1], [0, 0, 1, 1], [], []>} : vector<16x144xbf16>, vector<144x32xbf16>, vector<16x32xf32> -> vector<16x32xf32>
    %c0_3 = arith.constant 0 : index
    %c0_4 = arith.constant 0 : index
    %3 = vector.load %arg3[%c0_3, %c0_4] : memref<1x32xf32, #tpu.memory_space<vmem>>, vector<1x32xf32>
    %4 = vector.broadcast %3 : vector<1x32xf32> to vector<16x32xf32>
    %5 = arith.addf %2, %4 : vector<16x32xf32>
    %cst_5 = arith.constant dense<0.000000e+00> : vector<32xf32>
    %6 = vector.multi_reduction <add>, %5, %cst_5 [0] : vector<16x32xf32> to vector<32xf32>
    %7 = vector.shape_cast %6 : vector<32xf32> to vector<1x32xf32>
    %cst_6 = arith.constant 1.600000e+01 : f32
    %8 = vector.broadcast %cst_6 : f32 to vector<1x32xf32>
    %9 = arith.divf %7, %8 : vector<1x32xf32>
    %10 = vector.broadcast %9 : vector<1x32xf32> to vector<16x32xf32>
    %11 = arith.subf %5, %10 : vector<16x32xf32>
    %12 = arith.mulf %11, %11 : vector<16x32xf32>
    %cst_7 = arith.constant dense<0.000000e+00> : vector<32xf32>
    %13 = vector.multi_reduction <add>, %12, %cst_7 [0] : vector<16x32xf32> to vector<32xf32>
    %14 = vector.shape_cast %13 : vector<32xf32> to vector<1x32xf32>
    %cst_8 = arith.constant 1.600000e+01 : f32
    %15 = vector.broadcast %cst_8 : f32 to vector<1x32xf32>
    %16 = arith.divf %14, %15 : vector<1x32xf32>
    %cst_9 = arith.constant 9.99999974E-6 : f32
    %17 = vector.broadcast %cst_9 : f32 to vector<1x32xf32>
    %18 = arith.addf %16, %17 : vector<1x32xf32>
    %19 = math.rsqrt %18 : vector<1x32xf32>
    %20 = vector.broadcast %19 : vector<1x32xf32> to vector<16x32xf32>
    %21 = arith.mulf %11, %20 : vector<16x32xf32>
    %c0_10 = arith.constant 0 : index
    %22 = memref.load %arg4[%c0_10] : memref<1xf32, #tpu.memory_space<smem>>
    %cst_11 = arith.constant 0.000000e+00 : f32
    %23 = vector.broadcast %cst_11 : f32 to vector<16x32xf32>
    %24 = arith.cmpf oge, %21, %23 : vector<16x32xf32>
    %25 = vector.broadcast %22 : f32 to vector<16x32xf32>
    %26 = arith.mulf %25, %21 : vector<16x32xf32>
    %27 = arith.select %24, %21, %26 : vector<16x32xi1>, vector<16x32xf32>
    %c0_12 = arith.constant 0 : index
    %c0_13 = arith.constant 0 : index
    %28 = vector.load %arg5[%c0_12, %c0_13] : memref<16x32xf32, #tpu.memory_space<vmem>>, vector<16x32xf32>
    tpu.vector_store %arg5[%c0_12, %c0_13], %27 {strides = array<i32>} : memref<16x32xf32, #tpu.memory_space<vmem>>, vector<16x32xf32>,
    return
  }
  func.func @transform_0(%arg0: i32) -> (i32, i32) {
    %c0_i32 = arith.constant 0 : i32
    %c0_i32_0 = arith.constant 0 : i32
    return %arg0, %c0_i32 : i32, i32
  }
  func.func @transform_1(%arg0: i32) -> (i32, i32) {
    %c0_i32 = arith.constant 0 : i32
    %c0_i32_0 = arith.constant 0 : i32
    %c0_i32_1 = arith.constant 0 : i32
    return %c0_i32, %c0_i32_0 : i32, i32
  }
  func.func @transform_2(%arg0: i32) -> (i32, i32) {
    %c0_i32 = arith.constant 0 : i32
    %c0_i32_0 = arith.constant 0 : i32
    %c0_i32_1 = arith.constant 0 : i32
    return %c0_i32, %c0_i32_0 : i32, i32
  }
  func.func @transform_3(%arg0: i32) -> i32 {
    %c0_i32 = arith.constant 0 : i32
    %c0_i32_0 = arith.constant 0 : i32
    return %c0_i32 : i32
  }
  func.func @transform_4(%arg0: i32) -> (i32, i32) {
    %c0_i32 = arith.constant 0 : i32
    %c0_i32_0 = arith.constant 0 : i32
    return %arg0, %c0_i32 : i32, i32
  }
}

module attributes {stable_mosaic.version = 11 : i64} {
  func.func @kernel(%arg0: i32, %arg1: memref<16x144xbf16, #tpu.memory_space<vmem>>, %arg2: memref<144x32xbf16, #tpu.memory_space<vmem>>, %arg3: memref<1x32xf32, #tpu.memory_space<vmem>>, %arg4: memref<16x32xf32, #tpu.memory_space<vmem>>) attributes {dimension_semantics = [#tpu.dimension_semantics<parallel>], iteration_bounds = array<i64: 2>, scalar_prefetch = 0 : i64, scratch_operands = 0 : i64, tpu.core_type = #tpu.core_type<tc>, window_params = [{transform_indices = @transform_0, window_bounds = array<i64: 16, 144>}, {pipeline_mode = #tpu.pipeline_mode<synchronous>, transform_indices = @transform_1, window_bounds = array<i64: 144, 32>}, {pipeline_mode = #tpu.pipeline_mode<synchronous>, transform_indices = @transform_2, window_bounds = array<i64: 1, 32>}, {transform_indices = @transform_3, window_bounds = array<i64: 16, 32>}]} {
    %c0 = arith.constant 0 : index
    %c0_0 = arith.constant 0 : index
    %0 = vector.load %arg1[%c0, %c0_0] : memref<16x144xbf16, #tpu.memory_space<vmem>>, vector<16x144xbf16>
    %c0_1 = arith.constant 0 : index
    %c0_2 = arith.constant 0 : index
    %1 = vector.load %arg2[%c0_1, %c0_2] : memref<144x32xbf16, #tpu.memory_space<vmem>>, vector<144x32xbf16>
    %cst = arith.constant dense<0.000000e+00> : vector<16x32xf32>
    %2 = tpu.matmul %0, %1, %cst {dimension_numbers = #tpu.dot_dimension_numbers<[1], [0], [0], [1], [0, 0, 1, 1], [], []>} : vector<16x144xbf16>, vector<144x32xbf16>, vector<16x32xf32> -> vector<16x32xf32>
    %c0_3 = arith.constant 0 : index
    %c0_4 = arith.constant 0 : index
    %3 = vector.load %arg3[%c0_3, %c0_4] : memref<1x32xf32, #tpu.memory_space<vmem>>, vector<1x32xf32>
    %4 = vector.broadcast %3 : vector<1x32xf32> to vector<16x32xf32>
    %5 = arith.addf %2, %4 : vector<16x32xf32>
    %c0_5 = arith.constant 0 : index
    %c0_6 = arith.constant 0 : index
    %6 = vector.load %arg4[%c0_5, %c0_6] : memref<16x32xf32, #tpu.memory_space<vmem>>, vector<16x32xf32>
    tpu.vector_store %arg4[%c0_5, %c0_6], %5 {strides = array<i32>} : memref<16x32xf32, #tpu.memory_space<vmem>>, vector<16x32xf32>,
    return
  }
  func.func @transform_0(%arg0: i32) -> (i32, i32) {
    %c0_i32 = arith.constant 0 : i32
    %c0_i32_0 = arith.constant 0 : i32
    return %arg0, %c0_i32 : i32, i32
  }
  func.func @transform_1(%arg0: i32) -> (i32, i32) {
    %c0_i32 = arith.constant 0 : i32
    %c0_i32_0 = arith.constant 0 : i32
    %c0_i32_1 = arith.constant 0 : i32
    return %c0_i32, %c0_i32_0 : i32, i32
  }
  func.func @transform_2(%arg0: i32) -> (i32, i32) {
    %c0_i32 = arith.constant 0 : i32
    %c0_i32_0 = arith.constant 0 : i32
    %c0_i32_1 = arith.constant 0 : i32
    return %c0_i32, %c0_i32_0 : i32, i32
  }
  func.func @transform_3(%arg0: i32) -> (i32, i32) {
    %c0_i32 = arith.constant 0 : i32
    %c0_i32_0 = arith.constant 0 : i32
    return %arg0, %c0_i32 : i32, i32
  }
}

module attributes {stable_mosaic.version = 11 : i64} {
  func.func @kernel(%arg0: i32, %arg1: memref<16x288xbf16, #tpu.memory_space<vmem>>, %arg2: memref<288x32xbf16, #tpu.memory_space<vmem>>, %arg3: memref<1x32xf32, #tpu.memory_space<vmem>>, %arg4: memref<1xf32, #tpu.memory_space<smem>>, %arg5: memref<16x32xf32, #tpu.memory_space<vmem>>, %arg6: memref<16x32xf32, #tpu.memory_space<vmem>>) attributes {dimension_semantics = [#tpu.dimension_semantics<parallel>], iteration_bounds = array<i64: 2>, scalar_prefetch = 0 : i64, scratch_operands = 0 : i64, tpu.core_type = #tpu.core_type<tc>, window_params = [{transform_indices = @transform_0, window_bounds = array<i64: 16, 288>}, {pipeline_mode = #tpu.pipeline_mode<synchronous>, transform_indices = @transform_1, window_bounds = array<i64: 288, 32>}, {pipeline_mode = #tpu.pipeline_mode<synchronous>, transform_indices = @transform_2, window_bounds = array<i64: 1, 32>}, {transform_indices = @transform_3, window_bounds = array<i64: 1>}, {transform_indices = @transform_4, window_bounds = array<i64: 16, 32>}, {transform_indices = @transform_5, window_bounds = array<i64: 16, 32>}]} {
    %c0 = arith.constant 0 : index
    %c0_0 = arith.constant 0 : index
    %0 = vector.load %arg1[%c0, %c0_0] : memref<16x288xbf16, #tpu.memory_space<vmem>>, vector<16x288xbf16>
    %c0_1 = arith.constant 0 : index
    %c0_2 = arith.constant 0 : index
    %1 = vector.load %arg2[%c0_1, %c0_2] : memref<288x32xbf16, #tpu.memory_space<vmem>>, vector<288x32xbf16>
    %cst = arith.constant dense<0.000000e+00> : vector<16x32xf32>
    %2 = tpu.matmul %0, %1, %cst {dimension_numbers = #tpu.dot_dimension_numbers<[1], [0], [0], [1], [0, 0, 1, 1], [], []>} : vector<16x288xbf16>, vector<288x32xbf16>, vector<16x32xf32> -> vector<16x32xf32>
    %c0_3 = arith.constant 0 : index
    %c0_4 = arith.constant 0 : index
    %3 = vector.load %arg3[%c0_3, %c0_4] : memref<1x32xf32, #tpu.memory_space<vmem>>, vector<1x32xf32>
    %4 = vector.broadcast %3 : vector<1x32xf32> to vector<16x32xf32>
    %5 = arith.addf %2, %4 : vector<16x32xf32>
    %cst_5 = arith.constant dense<0.000000e+00> : vector<32xf32>
    %6 = vector.multi_reduction <add>, %5, %cst_5 [0] : vector<16x32xf32> to vector<32xf32>
    %7 = vector.shape_cast %6 : vector<32xf32> to vector<1x32xf32>
    %cst_6 = arith.constant 1.600000e+01 : f32
    %8 = vector.broadcast %cst_6 : f32 to vector<1x32xf32>
    %9 = arith.divf %7, %8 : vector<1x32xf32>
    %10 = vector.broadcast %9 : vector<1x32xf32> to vector<16x32xf32>
    %11 = arith.subf %5, %10 : vector<16x32xf32>
    %12 = arith.mulf %11, %11 : vector<16x32xf32>
    %cst_7 = arith.constant dense<0.000000e+00> : vector<32xf32>
    %13 = vector.multi_reduction <add>, %12, %cst_7 [0] : vector<16x32xf32> to vector<32xf32>
    %14 = vector.shape_cast %13 : vector<32xf32> to vector<1x32xf32>
    %cst_8 = arith.constant 1.600000e+01 : f32
    %15 = vector.broadcast %cst_8 : f32 to vector<1x32xf32>
    %16 = arith.divf %14, %15 : vector<1x32xf32>
    %cst_9 = arith.constant 9.99999974E-6 : f32
    %17 = vector.broadcast %cst_9 : f32 to vector<1x32xf32>
    %18 = arith.addf %16, %17 : vector<1x32xf32>
    %19 = math.rsqrt %18 : vector<1x32xf32>
    %20 = vector.broadcast %19 : vector<1x32xf32> to vector<16x32xf32>
    %21 = arith.mulf %11, %20 : vector<16x32xf32>
    %c0_10 = arith.constant 0 : index
    %22 = memref.load %arg4[%c0_10] : memref<1xf32, #tpu.memory_space<smem>>
    %cst_11 = arith.constant 0.000000e+00 : f32
    %23 = vector.broadcast %cst_11 : f32 to vector<16x32xf32>
    %24 = arith.cmpf oge, %21, %23 : vector<16x32xf32>
    %25 = vector.broadcast %22 : f32 to vector<16x32xf32>
    %26 = arith.mulf %25, %21 : vector<16x32xf32>
    %27 = arith.select %24, %21, %26 : vector<16x32xi1>, vector<16x32xf32>
    %c0_12 = arith.constant 0 : index
    %c0_13 = arith.constant 0 : index
    %28 = vector.load %arg5[%c0_12, %c0_13] : memref<16x32xf32, #tpu.memory_space<vmem>>, vector<16x32xf32>
    %29 = arith.addf %27, %28 : vector<16x32xf32>
    %c0_14 = arith.constant 0 : index
    %c0_15 = arith.constant 0 : index
    %30 = vector.load %arg6[%c0_14, %c0_15] : memref<16x32xf32, #tpu.memory_space<vmem>>, vector<16x32xf32>
    tpu.vector_store %arg6[%c0_14, %c0_15], %29 {strides = array<i32>} : memref<16x32xf32, #tpu.memory_space<vmem>>, vector<16x32xf32>,
    return
  }
  func.func @transform_0(%arg0: i32) -> (i32, i32) {
    %c0_i32 = arith.constant 0 : i32
    %c0_i32_0 = arith.constant 0 : i32
    return %arg0, %c0_i32 : i32, i32
  }
  func.func @transform_1(%arg0: i32) -> (i32, i32) {
    %c0_i32 = arith.constant 0 : i32
    %c0_i32_0 = arith.constant 0 : i32
    %c0_i32_1 = arith.constant 0 : i32
    return %c0_i32, %c0_i32_0 : i32, i32
  }
  func.func @transform_2(%arg0: i32) -> (i32, i32) {
    %c0_i32 = arith.constant 0 : i32
    %c0_i32_0 = arith.constant 0 : i32
    %c0_i32_1 = arith.constant 0 : i32
    return %c0_i32, %c0_i32_0 : i32, i32
  }
  func.func @transform_3(%arg0: i32) -> i32 {
    %c0_i32 = arith.constant 0 : i32
    %c0_i32_0 = arith.constant 0 : i32
    return %c0_i32 : i32
  }
  func.func @transform_4(%arg0: i32) -> (i32, i32) {
    %c0_i32 = arith.constant 0 : i32
    %c0_i32_0 = arith.constant 0 : i32
    return %arg0, %c0_i32 : i32, i32
  }
  func.func @transform_5(%arg0: i32) -> (i32, i32) {
    %c0_i32 = arith.constant 0 : i32
    %c0_i32_0 = arith.constant 0 : i32
    return %arg0, %c0_i32 : i32, i32
  }
}

module attributes {stable_mosaic.version = 11 : i64} {
  func.func @kernel(%arg0: i32, %arg1: memref<16x288xbf16, #tpu.memory_space<vmem>>, %arg2: memref<288x64xbf16, #tpu.memory_space<vmem>>, %arg3: memref<1x64xf32, #tpu.memory_space<vmem>>, %arg4: memref<1xf32, #tpu.memory_space<smem>>, %arg5: memref<16x64xf32, #tpu.memory_space<vmem>>) attributes {dimension_semantics = [#tpu.dimension_semantics<parallel>], iteration_bounds = array<i64: 2>, scalar_prefetch = 0 : i64, scratch_operands = 0 : i64, tpu.core_type = #tpu.core_type<tc>, window_params = [{transform_indices = @transform_0, window_bounds = array<i64: 16, 288>}, {pipeline_mode = #tpu.pipeline_mode<synchronous>, transform_indices = @transform_1, window_bounds = array<i64: 288, 64>}, {pipeline_mode = #tpu.pipeline_mode<synchronous>, transform_indices = @transform_2, window_bounds = array<i64: 1, 64>}, {transform_indices = @transform_3, window_bounds = array<i64: 1>}, {transform_indices = @transform_4, window_bounds = array<i64: 16, 64>}]} {
    %c0 = arith.constant 0 : index
    %c0_0 = arith.constant 0 : index
    %0 = vector.load %arg1[%c0, %c0_0] : memref<16x288xbf16, #tpu.memory_space<vmem>>, vector<16x288xbf16>
    %c0_1 = arith.constant 0 : index
    %c0_2 = arith.constant 0 : index
    %1 = vector.load %arg2[%c0_1, %c0_2] : memref<288x64xbf16, #tpu.memory_space<vmem>>, vector<288x64xbf16>
    %cst = arith.constant dense<0.000000e+00> : vector<16x64xf32>
    %2 = tpu.matmul %0, %1, %cst {dimension_numbers = #tpu.dot_dimension_numbers<[1], [0], [0], [1], [0, 0, 1, 1], [], []>} : vector<16x288xbf16>, vector<288x64xbf16>, vector<16x64xf32> -> vector<16x64xf32>
    %c0_3 = arith.constant 0 : index
    %c0_4 = arith.constant 0 : index
    %3 = vector.load %arg3[%c0_3, %c0_4] : memref<1x64xf32, #tpu.memory_space<vmem>>, vector<1x64xf32>
    %4 = vector.broadcast %3 : vector<1x64xf32> to vector<16x64xf32>
    %5 = arith.addf %2, %4 : vector<16x64xf32>
    %cst_5 = arith.constant dense<0.000000e+00> : vector<64xf32>
    %6 = vector.multi_reduction <add>, %5, %cst_5 [0] : vector<16x64xf32> to vector<64xf32>
    %7 = vector.shape_cast %6 : vector<64xf32> to vector<1x64xf32>
    %cst_6 = arith.constant 1.600000e+01 : f32
    %8 = vector.broadcast %cst_6 : f32 to vector<1x64xf32>
    %9 = arith.divf %7, %8 : vector<1x64xf32>
    %10 = vector.broadcast %9 : vector<1x64xf32> to vector<16x64xf32>
    %11 = arith.subf %5, %10 : vector<16x64xf32>
    %12 = arith.mulf %11, %11 : vector<16x64xf32>
    %cst_7 = arith.constant dense<0.000000e+00> : vector<64xf32>
    %13 = vector.multi_reduction <add>, %12, %cst_7 [0] : vector<16x64xf32> to vector<64xf32>
    %14 = vector.shape_cast %13 : vector<64xf32> to vector<1x64xf32>
    %cst_8 = arith.constant 1.600000e+01 : f32
    %15 = vector.broadcast %cst_8 : f32 to vector<1x64xf32>
    %16 = arith.divf %14, %15 : vector<1x64xf32>
    %cst_9 = arith.constant 9.99999974E-6 : f32
    %17 = vector.broadcast %cst_9 : f32 to vector<1x64xf32>
    %18 = arith.addf %16, %17 : vector<1x64xf32>
    %19 = math.rsqrt %18 : vector<1x64xf32>
    %20 = vector.broadcast %19 : vector<1x64xf32> to vector<16x64xf32>
    %21 = arith.mulf %11, %20 : vector<16x64xf32>
    %c0_10 = arith.constant 0 : index
    %22 = memref.load %arg4[%c0_10] : memref<1xf32, #tpu.memory_space<smem>>
    %cst_11 = arith.constant 0.000000e+00 : f32
    %23 = vector.broadcast %cst_11 : f32 to vector<16x64xf32>
    %24 = arith.cmpf oge, %21, %23 : vector<16x64xf32>
    %25 = vector.broadcast %22 : f32 to vector<16x64xf32>
    %26 = arith.mulf %25, %21 : vector<16x64xf32>
    %27 = arith.select %24, %21, %26 : vector<16x64xi1>, vector<16x64xf32>
    %c0_12 = arith.constant 0 : index
    %c0_13 = arith.constant 0 : index
    %28 = vector.load %arg5[%c0_12, %c0_13] : memref<16x64xf32, #tpu.memory_space<vmem>>, vector<16x64xf32>
    tpu.vector_store %arg5[%c0_12, %c0_13], %27 {strides = array<i32>} : memref<16x64xf32, #tpu.memory_space<vmem>>, vector<16x64xf32>,
    return
  }
  func.func @transform_0(%arg0: i32) -> (i32, i32) {
    %c0_i32 = arith.constant 0 : i32
    %c0_i32_0 = arith.constant 0 : i32
    return %arg0, %c0_i32 : i32, i32
  }
  func.func @transform_1(%arg0: i32) -> (i32, i32) {
    %c0_i32 = arith.constant 0 : i32
    %c0_i32_0 = arith.constant 0 : i32
    %c0_i32_1 = arith.constant 0 : i32
    return %c0_i32, %c0_i32_0 : i32, i32
  }
  func.func @transform_2(%arg0: i32) -> (i32, i32) {
    %c0_i32 = arith.constant 0 : i32
    %c0_i32_0 = arith.constant 0 : i32
    %c0_i32_1 = arith.constant 0 : i32
    return %c0_i32, %c0_i32_0 : i32, i32
  }
  func.func @transform_3(%arg0: i32) -> i32 {
    %c0_i32 = arith.constant 0 : i32
    %c0_i32_0 = arith.constant 0 : i32
    return %c0_i32 : i32
  }
  func.func @transform_4(%arg0: i32) -> (i32, i32) {
    %c0_i32 = arith.constant 0 : i32
    %c0_i32_0 = arith.constant 0 : i32
    return %arg0, %c0_i32 : i32, i32
  }
}

module attributes {stable_mosaic.version = 11 : i64} {
  func.func @kernel(%arg0: i32, %arg1: memref<16x32xbf16, #tpu.memory_space<vmem>>, %arg2: memref<32x64xbf16, #tpu.memory_space<vmem>>, %arg3: memref<1x64xf32, #tpu.memory_space<vmem>>, %arg4: memref<16x64xf32, #tpu.memory_space<vmem>>) attributes {dimension_semantics = [#tpu.dimension_semantics<parallel>], iteration_bounds = array<i64: 2>, scalar_prefetch = 0 : i64, scratch_operands = 0 : i64, tpu.core_type = #tpu.core_type<tc>, window_params = [{transform_indices = @transform_0, window_bounds = array<i64: 16, 32>}, {pipeline_mode = #tpu.pipeline_mode<synchronous>, transform_indices = @transform_1, window_bounds = array<i64: 32, 64>}, {pipeline_mode = #tpu.pipeline_mode<synchronous>, transform_indices = @transform_2, window_bounds = array<i64: 1, 64>}, {transform_indices = @transform_3, window_bounds = array<i64: 16, 64>}]} {
    %c0 = arith.constant 0 : index
    %c0_0 = arith.constant 0 : index
    %0 = vector.load %arg1[%c0, %c0_0] : memref<16x32xbf16, #tpu.memory_space<vmem>>, vector<16x32xbf16>
    %c0_1 = arith.constant 0 : index
    %c0_2 = arith.constant 0 : index
    %1 = vector.load %arg2[%c0_1, %c0_2] : memref<32x64xbf16, #tpu.memory_space<vmem>>, vector<32x64xbf16>
    %cst = arith.constant dense<0.000000e+00> : vector<16x64xf32>
    %2 = tpu.matmul %0, %1, %cst {dimension_numbers = #tpu.dot_dimension_numbers<[1], [0], [0], [1], [0, 0, 1, 1], [], []>} : vector<16x32xbf16>, vector<32x64xbf16>, vector<16x64xf32> -> vector<16x64xf32>
    %c0_3 = arith.constant 0 : index
    %c0_4 = arith.constant 0 : index
    %3 = vector.load %arg3[%c0_3, %c0_4] : memref<1x64xf32, #tpu.memory_space<vmem>>, vector<1x64xf32>
    %4 = vector.broadcast %3 : vector<1x64xf32> to vector<16x64xf32>
    %5 = arith.addf %2, %4 : vector<16x64xf32>
    %c0_5 = arith.constant 0 : index
    %c0_6 = arith.constant 0 : index
    %6 = vector.load %arg4[%c0_5, %c0_6] : memref<16x64xf32, #tpu.memory_space<vmem>>, vector<16x64xf32>
    tpu.vector_store %arg4[%c0_5, %c0_6], %5 {strides = array<i32>} : memref<16x64xf32, #tpu.memory_space<vmem>>, vector<16x64xf32>,
    return
  }
  func.func @transform_0(%arg0: i32) -> (i32, i32) {
    %c0_i32 = arith.constant 0 : i32
    %c0_i32_0 = arith.constant 0 : i32
    return %arg0, %c0_i32 : i32, i32
  }
  func.func @transform_1(%arg0: i32) -> (i32, i32) {
    %c0_i32 = arith.constant 0 : i32
    %c0_i32_0 = arith.constant 0 : i32
    %c0_i32_1 = arith.constant 0 : i32
    return %c0_i32, %c0_i32_0 : i32, i32
  }
  func.func @transform_2(%arg0: i32) -> (i32, i32) {
    %c0_i32 = arith.constant 0 : i32
    %c0_i32_0 = arith.constant 0 : i32
    %c0_i32_1 = arith.constant 0 : i32
    return %c0_i32, %c0_i32_0 : i32, i32
  }
  func.func @transform_3(%arg0: i32) -> (i32, i32) {
    %c0_i32 = arith.constant 0 : i32
    %c0_i32_0 = arith.constant 0 : i32
    return %arg0, %c0_i32 : i32, i32
  }
}

module attributes {stable_mosaic.version = 11 : i64} {
  func.func @kernel(%arg0: i32, %arg1: memref<16x576xbf16, #tpu.memory_space<vmem>>, %arg2: memref<576x64xbf16, #tpu.memory_space<vmem>>, %arg3: memref<1x64xf32, #tpu.memory_space<vmem>>, %arg4: memref<1xf32, #tpu.memory_space<smem>>, %arg5: memref<16x64xf32, #tpu.memory_space<vmem>>, %arg6: memref<16x64xf32, #tpu.memory_space<vmem>>) attributes {dimension_semantics = [#tpu.dimension_semantics<parallel>], iteration_bounds = array<i64: 2>, scalar_prefetch = 0 : i64, scratch_operands = 0 : i64, tpu.core_type = #tpu.core_type<tc>, window_params = [{transform_indices = @transform_0, window_bounds = array<i64: 16, 576>}, {pipeline_mode = #tpu.pipeline_mode<synchronous>, transform_indices = @transform_1, window_bounds = array<i64: 576, 64>}, {pipeline_mode = #tpu.pipeline_mode<synchronous>, transform_indices = @transform_2, window_bounds = array<i64: 1, 64>}, {transform_indices = @transform_3, window_bounds = array<i64: 1>}, {transform_indices = @transform_4, window_bounds = array<i64: 16, 64>}, {transform_indices = @transform_5, window_bounds = array<i64: 16, 64>}]} {
    %c0 = arith.constant 0 : index
    %c0_0 = arith.constant 0 : index
    %0 = vector.load %arg1[%c0, %c0_0] : memref<16x576xbf16, #tpu.memory_space<vmem>>, vector<16x576xbf16>
    %c0_1 = arith.constant 0 : index
    %c0_2 = arith.constant 0 : index
    %1 = vector.load %arg2[%c0_1, %c0_2] : memref<576x64xbf16, #tpu.memory_space<vmem>>, vector<576x64xbf16>
    %cst = arith.constant dense<0.000000e+00> : vector<16x64xf32>
    %2 = tpu.matmul %0, %1, %cst {dimension_numbers = #tpu.dot_dimension_numbers<[1], [0], [0], [1], [0, 0, 1, 1], [], []>} : vector<16x576xbf16>, vector<576x64xbf16>, vector<16x64xf32> -> vector<16x64xf32>
    %c0_3 = arith.constant 0 : index
    %c0_4 = arith.constant 0 : index
    %3 = vector.load %arg3[%c0_3, %c0_4] : memref<1x64xf32, #tpu.memory_space<vmem>>, vector<1x64xf32>
    %4 = vector.broadcast %3 : vector<1x64xf32> to vector<16x64xf32>
    %5 = arith.addf %2, %4 : vector<16x64xf32>
    %cst_5 = arith.constant dense<0.000000e+00> : vector<64xf32>
    %6 = vector.multi_reduction <add>, %5, %cst_5 [0] : vector<16x64xf32> to vector<64xf32>
    %7 = vector.shape_cast %6 : vector<64xf32> to vector<1x64xf32>
    %cst_6 = arith.constant 1.600000e+01 : f32
    %8 = vector.broadcast %cst_6 : f32 to vector<1x64xf32>
    %9 = arith.divf %7, %8 : vector<1x64xf32>
    %10 = vector.broadcast %9 : vector<1x64xf32> to vector<16x64xf32>
    %11 = arith.subf %5, %10 : vector<16x64xf32>
    %12 = arith.mulf %11, %11 : vector<16x64xf32>
    %cst_7 = arith.constant dense<0.000000e+00> : vector<64xf32>
    %13 = vector.multi_reduction <add>, %12, %cst_7 [0] : vector<16x64xf32> to vector<64xf32>
    %14 = vector.shape_cast %13 : vector<64xf32> to vector<1x64xf32>
    %cst_8 = arith.constant 1.600000e+01 : f32
    %15 = vector.broadcast %cst_8 : f32 to vector<1x64xf32>
    %16 = arith.divf %14, %15 : vector<1x64xf32>
    %cst_9 = arith.constant 9.99999974E-6 : f32
    %17 = vector.broadcast %cst_9 : f32 to vector<1x64xf32>
    %18 = arith.addf %16, %17 : vector<1x64xf32>
    %19 = math.rsqrt %18 : vector<1x64xf32>
    %20 = vector.broadcast %19 : vector<1x64xf32> to vector<16x64xf32>
    %21 = arith.mulf %11, %20 : vector<16x64xf32>
    %c0_10 = arith.constant 0 : index
    %22 = memref.load %arg4[%c0_10] : memref<1xf32, #tpu.memory_space<smem>>
    %cst_11 = arith.constant 0.000000e+00 : f32
    %23 = vector.broadcast %cst_11 : f32 to vector<16x64xf32>
    %24 = arith.cmpf oge, %21, %23 : vector<16x64xf32>
    %25 = vector.broadcast %22 : f32 to vector<16x64xf32>
    %26 = arith.mulf %25, %21 : vector<16x64xf32>
    %27 = arith.select %24, %21, %26 : vector<16x64xi1>, vector<16x64xf32>
    %c0_12 = arith.constant 0 : index
    %c0_13 = arith.constant 0 : index
    %28 = vector.load %arg5[%c0_12, %c0_13] : memref<16x64xf32, #tpu.memory_space<vmem>>, vector<16x64xf32>
    %29 = arith.addf %27, %28 : vector<16x64xf32>
    %c0_14 = arith.constant 0 : index
    %c0_15 = arith.constant 0 : index
    %30 = vector.load %arg6[%c0_14, %c0_15] : memref<16x64xf32, #tpu.memory_space<vmem>>, vector<16x64xf32>
    tpu.vector_store %arg6[%c0_14, %c0_15], %29 {strides = array<i32>} : memref<16x64xf32, #tpu.memory_space<vmem>>, vector<16x64xf32>,
    return
  }
  func.func @transform_0(%arg0: i32) -> (i32, i32) {
    %c0_i32 = arith.constant 0 : i32
    %c0_i32_0 = arith.constant 0 : i32
    return %arg0, %c0_i32 : i32, i32
  }
  func.func @transform_1(%arg0: i32) -> (i32, i32) {
    %c0_i32 = arith.constant 0 : i32
    %c0_i32_0 = arith.constant 0 : i32
    %c0_i32_1 = arith.constant 0 : i32
    return %c0_i32, %c0_i32_0 : i32, i32
  }
  func.func @transform_2(%arg0: i32) -> (i32, i32) {
    %c0_i32 = arith.constant 0 : i32
    %c0_i32_0 = arith.constant 0 : i32
    %c0_i32_1 = arith.constant 0 : i32
    return %c0_i32, %c0_i32_0 : i32, i32
  }
  func.func @transform_3(%arg0: i32) -> i32 {
    %c0_i32 = arith.constant 0 : i32
    %c0_i32_0 = arith.constant 0 : i32
    return %c0_i32 : i32
  }
  func.func @transform_4(%arg0: i32) -> (i32, i32) {
    %c0_i32 = arith.constant 0 : i32
    %c0_i32_0 = arith.constant 0 : i32
    return %arg0, %c0_i32 : i32, i32
  }
  func.func @transform_5(%arg0: i32) -> (i32, i32) {
    %c0_i32 = arith.constant 0 : i32
    %c0_i32_0 = arith.constant 0 : i32
    return %arg0, %c0_i32 : i32, i32
  }
}

module attributes {stable_mosaic.version = 11 : i64} {
  func.func @kernel(%arg0: i32, %arg1: memref<16x384xbf16, #tpu.memory_space<vmem>>, %arg2: memref<384x64xbf16, #tpu.memory_space<vmem>>, %arg3: memref<1x64xf32, #tpu.memory_space<vmem>>, %arg4: memref<1xf32, #tpu.memory_space<smem>>, %arg5: memref<16x64xf32, #tpu.memory_space<vmem>>) attributes {dimension_semantics = [#tpu.dimension_semantics<parallel>], iteration_bounds = array<i64: 2>, scalar_prefetch = 0 : i64, scratch_operands = 0 : i64, tpu.core_type = #tpu.core_type<tc>, window_params = [{transform_indices = @transform_0, window_bounds = array<i64: 16, 384>}, {pipeline_mode = #tpu.pipeline_mode<synchronous>, transform_indices = @transform_1, window_bounds = array<i64: 384, 64>}, {pipeline_mode = #tpu.pipeline_mode<synchronous>, transform_indices = @transform_2, window_bounds = array<i64: 1, 64>}, {transform_indices = @transform_3, window_bounds = array<i64: 1>}, {transform_indices = @transform_4, window_bounds = array<i64: 16, 64>}]} {
    %c0 = arith.constant 0 : index
    %c0_0 = arith.constant 0 : index
    %0 = vector.load %arg1[%c0, %c0_0] : memref<16x384xbf16, #tpu.memory_space<vmem>>, vector<16x384xbf16>
    %c0_1 = arith.constant 0 : index
    %c0_2 = arith.constant 0 : index
    %1 = vector.load %arg2[%c0_1, %c0_2] : memref<384x64xbf16, #tpu.memory_space<vmem>>, vector<384x64xbf16>
    %cst = arith.constant dense<0.000000e+00> : vector<16x64xf32>
    %2 = tpu.matmul %0, %1, %cst {dimension_numbers = #tpu.dot_dimension_numbers<[1], [0], [0], [1], [0, 0, 1, 1], [], []>} : vector<16x384xbf16>, vector<384x64xbf16>, vector<16x64xf32> -> vector<16x64xf32>
    %c0_3 = arith.constant 0 : index
    %c0_4 = arith.constant 0 : index
    %3 = vector.load %arg3[%c0_3, %c0_4] : memref<1x64xf32, #tpu.memory_space<vmem>>, vector<1x64xf32>
    %4 = vector.broadcast %3 : vector<1x64xf32> to vector<16x64xf32>
    %5 = arith.addf %2, %4 : vector<16x64xf32>
    %cst_5 = arith.constant dense<0.000000e+00> : vector<64xf32>
    %6 = vector.multi_reduction <add>, %5, %cst_5 [0] : vector<16x64xf32> to vector<64xf32>
    %7 = vector.shape_cast %6 : vector<64xf32> to vector<1x64xf32>
    %cst_6 = arith.constant 1.600000e+01 : f32
    %8 = vector.broadcast %cst_6 : f32 to vector<1x64xf32>
    %9 = arith.divf %7, %8 : vector<1x64xf32>
    %10 = vector.extract_strided_slice %9 {offsets = [0, 0], sizes = [1, 16], strides = [1, 1]} : vector<1x64xf32> to vector<1x16xf32>
    %11 = vector.extract_strided_slice %9 {offsets = [0, 16], sizes = [1, 16], strides = [1, 1]} : vector<1x64xf32> to vector<1x16xf32>
    %12 = arith.addf %10, %11 : vector<1x16xf32>
    %13 = vector.extract_strided_slice %9 {offsets = [0, 32], sizes = [1, 16], strides = [1, 1]} : vector<1x64xf32> to vector<1x16xf32>
    %14 = arith.addf %12, %13 : vector<1x16xf32>
    %15 = vector.extract_strided_slice %9 {offsets = [0, 48], sizes = [1, 16], strides = [1, 1]} : vector<1x64xf32> to vector<1x16xf32>
    %16 = arith.addf %14, %15 : vector<1x16xf32>
    %cst_7 = arith.constant 2.500000e-01 : f32
    %17 = vector.broadcast %cst_7 : f32 to vector<1x16xf32>
    %18 = arith.mulf %16, %17 : vector<1x16xf32>
    %19 = tpu.concatenate %18, %18, %18, %18 in 1 : vector<1x16xf32>, vector<1x16xf32>, vector<1x16xf32>, vector<1x16xf32> -> vector<1x64xf32>
    %20 = vector.broadcast %19 : vector<1x64xf32> to vector<16x64xf32>
    %21 = arith.subf %5, %20 : vector<16x64xf32>
    %22 = arith.mulf %21, %21 : vector<16x64xf32>
    %cst_8 = arith.constant dense<0.000000e+00> : vector<64xf32>
    %23 = vector.multi_reduction <add>, %22, %cst_8 [0] : vector<16x64xf32> to vector<64xf32>
    %24 = vector.shape_cast %23 : vector<64xf32> to vector<1x64xf32>
    %cst_9 = arith.constant 1.600000e+01 : f32
    %25 = vector.broadcast %cst_9 : f32 to vector<1x64xf32>
    %26 = arith.divf %24, %25 : vector<1x64xf32>
    %27 = vector.extract_strided_slice %26 {offsets = [0, 0], sizes = [1, 16], strides = [1, 1]} : vector<1x64xf32> to vector<1x16xf32>
    %28 = vector.extract_strided_slice %26 {offsets = [0, 16], sizes = [1, 16], strides = [1, 1]} : vector<1x64xf32> to vector<1x16xf32>
    %29 = arith.addf %27, %28 : vector<1x16xf32>
    %30 = vector.extract_strided_slice %26 {offsets = [0, 32], sizes = [1, 16], strides = [1, 1]} : vector<1x64xf32> to vector<1x16xf32>
    %31 = arith.addf %29, %30 : vector<1x16xf32>
    %32 = vector.extract_strided_slice %26 {offsets = [0, 48], sizes = [1, 16], strides = [1, 1]} : vector<1x64xf32> to vector<1x16xf32>
    %33 = arith.addf %31, %32 : vector<1x16xf32>
    %cst_10 = arith.constant 2.500000e-01 : f32
    %34 = vector.broadcast %cst_10 : f32 to vector<1x16xf32>
    %35 = arith.mulf %33, %34 : vector<1x16xf32>
    %36 = tpu.concatenate %35, %35, %35, %35 in 1 : vector<1x16xf32>, vector<1x16xf32>, vector<1x16xf32>, vector<1x16xf32> -> vector<1x64xf32>
    %cst_11 = arith.constant 9.99999974E-6 : f32
    %37 = vector.broadcast %cst_11 : f32 to vector<1x64xf32>
    %38 = arith.addf %36, %37 : vector<1x64xf32>
    %39 = math.rsqrt %38 : vector<1x64xf32>
    %40 = vector.broadcast %39 : vector<1x64xf32> to vector<16x64xf32>
    %41 = arith.mulf %21, %40 : vector<16x64xf32>
    %c0_12 = arith.constant 0 : index
    %42 = memref.load %arg4[%c0_12] : memref<1xf32, #tpu.memory_space<smem>>
    %cst_13 = arith.constant 0.000000e+00 : f32
    %43 = vector.broadcast %cst_13 : f32 to vector<16x64xf32>
    %44 = arith.cmpf oge, %41, %43 : vector<16x64xf32>
    %45 = vector.broadcast %42 : f32 to vector<16x64xf32>
    %46 = arith.mulf %45, %41 : vector<16x64xf32>
    %47 = arith.select %44, %41, %46 : vector<16x64xi1>, vector<16x64xf32>
    %c0_14 = arith.constant 0 : index
    %c0_15 = arith.constant 0 : index
    %48 = vector.load %arg5[%c0_14, %c0_15] : memref<16x64xf32, #tpu.memory_space<vmem>>, vector<16x64xf32>
    tpu.vector_store %arg5[%c0_14, %c0_15], %47 {strides = array<i32>} : memref<16x64xf32, #tpu.memory_space<vmem>>, vector<16x64xf32>,
    return
  }
  func.func @transform_0(%arg0: i32) -> (i32, i32) {
    %c0_i32 = arith.constant 0 : i32
    %c0_i32_0 = arith.constant 0 : i32
    return %arg0, %c0_i32 : i32, i32
  }
  func.func @transform_1(%arg0: i32) -> (i32, i32) {
    %c0_i32 = arith.constant 0 : i32
    %c0_i32_0 = arith.constant 0 : i32
    %c0_i32_1 = arith.constant 0 : i32
    return %c0_i32, %c0_i32_0 : i32, i32
  }
  func.func @transform_2(%arg0: i32) -> (i32, i32) {
    %c0_i32 = arith.constant 0 : i32
    %c0_i32_0 = arith.constant 0 : i32
    %c0_i32_1 = arith.constant 0 : i32
    return %c0_i32, %c0_i32_0 : i32, i32
  }
  func.func @transform_3(%arg0: i32) -> i32 {
    %c0_i32 = arith.constant 0 : i32
    %c0_i32_0 = arith.constant 0 : i32
    return %c0_i32 : i32
  }
  func.func @transform_4(%arg0: i32) -> (i32, i32) {
    %c0_i32 = arith.constant 0 : i32
    %c0_i32_0 = arith.constant 0 : i32
    return %arg0, %c0_i32 : i32, i32
  }
}

module attributes {stable_mosaic.version = 11 : i64} {
  func.func @kernel(%arg0: i32, %arg1: memref<64x128xf32, #tpu.memory_space<vmem>>, %arg2: memref<4x128xf32, #tpu.memory_space<vmem>>, %arg3: memref<1x4xf32, #tpu.memory_space<vmem>>, %arg4: memref<1xf32, #tpu.memory_space<smem>>, %arg5: memref<64x4xf32, #tpu.memory_space<vmem>>) attributes {dimension_semantics = [#tpu.dimension_semantics<parallel>], iteration_bounds = array<i64: 2>, scalar_prefetch = 0 : i64, scratch_operands = 0 : i64, tpu.core_type = #tpu.core_type<tc>, window_params = [{transform_indices = @transform_0, window_bounds = array<i64: 64, 128>}, {pipeline_mode = #tpu.pipeline_mode<synchronous>, transform_indices = @transform_1, window_bounds = array<i64: 4, 128>}, {pipeline_mode = #tpu.pipeline_mode<synchronous>, transform_indices = @transform_2, window_bounds = array<i64: 1, 4>}, {transform_indices = @transform_3, window_bounds = array<i64: 1>}, {transform_indices = @transform_4, window_bounds = array<i64: 64, 4>}]} {
    %c0 = arith.constant 0 : index
    %c0_0 = arith.constant 0 : index
    %0 = vector.load %arg1[%c0, %c0_0] : memref<64x128xf32, #tpu.memory_space<vmem>>, vector<64x128xf32>
    %c0_1 = arith.constant 0 : index
    %c0_2 = arith.constant 0 : index
    %1 = vector.load %arg2[%c0_1, %c0_2] : memref<4x128xf32, #tpu.memory_space<vmem>>, vector<1x128xf32>
    %2 = vector.broadcast %1 : vector<1x128xf32> to vector<64x128xf32>
    %3 = arith.mulf %0, %2 : vector<64x128xf32>
    %cst = arith.constant dense<0.000000e+00> : vector<64xf32>
    %4 = vector.multi_reduction <add>, %3, %cst [1] : vector<64x128xf32> to vector<64xf32>
    %5 = vector.shape_cast %4 : vector<64xf32> to vector<64x1xf32>
    %c1 = arith.constant 1 : index
    %c0_3 = arith.constant 0 : index
    %6 = vector.load %arg2[%c1, %c0_3] : memref<4x128xf32, #tpu.memory_space<vmem>>, vector<1x128xf32>
    %7 = vector.broadcast %6 : vector<1x128xf32> to vector<64x128xf32>
    %8 = arith.mulf %0, %7 : vector<64x128xf32>
    %cst_4 = arith.constant dense<0.000000e+00> : vector<64xf32>
    %9 = vector.multi_reduction <add>, %8, %cst_4 [1] : vector<64x128xf32> to vector<64xf32>
    %10 = vector.shape_cast %9 : vector<64xf32> to vector<64x1xf32>
    %c2 = arith.constant 2 : index
    %c0_5 = arith.constant 0 : index
    %11 = vector.load %arg2[%c2, %c0_5] : memref<4x128xf32, #tpu.memory_space<vmem>>, vector<1x128xf32>
    %12 = vector.broadcast %11 : vector<1x128xf32> to vector<64x128xf32>
    %13 = arith.mulf %0, %12 : vector<64x128xf32>
    %cst_6 = arith.constant dense<0.000000e+00> : vector<64xf32>
    %14 = vector.multi_reduction <add>, %13, %cst_6 [1] : vector<64x128xf32> to vector<64xf32>
    %15 = vector.shape_cast %14 : vector<64xf32> to vector<64x1xf32>
    %c3 = arith.constant 3 : index
    %c0_7 = arith.constant 0 : index
    %16 = vector.load %arg2[%c3, %c0_7] : memref<4x128xf32, #tpu.memory_space<vmem>>, vector<1x128xf32>
    %17 = vector.broadcast %16 : vector<1x128xf32> to vector<64x128xf32>
    %18 = arith.mulf %0, %17 : vector<64x128xf32>
    %cst_8 = arith.constant dense<0.000000e+00> : vector<64xf32>
    %19 = vector.multi_reduction <add>, %18, %cst_8 [1] : vector<64x128xf32> to vector<64xf32>
    %20 = vector.shape_cast %19 : vector<64xf32> to vector<64x1xf32>
    %21 = tpu.concatenate %5, %10, %15, %20 in 1 : vector<64x1xf32>, vector<64x1xf32>, vector<64x1xf32>, vector<64x1xf32> -> vector<64x4xf32>
    %c0_9 = arith.constant 0 : index
    %c0_10 = arith.constant 0 : index
    %22 = vector.load %arg3[%c0_9, %c0_10] : memref<1x4xf32, #tpu.memory_space<vmem>>, vector<1x4xf32>
    %23 = vector.broadcast %22 : vector<1x4xf32> to vector<64x4xf32>
    %24 = arith.addf %21, %23 : vector<64x4xf32>
    %cst_11 = arith.constant dense<0.000000e+00> : vector<4xf32>
    %25 = vector.multi_reduction <add>, %24, %cst_11 [0] : vector<64x4xf32> to vector<4xf32>
    %26 = vector.shape_cast %25 : vector<4xf32> to vector<1x4xf32>
    %cst_12 = arith.constant 6.400000e+01 : f32
    %27 = vector.broadcast %cst_12 : f32 to vector<1x4xf32>
    %28 = arith.divf %26, %27 : vector<1x4xf32>
    %29 = vector.extract_strided_slice %28 {offsets = [0, 0], sizes = [1, 1], strides = [1, 1]} : vector<1x4xf32> to vector<1x1xf32>
    %30 = vector.extract_strided_slice %28 {offsets = [0, 1], sizes = [1, 1], strides = [1, 1]} : vector<1x4xf32> to vector<1x1xf32>
    %31 = arith.addf %29, %30 : vector<1x1xf32>
    %32 = vector.extract_strided_slice %28 {offsets = [0, 2], sizes = [1, 1], strides = [1, 1]} : vector<1x4xf32> to vector<1x1xf32>
    %33 = arith.addf %31, %32 : vector<1x1xf32>
    %34 = vector.extract_strided_slice %28 {offsets = [0, 3], sizes = [1, 1], strides = [1, 1]} : vector<1x4xf32> to vector<1x1xf32>
    %35 = arith.addf %33, %34 : vector<1x1xf32>
    %cst_13 = arith.constant 2.500000e-01 : f32
    %36 = vector.broadcast %cst_13 : f32 to vector<1x1xf32>
    %37 = arith.mulf %35, %36 : vector<1x1xf32>
    %38 = tpu.concatenate %37, %37, %37, %37 in 1 : vector<1x1xf32>, vector<1x1xf32>, vector<1x1xf32>, vector<1x1xf32> -> vector<1x4xf32>
    %39 = vector.broadcast %38 : vector<1x4xf32> to vector<64x4xf32>
    %40 = arith.subf %24, %39 : vector<64x4xf32>
    %41 = arith.mulf %40, %40 : vector<64x4xf32>
    %cst_14 = arith.constant dense<0.000000e+00> : vector<4xf32>
    %42 = vector.multi_reduction <add>, %41, %cst_14 [0] : vector<64x4xf32> to vector<4xf32>
    %43 = vector.shape_cast %42 : vector<4xf32> to vector<1x4xf32>
    %cst_15 = arith.constant 6.400000e+01 : f32
    %44 = vector.broadcast %cst_15 : f32 to vector<1x4xf32>
    %45 = arith.divf %43, %44 : vector<1x4xf32>
    %46 = vector.extract_strided_slice %45 {offsets = [0, 0], sizes = [1, 1], strides = [1, 1]} : vector<1x4xf32> to vector<1x1xf32>
    %47 = vector.extract_strided_slice %45 {offsets = [0, 1], sizes = [1, 1], strides = [1, 1]} : vector<1x4xf32> to vector<1x1xf32>
    %48 = arith.addf %46, %47 : vector<1x1xf32>
    %49 = vector.extract_strided_slice %45 {offsets = [0, 2], sizes = [1, 1], strides = [1, 1]} : vector<1x4xf32> to vector<1x1xf32>
    %50 = arith.addf %48, %49 : vector<1x1xf32>
    %51 = vector.extract_strided_slice %45 {offsets = [0, 3], sizes = [1, 1], strides = [1, 1]} : vector<1x4xf32> to vector<1x1xf32>
    %52 = arith.addf %50, %51 : vector<1x1xf32>
    %cst_16 = arith.constant 2.500000e-01 : f32
    %53 = vector.broadcast %cst_16 : f32 to vector<1x1xf32>
    %54 = arith.mulf %52, %53 : vector<1x1xf32>
    %55 = tpu.concatenate %54, %54, %54, %54 in 1 : vector<1x1xf32>, vector<1x1xf32>, vector<1x1xf32>, vector<1x1xf32> -> vector<1x4xf32>
    %cst_17 = arith.constant 9.99999974E-6 : f32
    %56 = vector.broadcast %cst_17 : f32 to vector<1x4xf32>
    %57 = arith.addf %55, %56 : vector<1x4xf32>
    %58 = math.rsqrt %57 : vector<1x4xf32>
    %59 = vector.broadcast %58 : vector<1x4xf32> to vector<64x4xf32>
    %60 = arith.mulf %40, %59 : vector<64x4xf32>
    %c0_18 = arith.constant 0 : index
    %61 = memref.load %arg4[%c0_18] : memref<1xf32, #tpu.memory_space<smem>>
    %cst_19 = arith.constant 0.000000e+00 : f32
    %62 = vector.broadcast %cst_19 : f32 to vector<64x4xf32>
    %63 = arith.cmpf oge, %60, %62 : vector<64x4xf32>
    %64 = vector.broadcast %61 : f32 to vector<64x4xf32>
    %65 = arith.mulf %64, %60 : vector<64x4xf32>
    %66 = arith.select %63, %60, %65 : vector<64x4xi1>, vector<64x4xf32>
    %c0_20 = arith.constant 0 : index
    %c0_21 = arith.constant 0 : index
    %67 = vector.load %arg5[%c0_20, %c0_21] : memref<64x4xf32, #tpu.memory_space<vmem>>, vector<64x4xf32>
    tpu.vector_store %arg5[%c0_20, %c0_21], %66 {strides = array<i32>} : memref<64x4xf32, #tpu.memory_space<vmem>>, vector<64x4xf32>,
    return
  }
  func.func @transform_0(%arg0: i32) -> (i32, i32) {
    %c0_i32 = arith.constant 0 : i32
    %c0_i32_0 = arith.constant 0 : i32
    return %arg0, %c0_i32 : i32, i32
  }
  func.func @transform_1(%arg0: i32) -> (i32, i32) {
    %c0_i32 = arith.constant 0 : i32
    %c0_i32_0 = arith.constant 0 : i32
    %c0_i32_1 = arith.constant 0 : i32
    return %c0_i32, %c0_i32_0 : i32, i32
  }
  func.func @transform_2(%arg0: i32) -> (i32, i32) {
    %c0_i32 = arith.constant 0 : i32
    %c0_i32_0 = arith.constant 0 : i32
    %c0_i32_1 = arith.constant 0 : i32
    return %c0_i32, %c0_i32_0 : i32, i32
  }
  func.func @transform_3(%arg0: i32) -> i32 {
    %c0_i32 = arith.constant 0 : i32
    %c0_i32_0 = arith.constant 0 : i32
    return %c0_i32 : i32
  }
  func.func @transform_4(%arg0: i32) -> (i32, i32) {
    %c0_i32 = arith.constant 0 : i32
    %c0_i32_0 = arith.constant 0 : i32
    return %arg0, %c0_i32 : i32, i32
  }
}

module attributes {stable_mosaic.version = 11 : i64} {
  func.func @kernel(%arg0: i32, %arg1: memref<256x9xf32, #tpu.memory_space<vmem>>, %arg2: memref<1x9xf32, #tpu.memory_space<vmem>>, %arg3: memref<1x1xf32, #tpu.memory_space<vmem>>, %arg4: memref<256x1xf32, #tpu.memory_space<vmem>>, %arg5: memref<256x1xf32, #tpu.memory_space<vmem>>) attributes {dimension_semantics = [#tpu.dimension_semantics<parallel>], iteration_bounds = array<i64: 2>, scalar_prefetch = 0 : i64, scratch_operands = 0 : i64, tpu.core_type = #tpu.core_type<tc>, window_params = [{transform_indices = @transform_0, window_bounds = array<i64: 256, 9>}, {pipeline_mode = #tpu.pipeline_mode<synchronous>, transform_indices = @transform_1, window_bounds = array<i64: 1, 9>}, {pipeline_mode = #tpu.pipeline_mode<synchronous>, transform_indices = @transform_2, window_bounds = array<i64: 1, 1>}, {transform_indices = @transform_3, window_bounds = array<i64: 256, 1>}, {transform_indices = @transform_4, window_bounds = array<i64: 256, 1>}]} {
    %c0 = arith.constant 0 : index
    %c0_0 = arith.constant 0 : index
    %0 = vector.load %arg1[%c0, %c0_0] : memref<256x9xf32, #tpu.memory_space<vmem>>, vector<256x9xf32>
    %c0_1 = arith.constant 0 : index
    %c0_2 = arith.constant 0 : index
    %1 = vector.load %arg2[%c0_1, %c0_2] : memref<1x9xf32, #tpu.memory_space<vmem>>, vector<1x9xf32>
    %2 = vector.broadcast %1 : vector<1x9xf32> to vector<256x9xf32>
    %3 = arith.mulf %0, %2 : vector<256x9xf32>
    %cst = arith.constant dense<0.000000e+00> : vector<256xf32>
    %4 = vector.multi_reduction <add>, %3, %cst [1] : vector<256x9xf32> to vector<256xf32>
    %5 = vector.shape_cast %4 : vector<256xf32> to vector<256x1xf32>
    %c0_3 = arith.constant 0 : index
    %c0_4 = arith.constant 0 : index
    %6 = vector.load %arg3[%c0_3, %c0_4] : memref<1x1xf32, #tpu.memory_space<vmem>>, vector<1x1xf32>
    %7 = vector.broadcast %6 : vector<1x1xf32> to vector<256x1xf32>
    %8 = arith.addf %5, %7 : vector<256x1xf32>
    %c0_5 = arith.constant 0 : index
    %c0_6 = arith.constant 0 : index
    %9 = vector.load %arg4[%c0_5, %c0_6] : memref<256x1xf32, #tpu.memory_space<vmem>>, vector<256x1xf32>
    %10 = arith.addf %8, %9 : vector<256x1xf32>
    %c0_7 = arith.constant 0 : index
    %c0_8 = arith.constant 0 : index
    %11 = vector.load %arg5[%c0_7, %c0_8] : memref<256x1xf32, #tpu.memory_space<vmem>>, vector<256x1xf32>
    tpu.vector_store %arg5[%c0_7, %c0_8], %10 {strides = array<i32>} : memref<256x1xf32, #tpu.memory_space<vmem>>, vector<256x1xf32>,
    return
  }
  func.func @transform_0(%arg0: i32) -> (i32, i32) {
    %c0_i32 = arith.constant 0 : i32
    %c0_i32_0 = arith.constant 0 : i32
    return %arg0, %c0_i32 : i32, i32
  }
  func.func @transform_1(%arg0: i32) -> (i32, i32) {
    %c0_i32 = arith.constant 0 : i32
    %c0_i32_0 = arith.constant 0 : i32
    %c0_i32_1 = arith.constant 0 : i32
    return %c0_i32, %c0_i32_0 : i32, i32
  }
  func.func @transform_2(%arg0: i32) -> (i32, i32) {
    %c0_i32 = arith.constant 0 : i32
    %c0_i32_0 = arith.constant 0 : i32
    %c0_i32_1 = arith.constant 0 : i32
    return %c0_i32, %c0_i32_0 : i32, i32
  }
  func.func @transform_3(%arg0: i32) -> (i32, i32) {
    %c0_i32 = arith.constant 0 : i32
    %c0_i32_0 = arith.constant 0 : i32
    return %arg0, %c0_i32 : i32, i32
  }
  func.func @transform_4(%arg0: i32) -> (i32, i32) {
    %c0_i32 = arith.constant 0 : i32
    %c0_i32_0 = arith.constant 0 : i32
    return %arg0, %c0_i32 : i32, i32
  }
}

</mosaic_0001>

<llo_original>
// kernel: reconstruction_forward.14
$region0: #{reconstruction_forward.14}
  #allocation0 [shape = 'u32[]', space=smem, size = 0x4, offset = 0x4, fixed_abs, tag = 'smem constant byte address 0x4 - core index']
  #allocation1 [shape = 'u32[72,128]{1,0:T(1,128)}', space=vmem, size = 0x9000, scoped, tag = 'internal scratch']
  #allocation2 [shape = 'f32[1]{0:T(128)S(6)}', space=smem, size = 0x200, scoped, tag = 'scoped memory for reconstruction_forward.14']
  %s0 = inlined_call_operand.vmem [shape: bf16[128,48], index: 0, kind: input, shape index: {}]
  %s1 = inlined_call_operand.vmem [shape: bf16[48,16], index: 1, kind: input, shape index: {}]
  %s2 = inlined_call_operand.vmem [shape: f32[1,16], index: 2, kind: input, shape index: {}]
  %s3 = inlined_call_operand.<no memory space> [shape: f32[1], index: 3, kind: input, shape index: {}]
  %s4 = inlined_call_operand.vmem [shape: f32[128,16], index: 4, kind: output, shape index: {}]
  %s5 = sld [smem:[#allocation0]]
  $region49: #{reconstruction_forward.14} parent=0
    _
  %s7 = ssub.s32 1, %s5
  %s8 = scalar_select 0, %s7, %s5
  %9 = sst [smem:[#allocation2]] %s3
  loop: start=0, step=1, limit=4
  $region2: #{reconstruction_forward.14} parent=0 // loop_pre_header
    _
  $region3: #{reconstruction_forward.14} parent=0 // loop_header
    %s11 = sphi 0, %s15
    %p12 = scmp.ge.s32.totalorder %s11, 4
    %s21 = sphi 0, %s23
    %s24 = sphi 0, %s21
    %s25 = sphi 0, %s24
    %s41 = sphi 0, %s25
    %s45 = sphi 0, %s45
    %s47 = sphi 0, %s45
    %s48 = sphi 0, %s47
    %s62 = sphi 0, %s48
    %s66 = sphi 0, %s66
    %s68 = sphi 0, %s66
    %s69 = sphi 0, %s68
    %s83 = sphi 0, %s69
    %s87 = sphi 0, %s87
    %s89 = sphi 0, %s87
    %s90 = sphi 0, %s89
    %s104 = sphi 0, %s90
    %s110 = sphi 0, %s112
    %s113 = sphi 0, %s110
    %s114 = sphi 0, %s113
    %s130 = sphi 0, %s114
  $region4: #{reconstruction_forward.14} parent=0 // loop_header_branch
    %14 = sbr.rel (%p12) target = $region8
  $region5: #{reconstruction_forward.14} parent=0 // loop_body
    %s16 = ssub.s32 %s11, 1
    %s17 = ssub.s32 %s11, 2
    %s18 = sadd.s32 %s11, 1
    %s19 = ssub.s32 %s11, %s18
    %p20 = scmp.eq.s32.totalorder %s19, 0
    %s22 = sadd.s32 %s21, 1
    %s23 = scalar_select %p20, %s21, %s22
    %p26 = pneg %p20
    %p27 = scmp.eq.s32.totalorder %s11, 1
    %p28 = por %p26, %p27
    %p29 = scmp.ne.s32.totalorder %s21, %s24
    %p30 = scmp.eq.s32.totalorder %s11, 0
    %p31 = por %p29, %p30
    %p32 = scmp.ne.s32.totalorder %s21, %s24
    %p33 = scmp.eq.s32.totalorder %s16, 1
    %p34 = por %p32, %p33
    %p35 = scmp.ne.s32.totalorder %s24, %s25
    %p36 = scmp.eq.s32.totalorder %s16, 0
    %p37 = por %p35, %p36
    %p38 = scmp.ne.s32.totalorder %s24, %s25
    %p39 = scmp.eq.s32.totalorder %s17, 1
    %p40 = por %p38, %p39
    %p42 = scmp.ne.s32.totalorder %s25, %s41
    %p43 = scmp.eq.s32.totalorder %s17, 0
    %p44 = por %p42, %p43
    %s46 = sadd.s32 %s45, 1
    %p49 = scmp.eq.s32.totalorder %s11, 1
    %p50 = scmp.ne.s32.totalorder %s45, %s47
    %p51 = scmp.eq.s32.totalorder %s11, 0
    %p52 = por %p50, %p51
    %p53 = scmp.ne.s32.totalorder %s45, %s47
    %p54 = scmp.eq.s32.totalorder %s16, 1
    %p55 = por %p53, %p54
    %p56 = scmp.ne.s32.totalorder %s47, %s48
    %p57 = scmp.eq.s32.totalorder %s16, 0
    %p58 = por %p56, %p57
    %p59 = scmp.ne.s32.totalorder %s47, %s48
    %p60 = scmp.eq.s32.totalorder %s17, 1
    %p61 = por %p59, %p60
    %p63 = scmp.ne.s32.totalorder %s48, %s62
    %p64 = scmp.eq.s32.totalorder %s17, 0
    %p65 = por %p63, %p64
    %s67 = sadd.s32 %s66, 1
    %p70 = scmp.eq.s32.totalorder %s11, 1
    %p71 = scmp.ne.s32.totalorder %s66, %s68
    %p72 = scmp.eq.s32.totalorder %s11, 0
    %p73 = por %p71, %p72
    %p74 = scmp.ne.s32.totalorder %s66, %s68
    %p75 = scmp.eq.s32.totalorder %s16, 1
    %p76 = por %p74, %p75
    %p77 = scmp.ne.s32.totalorder %s68, %s69
    %p78 = scmp.eq.s32.totalorder %s16, 0
    %p79 = por %p77, %p78
    %p80 = scmp.ne.s32.totalorder %s68, %s69
    %p81 = scmp.eq.s32.totalorder %s17, 1
    %p82 = por %p80, %p81
    %p84 = scmp.ne.s32.totalorder %s69, %s83
    %p85 = scmp.eq.s32.totalorder %s17, 0
    %p86 = por %p84, %p85
    %s88 = sadd.s32 %s87, 1
    %p91 = scmp.eq.s32.totalorder %s11, 1
    %p92 = scmp.ne.s32.totalorder %s87, %s89
    %p93 = scmp.eq.s32.totalorder %s11, 0
    %p94 = por %p92, %p93
    %p95 = scmp.ne.s32.totalorder %s87, %s89
    %p96 = scmp.eq.s32.totalorder %s16, 1
    %p97 = por %p95, %p96
    %p98 = scmp.ne.s32.totalorder %s89, %s90
    %p99 = scmp.eq.s32.totalorder %s16, 0
    %p100 = por %p98, %p99
    %p101 = scmp.ne.s32.totalorder %s89, %s90
    %p102 = scmp.eq.s32.totalorder %s17, 1
    %p103 = por %p101, %p102
    %p105 = scmp.ne.s32.totalorder %s90, %s104
    %p106 = scmp.eq.s32.totalorder %s17, 0
    %p107 = por %p105, %p106
    %s108 = ssub.s32 %s11, %s18
    %p109 = scmp.eq.s32.totalorder %s108, 0
    %s111 = sadd.s32 %s110, 1
    %s112 = scalar_select %p109, %s110, %s111
    %p115 = pneg %p109
    %p116 = scmp.eq.s32.totalorder %s11, 1
    %p117 = por %p115, %p116
    %p118 = scmp.ne.s32.totalorder %s110, %s113
    %p119 = scmp.eq.s32.totalorder %s11, 0
    %p120 = por %p118, %p119
    %p121 = scmp.ne.s32.totalorder %s110, %s113
    %p122 = scmp.eq.s32.totalorder %s16, 1
    %p123 = por %p121, %p122
    %p124 = scmp.ne.s32.totalorder %s113, %s114
    %p125 = scmp.eq.s32.totalorder %s16, 0
    %p126 = por %p124, %p125
    %p127 = scmp.ne.s32.totalorder %s113, %s114
    %p128 = scmp.eq.s32.totalorder %s17, 1
    %p129 = por %p127, %p128
    %p131 = scmp.ne.s32.totalorder %s114, %s130
    %p132 = scmp.eq.s32.totalorder %s17, 0
    %p133 = por %p131, %p132
    %p134 = scmp.le.s32.totalorder 1, %s11
    %p135 = scmp.lt.s32.totalorder %s11, 3
    %p136 = pnand %p134, %p135
    %p137 = pneg %p136
    // Predicated region
    $region9: #{reconstruction_forward.14} parent=5 // pred_check
      _
    $region10: #{reconstruction_forward.14} parent=5 // pred_check_branch
      %139 = sbr.rel (%p136) target = $region12
    $region11: #{reconstruction_forward.14} parent=5 // pred_region
      %s140 = ssub.s32 %s11, 1
      // Predicated region
      $region13: #{reconstruction_forward.14} parent=11 // pred_check
        %p141 = pneg %p58
      $region14: #{reconstruction_forward.14} parent=11 // pred_check_branch
        %143 = sbr.rel (%p141) target = $region16
      $region15: #{reconstruction_forward.14} parent=11 // pred_region
        _
      $region16: #{reconstruction_forward.14} parent=11 // pred_fallthru
        _
      // Predicated region
      $region17: #{reconstruction_forward.14} parent=11 // pred_check
        %p144 = pneg %p79
      $region18: #{reconstruction_forward.14} parent=11 // pred_check_branch
        %146 = sbr.rel (%p144) target = $region20
      $region19: #{reconstruction_forward.14} parent=11 // pred_region
        _
      $region20: #{reconstruction_forward.14} parent=11 // pred_fallthru
        _
      // Predicated region
      $region21: #{reconstruction_forward.14} parent=11 // pred_check
        %p147 = pneg %p100
      $region22: #{reconstruction_forward.14} parent=11 // pred_check_branch
        %149 = sbr.rel (%p147) target = $region24
      $region23: #{reconstruction_forward.14} parent=11 // pred_region
        _
      $region24: #{reconstruction_forward.14} parent=11 // pred_fallthru
        _
    $region12: #{reconstruction_forward.14} parent=5 // pred_fallthru
      _
    %p150 = scmp.lt.s32.totalorder %s11, 2
    // Predicated region
    $region25: #{reconstruction_forward.14} parent=5 // pred_check
      %p151 = pneg %p150
    $region26: #{reconstruction_forward.14} parent=5 // pred_check_branch
      %153 = sbr.rel (%p151) target = $region28
    $region27: #{reconstruction_forward.14} parent=5 // pred_region
      // Predicated region
      $region29: #{reconstruction_forward.14} parent=27 // pred_check
        %p154 = pneg %p31
      $region30: #{reconstruction_forward.14} parent=27 // pred_check_branch
        %156 = sbr.rel (%p154) target = $region32
      $region31: #{reconstruction_forward.14} parent=27 // pred_region
        %s157 = smul.u32 8, %s11
        %p158 = scmp.lt.s32.totalorder %s157, 15
        %s159 = scalar_select %p158, %s157, 15
        %s160 = smul.addr %s159, 4
        %s161 = scalar_lea.vmem %s0, %s160
        %s162 = smul.u32 8, %s11
      $region32: #{reconstruction_forward.14} parent=27 // pred_fallthru
        _
    $region28: #{reconstruction_forward.14} parent=5 // pred_fallthru
      _
    %p163 = scmp.le.s32.totalorder 1, %s11
    %p164 = scmp.lt.s32.totalorder %s11, 3
    %p165 = pnand %p163, %p164
    %p166 = pneg %p165
    // Predicated region
    $region33: #{reconstruction_forward.14} parent=5 // pred_check
      _
    $region34: #{reconstruction_forward.14} parent=5 // pred_check_branch
      %168 = sbr.rel (%p165) target = $region36
    $region35: #{reconstruction_forward.14} parent=5 // pred_region
      %s169 = ssub.s32 %s11, 1
      %s170 = smul.u32 8, %s16
      %p171 = scmp.lt.s32.totalorder %s170, 15
      %s172 = scalar_select %p171, %s170, 15
      %s173 = smul.addr %s172, 4
      %s174 = scalar_lea.vmem %s0, %s173
      %p175 = pneg %p37
      %p176 = pneg %p34
      %p177 = pneg %p58
      %p178 = pneg %p55
      %p179 = pneg %p79
      %p180 = pneg %p76
      %p181 = pneg %p100
      %p182 = pneg %p97
      %p183 = pneg %p126
      %p184 = pneg %p123
      %s185 = smul.u32 8, %s16
      %p186 = scmp.lt.s32.totalorder %s185, 15
      %s187 = scalar_select %p186, %s185, 15
      %s188 = smul.addr %s187, 8
      %s189 = scalar_lea.vmem %s4, %s188
      %s190 = smul.u32 8, %s16
      %p191 = scmp.lt.s32.totalorder %s190, 15
      %s192 = scalar_select %p191, %s190, 15
      %s193 = smul.addr %s192, 4
      %s194 = scalar_lea.vmem %s0, %s193
      %s195 = smul.u32 8, %s16
      %s196 = smul.u32 8, %s16
      %p197 = scmp.lt.s32.totalorder %s196, 15
      %s198 = scalar_select %p197, %s196, 15
      %s199 = smul.addr %s198, 8
      %s200 = scalar_lea.vmem %s4, %s199
      %s201 = smul.u32 8, %s16
      %v203 = vld [vmem:[%s194] sm:$0xf]
      %v204 = vld [vmem:[%s194 + $0x4] sm:$0xf]
      %v205 = vld [vmem:[%s194 + $0x8] sm:$0xf]
      %v206 = vld [vmem:[%s194 + $0xc] sm:$0xf]
      %v207 = vld [vmem:[%s194 + $0x10] sm:$0xf]
      %v208 = vld [vmem:[%s194 + $0x14] sm:$0xf]
      %v209 = vld [vmem:[%s194 + $0x18] sm:$0xf]
      %v210 = vld [vmem:[%s194 + $0x1c] sm:$0xf]
      %v211 = vld [vmem:[%s1] sm:$0xf]
      %v212 = vld [vmem:[%s1 + $0x4] sm:$0xf]
      %v213 = vld [vmem:[%s1 + $0x8] sm:$0xf]
      %v214 = vld [vmem:[%s1 + $0xc] sm:$0xf]
      %v215 = vld [vmem:[%s1 + $0x10] sm:$0xf]
      %v216 = vld [vmem:[%s1 + $0x14] sm:$0xf]
      %v217 = vld [vmem:[%s2] sm:$0x1]
      %v219 = vperm.slane %v217, 0
      %v229 = vunpack.c.l.b16 %v203
      %v230 = vunpack.c.l.b16 %v204
      %v231 = vunpack.c.l.b16 %v205
      %v232 = vunpack.c.l.b16 %v206
      %v233 = vunpack.c.l.b16 %v207
      %v234 = vunpack.c.l.b16 %v208
      %v235 = vunpack.c.l.b16 %v209
      %v236 = vunpack.c.l.b16 %v210
      %v237 = vpack.c.b16 %v230, %v229
      %v238 = vpack.c.b16 %v232, %v231
      %v239 = vpack.c.b16 %v234, %v233
      %v240 = vpack.c.b16 %v236, %v235
      %v247 = vunpack.c.l.b16 %v211
      %v248 = vunpack.c.l.b16 %v212
      %v249 = vunpack.c.l.b16 %v213
      %v250 = vunpack.c.l.b16 %v214
      %v251 = vunpack.c.l.b16 %v215
      %v252 = vunpack.c.l.b16 %v216
      %v253 = vpack.c.b16 %v248, %v247
      %v254 = vpack.c.b16 %v250, %v249
      %v255 = vpack.c.b16 %v252, %v251
      %vm259 = vcmask 392192
      %v261 = vsel %vm259, %v237, 0
      %v264 = vsel %vm259, %v238, 0
      %v267 = vsel %vm259, %v239, 0
      %v270 = vsel %vm259, %v240, 0
      %272 = vmatpush.bf16.msra.mxu0 0
      %273 = vmatpush.bf16.msra.mxu0 0
      %274 = vmatpush.bf16.msra.mxu0 0
      %275 = vmatpush.bf16.msra.mxu0 0
      %276 = vmatpush.bf16.msra.mxu0 0
      %277 = vmatpush.bf16.msra.mxu0 %v255
      %278 = vmatpush.bf16.msra.mxu0 %v254
      %279 = vmatpush.bf16.msra.mxu0 %v253
      %280 = vmatmul.bf16.gmra.mxu0 %v261
      %v281 = vpop.f32.mrf.mxu0
      %v282 = vadd.f32 %v219, %v281
      %v283 = vpop.f32.mrf.mxu0
      %v284 = vadd.f32 %v219, %v283
      %285 = vmatmul.bf16.gmra.mxu0 %v264
      %v286 = vpop.f32.mrf.mxu0
      %v287 = vadd.f32 %v219, %v286
      %v288 = vpop.f32.mrf.mxu0
      %v289 = vadd.f32 %v219, %v288
      %290 = vmatmul.bf16.gmra.mxu0 %v267
      %v291 = vpop.f32.mrf.mxu0
      %v292 = vadd.f32 %v219, %v291
      %v293 = vpop.f32.mrf.mxu0
      %v294 = vadd.f32 %v219, %v293
      %295 = vmatmul.bf16.gmra.mxu0 %v270
      %v296 = vpop.f32.mrf.mxu0
      %v297 = vadd.f32 %v219, %v296
      %v298 = vpop.f32.mrf.mxu0
      %v299 = vadd.f32 %v219, %v298
      %300 = vdwg.mxu0
      %vm301 = vcmask 130048
      %v302 = vsel %vm301, %v282, 0.0
      %v303 = vsel %vm301, %v284, 0.0
      %v304 = vadd.f32 %v302, %v303
      %v305 = vsel %vm301, %v287, 0.0
      %v306 = vadd.f32 %v304, %v305
      %v307 = vsel %vm301, %v289, 0.0
      %v308 = vadd.f32 %v306, %v307
      %v309 = vsel %vm301, %v292, 0.0
      %v310 = vadd.f32 %v308, %v309
      %v311 = vsel %vm301, %v294, 0.0
      %v312 = vadd.f32 %v310, %v311
      %v313 = vsel %vm301, %v297, 0.0
      %v314 = vadd.f32 %v312, %v313
      %v315 = vsel %vm301, %v299, 0.0
      %v316 = vadd.f32 %v314, %v315
      %v317 = vrot.slane %v316, 4
      %v318 = vadd.f32 %v316, %v317
      %v319 = vrot.slane %v318, 2
      %v320 = vadd.f32 %v318, %v319
      %v321 = vrot.slane %v320, 1
      %v322 = vadd.f32 %v320, %v321
      %v323 = vrcp.pop 64.0
      %v324 = vmul.f32 64.0, %v323
      %v325 = vsub.f32 1.0, %v324
      %v326 = vmul.f32 %v323, %v325
      %v327 = vadd.f32 %v323, %v326
      %vm328 = vweird.f32 %v323
      %v329 = vsel %vm328, %v323, %v327
      %v330 = vmul.f32 %v322, %v329
      %v331 = vsub.f32 %v282, %v330
      %v332 = vsub.f32 %v284, %v330
      %v333 = vsub.f32 %v287, %v330
      %v334 = vsub.f32 %v289, %v330
      %v335 = vsub.f32 %v292, %v330
      %v336 = vsub.f32 %v294, %v330
      %v337 = vsub.f32 %v297, %v330
      %v338 = vsub.f32 %v299, %v330
      %v339 = vmul.f32 %v331, %v331
      %v340 = vmul.f32 %v332, %v332
      %v341 = vmul.f32 %v333, %v333
      %v342 = vmul.f32 %v334, %v334
      %v343 = vmul.f32 %v335, %v335
      %v344 = vmul.f32 %v336, %v336
      %v345 = vmul.f32 %v337, %v337
      %v346 = vmul.f32 %v338, %v338
      %v347 = vsel %vm301, %v339, 0.0
      %v348 = vsel %vm301, %v340, 0.0
      %v349 = vadd.f32 %v347, %v348
      %v350 = vsel %vm301, %v341, 0.0
      %v351 = vadd.f32 %v349, %v350
      %v352 = vsel %vm301, %v342, 0.0
      %v353 = vadd.f32 %v351, %v352
      %v354 = vsel %vm301, %v343, 0.0
      %v355 = vadd.f32 %v353, %v354
      %v356 = vsel %vm301, %v344, 0.0
      %v357 = vadd.f32 %v355, %v356
      %v358 = vsel %vm301, %v345, 0.0
      %v359 = vadd.f32 %v357, %v358
      %v360 = vsel %vm301, %v346, 0.0
      %v361 = vadd.f32 %v359, %v360
      %v362 = vrot.slane %v361, 4
      %v363 = vadd.f32 %v361, %v362
      %v364 = vrot.slane %v363, 2
      %v365 = vadd.f32 %v363, %v364
      %v366 = vrot.slane %v365, 1
      %v367 = vadd.f32 %v365, %v366
      %v368 = vmul.f32 %v367, %v329
      %v369 = vadd.f32 %v368, 1e-05
      %v370 = vrsqrt.pop %v369
      %v371 = vmul.f32 %v370, %v369
      %v372 = vmul.f32 %v371, %v370
      %v373 = vmul.f32 0.5, %v372
      %v374 = vsub.f32 1.5, %v373
      %v375 = vmul.f32 %v370, %v374
      %vm376 = vweird.f32 %v369
      %vm377 = vweird.f32 %v370
      %vm378 = vmor %vm376, %vm377
      %v379 = vsel %vm378, %v370, %v375
      %v380 = vmul.f32 %v331, %v379
      %v381 = vmul.f32 %v332, %v379
      %v382 = vmul.f32 %v333, %v379
      %v383 = vmul.f32 %v334, %v379
      %v384 = vmul.f32 %v335, %v379
      %v385 = vmul.f32 %v336, %v379
      %v386 = vmul.f32 %v337, %v379
      %v387 = vmul.f32 %v338, %v379
      %s388 = sld [smem:[#allocation2]]
      %vm389 = vcmp.ge.f32.partialorder %v380, 0.0
      %vm390 = vcmp.ge.f32.partialorder %v381, 0.0
      %vm391 = vcmp.ge.f32.partialorder %v382, 0.0
      %vm392 = vcmp.ge.f32.partialorder %v383, 0.0
      %vm393 = vcmp.ge.f32.partialorder %v384, 0.0
      %vm394 = vcmp.ge.f32.partialorder %v385, 0.0
      %vm395 = vcmp.ge.f32.partialorder %v386, 0.0
      %vm396 = vcmp.ge.f32.partialorder %v387, 0.0
      %v397 = vstv %s388
      %v398 = vmul.f32 %v397, %v380
      %v399 = vmul.f32 %v397, %v381
      %v400 = vmul.f32 %v397, %v382
      %v401 = vmul.f32 %v397, %v383
      %v402 = vmul.f32 %v397, %v384
      %v403 = vmul.f32 %v397, %v385
      %v404 = vmul.f32 %v397, %v386
      %v405 = vmul.f32 %v397, %v387
      %v406 = vsel %vm389, %v380, %v398
      %v407 = vsel %vm390, %v381, %v399
      %v408 = vsel %vm391, %v382, %v400
      %v409 = vsel %vm392, %v383, %v401
      %v410 = vsel %vm393, %v384, %v402
      %v411 = vsel %vm394, %v385, %v403
      %v412 = vsel %vm395, %v386, %v404
      %v413 = vsel %vm396, %v387, %v405
      %414 = vst.msk [vmem:[%s200] sm:$0xff] %vm301, %v406
      %415 = vst.msk [vmem:[%s200 + $0x8] sm:$0xff] %vm301, %v407
      %416 = vst.msk [vmem:[%s200 + $0x10] sm:$0xff] %vm301, %v408
      %417 = vst.msk [vmem:[%s200 + $0x18] sm:$0xff] %vm301, %v409
      %418 = vst.msk [vmem:[%s200 + $0x20] sm:$0xff] %vm301, %v410
      %419 = vst.msk [vmem:[%s200 + $0x28] sm:$0xff] %vm301, %v411
      %420 = vst.msk [vmem:[%s200 + $0x30] sm:$0xff] %vm301, %v412
      %421 = vst.msk [vmem:[%s200 + $0x38] sm:$0xff] %vm301, %v413
      %s422 = smul.u32 8, %s16
      %p423 = scmp.lt.s32.totalorder %s422, 15
      %s424 = scalar_select %p423, %s422, 15
      %s425 = smul.addr %s424, 8
      %s426 = scalar_lea.vmem %s4, %s425
      // Predicated region
      $region37: #{reconstruction_forward.14} parent=35 // pred_check
        %p427 = pneg %p123
      $region38: #{reconstruction_forward.14} parent=35 // pred_check_branch
        %429 = sbr.rel (%p427) target = $region40
      $region39: #{reconstruction_forward.14} parent=35 // pred_region
        %s430 = smul.u32 8, %s16
      $region40: #{reconstruction_forward.14} parent=35 // pred_fallthru
        _
    $region36: #{reconstruction_forward.14} parent=5 // pred_fallthru
      _
    %p431 = scmp.le.s32.totalorder 2, %s11
    // Predicated region
    $region41: #{reconstruction_forward.14} parent=5 // pred_check
      %p432 = pneg %p431
    $region42: #{reconstruction_forward.14} parent=5 // pred_check_branch
      %434 = sbr.rel (%p432) target = $region44
    $region43: #{reconstruction_forward.14} parent=5 // pred_region
      %s435 = ssub.s32 %s11, 2
      // Predicated region
      $region45: #{reconstruction_forward.14} parent=43 // pred_check
        %p436 = pneg %p129
      $region46: #{reconstruction_forward.14} parent=43 // pred_check_branch
        %438 = sbr.rel (%p436) target = $region48
      $region47: #{reconstruction_forward.14} parent=43 // pred_region
        %s439 = smul.u32 8, %s17
        %p440 = scmp.lt.s32.totalorder %s439, 15
        %s441 = scalar_select %p440, %s439, 15
        %s442 = smul.addr %s441, 8
        %s443 = scalar_lea.vmem %s4, %s442
      $region48: #{reconstruction_forward.14} parent=43 // pred_fallthru
        _
    $region44: #{reconstruction_forward.14} parent=5 // pred_fallthru
      _
  $region6: #{reconstruction_forward.14} parent=0 // loop_footer
    %s15 = sadd.s32 1, %s11
  $region7: #{reconstruction_forward.14} parent=0 // loop_footer_branch
    %10 = sbr.rel target = $region3
  $region8: #{reconstruction_forward.14} parent=0 // loop_exit
    _

// kernel: reconstruction_forward.13
$region0: #{reconstruction_forward.13}
  #allocation0 [shape = 'u32[]', space=smem, size = 0x4, offset = 0x4, fixed_abs, tag = 'smem constant byte address 0x4 - core index']
  #allocation1 [shape = 'u32[72,128]{1,0:T(1,128)}', space=vmem, size = 0x9000, scoped, tag = 'internal scratch']
  %s0 = inlined_call_operand.vmem [shape: bf16[128,48], index: 0, kind: input, shape index: {}]
  %s1 = inlined_call_operand.vmem [shape: bf16[48,16], index: 1, kind: input, shape index: {}]
  %s2 = inlined_call_operand.vmem [shape: f32[1,16], index: 2, kind: input, shape index: {}]
  %s3 = inlined_call_operand.vmem [shape: f32[128,16], index: 3, kind: output, shape index: {}]
  %s4 = sld [smem:[#allocation0]]
  $region45: #{reconstruction_forward.13} parent=0
    _
  %s6 = ssub.s32 1, %s4
  %s7 = scalar_select 0, %s6, %s4
  loop: start=0, step=1, limit=4
  $region2: #{reconstruction_forward.13} parent=0 // loop_pre_header
    _
  $region3: #{reconstruction_forward.13} parent=0 // loop_header
    %s9 = sphi 0, %s13
    %p10 = scmp.ge.s32.totalorder %s9, 4
    %s19 = sphi 0, %s21
    %s22 = sphi 0, %s19
    %s23 = sphi 0, %s22
    %s39 = sphi 0, %s23
    %s43 = sphi 0, %s43
    %s45 = sphi 0, %s43
    %s46 = sphi 0, %s45
    %s60 = sphi 0, %s46
    %s64 = sphi 0, %s64
    %s66 = sphi 0, %s64
    %s67 = sphi 0, %s66
    %s81 = sphi 0, %s67
    %s87 = sphi 0, %s89
    %s90 = sphi 0, %s87
    %s91 = sphi 0, %s90
    %s107 = sphi 0, %s91
  $region4: #{reconstruction_forward.13} parent=0 // loop_header_branch
    %12 = sbr.rel (%p10) target = $region8
  $region5: #{reconstruction_forward.13} parent=0 // loop_body
    %s14 = ssub.s32 %s9, 1
    %s15 = ssub.s32 %s9, 2
    %s16 = sadd.s32 %s9, 1
    %s17 = ssub.s32 %s9, %s16
    %p18 = scmp.eq.s32.totalorder %s17, 0
    %s20 = sadd.s32 %s19, 1
    %s21 = scalar_select %p18, %s19, %s20
    %p24 = pneg %p18
    %p25 = scmp.eq.s32.totalorder %s9, 1
    %p26 = por %p24, %p25
    %p27 = scmp.ne.s32.totalorder %s19, %s22
    %p28 = scmp.eq.s32.totalorder %s9, 0
    %p29 = por %p27, %p28
    %p30 = scmp.ne.s32.totalorder %s19, %s22
    %p31 = scmp.eq.s32.totalorder %s14, 1
    %p32 = por %p30, %p31
    %p33 = scmp.ne.s32.totalorder %s22, %s23
    %p34 = scmp.eq.s32.totalorder %s14, 0
    %p35 = por %p33, %p34
    %p36 = scmp.ne.s32.totalorder %s22, %s23
    %p37 = scmp.eq.s32.totalorder %s15, 1
    %p38 = por %p36, %p37
    %p40 = scmp.ne.s32.totalorder %s23, %s39
    %p41 = scmp.eq.s32.totalorder %s15, 0
    %p42 = por %p40, %p41
    %s44 = sadd.s32 %s43, 1
    %p47 = scmp.eq.s32.totalorder %s9, 1
    %p48 = scmp.ne.s32.totalorder %s43, %s45
    %p49 = scmp.eq.s32.totalorder %s9, 0
    %p50 = por %p48, %p49
    %p51 = scmp.ne.s32.totalorder %s43, %s45
    %p52 = scmp.eq.s32.totalorder %s14, 1
    %p53 = por %p51, %p52
    %p54 = scmp.ne.s32.totalorder %s45, %s46
    %p55 = scmp.eq.s32.totalorder %s14, 0
    %p56 = por %p54, %p55
    %p57 = scmp.ne.s32.totalorder %s45, %s46
    %p58 = scmp.eq.s32.totalorder %s15, 1
    %p59 = por %p57, %p58
    %p61 = scmp.ne.s32.totalorder %s46, %s60
    %p62 = scmp.eq.s32.totalorder %s15, 0
    %p63 = por %p61, %p62
    %s65 = sadd.s32 %s64, 1
    %p68 = scmp.eq.s32.totalorder %s9, 1
    %p69 = scmp.ne.s32.totalorder %s64, %s66
    %p70 = scmp.eq.s32.totalorder %s9, 0
    %p71 = por %p69, %p70
    %p72 = scmp.ne.s32.totalorder %s64, %s66
    %p73 = scmp.eq.s32.totalorder %s14, 1
    %p74 = por %p72, %p73
    %p75 = scmp.ne.s32.totalorder %s66, %s67
    %p76 = scmp.eq.s32.totalorder %s14, 0
    %p77 = por %p75, %p76
    %p78 = scmp.ne.s32.totalorder %s66, %s67
    %p79 = scmp.eq.s32.totalorder %s15, 1
    %p80 = por %p78, %p79
    %p82 = scmp.ne.s32.totalorder %s67, %s81
    %p83 = scmp.eq.s32.totalorder %s15, 0
    %p84 = por %p82, %p83
    %s85 = ssub.s32 %s9, %s16
    %p86 = scmp.eq.s32.totalorder %s85, 0
    %s88 = sadd.s32 %s87, 1
    %s89 = scalar_select %p86, %s87, %s88
    %p92 = pneg %p86
    %p93 = scmp.eq.s32.totalorder %s9, 1
    %p94 = por %p92, %p93
    %p95 = scmp.ne.s32.totalorder %s87, %s90
    %p96 = scmp.eq.s32.totalorder %s9, 0
    %p97 = por %p95, %p96
    %p98 = scmp.ne.s32.totalorder %s87, %s90
    %p99 = scmp.eq.s32.totalorder %s14, 1
    %p100 = por %p98, %p99
    %p101 = scmp.ne.s32.totalorder %s90, %s91
    %p102 = scmp.eq.s32.totalorder %s14, 0
    %p103 = por %p101, %p102
    %p104 = scmp.ne.s32.totalorder %s90, %s91
    %p105 = scmp.eq.s32.totalorder %s15, 1
    %p106 = por %p104, %p105
    %p108 = scmp.ne.s32.totalorder %s91, %s107
    %p109 = scmp.eq.s32.totalorder %s15, 0
    %p110 = por %p108, %p109
    %p111 = scmp.le.s32.totalorder 1, %s9
    %p112 = scmp.lt.s32.totalorder %s9, 3
    %p113 = pnand %p111, %p112
    %p114 = pneg %p113
    // Predicated region
    $region9: #{reconstruction_forward.13} parent=5 // pred_check
      _
    $region10: #{reconstruction_forward.13} parent=5 // pred_check_branch
      %116 = sbr.rel (%p113) target = $region12
    $region11: #{reconstruction_forward.13} parent=5 // pred_region
      %s117 = ssub.s32 %s9, 1
      // Predicated region
      $region13: #{reconstruction_forward.13} parent=11 // pred_check
        %p118 = pneg %p56
      $region14: #{reconstruction_forward.13} parent=11 // pred_check_branch
        %120 = sbr.rel (%p118) target = $region16
      $region15: #{reconstruction_forward.13} parent=11 // pred_region
        _
      $region16: #{reconstruction_forward.13} parent=11 // pred_fallthru
        _
      // Predicated region
      $region17: #{reconstruction_forward.13} parent=11 // pred_check
        %p121 = pneg %p77
      $region18: #{reconstruction_forward.13} parent=11 // pred_check_branch
        %123 = sbr.rel (%p121) target = $region20
      $region19: #{reconstruction_forward.13} parent=11 // pred_region
        _
      $region20: #{reconstruction_forward.13} parent=11 // pred_fallthru
        _
    $region12: #{reconstruction_forward.13} parent=5 // pred_fallthru
      _
    %p124 = scmp.lt.s32.totalorder %s9, 2
    // Predicated region
    $region21: #{reconstruction_forward.13} parent=5 // pred_check
      %p125 = pneg %p124
    $region22: #{reconstruction_forward.13} parent=5 // pred_check_branch
      %127 = sbr.rel (%p125) target = $region24
    $region23: #{reconstruction_forward.13} parent=5 // pred_region
      // Predicated region
      $region25: #{reconstruction_forward.13} parent=23 // pred_check
        %p128 = pneg %p29
      $region26: #{reconstruction_forward.13} parent=23 // pred_check_branch
        %130 = sbr.rel (%p128) target = $region28
      $region27: #{reconstruction_forward.13} parent=23 // pred_region
        %s131 = smul.u32 8, %s9
        %p132 = scmp.lt.s32.totalorder %s131, 15
        %s133 = scalar_select %p132, %s131, 15
        %s134 = smul.addr %s133, 4
        %s135 = scalar_lea.vmem %s0, %s134
        %s136 = smul.u32 8, %s9
      $region28: #{reconstruction_forward.13} parent=23 // pred_fallthru
        _
    $region24: #{reconstruction_forward.13} parent=5 // pred_fallthru
      _
    %p137 = scmp.le.s32.totalorder 1, %s9
    %p138 = scmp.lt.s32.totalorder %s9, 3
    %p139 = pnand %p137, %p138
    %p140 = pneg %p139
    // Predicated region
    $region29: #{reconstruction_forward.13} parent=5 // pred_check
      _
    $region30: #{reconstruction_forward.13} parent=5 // pred_check_branch
      %142 = sbr.rel (%p139) target = $region32
    $region31: #{reconstruction_forward.13} parent=5 // pred_region
      %s143 = ssub.s32 %s9, 1
      %s144 = smul.u32 8, %s14
      %p145 = scmp.lt.s32.totalorder %s144, 15
      %s146 = scalar_select %p145, %s144, 15
      %s147 = smul.addr %s146, 4
      %s148 = scalar_lea.vmem %s0, %s147
      %p149 = pneg %p35
      %p150 = pneg %p32
      %p151 = pneg %p56
      %p152 = pneg %p53
      %p153 = pneg %p77
      %p154 = pneg %p74
      %p155 = pneg %p103
      %p156 = pneg %p100
      %s157 = smul.u32 8, %s14
      %p158 = scmp.lt.s32.totalorder %s157, 15
      %s159 = scalar_select %p158, %s157, 15
      %s160 = smul.addr %s159, 8
      %s161 = scalar_lea.vmem %s3, %s160
      %s162 = smul.u32 8, %s14
      %p163 = scmp.lt.s32.totalorder %s162, 15
      %s164 = scalar_select %p163, %s162, 15
      %s165 = smul.addr %s164, 4
      %s166 = scalar_lea.vmem %s0, %s165
      %s167 = smul.u32 8, %s14
      %s168 = smul.u32 8, %s14
      %p169 = scmp.lt.s32.totalorder %s168, 15
      %s170 = scalar_select %p169, %s168, 15
      %s171 = smul.addr %s170, 8
      %s172 = scalar_lea.vmem %s3, %s171
      %s173 = smul.u32 8, %s14
      %v175 = vld [vmem:[%s166] sm:$0xf]
      %v176 = vld [vmem:[%s166 + $0x4] sm:$0xf]
      %v177 = vld [vmem:[%s166 + $0x8] sm:$0xf]
      %v178 = vld [vmem:[%s166 + $0xc] sm:$0xf]
      %v179 = vld [vmem:[%s166 + $0x10] sm:$0xf]
      %v180 = vld [vmem:[%s166 + $0x14] sm:$0xf]
      %v181 = vld [vmem:[%s166 + $0x18] sm:$0xf]
      %v182 = vld [vmem:[%s166 + $0x1c] sm:$0xf]
      %v183 = vld [vmem:[%s1] sm:$0xf]
      %v184 = vld [vmem:[%s1 + $0x4] sm:$0xf]
      %v185 = vld [vmem:[%s1 + $0x8] sm:$0xf]
      %v186 = vld [vmem:[%s1 + $0xc] sm:$0xf]
      %v187 = vld [vmem:[%s1 + $0x10] sm:$0xf]
      %v188 = vld [vmem:[%s1 + $0x14] sm:$0xf]
      %v189 = vld [vmem:[%s2] sm:$0x1]
      %v191 = vperm.slane %v189, 0
      %v201 = vunpack.c.l.b16 %v175
      %v202 = vunpack.c.l.b16 %v176
      %v203 = vunpack.c.l.b16 %v177
      %v204 = vunpack.c.l.b16 %v178
      %v205 = vunpack.c.l.b16 %v179
      %v206 = vunpack.c.l.b16 %v180
      %v207 = vunpack.c.l.b16 %v181
      %v208 = vunpack.c.l.b16 %v182
      %v209 = vpack.c.b16 %v202, %v201
      %v210 = vpack.c.b16 %v204, %v203
      %v211 = vpack.c.b16 %v206, %v205
      %v212 = vpack.c.b16 %v208, %v207
      %v219 = vunpack.c.l.b16 %v183
      %v220 = vunpack.c.l.b16 %v184
      %v221 = vunpack.c.l.b16 %v185
      %v222 = vunpack.c.l.b16 %v186
      %v223 = vunpack.c.l.b16 %v187
      %v224 = vunpack.c.l.b16 %v188
      %v225 = vpack.c.b16 %v220, %v219
      %v226 = vpack.c.b16 %v222, %v221
      %v227 = vpack.c.b16 %v224, %v223
      %vm231 = vcmask 392192
      %v233 = vsel %vm231, %v209, 0
      %v236 = vsel %vm231, %v210, 0
      %v239 = vsel %vm231, %v211, 0
      %v242 = vsel %vm231, %v212, 0
      %244 = vmatpush.bf16.msra.mxu0 0
      %245 = vmatpush.bf16.msra.mxu0 0
      %246 = vmatpush.bf16.msra.mxu0 0
      %247 = vmatpush.bf16.msra.mxu0 0
      %248 = vmatpush.bf16.msra.mxu0 0
      %249 = vmatpush.bf16.msra.mxu0 %v227
      %250 = vmatpush.bf16.msra.mxu0 %v226
      %251 = vmatpush.bf16.msra.mxu0 %v225
      %252 = vmatmul.bf16.gmra.mxu0 %v233
      %v253 = vpop.f32.mrf.mxu0
      %v254 = vadd.f32 %v191, %v253
      %v255 = vpop.f32.mrf.mxu0
      %v256 = vadd.f32 %v191, %v255
      %257 = vmatmul.bf16.gmra.mxu0 %v236
      %v258 = vpop.f32.mrf.mxu0
      %v259 = vadd.f32 %v191, %v258
      %v260 = vpop.f32.mrf.mxu0
      %v261 = vadd.f32 %v191, %v260
      %262 = vmatmul.bf16.gmra.mxu0 %v239
      %v263 = vpop.f32.mrf.mxu0
      %v264 = vadd.f32 %v191, %v263
      %v265 = vpop.f32.mrf.mxu0
      %v266 = vadd.f32 %v191, %v265
      %267 = vmatmul.bf16.gmra.mxu0 %v242
      %v268 = vpop.f32.mrf.mxu0
      %v269 = vadd.f32 %v191, %v268
      %v270 = vpop.f32.mrf.mxu0
      %v271 = vadd.f32 %v191, %v270
      %272 = vdwg.mxu0
      %vm273 = vcmask 130048
      %274 = vst.msk [vmem:[%s172] sm:$0xff] %vm273, %v254
      %275 = vst.msk [vmem:[%s172 + $0x8] sm:$0xff] %vm273, %v256
      %276 = vst.msk [vmem:[%s172 + $0x10] sm:$0xff] %vm273, %v259
      %277 = vst.msk [vmem:[%s172 + $0x18] sm:$0xff] %vm273, %v261
      %278 = vst.msk [vmem:[%s172 + $0x20] sm:$0xff] %vm273, %v264
      %279 = vst.msk [vmem:[%s172 + $0x28] sm:$0xff] %vm273, %v266
      %280 = vst.msk [vmem:[%s172 + $0x30] sm:$0xff] %vm273, %v269
      %281 = vst.msk [vmem:[%s172 + $0x38] sm:$0xff] %vm273, %v271
      %s282 = smul.u32 8, %s14
      %p283 = scmp.lt.s32.totalorder %s282, 15
      %s284 = scalar_select %p283, %s282, 15
      %s285 = smul.addr %s284, 8
      %s286 = scalar_lea.vmem %s3, %s285
      // Predicated region
      $region33: #{reconstruction_forward.13} parent=31 // pred_check
        %p287 = pneg %p100
      $region34: #{reconstruction_forward.13} parent=31 // pred_check_branch
        %289 = sbr.rel (%p287) target = $region36
      $region35: #{reconstruction_forward.13} parent=31 // pred_region
        %s290 = smul.u32 8, %s14
      $region36: #{reconstruction_forward.13} parent=31 // pred_fallthru
        _
    $region32: #{reconstruction_forward.13} parent=5 // pred_fallthru
      _
    %p291 = scmp.le.s32.totalorder 2, %s9
    // Predicated region
    $region37: #{reconstruction_forward.13} parent=5 // pred_check
      %p292 = pneg %p291
    $region38: #{reconstruction_forward.13} parent=5 // pred_check_branch
      %294 = sbr.rel (%p292) target = $region40
    $region39: #{reconstruction_forward.13} parent=5 // pred_region
      %s295 = ssub.s32 %s9, 2
      // Predicated region
      $region41: #{reconstruction_forward.13} parent=39 // pred_check
        %p296 = pneg %p106
      $region42: #{reconstruction_forward.13} parent=39 // pred_check_branch
        %298 = sbr.rel (%p296) target = $region44
      $region43: #{reconstruction_forward.13} parent=39 // pred_region
        %s299 = smul.u32 8, %s15
        %p300 = scmp.lt.s32.totalorder %s299, 15
        %s301 = scalar_select %p300, %s299, 15
        %s302 = smul.addr %s301, 8
        %s303 = scalar_lea.vmem %s3, %s302
      $region44: #{reconstruction_forward.13} parent=39 // pred_fallthru
        _
    $region40: #{reconstruction_forward.13} parent=5 // pred_fallthru
      _
  $region6: #{reconstruction_forward.13} parent=0 // loop_footer
    %s13 = sadd.s32 1, %s9
  $region7: #{reconstruction_forward.13} parent=0 // loop_footer_branch
    %8 = sbr.rel target = $region3
  $region8: #{reconstruction_forward.13} parent=0 // loop_exit
    _

// kernel: reconstruction_forward.15
$region0: #{reconstruction_forward.15}
  #allocation0 [shape = 'u32[]', space=smem, size = 0x4, offset = 0x4, fixed_abs, tag = 'smem constant byte address 0x4 - core index']
  #allocation1 [shape = 'u32[72,128]{1,0:T(1,128)}', space=vmem, size = 0x9000, scoped, tag = 'internal scratch']
  #allocation2 [shape = 'f32[1]{0:T(128)S(6)}', space=smem, size = 0x200, scoped, tag = 'scoped memory for reconstruction_forward.15']
  %s0 = inlined_call_operand.vmem [shape: bf16[128,144], index: 0, kind: input, shape index: {}]
  %s1 = inlined_call_operand.vmem [shape: bf16[144,16], index: 1, kind: input, shape index: {}]
  %s2 = inlined_call_operand.vmem [shape: f32[1,16], index: 2, kind: input, shape index: {}]
  %s3 = inlined_call_operand.<no memory space> [shape: f32[1], index: 3, kind: input, shape index: {}]
  %s4 = inlined_call_operand.vmem [shape: f32[128,16], index: 4, kind: input, shape index: {}]
  %s5 = inlined_call_operand.vmem [shape: f32[128,16], index: 5, kind: output, shape index: {}]
  %s6 = sld [smem:[#allocation0]]
  $region53: #{reconstruction_forward.15} parent=0
    _
  %s8 = ssub.s32 1, %s6
  %s9 = scalar_select 0, %s8, %s6
  %10 = sst [smem:[#allocation2]] %s3
  loop: start=0, step=1, limit=4
  $region2: #{reconstruction_forward.15} parent=0 // loop_pre_header
    _
  $region3: #{reconstruction_forward.15} parent=0 // loop_header
    %s12 = sphi 0, %s16
    %p13 = scmp.ge.s32.totalorder %s12, 4
    %s22 = sphi 0, %s24
    %s25 = sphi 0, %s22
    %s26 = sphi 0, %s25
    %s42 = sphi 0, %s26
    %s46 = sphi 0, %s46
    %s48 = sphi 0, %s46
    %s49 = sphi 0, %s48
    %s63 = sphi 0, %s49
    %s67 = sphi 0, %s67
    %s69 = sphi 0, %s67
    %s70 = sphi 0, %s69
    %s84 = sphi 0, %s70
    %s88 = sphi 0, %s88
    %s90 = sphi 0, %s88
    %s91 = sphi 0, %s90
    %s105 = sphi 0, %s91
    %s111 = sphi 0, %s113
    %s114 = sphi 0, %s111
    %s115 = sphi 0, %s114
    %s131 = sphi 0, %s115
    %s137 = sphi 0, %s139
    %s140 = sphi 0, %s137
    %s141 = sphi 0, %s140
    %s157 = sphi 0, %s141
  $region4: #{reconstruction_forward.15} parent=0 // loop_header_branch
    %15 = sbr.rel (%p13) target = $region8
  $region5: #{reconstruction_forward.15} parent=0 // loop_body
    %s17 = ssub.s32 %s12, 1
    %s18 = ssub.s32 %s12, 2
    %s19 = sadd.s32 %s12, 1
    %s20 = ssub.s32 %s12, %s19
    %p21 = scmp.eq.s32.totalorder %s20, 0
    %s23 = sadd.s32 %s22, 1
    %s24 = scalar_select %p21, %s22, %s23
    %p27 = pneg %p21
    %p28 = scmp.eq.s32.totalorder %s12, 1
    %p29 = por %p27, %p28
    %p30 = scmp.ne.s32.totalorder %s22, %s25
    %p31 = scmp.eq.s32.totalorder %s12, 0
    %p32 = por %p30, %p31
    %p33 = scmp.ne.s32.totalorder %s22, %s25
    %p34 = scmp.eq.s32.totalorder %s17, 1
    %p35 = por %p33, %p34
    %p36 = scmp.ne.s32.totalorder %s25, %s26
    %p37 = scmp.eq.s32.totalorder %s17, 0
    %p38 = por %p36, %p37
    %p39 = scmp.ne.s32.totalorder %s25, %s26
    %p40 = scmp.eq.s32.totalorder %s18, 1
    %p41 = por %p39, %p40
    %p43 = scmp.ne.s32.totalorder %s26, %s42
    %p44 = scmp.eq.s32.totalorder %s18, 0
    %p45 = por %p43, %p44
    %s47 = sadd.s32 %s46, 1
    %p50 = scmp.eq.s32.totalorder %s12, 1
    %p51 = scmp.ne.s32.totalorder %s46, %s48
    %p52 = scmp.eq.s32.totalorder %s12, 0
    %p53 = por %p51, %p52
    %p54 = scmp.ne.s32.totalorder %s46, %s48
    %p55 = scmp.eq.s32.totalorder %s17, 1
    %p56 = por %p54, %p55
    %p57 = scmp.ne.s32.totalorder %s48, %s49
    %p58 = scmp.eq.s32.totalorder %s17, 0
    %p59 = por %p57, %p58
    %p60 = scmp.ne.s32.totalorder %s48, %s49
    %p61 = scmp.eq.s32.totalorder %s18, 1
    %p62 = por %p60, %p61
    %p64 = scmp.ne.s32.totalorder %s49, %s63
    %p65 = scmp.eq.s32.totalorder %s18, 0
    %p66 = por %p64, %p65
    %s68 = sadd.s32 %s67, 1
    %p71 = scmp.eq.s32.totalorder %s12, 1
    %p72 = scmp.ne.s32.totalorder %s67, %s69
    %p73 = scmp.eq.s32.totalorder %s12, 0
    %p74 = por %p72, %p73
    %p75 = scmp.ne.s32.totalorder %s67, %s69
    %p76 = scmp.eq.s32.totalorder %s17, 1
    %p77 = por %p75, %p76
    %p78 = scmp.ne.s32.totalorder %s69, %s70
    %p79 = scmp.eq.s32.totalorder %s17, 0
    %p80 = por %p78, %p79
    %p81 = scmp.ne.s32.totalorder %s69, %s70
    %p82 = scmp.eq.s32.totalorder %s18, 1
    %p83 = por %p81, %p82
    %p85 = scmp.ne.s32.totalorder %s70, %s84
    %p86 = scmp.eq.s32.totalorder %s18, 0
    %p87 = por %p85, %p86
    %s89 = sadd.s32 %s88, 1
    %p92 = scmp.eq.s32.totalorder %s12, 1
    %p93 = scmp.ne.s32.totalorder %s88, %s90
    %p94 = scmp.eq.s32.totalorder %s12, 0
    %p95 = por %p93, %p94
    %p96 = scmp.ne.s32.totalorder %s88, %s90
    %p97 = scmp.eq.s32.totalorder %s17, 1
    %p98 = por %p96, %p97
    %p99 = scmp.ne.s32.totalorder %s90, %s91
    %p100 = scmp.eq.s32.totalorder %s17, 0
    %p101 = por %p99, %p100
    %p102 = scmp.ne.s32.totalorder %s90, %s91
    %p103 = scmp.eq.s32.totalorder %s18, 1
    %p104 = por %p102, %p103
    %p106 = scmp.ne.s32.totalorder %s91, %s105
    %p107 = scmp.eq.s32.totalorder %s18, 0
    %p108 = por %p106, %p107
    %s109 = ssub.s32 %s12, %s19
    %p110 = scmp.eq.s32.totalorder %s109, 0
    %s112 = sadd.s32 %s111, 1
    %s113 = scalar_select %p110, %s111, %s112
    %p116 = pneg %p110
    %p117 = scmp.eq.s32.totalorder %s12, 1
    %p118 = por %p116, %p117
    %p119 = scmp.ne.s32.totalorder %s111, %s114
    %p120 = scmp.eq.s32.totalorder %s12, 0
    %p121 = por %p119, %p120
    %p122 = scmp.ne.s32.totalorder %s111, %s114
    %p123 = scmp.eq.s32.totalorder %s17, 1
    %p124 = por %p122, %p123
    %p125 = scmp.ne.s32.totalorder %s114, %s115
    %p126 = scmp.eq.s32.totalorder %s17, 0
    %p127 = por %p125, %p126
    %p128 = scmp.ne.s32.totalorder %s114, %s115
    %p129 = scmp.eq.s32.totalorder %s18, 1
    %p130 = por %p128, %p129
    %p132 = scmp.ne.s32.totalorder %s115, %s131
    %p133 = scmp.eq.s32.totalorder %s18, 0
    %p134 = por %p132, %p133
    %s135 = ssub.s32 %s12, %s19
    %p136 = scmp.eq.s32.totalorder %s135, 0
    %s138 = sadd.s32 %s137, 1
    %s139 = scalar_select %p136, %s137, %s138
    %p142 = pneg %p136
    %p143 = scmp.eq.s32.totalorder %s12, 1
    %p144 = por %p142, %p143
    %p145 = scmp.ne.s32.totalorder %s137, %s140
    %p146 = scmp.eq.s32.totalorder %s12, 0
    %p147 = por %p145, %p146
    %p148 = scmp.ne.s32.totalorder %s137, %s140
    %p149 = scmp.eq.s32.totalorder %s17, 1
    %p150 = por %p148, %p149
    %p151 = scmp.ne.s32.totalorder %s140, %s141
    %p152 = scmp.eq.s32.totalorder %s17, 0
    %p153 = por %p151, %p152
    %p154 = scmp.ne.s32.totalorder %s140, %s141
    %p155 = scmp.eq.s32.totalorder %s18, 1
    %p156 = por %p154, %p155
    %p158 = scmp.ne.s32.totalorder %s141, %s157
    %p159 = scmp.eq.s32.totalorder %s18, 0
    %p160 = por %p158, %p159
    %p161 = scmp.le.s32.totalorder 1, %s12
    %p162 = scmp.lt.s32.totalorder %s12, 3
    %p163 = pnand %p161, %p162
    %p164 = pneg %p163
    // Predicated region
    $region9: #{reconstruction_forward.15} parent=5 // pred_check
      _
    $region10: #{reconstruction_forward.15} parent=5 // pred_check_branch
      %166 = sbr.rel (%p163) target = $region12
    $region11: #{reconstruction_forward.15} parent=5 // pred_region
      %s167 = ssub.s32 %s12, 1
      // Predicated region
      $region13: #{reconstruction_forward.15} parent=11 // pred_check
        %p168 = pneg %p59
      $region14: #{reconstruction_forward.15} parent=11 // pred_check_branch
        %170 = sbr.rel (%p168) target = $region16
      $region15: #{reconstruction_forward.15} parent=11 // pred_region
        _
      $region16: #{reconstruction_forward.15} parent=11 // pred_fallthru
        _
      // Predicated region
      $region17: #{reconstruction_forward.15} parent=11 // pred_check
        %p171 = pneg %p80
      $region18: #{reconstruction_forward.15} parent=11 // pred_check_branch
        %173 = sbr.rel (%p171) target = $region20
      $region19: #{reconstruction_forward.15} parent=11 // pred_region
        _
      $region20: #{reconstruction_forward.15} parent=11 // pred_fallthru
        _
      // Predicated region
      $region21: #{reconstruction_forward.15} parent=11 // pred_check
        %p174 = pneg %p101
      $region22: #{reconstruction_forward.15} parent=11 // pred_check_branch
        %176 = sbr.rel (%p174) target = $region24
      $region23: #{reconstruction_forward.15} parent=11 // pred_region
        _
      $region24: #{reconstruction_forward.15} parent=11 // pred_fallthru
        _
    $region12: #{reconstruction_forward.15} parent=5 // pred_fallthru
      _
    %p177 = scmp.lt.s32.totalorder %s12, 2
    // Predicated region
    $region25: #{reconstruction_forward.15} parent=5 // pred_check
      %p178 = pneg %p177
    $region26: #{reconstruction_forward.15} parent=5 // pred_check_branch
      %180 = sbr.rel (%p178) target = $region28
    $region27: #{reconstruction_forward.15} parent=5 // pred_region
      // Predicated region
      $region29: #{reconstruction_forward.15} parent=27 // pred_check
        %p181 = pneg %p32
      $region30: #{reconstruction_forward.15} parent=27 // pred_check_branch
        %183 = sbr.rel (%p181) target = $region32
      $region31: #{reconstruction_forward.15} parent=27 // pred_region
        %s184 = smul.u32 8, %s12
        %p185 = scmp.lt.s32.totalorder %s184, 15
        %s186 = scalar_select %p185, %s184, 15
        %s187 = smul.addr %s186, 2
        %s188 = smul.addr %s187, 4
        %s189 = scalar_lea.vmem %s0, %s188
        %s190 = smul.u32 8, %s12
      $region32: #{reconstruction_forward.15} parent=27 // pred_fallthru
        _
      // Predicated region
      $region33: #{reconstruction_forward.15} parent=27 // pred_check
        %p191 = pneg %p121
      $region34: #{reconstruction_forward.15} parent=27 // pred_check_branch
        %193 = sbr.rel (%p191) target = $region36
      $region35: #{reconstruction_forward.15} parent=27 // pred_region
        %s194 = smul.u32 8, %s12
        %p195 = scmp.lt.s32.totalorder %s194, 15
        %s196 = scalar_select %p195, %s194, 15
        %s197 = smul.addr %s196, 8
        %s198 = scalar_lea.vmem %s4, %s197
        %s199 = smul.u32 8, %s12
      $region36: #{reconstruction_forward.15} parent=27 // pred_fallthru
        _
    $region28: #{reconstruction_forward.15} parent=5 // pred_fallthru
      _
    %p200 = scmp.le.s32.totalorder 1, %s12
    %p201 = scmp.lt.s32.totalorder %s12, 3
    %p202 = pnand %p200, %p201
    %p203 = pneg %p202
    // Predicated region
    $region37: #{reconstruction_forward.15} parent=5 // pred_check
      _
    $region38: #{reconstruction_forward.15} parent=5 // pred_check_branch
      %205 = sbr.rel (%p202) target = $region40
    $region39: #{reconstruction_forward.15} parent=5 // pred_region
      %s206 = ssub.s32 %s12, 1
      %s207 = smul.u32 8, %s17
      %p208 = scmp.lt.s32.totalorder %s207, 15
      %s209 = scalar_select %p208, %s207, 15
      %s210 = smul.addr %s209, 2
      %s211 = smul.addr %s210, 4
      %s212 = scalar_lea.vmem %s0, %s211
      %p213 = pneg %p38
      %p214 = pneg %p35
      %p215 = pneg %p59
      %p216 = pneg %p56
      %p217 = pneg %p80
      %p218 = pneg %p77
      %p219 = pneg %p101
      %p220 = pneg %p98
      %s221 = smul.u32 8, %s17
      %p222 = scmp.lt.s32.totalorder %s221, 15
      %s223 = scalar_select %p222, %s221, 15
      %s224 = smul.addr %s223, 8
      %s225 = scalar_lea.vmem %s4, %s224
      %p226 = pneg %p127
      %p227 = pneg %p124
      %p228 = pneg %p153
      %p229 = pneg %p150
      %s230 = smul.u32 8, %s17
      %p231 = scmp.lt.s32.totalorder %s230, 15
      %s232 = scalar_select %p231, %s230, 15
      %s233 = smul.addr %s232, 8
      %s234 = scalar_lea.vmem %s5, %s233
      %s235 = smul.u32 8, %s17
      %p236 = scmp.lt.s32.totalorder %s235, 15
      %s237 = scalar_select %p236, %s235, 15
      %s238 = smul.addr %s237, 2
      %s239 = smul.addr %s238, 4
      %s240 = scalar_lea.vmem %s0, %s239
      %s241 = smul.u32 8, %s17
      %s242 = smul.u32 8, %s17
      %p243 = scmp.lt.s32.totalorder %s242, 15
      %s244 = scalar_select %p243, %s242, 15
      %s245 = smul.addr %s244, 8
      %s246 = scalar_lea.vmem %s4, %s245
      %s247 = smul.u32 8, %s17
      %s248 = smul.u32 8, %s17
      %p249 = scmp.lt.s32.totalorder %s248, 15
      %s250 = scalar_select %p249, %s248, 15
      %s251 = smul.addr %s250, 8
      %s252 = scalar_lea.vmem %s5, %s251
      %s253 = smul.u32 8, %s17
      %v255 = vld [vmem:[%s240] sm:$0xff]
      %v256 = vld [vmem:[%s240 + $0x8] sm:$0xff]
      %v257 = vld [vmem:[%s240 + $0x10] sm:$0xff]
      %v258 = vld [vmem:[%s240 + $0x18] sm:$0xff]
      %v259 = vld [vmem:[%s240 + $0x20] sm:$0xff]
      %v260 = vld [vmem:[%s240 + $0x28] sm:$0xff]
      %v261 = vld [vmem:[%s240 + $0x30] sm:$0xff]
      %v262 = vld [vmem:[%s240 + $0x38] sm:$0xff]
      %v263 = vld [vmem:[%s1] sm:$0xf]
      %v264 = vld [vmem:[%s1 + $0x4] sm:$0xf]
      %v265 = vld [vmem:[%s1 + $0x8] sm:$0xf]
      %v266 = vld [vmem:[%s1 + $0xc] sm:$0xf]
      %v267 = vld [vmem:[%s1 + $0x10] sm:$0xf]
      %v268 = vld [vmem:[%s1 + $0x14] sm:$0xf]
      %v269 = vld [vmem:[%s1 + $0x18] sm:$0xf]
      %v270 = vld [vmem:[%s1 + $0x1c] sm:$0xf]
      %v271 = vld [vmem:[%s1 + $0x20] sm:$0xf]
      %v272 = vld [vmem:[%s1 + $0x24] sm:$0xf]
      %v273 = vld [vmem:[%s1 + $0x28] sm:$0xf]
      %v274 = vld [vmem:[%s1 + $0x2c] sm:$0xf]
      %v275 = vld [vmem:[%s1 + $0x30] sm:$0xf]
      %v276 = vld [vmem:[%s1 + $0x34] sm:$0xf]
      %v277 = vld [vmem:[%s1 + $0x38] sm:$0xf]
      %v278 = vld [vmem:[%s1 + $0x3c] sm:$0xf]
      %v279 = vld [vmem:[%s1 + $0x40] sm:$0xf]
      %v280 = vld [vmem:[%s1 + $0x44] sm:$0xf]
      %v281 = vld [vmem:[%s2] sm:$0x1]
      %v283 = vperm.slane %v281, 0
      %v293 = vunpack.c.l.b16 %v255
      %v294 = vunpack.c.h.b16 %v255
      %v295 = vunpack.c.l.b16 %v256
      %v296 = vunpack.c.h.b16 %v256
      %v297 = vunpack.c.l.b16 %v257
      %v298 = vunpack.c.h.b16 %v257
      %v299 = vunpack.c.l.b16 %v258
      %v300 = vunpack.c.h.b16 %v258
      %v301 = vunpack.c.l.b16 %v259
      %v302 = vunpack.c.h.b16 %v259
      %v303 = vunpack.c.l.b16 %v260
      %v304 = vunpack.c.h.b16 %v260
      %v305 = vunpack.c.l.b16 %v261
      %v306 = vunpack.c.h.b16 %v261
      %v307 = vunpack.c.l.b16 %v262
      %v308 = vunpack.c.h.b16 %v262
      %v309 = vpack.c.b16 %v295, %v293
      %v310 = vpack.c.b16 %v296, %v294
      %v311 = vpack.c.b16 %v299, %v297
      %v312 = vpack.c.b16 %v300, %v298
      %v313 = vpack.c.b16 %v303, %v301
      %v314 = vpack.c.b16 %v304, %v302
      %v315 = vpack.c.b16 %v307, %v305
      %v316 = vpack.c.b16 %v308, %v306
      %v339 = vunpack.c.l.b16 %v263
      %v340 = vunpack.c.l.b16 %v264
      %v341 = vunpack.c.l.b16 %v265
      %v342 = vunpack.c.l.b16 %v266
      %v343 = vunpack.c.l.b16 %v267
      %v344 = vunpack.c.l.b16 %v268
      %v345 = vunpack.c.l.b16 %v269
      %v346 = vunpack.c.l.b16 %v270
      %v347 = vunpack.c.l.b16 %v271
      %v348 = vunpack.c.l.b16 %v272
      %v349 = vunpack.c.l.b16 %v273
      %v350 = vunpack.c.l.b16 %v274
      %v351 = vunpack.c.l.b16 %v275
      %v352 = vunpack.c.l.b16 %v276
      %v353 = vunpack.c.l.b16 %v277
      %v354 = vunpack.c.l.b16 %v278
      %v355 = vunpack.c.l.b16 %v279
      %v356 = vunpack.c.l.b16 %v280
      %v357 = vpack.c.b16 %v340, %v339
      %v358 = vpack.c.b16 %v342, %v341
      %v359 = vpack.c.b16 %v344, %v343
      %v360 = vpack.c.b16 %v346, %v345
      %v361 = vpack.c.b16 %v348, %v347
      %v362 = vpack.c.b16 %v350, %v349
      %v363 = vpack.c.b16 %v352, %v351
      %v364 = vpack.c.b16 %v354, %v353
      %v365 = vpack.c.b16 %v356, %v355
      %vm375 = vcmask 130048
      %v377 = vsel %vm375, %v310, 0
      %v380 = vsel %vm375, %v312, 0
      %v383 = vsel %vm375, %v314, 0
      %v386 = vsel %vm375, %v316, 0
      %388 = vmatpush.bf16.msra.mxu0 %v364
      %389 = vmatpush.bf16.msra.mxu0 %v363
      %390 = vmatpush.bf16.msra.mxu0 %v362
      %391 = vmatpush.bf16.msra.mxu0 %v361
      %392 = vmatpush.bf16.msra.mxu0 %v360
      %393 = vmatpush.bf16.msra.mxu0 %v359
      %394 = vmatpush.bf16.msra.mxu0 %v358
      %395 = vmatpush.bf16.msra.mxu0 %v357
      %396 = vmatmul.bf16.gmra.mxu0 %v309
      %v397 = vpop.f32.mrf.mxu0
      %v398 = vadd.f32 %v283, %v397
      %v399 = vpop.f32.mrf.mxu0
      %v400 = vadd.f32 %v283, %v399
      %401 = vmatmul.bf16.gmra.mxu0 %v311
      %v402 = vpop.f32.mrf.mxu0
      %v403 = vadd.f32 %v283, %v402
      %v404 = vpop.f32.mrf.mxu0
      %v405 = vadd.f32 %v283, %v404
      %406 = vmatmul.bf16.gmra.mxu0 %v313
      %v407 = vpop.f32.mrf.mxu0
      %v408 = vadd.f32 %v283, %v407
      %v409 = vpop.f32.mrf.mxu0
      %v410 = vadd.f32 %v283, %v409
      %411 = vmatmul.bf16.gmra.mxu0 %v315
      %v412 = vpop.f32.mrf.mxu0
      %v413 = vadd.f32 %v283, %v412
      %v414 = vpop.f32.mrf.mxu0
      %v415 = vadd.f32 %v283, %v414
      %416 = vdwg.mxu0
      %417 = vmatpush.bf16.msra.mxu0 0
      %418 = vmatpush.bf16.msra.mxu0 0
      %419 = vmatpush.bf16.msra.mxu0 0
      %420 = vmatpush.bf16.msra.mxu0 0
      %421 = vmatpush.bf16.msra.mxu0 0
      %422 = vmatpush.bf16.msra.mxu0 0
      %423 = vmatpush.bf16.msra.mxu0 0
      %424 = vmatpush.bf16.msra.mxu0 %v365
      %425 = vmatmul.bf16.gmra.mxu0 %v377
      %v426 = vpop.f32.mrf.mxu0
      %v427 = vadd.f32 %v398, %v426
      %v428 = vpop.f32.mrf.mxu0
      %v429 = vadd.f32 %v400, %v428
      %430 = vmatmul.bf16.gmra.mxu0 %v380
      %v431 = vpop.f32.mrf.mxu0
      %v432 = vadd.f32 %v403, %v431
      %v433 = vpop.f32.mrf.mxu0
      %v434 = vadd.f32 %v405, %v433
      %435 = vmatmul.bf16.gmra.mxu0 %v383
      %v436 = vpop.f32.mrf.mxu0
      %v437 = vadd.f32 %v408, %v436
      %v438 = vpop.f32.mrf.mxu0
      %v439 = vadd.f32 %v410, %v438
      %440 = vmatmul.bf16.gmra.mxu0 %v386
      %v441 = vpop.f32.mrf.mxu0
      %v442 = vadd.f32 %v413, %v441
      %v443 = vpop.f32.mrf.mxu0
      %v444 = vadd.f32 %v415, %v443
      %445 = vdwg.mxu0
      %v446 = vsel %vm375, %v427, 0.0
      %v447 = vsel %vm375, %v429, 0.0
      %v448 = vadd.f32 %v446, %v447
      %v449 = vsel %vm375, %v432, 0.0
      %v450 = vadd.f32 %v448, %v449
      %v451 = vsel %vm375, %v434, 0.0
      %v452 = vadd.f32 %v450, %v451
      %v453 = vsel %vm375, %v437, 0.0
      %v454 = vadd.f32 %v452, %v453
      %v455 = vsel %vm375, %v439, 0.0
      %v456 = vadd.f32 %v454, %v455
      %v457 = vsel %vm375, %v442, 0.0
      %v458 = vadd.f32 %v456, %v457
      %v459 = vsel %vm375, %v444, 0.0
      %v460 = vadd.f32 %v458, %v459
      %v461 = vrot.slane %v460, 4
      %v462 = vadd.f32 %v460, %v461
      %v463 = vrot.slane %v462, 2
      %v464 = vadd.f32 %v462, %v463
      %v465 = vrot.slane %v464, 1
      %v466 = vadd.f32 %v464, %v465
      %v467 = vrcp.pop 64.0
      %v468 = vmul.f32 64.0, %v467
      %v469 = vsub.f32 1.0, %v468
      %v470 = vmul.f32 %v467, %v469
      %v471 = vadd.f32 %v467, %v470
      %vm472 = vweird.f32 %v467
      %v473 = vsel %vm472, %v467, %v471
      %v474 = vmul.f32 %v466, %v473
      %v475 = vsub.f32 %v427, %v474
      %v476 = vsub.f32 %v429, %v474
      %v477 = vsub.f32 %v432, %v474
      %v478 = vsub.f32 %v434, %v474
      %v479 = vsub.f32 %v437, %v474
      %v480 = vsub.f32 %v439, %v474
      %v481 = vsub.f32 %v442, %v474
      %v482 = vsub.f32 %v444, %v474
      %v483 = vmul.f32 %v475, %v475
      %v484 = vmul.f32 %v476, %v476
      %v485 = vmul.f32 %v477, %v477
      %v486 = vmul.f32 %v478, %v478
      %v487 = vmul.f32 %v479, %v479
      %v488 = vmul.f32 %v480, %v480
      %v489 = vmul.f32 %v481, %v481
      %v490 = vmul.f32 %v482, %v482
      %v491 = vsel %vm375, %v483, 0.0
      %v492 = vsel %vm375, %v484, 0.0
      %v493 = vadd.f32 %v491, %v492
      %v494 = vsel %vm375, %v485, 0.0
      %v495 = vadd.f32 %v493, %v494
      %v496 = vsel %vm375, %v486, 0.0
      %v497 = vadd.f32 %v495, %v496
      %v498 = vsel %vm375, %v487, 0.0
      %v499 = vadd.f32 %v497, %v498
      %v500 = vsel %vm375, %v488, 0.0
      %v501 = vadd.f32 %v499, %v500
      %v502 = vsel %vm375, %v489, 0.0
      %v503 = vadd.f32 %v501, %v502
      %v504 = vsel %vm375, %v490, 0.0
      %v505 = vadd.f32 %v503, %v504
      %v506 = vrot.slane %v505, 4
      %v507 = vadd.f32 %v505, %v506
      %v508 = vrot.slane %v507, 2
      %v509 = vadd.f32 %v507, %v508
      %v510 = vrot.slane %v509, 1
      %v511 = vadd.f32 %v509, %v510
      %v512 = vmul.f32 %v511, %v473
      %v513 = vadd.f32 %v512, 1e-05
      %v514 = vrsqrt.pop %v513
      %v515 = vmul.f32 %v514, %v513
      %v516 = vmul.f32 %v515, %v514
      %v517 = vmul.f32 0.5, %v516
      %v518 = vsub.f32 1.5, %v517
      %v519 = vmul.f32 %v514, %v518
      %vm520 = vweird.f32 %v513
      %vm521 = vweird.f32 %v514
      %vm522 = vmor %vm520, %vm521
      %v523 = vsel %vm522, %v514, %v519
      %v524 = vmul.f32 %v475, %v523
      %v525 = vmul.f32 %v476, %v523
      %v526 = vmul.f32 %v477, %v523
      %v527 = vmul.f32 %v478, %v523
      %v528 = vmul.f32 %v479, %v523
      %v529 = vmul.f32 %v480, %v523
      %v530 = vmul.f32 %v481, %v523
      %v531 = vmul.f32 %v482, %v523
      %s532 = sld [smem:[#allocation2]]
      %vm533 = vcmp.ge.f32.partialorder %v524, 0.0
      %vm534 = vcmp.ge.f32.partialorder %v525, 0.0
      %vm535 = vcmp.ge.f32.partialorder %v526, 0.0
      %vm536 = vcmp.ge.f32.partialorder %v527, 0.0
      %vm537 = vcmp.ge.f32.partialorder %v528, 0.0
      %vm538 = vcmp.ge.f32.partialorder %v529, 0.0
      %vm539 = vcmp.ge.f32.partialorder %v530, 0.0
      %vm540 = vcmp.ge.f32.partialorder %v531, 0.0
      %v541 = vstv %s532
      %v542 = vmul.f32 %v541, %v524
      %v543 = vmul.f32 %v541, %v525
      %v544 = vmul.f32 %v541, %v526
      %v545 = vmul.f32 %v541, %v527
      %v546 = vmul.f32 %v541, %v528
      %v547 = vmul.f32 %v541, %v529
      %v548 = vmul.f32 %v541, %v530
      %v549 = vmul.f32 %v541, %v531
      %v550 = vsel %vm533, %v524, %v542
      %v551 = vsel %vm534, %v525, %v543
      %v552 = vsel %vm535, %v526, %v544
      %v553 = vsel %vm536, %v527, %v545
      %v554 = vsel %vm537, %v528, %v546
      %v555 = vsel %vm538, %v529, %v547
      %v556 = vsel %vm539, %v530, %v548
      %v557 = vsel %vm540, %v531, %v549
      %v558 = vld [vmem:[%s246] sm:$0xff]
      %v559 = vld [vmem:[%s246 + $0x8] sm:$0xff]
      %v560 = vld [vmem:[%s246 + $0x10] sm:$0xff]
      %v561 = vld [vmem:[%s246 + $0x18] sm:$0xff]
      %v562 = vld [vmem:[%s246 + $0x20] sm:$0xff]
      %v563 = vld [vmem:[%s246 + $0x28] sm:$0xff]
      %v564 = vld [vmem:[%s246 + $0x30] sm:$0xff]
      %v565 = vld [vmem:[%s246 + $0x38] sm:$0xff]
      %v566 = vadd.f32 %v550, %v558
      %v567 = vadd.f32 %v551, %v559
      %v568 = vadd.f32 %v552, %v560
      %v569 = vadd.f32 %v553, %v561
      %v570 = vadd.f32 %v554, %v562
      %v571 = vadd.f32 %v555, %v563
      %v572 = vadd.f32 %v556, %v564
      %v573 = vadd.f32 %v557, %v565
      %574 = vst.msk [vmem:[%s252] sm:$0xff] %vm375, %v566
      %575 = vst.msk [vmem:[%s252 + $0x8] sm:$0xff] %vm375, %v567
      %576 = vst.msk [vmem:[%s252 + $0x10] sm:$0xff] %vm375, %v568
      %577 = vst.msk [vmem:[%s252 + $0x18] sm:$0xff] %vm375, %v569
      %578 = vst.msk [vmem:[%s252 + $0x20] sm:$0xff] %vm375, %v570
      %579 = vst.msk [vmem:[%s252 + $0x28] sm:$0xff] %vm375, %v571
      %580 = vst.msk [vmem:[%s252 + $0x30] sm:$0xff] %vm375, %v572
      %581 = vst.msk [vmem:[%s252 + $0x38] sm:$0xff] %vm375, %v573
      %s582 = smul.u32 8, %s17
      %p583 = scmp.lt.s32.totalorder %s582, 15
      %s584 = scalar_select %p583, %s582, 15
      %s585 = smul.addr %s584, 8
      %s586 = scalar_lea.vmem %s5, %s585
      // Predicated region
      $region41: #{reconstruction_forward.15} parent=39 // pred_check
        %p587 = pneg %p150
      $region42: #{reconstruction_forward.15} parent=39 // pred_check_branch
        %589 = sbr.rel (%p587) target = $region44
      $region43: #{reconstruction_forward.15} parent=39 // pred_region
        %s590 = smul.u32 8, %s17
      $region44: #{reconstruction_forward.15} parent=39 // pred_fallthru
        _
    $region40: #{reconstruction_forward.15} parent=5 // pred_fallthru
      _
    %p591 = scmp.le.s32.totalorder 2, %s12
    // Predicated region
    $region45: #{reconstruction_forward.15} parent=5 // pred_check
      %p592 = pneg %p591
    $region46: #{reconstruction_forward.15} parent=5 // pred_check_branch
      %594 = sbr.rel (%p592) target = $region48
    $region47: #{reconstruction_forward.15} parent=5 // pred_region
      %s595 = ssub.s32 %s12, 2
      // Predicated region
      $region49: #{reconstruction_forward.15} parent=47 // pred_check
        %p596 = pneg %p156
      $region50: #{reconstruction_forward.15} parent=47 // pred_check_branch
        %598 = sbr.rel (%p596) target = $region52
      $region51: #{reconstruction_forward.15} parent=47 // pred_region
        %s599 = smul.u32 8, %s18
        %p600 = scmp.lt.s32.totalorder %s599, 15
        %s601 = scalar_select %p600, %s599, 15
        %s602 = smul.addr %s601, 8
        %s603 = scalar_lea.vmem %s5, %s602
      $region52: #{reconstruction_forward.15} parent=47 // pred_fallthru
        _
    $region48: #{reconstruction_forward.15} parent=5 // pred_fallthru
      _
  $region6: #{reconstruction_forward.15} parent=0 // loop_footer
    %s16 = sadd.s32 1, %s12
  $region7: #{reconstruction_forward.15} parent=0 // loop_footer_branch
    %11 = sbr.rel target = $region3
  $region8: #{reconstruction_forward.15} parent=0 // loop_exit
    _

// kernel: reconstruction_forward.17
$region0: #{reconstruction_forward.17}
  #allocation0 [shape = 'u32[]', space=smem, size = 0x4, offset = 0x4, fixed_abs, tag = 'smem constant byte address 0x4 - core index']
  #allocation1 [shape = 'u32[72,128]{1,0:T(1,128)}', space=vmem, size = 0x9000, scoped, tag = 'internal scratch']
  #allocation2 [shape = 'f32[1]{0:T(128)S(6)}', space=smem, size = 0x200, scoped, tag = 'scoped memory for reconstruction_forward.17']
  %s0 = inlined_call_operand.vmem [shape: bf16[32,144], index: 0, kind: input, shape index: {}]
  %s1 = inlined_call_operand.vmem [shape: bf16[144,32], index: 1, kind: input, shape index: {}]
  %s2 = inlined_call_operand.vmem [shape: f32[1,32], index: 2, kind: input, shape index: {}]
  %s3 = inlined_call_operand.<no memory space> [shape: f32[1], index: 3, kind: input, shape index: {}]
  %s4 = inlined_call_operand.vmem [shape: f32[32,32], index: 4, kind: output, shape index: {}]
  %s5 = sld [smem:[#allocation0]]
  $region49: #{reconstruction_forward.17} parent=0
    _
  %s7 = ssub.s32 1, %s5
  %s8 = scalar_select 0, %s7, %s5
  %9 = sst [smem:[#allocation2]] %s3
  loop: start=0, step=1, limit=4
  $region2: #{reconstruction_forward.17} parent=0 // loop_pre_header
    _
  $region3: #{reconstruction_forward.17} parent=0 // loop_header
    %s11 = sphi 0, %s15
    %p12 = scmp.ge.s32.totalorder %s11, 4
    %s21 = sphi 0, %s23
    %s24 = sphi 0, %s21
    %s25 = sphi 0, %s24
    %s41 = sphi 0, %s25
    %s45 = sphi 0, %s45
    %s47 = sphi 0, %s45
    %s48 = sphi 0, %s47
    %s62 = sphi 0, %s48
    %s66 = sphi 0, %s66
    %s68 = sphi 0, %s66
    %s69 = sphi 0, %s68
    %s83 = sphi 0, %s69
    %s87 = sphi 0, %s87
    %s89 = sphi 0, %s87
    %s90 = sphi 0, %s89
    %s104 = sphi 0, %s90
    %s110 = sphi 0, %s112
    %s113 = sphi 0, %s110
    %s114 = sphi 0, %s113
    %s130 = sphi 0, %s114
  $region4: #{reconstruction_forward.17} parent=0 // loop_header_branch
    %14 = sbr.rel (%p12) target = $region8
  $region5: #{reconstruction_forward.17} parent=0 // loop_body
    %s16 = ssub.s32 %s11, 1
    %s17 = ssub.s32 %s11, 2
    %s18 = sadd.s32 %s11, 1
    %s19 = ssub.s32 %s11, %s18
    %p20 = scmp.eq.s32.totalorder %s19, 0
    %s22 = sadd.s32 %s21, 1
    %s23 = scalar_select %p20, %s21, %s22
    %p26 = pneg %p20
    %p27 = scmp.eq.s32.totalorder %s11, 1
    %p28 = por %p26, %p27
    %p29 = scmp.ne.s32.totalorder %s21, %s24
    %p30 = scmp.eq.s32.totalorder %s11, 0
    %p31 = por %p29, %p30
    %p32 = scmp.ne.s32.totalorder %s21, %s24
    %p33 = scmp.eq.s32.totalorder %s16, 1
    %p34 = por %p32, %p33
    %p35 = scmp.ne.s32.totalorder %s24, %s25
    %p36 = scmp.eq.s32.totalorder %s16, 0
    %p37 = por %p35, %p36
    %p38 = scmp.ne.s32.totalorder %s24, %s25
    %p39 = scmp.eq.s32.totalorder %s17, 1
    %p40 = por %p38, %p39
    %p42 = scmp.ne.s32.totalorder %s25, %s41
    %p43 = scmp.eq.s32.totalorder %s17, 0
    %p44 = por %p42, %p43
    %s46 = sadd.s32 %s45, 1
    %p49 = scmp.eq.s32.totalorder %s11, 1
    %p50 = scmp.ne.s32.totalorder %s45, %s47
    %p51 = scmp.eq.s32.totalorder %s11, 0
    %p52 = por %p50, %p51
    %p53 = scmp.ne.s32.totalorder %s45, %s47
    %p54 = scmp.eq.s32.totalorder %s16, 1
    %p55 = por %p53, %p54
    %p56 = scmp.ne.s32.totalorder %s47, %s48
    %p57 = scmp.eq.s32.totalorder %s16, 0
    %p58 = por %p56, %p57
    %p59 = scmp.ne.s32.totalorder %s47, %s48
    %p60 = scmp.eq.s32.totalorder %s17, 1
    %p61 = por %p59, %p60
    %p63 = scmp.ne.s32.totalorder %s48, %s62
    %p64 = scmp.eq.s32.totalorder %s17, 0
    %p65 = por %p63, %p64
    %s67 = sadd.s32 %s66, 1
    %p70 = scmp.eq.s32.totalorder %s11, 1
    %p71 = scmp.ne.s32.totalorder %s66, %s68
    %p72 = scmp.eq.s32.totalorder %s11, 0
    %p73 = por %p71, %p72
    %p74 = scmp.ne.s32.totalorder %s66, %s68
    %p75 = scmp.eq.s32.totalorder %s16, 1
    %p76 = por %p74, %p75
    %p77 = scmp.ne.s32.totalorder %s68, %s69
    %p78 = scmp.eq.s32.totalorder %s16, 0
    %p79 = por %p77, %p78
    %p80 = scmp.ne.s32.totalorder %s68, %s69
    %p81 = scmp.eq.s32.totalorder %s17, 1
    %p82 = por %p80, %p81
    %p84 = scmp.ne.s32.totalorder %s69, %s83
    %p85 = scmp.eq.s32.totalorder %s17, 0
    %p86 = por %p84, %p85
    %s88 = sadd.s32 %s87, 1
    %p91 = scmp.eq.s32.totalorder %s11, 1
    %p92 = scmp.ne.s32.totalorder %s87, %s89
    %p93 = scmp.eq.s32.totalorder %s11, 0
    %p94 = por %p92, %p93
    %p95 = scmp.ne.s32.totalorder %s87, %s89
    %p96 = scmp.eq.s32.totalorder %s16, 1
    %p97 = por %p95, %p96
    %p98 = scmp.ne.s32.totalorder %s89, %s90
    %p99 = scmp.eq.s32.totalorder %s16, 0
    %p100 = por %p98, %p99
    %p101 = scmp.ne.s32.totalorder %s89, %s90
    %p102 = scmp.eq.s32.totalorder %s17, 1
    %p103 = por %p101, %p102
    %p105 = scmp.ne.s32.totalorder %s90, %s104
    %p106 = scmp.eq.s32.totalorder %s17, 0
    %p107 = por %p105, %p106
    %s108 = ssub.s32 %s11, %s18
    %p109 = scmp.eq.s32.totalorder %s108, 0
    %s111 = sadd.s32 %s110, 1
    %s112 = scalar_select %p109, %s110, %s111
    %p115 = pneg %p109
    %p116 = scmp.eq.s32.totalorder %s11, 1
    %p117 = por %p115, %p116
    %p118 = scmp.ne.s32.totalorder %s110, %s113
    %p119 = scmp.eq.s32.totalorder %s11, 0
    %p120 = por %p118, %p119
    %p121 = scmp.ne.s32.totalorder %s110, %s113
    %p122 = scmp.eq.s32.totalorder %s16, 1
    %p123 = por %p121, %p122
    %p124 = scmp.ne.s32.totalorder %s113, %s114
    %p125 = scmp.eq.s32.totalorder %s16, 0
    %p126 = por %p124, %p125
    %p127 = scmp.ne.s32.totalorder %s113, %s114
    %p128 = scmp.eq.s32.totalorder %s17, 1
    %p129 = por %p127, %p128
    %p131 = scmp.ne.s32.totalorder %s114, %s130
    %p132 = scmp.eq.s32.totalorder %s17, 0
    %p133 = por %p131, %p132
    %p134 = scmp.le.s32.totalorder 1, %s11
    %p135 = scmp.lt.s32.totalorder %s11, 3
    %p136 = pnand %p134, %p135
    %p137 = pneg %p136
    // Predicated region
    $region9: #{reconstruction_forward.17} parent=5 // pred_check
      _
    $region10: #{reconstruction_forward.17} parent=5 // pred_check_branch
      %139 = sbr.rel (%p136) target = $region12
    $region11: #{reconstruction_forward.17} parent=5 // pred_region
      %s140 = ssub.s32 %s11, 1
      // Predicated region
      $region13: #{reconstruction_forward.17} parent=11 // pred_check
        %p141 = pneg %p58
      $region14: #{reconstruction_forward.17} parent=11 // pred_check_branch
        %143 = sbr.rel (%p141) target = $region16
      $region15: #{reconstruction_forward.17} parent=11 // pred_region
        _
      $region16: #{reconstruction_forward.17} parent=11 // pred_fallthru
        _
      // Predicated region
      $region17: #{reconstruction_forward.17} parent=11 // pred_check
        %p144 = pneg %p79
      $region18: #{reconstruction_forward.17} parent=11 // pred_check_branch
        %146 = sbr.rel (%p144) target = $region20
      $region19: #{reconstruction_forward.17} parent=11 // pred_region
        _
      $region20: #{reconstruction_forward.17} parent=11 // pred_fallthru
        _
      // Predicated region
      $region21: #{reconstruction_forward.17} parent=11 // pred_check
        %p147 = pneg %p100
      $region22: #{reconstruction_forward.17} parent=11 // pred_check_branch
        %149 = sbr.rel (%p147) target = $region24
      $region23: #{reconstruction_forward.17} parent=11 // pred_region
        _
      $region24: #{reconstruction_forward.17} parent=11 // pred_fallthru
        _
    $region12: #{reconstruction_forward.17} parent=5 // pred_fallthru
      _
    %p150 = scmp.lt.s32.totalorder %s11, 2
    // Predicated region
    $region25: #{reconstruction_forward.17} parent=5 // pred_check
      %p151 = pneg %p150
    $region26: #{reconstruction_forward.17} parent=5 // pred_check_branch
      %153 = sbr.rel (%p151) target = $region28
    $region27: #{reconstruction_forward.17} parent=5 // pred_region
      // Predicated region
      $region29: #{reconstruction_forward.17} parent=27 // pred_check
        %p154 = pneg %p31
      $region30: #{reconstruction_forward.17} parent=27 // pred_check_branch
        %156 = sbr.rel (%p154) target = $region32
      $region31: #{reconstruction_forward.17} parent=27 // pred_region
        %s157 = smul.u32 2, %s11
        %p158 = scmp.lt.s32.totalorder %s157, 3
        %s159 = scalar_select %p158, %s157, 3
        %s160 = smul.addr %s159, 2
        %s161 = smul.addr %s160, 4
        %s162 = scalar_lea.vmem %s0, %s161
        %s163 = smul.u32 2, %s11
      $region32: #{reconstruction_forward.17} parent=27 // pred_fallthru
        _
    $region28: #{reconstruction_forward.17} parent=5 // pred_fallthru
      _
    %p164 = scmp.le.s32.totalorder 1, %s11
    %p165 = scmp.lt.s32.totalorder %s11, 3
    %p166 = pnand %p164, %p165
    %p167 = pneg %p166
    // Predicated region
    $region33: #{reconstruction_forward.17} parent=5 // pred_check
      _
    $region34: #{reconstruction_forward.17} parent=5 // pred_check_branch
      %169 = sbr.rel (%p166) target = $region36
    $region35: #{reconstruction_forward.17} parent=5 // pred_region
      %s170 = ssub.s32 %s11, 1
      %s171 = smul.u32 2, %s16
      %p172 = scmp.lt.s32.totalorder %s171, 3
      %s173 = scalar_select %p172, %s171, 3
      %s174 = smul.addr %s173, 2
      %s175 = smul.addr %s174, 4
      %s176 = scalar_lea.vmem %s0, %s175
      %p177 = pneg %p37
      %p178 = pneg %p34
      %p179 = pneg %p58
      %p180 = pneg %p55
      %p181 = pneg %p79
      %p182 = pneg %p76
      %p183 = pneg %p100
      %p184 = pneg %p97
      %p185 = pneg %p126
      %p186 = pneg %p123
      %s187 = smul.u32 2, %s16
      %p188 = scmp.lt.s32.totalorder %s187, 3
      %s189 = scalar_select %p188, %s187, 3
      %s190 = smul.addr %s189, 8
      %s191 = scalar_lea.vmem %s4, %s190
      %s192 = smul.u32 2, %s16
      %p193 = scmp.lt.s32.totalorder %s192, 3
      %s194 = scalar_select %p193, %s192, 3
      %s195 = smul.addr %s194, 2
      %s196 = smul.addr %s195, 4
      %s197 = scalar_lea.vmem %s0, %s196
      %s198 = smul.u32 2, %s16
      %s199 = smul.u32 2, %s16
      %p200 = scmp.lt.s32.totalorder %s199, 3
      %s201 = scalar_select %p200, %s199, 3
      %s202 = smul.addr %s201, 8
      %s203 = scalar_lea.vmem %s4, %s202
      %s204 = smul.u32 2, %s16
      %v206 = vld [vmem:[%s197] sm:$0xff]
      %v207 = vld [vmem:[%s197 + $0x8] sm:$0xff]
      %v208 = vld [vmem:[%s1] sm:$0xf]
      %v209 = vld [vmem:[%s1 + $0x4] sm:$0xf]
      %v210 = vld [vmem:[%s1 + $0x8] sm:$0xf]
      %v211 = vld [vmem:[%s1 + $0xc] sm:$0xf]
      %v212 = vld [vmem:[%s1 + $0x10] sm:$0xf]
      %v213 = vld [vmem:[%s1 + $0x14] sm:$0xf]
      %v214 = vld [vmem:[%s1 + $0x18] sm:$0xf]
      %v215 = vld [vmem:[%s1 + $0x1c] sm:$0xf]
      %v216 = vld [vmem:[%s1 + $0x20] sm:$0xf]
      %v217 = vld [vmem:[%s1 + $0x24] sm:$0xf]
      %v218 = vld [vmem:[%s1 + $0x28] sm:$0xf]
      %v219 = vld [vmem:[%s1 + $0x2c] sm:$0xf]
      %v220 = vld [vmem:[%s1 + $0x30] sm:$0xf]
      %v221 = vld [vmem:[%s1 + $0x34] sm:$0xf]
      %v222 = vld [vmem:[%s1 + $0x38] sm:$0xf]
      %v223 = vld [vmem:[%s1 + $0x3c] sm:$0xf]
      %v224 = vld [vmem:[%s1 + $0x40] sm:$0xf]
      %v225 = vld [vmem:[%s1 + $0x44] sm:$0xf]
      %v226 = vld [vmem:[%s2] sm:$0x1]
      %v228 = vperm.slane %v226, 0
      %v232 = vunpack.c.l.b16 %v206
      %v233 = vunpack.c.h.b16 %v206
      %v234 = vunpack.c.l.b16 %v207
      %v235 = vunpack.c.h.b16 %v207
      %v236 = vpack.c.b16 %v234, %v232
      %v237 = vpack.c.b16 %v235, %v233
      %v257 = vunpack.c.l.b16 %v208
      %v258 = vunpack.c.l.b16 %v209
      %v259 = vunpack.c.l.b16 %v210
      %v260 = vunpack.c.l.b16 %v211
      %v261 = vunpack.c.l.b16 %v212
      %v262 = vunpack.c.l.b16 %v213
      %v263 = vunpack.c.l.b16 %v214
      %v264 = vunpack.c.l.b16 %v215
      %v265 = vunpack.c.l.b16 %v216
      %v266 = vunpack.c.l.b16 %v217
      %v267 = vunpack.c.l.b16 %v218
      %v268 = vunpack.c.l.b16 %v219
      %v269 = vunpack.c.l.b16 %v220
      %v270 = vunpack.c.l.b16 %v221
      %v271 = vunpack.c.l.b16 %v222
      %v272 = vunpack.c.l.b16 %v223
      %v273 = vunpack.c.l.b16 %v224
      %v274 = vunpack.c.l.b16 %v225
      %v275 = vpack.c.b16 %v258, %v257
      %v276 = vpack.c.b16 %v260, %v259
      %v277 = vpack.c.b16 %v262, %v261
      %v278 = vpack.c.b16 %v264, %v263
      %v279 = vpack.c.b16 %v266, %v265
      %v280 = vpack.c.b16 %v268, %v267
      %v281 = vpack.c.b16 %v270, %v269
      %v282 = vpack.c.b16 %v272, %v271
      %v283 = vpack.c.b16 %v274, %v273
      %vm293 = vcmask 130048
      %v295 = vsel %vm293, %v237, 0
      %297 = vmatpush.bf16.msra.mxu0 %v282
      %298 = vmatpush.bf16.msra.mxu0 %v281
      %299 = vmatpush.bf16.msra.mxu0 %v280
      %300 = vmatpush.bf16.msra.mxu0 %v279
      %301 = vmatpush.bf16.msra.mxu0 %v278
      %302 = vmatpush.bf16.msra.mxu0 %v277
      %303 = vmatpush.bf16.msra.mxu0 %v276
      %304 = vmatpush.bf16.msra.mxu0 %v275
      %305 = vmatmul.bf16.gmra.mxu0 %v236
      %v306 = vpop.f32.mrf.mxu0
      %v307 = vadd.f32 %v228, %v306
      %v308 = vpop.f32.mrf.mxu0
      %v309 = vadd.f32 %v228, %v308
      %310 = vdwg.mxu0
      %311 = vmatpush.bf16.msra.mxu0 0
      %312 = vmatpush.bf16.msra.mxu0 0
      %313 = vmatpush.bf16.msra.mxu0 0
      %314 = vmatpush.bf16.msra.mxu0 0
      %315 = vmatpush.bf16.msra.mxu0 0
      %316 = vmatpush.bf16.msra.mxu0 0
      %317 = vmatpush.bf16.msra.mxu0 0
      %318 = vmatpush.bf16.msra.mxu0 %v283
      %319 = vmatmul.bf16.gmra.mxu0 %v295
      %v320 = vpop.f32.mrf.mxu0
      %v321 = vadd.f32 %v307, %v320
      %v322 = vpop.f32.mrf.mxu0
      %v323 = vadd.f32 %v309, %v322
      %324 = vdwg.mxu0
      %vm325 = vcmask 261120
      %v326 = vsel %vm325, %v321, 0.0
      %v327 = vsel %vm325, %v323, 0.0
      %v328 = vadd.f32 %v326, %v327
      %v329 = vrot.slane %v328, 4
      %v330 = vadd.f32 %v328, %v329
      %v331 = vrot.slane %v330, 2
      %v332 = vadd.f32 %v330, %v331
      %v333 = vrot.slane %v332, 1
      %v334 = vadd.f32 %v332, %v333
      %v335 = vrcp.pop 16.0
      %v336 = vmul.f32 16.0, %v335
      %v337 = vsub.f32 1.0, %v336
      %v338 = vmul.f32 %v335, %v337
      %v339 = vadd.f32 %v335, %v338
      %vm340 = vweird.f32 %v335
      %v341 = vsel %vm340, %v335, %v339
      %v342 = vmul.f32 %v334, %v341
      %v343 = vsub.f32 %v321, %v342
      %v344 = vsub.f32 %v323, %v342
      %v345 = vmul.f32 %v343, %v343
      %v346 = vmul.f32 %v344, %v344
      %v347 = vsel %vm325, %v345, 0.0
      %v348 = vsel %vm325, %v346, 0.0
      %v349 = vadd.f32 %v347, %v348
      %v350 = vrot.slane %v349, 4
      %v351 = vadd.f32 %v349, %v350
      %v352 = vrot.slane %v351, 2
      %v353 = vadd.f32 %v351, %v352
      %v354 = vrot.slane %v353, 1
      %v355 = vadd.f32 %v353, %v354
      %v356 = vmul.f32 %v355, %v341
      %v357 = vadd.f32 %v356, 1e-05
      %v358 = vrsqrt.pop %v357
      %v359 = vmul.f32 %v358, %v357
      %v360 = vmul.f32 %v359, %v358
      %v361 = vmul.f32 0.5, %v360
      %v362 = vsub.f32 1.5, %v361
      %v363 = vmul.f32 %v358, %v362
      %vm364 = vweird.f32 %v357
      %vm365 = vweird.f32 %v358
      %vm366 = vmor %vm364, %vm365
      %v367 = vsel %vm366, %v358, %v363
      %v368 = vmul.f32 %v343, %v367
      %v369 = vmul.f32 %v344, %v367
      %s370 = sld [smem:[#allocation2]]
      %vm371 = vcmp.ge.f32.partialorder %v368, 0.0
      %vm372 = vcmp.ge.f32.partialorder %v369, 0.0
      %v373 = vstv %s370
      %v374 = vmul.f32 %v373, %v368
      %v375 = vmul.f32 %v373, %v369
      %v376 = vsel %vm371, %v368, %v374
      %v377 = vsel %vm372, %v369, %v375
      %378 = vst.msk [vmem:[%s203] sm:$0xff] %vm325, %v376
      %379 = vst.msk [vmem:[%s203 + $0x8] sm:$0xff] %vm325, %v377
      %s380 = smul.u32 2, %s16
      %p381 = scmp.lt.s32.totalorder %s380, 3
      %s382 = scalar_select %p381, %s380, 3
      %s383 = smul.addr %s382, 8
      %s384 = scalar_lea.vmem %s4, %s383
      // Predicated region
      $region37: #{reconstruction_forward.17} parent=35 // pred_check
        %p385 = pneg %p123
      $region38: #{reconstruction_forward.17} parent=35 // pred_check_branch
        %387 = sbr.rel (%p385) target = $region40
      $region39: #{reconstruction_forward.17} parent=35 // pred_region
        %s388 = smul.u32 2, %s16
      $region40: #{reconstruction_forward.17} parent=35 // pred_fallthru
        _
    $region36: #{reconstruction_forward.17} parent=5 // pred_fallthru
      _
    %p389 = scmp.le.s32.totalorder 2, %s11
    // Predicated region
    $region41: #{reconstruction_forward.17} parent=5 // pred_check
      %p390 = pneg %p389
    $region42: #{reconstruction_forward.17} parent=5 // pred_check_branch
      %392 = sbr.rel (%p390) target = $region44
    $region43: #{reconstruction_forward.17} parent=5 // pred_region
      %s393 = ssub.s32 %s11, 2
      // Predicated region
      $region45: #{reconstruction_forward.17} parent=43 // pred_check
        %p394 = pneg %p129
      $region46: #{reconstruction_forward.17} parent=43 // pred_check_branch
        %396 = sbr.rel (%p394) target = $region48
      $region47: #{reconstruction_forward.17} parent=43 // pred_region
        %s397 = smul.u32 2, %s17
        %p398 = scmp.lt.s32.totalorder %s397, 3
        %s399 = scalar_select %p398, %s397, 3
        %s400 = smul.addr %s399, 8
        %s401 = scalar_lea.vmem %s4, %s400
      $region48: #{reconstruction_forward.17} parent=43 // pred_fallthru
        _
    $region44: #{reconstruction_forward.17} parent=5 // pred_fallthru
      _
  $region6: #{reconstruction_forward.17} parent=0 // loop_footer
    %s15 = sadd.s32 1, %s11
  $region7: #{reconstruction_forward.17} parent=0 // loop_footer_branch
    %10 = sbr.rel target = $region3
  $region8: #{reconstruction_forward.17} parent=0 // loop_exit
    _

// kernel: reconstruction_forward.16
$region0: #{reconstruction_forward.16}
  #allocation0 [shape = 'u32[]', space=smem, size = 0x4, offset = 0x4, fixed_abs, tag = 'smem constant byte address 0x4 - core index']
  #allocation1 [shape = 'u32[72,128]{1,0:T(1,128)}', space=vmem, size = 0x9000, scoped, tag = 'internal scratch']
  %s0 = inlined_call_operand.vmem [shape: bf16[32,144], index: 0, kind: input, shape index: {}]
  %s1 = inlined_call_operand.vmem [shape: bf16[144,32], index: 1, kind: input, shape index: {}]
  %s2 = inlined_call_operand.vmem [shape: f32[1,32], index: 2, kind: input, shape index: {}]
  %s3 = inlined_call_operand.vmem [shape: f32[32,32], index: 3, kind: output, shape index: {}]
  %s4 = sld [smem:[#allocation0]]
  $region45: #{reconstruction_forward.16} parent=0
    _
  %s6 = ssub.s32 1, %s4
  %s7 = scalar_select 0, %s6, %s4
  loop: start=0, step=1, limit=4
  $region2: #{reconstruction_forward.16} parent=0 // loop_pre_header
    _
  $region3: #{reconstruction_forward.16} parent=0 // loop_header
    %s9 = sphi 0, %s13
    %p10 = scmp.ge.s32.totalorder %s9, 4
    %s19 = sphi 0, %s21
    %s22 = sphi 0, %s19
    %s23 = sphi 0, %s22
    %s39 = sphi 0, %s23
    %s43 = sphi 0, %s43
    %s45 = sphi 0, %s43
    %s46 = sphi 0, %s45
    %s60 = sphi 0, %s46
    %s64 = sphi 0, %s64
    %s66 = sphi 0, %s64
    %s67 = sphi 0, %s66
    %s81 = sphi 0, %s67
    %s87 = sphi 0, %s89
    %s90 = sphi 0, %s87
    %s91 = sphi 0, %s90
    %s107 = sphi 0, %s91
  $region4: #{reconstruction_forward.16} parent=0 // loop_header_branch
    %12 = sbr.rel (%p10) target = $region8
  $region5: #{reconstruction_forward.16} parent=0 // loop_body
    %s14 = ssub.s32 %s9, 1
    %s15 = ssub.s32 %s9, 2
    %s16 = sadd.s32 %s9, 1
    %s17 = ssub.s32 %s9, %s16
    %p18 = scmp.eq.s32.totalorder %s17, 0
    %s20 = sadd.s32 %s19, 1
    %s21 = scalar_select %p18, %s19, %s20
    %p24 = pneg %p18
    %p25 = scmp.eq.s32.totalorder %s9, 1
    %p26 = por %p24, %p25
    %p27 = scmp.ne.s32.totalorder %s19, %s22
    %p28 = scmp.eq.s32.totalorder %s9, 0
    %p29 = por %p27, %p28
    %p30 = scmp.ne.s32.totalorder %s19, %s22
    %p31 = scmp.eq.s32.totalorder %s14, 1
    %p32 = por %p30, %p31
    %p33 = scmp.ne.s32.totalorder %s22, %s23
    %p34 = scmp.eq.s32.totalorder %s14, 0
    %p35 = por %p33, %p34
    %p36 = scmp.ne.s32.totalorder %s22, %s23
    %p37 = scmp.eq.s32.totalorder %s15, 1
    %p38 = por %p36, %p37
    %p40 = scmp.ne.s32.totalorder %s23, %s39
    %p41 = scmp.eq.s32.totalorder %s15, 0
    %p42 = por %p40, %p41
    %s44 = sadd.s32 %s43, 1
    %p47 = scmp.eq.s32.totalorder %s9, 1
    %p48 = scmp.ne.s32.totalorder %s43, %s45
    %p49 = scmp.eq.s32.totalorder %s9, 0
    %p50 = por %p48, %p49
    %p51 = scmp.ne.s32.totalorder %s43, %s45
    %p52 = scmp.eq.s32.totalorder %s14, 1
    %p53 = por %p51, %p52
    %p54 = scmp.ne.s32.totalorder %s45, %s46
    %p55 = scmp.eq.s32.totalorder %s14, 0
    %p56 = por %p54, %p55
    %p57 = scmp.ne.s32.totalorder %s45, %s46
    %p58 = scmp.eq.s32.totalorder %s15, 1
    %p59 = por %p57, %p58
    %p61 = scmp.ne.s32.totalorder %s46, %s60
    %p62 = scmp.eq.s32.totalorder %s15, 0
    %p63 = por %p61, %p62
    %s65 = sadd.s32 %s64, 1
    %p68 = scmp.eq.s32.totalorder %s9, 1
    %p69 = scmp.ne.s32.totalorder %s64, %s66
    %p70 = scmp.eq.s32.totalorder %s9, 0
    %p71 = por %p69, %p70
    %p72 = scmp.ne.s32.totalorder %s64, %s66
    %p73 = scmp.eq.s32.totalorder %s14, 1
    %p74 = por %p72, %p73
    %p75 = scmp.ne.s32.totalorder %s66, %s67
    %p76 = scmp.eq.s32.totalorder %s14, 0
    %p77 = por %p75, %p76
    %p78 = scmp.ne.s32.totalorder %s66, %s67
    %p79 = scmp.eq.s32.totalorder %s15, 1
    %p80 = por %p78, %p79
    %p82 = scmp.ne.s32.totalorder %s67, %s81
    %p83 = scmp.eq.s32.totalorder %s15, 0
    %p84 = por %p82, %p83
    %s85 = ssub.s32 %s9, %s16
    %p86 = scmp.eq.s32.totalorder %s85, 0
    %s88 = sadd.s32 %s87, 1
    %s89 = scalar_select %p86, %s87, %s88
    %p92 = pneg %p86
    %p93 = scmp.eq.s32.totalorder %s9, 1
    %p94 = por %p92, %p93
    %p95 = scmp.ne.s32.totalorder %s87, %s90
    %p96 = scmp.eq.s32.totalorder %s9, 0
    %p97 = por %p95, %p96
    %p98 = scmp.ne.s32.totalorder %s87, %s90
    %p99 = scmp.eq.s32.totalorder %s14, 1
    %p100 = por %p98, %p99
    %p101 = scmp.ne.s32.totalorder %s90, %s91
    %p102 = scmp.eq.s32.totalorder %s14, 0
    %p103 = por %p101, %p102
    %p104 = scmp.ne.s32.totalorder %s90, %s91
    %p105 = scmp.eq.s32.totalorder %s15, 1
    %p106 = por %p104, %p105
    %p108 = scmp.ne.s32.totalorder %s91, %s107
    %p109 = scmp.eq.s32.totalorder %s15, 0
    %p110 = por %p108, %p109
    %p111 = scmp.le.s32.totalorder 1, %s9
    %p112 = scmp.lt.s32.totalorder %s9, 3
    %p113 = pnand %p111, %p112
    %p114 = pneg %p113
    // Predicated region
    $region9: #{reconstruction_forward.16} parent=5 // pred_check
      _
    $region10: #{reconstruction_forward.16} parent=5 // pred_check_branch
      %116 = sbr.rel (%p113) target = $region12
    $region11: #{reconstruction_forward.16} parent=5 // pred_region
      %s117 = ssub.s32 %s9, 1
      // Predicated region
      $region13: #{reconstruction_forward.16} parent=11 // pred_check
        %p118 = pneg %p56
      $region14: #{reconstruction_forward.16} parent=11 // pred_check_branch
        %120 = sbr.rel (%p118) target = $region16
      $region15: #{reconstruction_forward.16} parent=11 // pred_region
        _
      $region16: #{reconstruction_forward.16} parent=11 // pred_fallthru
        _
      // Predicated region
      $region17: #{reconstruction_forward.16} parent=11 // pred_check
        %p121 = pneg %p77
      $region18: #{reconstruction_forward.16} parent=11 // pred_check_branch
        %123 = sbr.rel (%p121) target = $region20
      $region19: #{reconstruction_forward.16} parent=11 // pred_region
        _
      $region20: #{reconstruction_forward.16} parent=11 // pred_fallthru
        _
    $region12: #{reconstruction_forward.16} parent=5 // pred_fallthru
      _
    %p124 = scmp.lt.s32.totalorder %s9, 2
    // Predicated region
    $region21: #{reconstruction_forward.16} parent=5 // pred_check
      %p125 = pneg %p124
    $region22: #{reconstruction_forward.16} parent=5 // pred_check_branch
      %127 = sbr.rel (%p125) target = $region24
    $region23: #{reconstruction_forward.16} parent=5 // pred_region
      // Predicated region
      $region25: #{reconstruction_forward.16} parent=23 // pred_check
        %p128 = pneg %p29
      $region26: #{reconstruction_forward.16} parent=23 // pred_check_branch
        %130 = sbr.rel (%p128) target = $region28
      $region27: #{reconstruction_forward.16} parent=23 // pred_region
        %s131 = smul.u32 2, %s9
        %p132 = scmp.lt.s32.totalorder %s131, 3
        %s133 = scalar_select %p132, %s131, 3
        %s134 = smul.addr %s133, 2
        %s135 = smul.addr %s134, 4
        %s136 = scalar_lea.vmem %s0, %s135
        %s137 = smul.u32 2, %s9
      $region28: #{reconstruction_forward.16} parent=23 // pred_fallthru
        _
    $region24: #{reconstruction_forward.16} parent=5 // pred_fallthru
      _
    %p138 = scmp.le.s32.totalorder 1, %s9
    %p139 = scmp.lt.s32.totalorder %s9, 3
    %p140 = pnand %p138, %p139
    %p141 = pneg %p140
    // Predicated region
    $region29: #{reconstruction_forward.16} parent=5 // pred_check
      _
    $region30: #{reconstruction_forward.16} parent=5 // pred_check_branch
      %143 = sbr.rel (%p140) target = $region32
    $region31: #{reconstruction_forward.16} parent=5 // pred_region
      %s144 = ssub.s32 %s9, 1
      %s145 = smul.u32 2, %s14
      %p146 = scmp.lt.s32.totalorder %s145, 3
      %s147 = scalar_select %p146, %s145, 3
      %s148 = smul.addr %s147, 2
      %s149 = smul.addr %s148, 4
      %s150 = scalar_lea.vmem %s0, %s149
      %p151 = pneg %p35
      %p152 = pneg %p32
      %p153 = pneg %p56
      %p154 = pneg %p53
      %p155 = pneg %p77
      %p156 = pneg %p74
      %p157 = pneg %p103
      %p158 = pneg %p100
      %s159 = smul.u32 2, %s14
      %p160 = scmp.lt.s32.totalorder %s159, 3
      %s161 = scalar_select %p160, %s159, 3
      %s162 = smul.addr %s161, 8
      %s163 = scalar_lea.vmem %s3, %s162
      %s164 = smul.u32 2, %s14
      %p165 = scmp.lt.s32.totalorder %s164, 3
      %s166 = scalar_select %p165, %s164, 3
      %s167 = smul.addr %s166, 2
      %s168 = smul.addr %s167, 4
      %s169 = scalar_lea.vmem %s0, %s168
      %s170 = smul.u32 2, %s14
      %s171 = smul.u32 2, %s14
      %p172 = scmp.lt.s32.totalorder %s171, 3
      %s173 = scalar_select %p172, %s171, 3
      %s174 = smul.addr %s173, 8
      %s175 = scalar_lea.vmem %s3, %s174
      %s176 = smul.u32 2, %s14
      %v178 = vld [vmem:[%s169] sm:$0xff]
      %v179 = vld [vmem:[%s169 + $0x8] sm:$0xff]
      %v180 = vld [vmem:[%s1] sm:$0xf]
      %v181 = vld [vmem:[%s1 + $0x4] sm:$0xf]
      %v182 = vld [vmem:[%s1 + $0x8] sm:$0xf]
      %v183 = vld [vmem:[%s1 + $0xc] sm:$0xf]
      %v184 = vld [vmem:[%s1 + $0x10] sm:$0xf]
      %v185 = vld [vmem:[%s1 + $0x14] sm:$0xf]
      %v186 = vld [vmem:[%s1 + $0x18] sm:$0xf]
      %v187 = vld [vmem:[%s1 + $0x1c] sm:$0xf]
      %v188 = vld [vmem:[%s1 + $0x20] sm:$0xf]
      %v189 = vld [vmem:[%s1 + $0x24] sm:$0xf]
      %v190 = vld [vmem:[%s1 + $0x28] sm:$0xf]
      %v191 = vld [vmem:[%s1 + $0x2c] sm:$0xf]
      %v192 = vld [vmem:[%s1 + $0x30] sm:$0xf]
      %v193 = vld [vmem:[%s1 + $0x34] sm:$0xf]
      %v194 = vld [vmem:[%s1 + $0x38] sm:$0xf]
      %v195 = vld [vmem:[%s1 + $0x3c] sm:$0xf]
      %v196 = vld [vmem:[%s1 + $0x40] sm:$0xf]
      %v197 = vld [vmem:[%s1 + $0x44] sm:$0xf]
      %v198 = vld [vmem:[%s2] sm:$0x1]
      %v200 = vperm.slane %v198, 0
      %v204 = vunpack.c.l.b16 %v178
      %v205 = vunpack.c.h.b16 %v178
      %v206 = vunpack.c.l.b16 %v179
      %v207 = vunpack.c.h.b16 %v179
      %v208 = vpack.c.b16 %v206, %v204
      %v209 = vpack.c.b16 %v207, %v205
      %v229 = vunpack.c.l.b16 %v180
      %v230 = vunpack.c.l.b16 %v181
      %v231 = vunpack.c.l.b16 %v182
      %v232 = vunpack.c.l.b16 %v183
      %v233 = vunpack.c.l.b16 %v184
      %v234 = vunpack.c.l.b16 %v185
      %v235 = vunpack.c.l.b16 %v186
      %v236 = vunpack.c.l.b16 %v187
      %v237 = vunpack.c.l.b16 %v188
      %v238 = vunpack.c.l.b16 %v189
      %v239 = vunpack.c.l.b16 %v190
      %v240 = vunpack.c.l.b16 %v191
      %v241 = vunpack.c.l.b16 %v192
      %v242 = vunpack.c.l.b16 %v193
      %v243 = vunpack.c.l.b16 %v194
      %v244 = vunpack.c.l.b16 %v195
      %v245 = vunpack.c.l.b16 %v196
      %v246 = vunpack.c.l.b16 %v197
      %v247 = vpack.c.b16 %v230, %v229
      %v248 = vpack.c.b16 %v232, %v231
      %v249 = vpack.c.b16 %v234, %v233
      %v250 = vpack.c.b16 %v236, %v235
      %v251 = vpack.c.b16 %v238, %v237
      %v252 = vpack.c.b16 %v240, %v239
      %v253 = vpack.c.b16 %v242, %v241
      %v254 = vpack.c.b16 %v244, %v243
      %v255 = vpack.c.b16 %v246, %v245
      %vm265 = vcmask 130048
      %v267 = vsel %vm265, %v209, 0
      %269 = vmatpush.bf16.msra.mxu0 %v254
      %270 = vmatpush.bf16.msra.mxu0 %v253
      %271 = vmatpush.bf16.msra.mxu0 %v252
      %272 = vmatpush.bf16.msra.mxu0 %v251
      %273 = vmatpush.bf16.msra.mxu0 %v250
      %274 = vmatpush.bf16.msra.mxu0 %v249
      %275 = vmatpush.bf16.msra.mxu0 %v248
      %276 = vmatpush.bf16.msra.mxu0 %v247
      %277 = vmatmul.bf16.gmra.mxu0 %v208
      %v278 = vpop.f32.mrf.mxu0
      %v279 = vadd.f32 %v200, %v278
      %v280 = vpop.f32.mrf.mxu0
      %v281 = vadd.f32 %v200, %v280
      %282 = vdwg.mxu0
      %283 = vmatpush.bf16.msra.mxu0 0
      %284 = vmatpush.bf16.msra.mxu0 0
      %285 = vmatpush.bf16.msra.mxu0 0
      %286 = vmatpush.bf16.msra.mxu0 0
      %287 = vmatpush.bf16.msra.mxu0 0
      %288 = vmatpush.bf16.msra.mxu0 0
      %289 = vmatpush.bf16.msra.mxu0 0
      %290 = vmatpush.bf16.msra.mxu0 %v255
      %291 = vmatmul.bf16.gmra.mxu0 %v267
      %v292 = vpop.f32.mrf.mxu0
      %v293 = vadd.f32 %v279, %v292
      %v294 = vpop.f32.mrf.mxu0
      %v295 = vadd.f32 %v281, %v294
      %296 = vdwg.mxu0
      %vm297 = vcmask 261120
      %298 = vst.msk [vmem:[%s175] sm:$0xff] %vm297, %v293
      %299 = vst.msk [vmem:[%s175 + $0x8] sm:$0xff] %vm297, %v295
      %s300 = smul.u32 2, %s14
      %p301 = scmp.lt.s32.totalorder %s300, 3
      %s302 = scalar_select %p301, %s300, 3
      %s303 = smul.addr %s302, 8
      %s304 = scalar_lea.vmem %s3, %s303
      // Predicated region
      $region33: #{reconstruction_forward.16} parent=31 // pred_check
        %p305 = pneg %p100
      $region34: #{reconstruction_forward.16} parent=31 // pred_check_branch
        %307 = sbr.rel (%p305) target = $region36
      $region35: #{reconstruction_forward.16} parent=31 // pred_region
        %s308 = smul.u32 2, %s14
      $region36: #{reconstruction_forward.16} parent=31 // pred_fallthru
        _
    $region32: #{reconstruction_forward.16} parent=5 // pred_fallthru
      _
    %p309 = scmp.le.s32.totalorder 2, %s9
    // Predicated region
    $region37: #{reconstruction_forward.16} parent=5 // pred_check
      %p310 = pneg %p309
    $region38: #{reconstruction_forward.16} parent=5 // pred_check_branch
      %312 = sbr.rel (%p310) target = $region40
    $region39: #{reconstruction_forward.16} parent=5 // pred_region
      %s313 = ssub.s32 %s9, 2
      // Predicated region
      $region41: #{reconstruction_forward.16} parent=39 // pred_check
        %p314 = pneg %p106
      $region42: #{reconstruction_forward.16} parent=39 // pred_check_branch
        %316 = sbr.rel (%p314) target = $region44
      $region43: #{reconstruction_forward.16} parent=39 // pred_region
        %s317 = smul.u32 2, %s15
        %p318 = scmp.lt.s32.totalorder %s317, 3
        %s319 = scalar_select %p318, %s317, 3
        %s320 = smul.addr %s319, 8
        %s321 = scalar_lea.vmem %s3, %s320
      $region44: #{reconstruction_forward.16} parent=39 // pred_fallthru
        _
    $region40: #{reconstruction_forward.16} parent=5 // pred_fallthru
      _
  $region6: #{reconstruction_forward.16} parent=0 // loop_footer
    %s13 = sadd.s32 1, %s9
  $region7: #{reconstruction_forward.16} parent=0 // loop_footer_branch
    %8 = sbr.rel target = $region3
  $region8: #{reconstruction_forward.16} parent=0 // loop_exit
    _

// kernel: reconstruction_forward.18
$region0: #{reconstruction_forward.18}
  #allocation0 [shape = 'u32[]', space=smem, size = 0x4, offset = 0x4, fixed_abs, tag = 'smem constant byte address 0x4 - core index']
  #allocation1 [shape = 'u32[72,128]{1,0:T(1,128)}', space=vmem, size = 0x9000, scoped, tag = 'internal scratch']
  #allocation2 [shape = 'f32[1]{0:T(128)S(6)}', space=smem, size = 0x200, scoped, tag = 'scoped memory for reconstruction_forward.18']
  %s0 = inlined_call_operand.vmem [shape: bf16[32,288], index: 0, kind: input, shape index: {}]
  %s1 = inlined_call_operand.vmem [shape: bf16[288,32], index: 1, kind: input, shape index: {}]
  %s2 = inlined_call_operand.vmem [shape: f32[1,32], index: 2, kind: input, shape index: {}]
  %s3 = inlined_call_operand.<no memory space> [shape: f32[1], index: 3, kind: input, shape index: {}]
  %s4 = inlined_call_operand.vmem [shape: f32[32,32], index: 4, kind: input, shape index: {}]
  %s5 = inlined_call_operand.vmem [shape: f32[32,32], index: 5, kind: output, shape index: {}]
  %s6 = sld [smem:[#allocation0]]
  $region53: #{reconstruction_forward.18} parent=0
    _
  %s8 = ssub.s32 1, %s6
  %s9 = scalar_select 0, %s8, %s6
  %10 = sst [smem:[#allocation2]] %s3
  loop: start=0, step=1, limit=4
  $region2: #{reconstruction_forward.18} parent=0 // loop_pre_header
    _
  $region3: #{reconstruction_forward.18} parent=0 // loop_header
    %s12 = sphi 0, %s16
    %p13 = scmp.ge.s32.totalorder %s12, 4
    %s22 = sphi 0, %s24
    %s25 = sphi 0, %s22
    %s26 = sphi 0, %s25
    %s42 = sphi 0, %s26
    %s46 = sphi 0, %s46
    %s48 = sphi 0, %s46
    %s49 = sphi 0, %s48
    %s63 = sphi 0, %s49
    %s67 = sphi 0, %s67
    %s69 = sphi 0, %s67
    %s70 = sphi 0, %s69
    %s84 = sphi 0, %s70
    %s88 = sphi 0, %s88
    %s90 = sphi 0, %s88
    %s91 = sphi 0, %s90
    %s105 = sphi 0, %s91
    %s111 = sphi 0, %s113
    %s114 = sphi 0, %s111
    %s115 = sphi 0, %s114
    %s131 = sphi 0, %s115
    %s137 = sphi 0, %s139
    %s140 = sphi 0, %s137
    %s141 = sphi 0, %s140
    %s157 = sphi 0, %s141
  $region4: #{reconstruction_forward.18} parent=0 // loop_header_branch
    %15 = sbr.rel (%p13) target = $region8
  $region5: #{reconstruction_forward.18} parent=0 // loop_body
    %s17 = ssub.s32 %s12, 1
    %s18 = ssub.s32 %s12, 2
    %s19 = sadd.s32 %s12, 1
    %s20 = ssub.s32 %s12, %s19
    %p21 = scmp.eq.s32.totalorder %s20, 0
    %s23 = sadd.s32 %s22, 1
    %s24 = scalar_select %p21, %s22, %s23
    %p27 = pneg %p21
    %p28 = scmp.eq.s32.totalorder %s12, 1
    %p29 = por %p27, %p28
    %p30 = scmp.ne.s32.totalorder %s22, %s25
    %p31 = scmp.eq.s32.totalorder %s12, 0
    %p32 = por %p30, %p31
    %p33 = scmp.ne.s32.totalorder %s22, %s25
    %p34 = scmp.eq.s32.totalorder %s17, 1
    %p35 = por %p33, %p34
    %p36 = scmp.ne.s32.totalorder %s25, %s26
    %p37 = scmp.eq.s32.totalorder %s17, 0
    %p38 = por %p36, %p37
    %p39 = scmp.ne.s32.totalorder %s25, %s26
    %p40 = scmp.eq.s32.totalorder %s18, 1
    %p41 = por %p39, %p40
    %p43 = scmp.ne.s32.totalorder %s26, %s42
    %p44 = scmp.eq.s32.totalorder %s18, 0
    %p45 = por %p43, %p44
    %s47 = sadd.s32 %s46, 1
    %p50 = scmp.eq.s32.totalorder %s12, 1
    %p51 = scmp.ne.s32.totalorder %s46, %s48
    %p52 = scmp.eq.s32.totalorder %s12, 0
    %p53 = por %p51, %p52
    %p54 = scmp.ne.s32.totalorder %s46, %s48
    %p55 = scmp.eq.s32.totalorder %s17, 1
    %p56 = por %p54, %p55
    %p57 = scmp.ne.s32.totalorder %s48, %s49
    %p58 = scmp.eq.s32.totalorder %s17, 0
    %p59 = por %p57, %p58
    %p60 = scmp.ne.s32.totalorder %s48, %s49
    %p61 = scmp.eq.s32.totalorder %s18, 1
    %p62 = por %p60, %p61
    %p64 = scmp.ne.s32.totalorder %s49, %s63
    %p65 = scmp.eq.s32.totalorder %s18, 0
    %p66 = por %p64, %p65
    %s68 = sadd.s32 %s67, 1
    %p71 = scmp.eq.s32.totalorder %s12, 1
    %p72 = scmp.ne.s32.totalorder %s67, %s69
    %p73 = scmp.eq.s32.totalorder %s12, 0
    %p74 = por %p72, %p73
    %p75 = scmp.ne.s32.totalorder %s67, %s69
    %p76 = scmp.eq.s32.totalorder %s17, 1
    %p77 = por %p75, %p76
    %p78 = scmp.ne.s32.totalorder %s69, %s70
    %p79 = scmp.eq.s32.totalorder %s17, 0
    %p80 = por %p78, %p79
    %p81 = scmp.ne.s32.totalorder %s69, %s70
    %p82 = scmp.eq.s32.totalorder %s18, 1
    %p83 = por %p81, %p82
    %p85 = scmp.ne.s32.totalorder %s70, %s84
    %p86 = scmp.eq.s32.totalorder %s18, 0
    %p87 = por %p85, %p86
    %s89 = sadd.s32 %s88, 1
    %p92 = scmp.eq.s32.totalorder %s12, 1
    %p93 = scmp.ne.s32.totalorder %s88, %s90
    %p94 = scmp.eq.s32.totalorder %s12, 0
    %p95 = por %p93, %p94
    %p96 = scmp.ne.s32.totalorder %s88, %s90
    %p97 = scmp.eq.s32.totalorder %s17, 1
    %p98 = por %p96, %p97
    %p99 = scmp.ne.s32.totalorder %s90, %s91
    %p100 = scmp.eq.s32.totalorder %s17, 0
    %p101 = por %p99, %p100
    %p102 = scmp.ne.s32.totalorder %s90, %s91
    %p103 = scmp.eq.s32.totalorder %s18, 1
    %p104 = por %p102, %p103
    %p106 = scmp.ne.s32.totalorder %s91, %s105
    %p107 = scmp.eq.s32.totalorder %s18, 0
    %p108 = por %p106, %p107
    %s109 = ssub.s32 %s12, %s19
    %p110 = scmp.eq.s32.totalorder %s109, 0
    %s112 = sadd.s32 %s111, 1
    %s113 = scalar_select %p110, %s111, %s112
    %p116 = pneg %p110
    %p117 = scmp.eq.s32.totalorder %s12, 1
    %p118 = por %p116, %p117
    %p119 = scmp.ne.s32.totalorder %s111, %s114
    %p120 = scmp.eq.s32.totalorder %s12, 0
    %p121 = por %p119, %p120
    %p122 = scmp.ne.s32.totalorder %s111, %s114
    %p123 = scmp.eq.s32.totalorder %s17, 1
    %p124 = por %p122, %p123
    %p125 = scmp.ne.s32.totalorder %s114, %s115
    %p126 = scmp.eq.s32.totalorder %s17, 0
    %p127 = por %p125, %p126
    %p128 = scmp.ne.s32.totalorder %s114, %s115
    %p129 = scmp.eq.s32.totalorder %s18, 1
    %p130 = por %p128, %p129
    %p132 = scmp.ne.s32.totalorder %s115, %s131
    %p133 = scmp.eq.s32.totalorder %s18, 0
    %p134 = por %p132, %p133
    %s135 = ssub.s32 %s12, %s19
    %p136 = scmp.eq.s32.totalorder %s135, 0
    %s138 = sadd.s32 %s137, 1
    %s139 = scalar_select %p136, %s137, %s138
    %p142 = pneg %p136
    %p143 = scmp.eq.s32.totalorder %s12, 1
    %p144 = por %p142, %p143
    %p145 = scmp.ne.s32.totalorder %s137, %s140
    %p146 = scmp.eq.s32.totalorder %s12, 0
    %p147 = por %p145, %p146
    %p148 = scmp.ne.s32.totalorder %s137, %s140
    %p149 = scmp.eq.s32.totalorder %s17, 1
    %p150 = por %p148, %p149
    %p151 = scmp.ne.s32.totalorder %s140, %s141
    %p152 = scmp.eq.s32.totalorder %s17, 0
    %p153 = por %p151, %p152
    %p154 = scmp.ne.s32.totalorder %s140, %s141
    %p155 = scmp.eq.s32.totalorder %s18, 1
    %p156 = por %p154, %p155
    %p158 = scmp.ne.s32.totalorder %s141, %s157
    %p159 = scmp.eq.s32.totalorder %s18, 0
    %p160 = por %p158, %p159
    %p161 = scmp.le.s32.totalorder 1, %s12
    %p162 = scmp.lt.s32.totalorder %s12, 3
    %p163 = pnand %p161, %p162
    %p164 = pneg %p163
    // Predicated region
    $region9: #{reconstruction_forward.18} parent=5 // pred_check
      _
    $region10: #{reconstruction_forward.18} parent=5 // pred_check_branch
      %166 = sbr.rel (%p163) target = $region12
    $region11: #{reconstruction_forward.18} parent=5 // pred_region
      %s167 = ssub.s32 %s12, 1
      // Predicated region
      $region13: #{reconstruction_forward.18} parent=11 // pred_check
        %p168 = pneg %p59
      $region14: #{reconstruction_forward.18} parent=11 // pred_check_branch
        %170 = sbr.rel (%p168) target = $region16
      $region15: #{reconstruction_forward.18} parent=11 // pred_region
        _
      $region16: #{reconstruction_forward.18} parent=11 // pred_fallthru
        _
      // Predicated region
      $region17: #{reconstruction_forward.18} parent=11 // pred_check
        %p171 = pneg %p80
      $region18: #{reconstruction_forward.18} parent=11 // pred_check_branch
        %173 = sbr.rel (%p171) target = $region20
      $region19: #{reconstruction_forward.18} parent=11 // pred_region
        _
      $region20: #{reconstruction_forward.18} parent=11 // pred_fallthru
        _
      // Predicated region
      $region21: #{reconstruction_forward.18} parent=11 // pred_check
        %p174 = pneg %p101
      $region22: #{reconstruction_forward.18} parent=11 // pred_check_branch
        %176 = sbr.rel (%p174) target = $region24
      $region23: #{reconstruction_forward.18} parent=11 // pred_region
        _
      $region24: #{reconstruction_forward.18} parent=11 // pred_fallthru
        _
    $region12: #{reconstruction_forward.18} parent=5 // pred_fallthru
      _
    %p177 = scmp.lt.s32.totalorder %s12, 2
    // Predicated region
    $region25: #{reconstruction_forward.18} parent=5 // pred_check
      %p178 = pneg %p177
    $region26: #{reconstruction_forward.18} parent=5 // pred_check_branch
      %180 = sbr.rel (%p178) target = $region28
    $region27: #{reconstruction_forward.18} parent=5 // pred_region
      // Predicated region
      $region29: #{reconstruction_forward.18} parent=27 // pred_check
        %p181 = pneg %p32
      $region30: #{reconstruction_forward.18} parent=27 // pred_check_branch
        %183 = sbr.rel (%p181) target = $region32
      $region31: #{reconstruction_forward.18} parent=27 // pred_region
        %s184 = smul.u32 2, %s12
        %p185 = scmp.lt.s32.totalorder %s184, 3
        %s186 = scalar_select %p185, %s184, 3
        %s187 = smul.addr %s186, 3
        %s188 = smul.addr %s187, 4
        %s189 = scalar_lea.vmem %s0, %s188
        %s190 = smul.u32 2, %s12
      $region32: #{reconstruction_forward.18} parent=27 // pred_fallthru
        _
      // Predicated region
      $region33: #{reconstruction_forward.18} parent=27 // pred_check
        %p191 = pneg %p121
      $region34: #{reconstruction_forward.18} parent=27 // pred_check_branch
        %193 = sbr.rel (%p191) target = $region36
      $region35: #{reconstruction_forward.18} parent=27 // pred_region
        %s194 = smul.u32 2, %s12
        %p195 = scmp.lt.s32.totalorder %s194, 3
        %s196 = scalar_select %p195, %s194, 3
        %s197 = smul.addr %s196, 8
        %s198 = scalar_lea.vmem %s4, %s197
        %s199 = smul.u32 2, %s12
      $region36: #{reconstruction_forward.18} parent=27 // pred_fallthru
        _
    $region28: #{reconstruction_forward.18} parent=5 // pred_fallthru
      _
    %p200 = scmp.le.s32.totalorder 1, %s12
    %p201 = scmp.lt.s32.totalorder %s12, 3
    %p202 = pnand %p200, %p201
    %p203 = pneg %p202
    // Predicated region
    $region37: #{reconstruction_forward.18} parent=5 // pred_check
      _
    $region38: #{reconstruction_forward.18} parent=5 // pred_check_branch
      %205 = sbr.rel (%p202) target = $region40
    $region39: #{reconstruction_forward.18} parent=5 // pred_region
      %s206 = ssub.s32 %s12, 1
      %s207 = smul.u32 2, %s17
      %p208 = scmp.lt.s32.totalorder %s207, 3
      %s209 = scalar_select %p208, %s207, 3
      %s210 = smul.addr %s209, 3
      %s211 = smul.addr %s210, 4
      %s212 = scalar_lea.vmem %s0, %s211
      %p213 = pneg %p38
      %p214 = pneg %p35
      %p215 = pneg %p59
      %p216 = pneg %p56
      %p217 = pneg %p80
      %p218 = pneg %p77
      %p219 = pneg %p101
      %p220 = pneg %p98
      %s221 = smul.u32 2, %s17
      %p222 = scmp.lt.s32.totalorder %s221, 3
      %s223 = scalar_select %p222, %s221, 3
      %s224 = smul.addr %s223, 8
      %s225 = scalar_lea.vmem %s4, %s224
      %p226 = pneg %p127
      %p227 = pneg %p124
      %p228 = pneg %p153
      %p229 = pneg %p150
      %s230 = smul.u32 2, %s17
      %p231 = scmp.lt.s32.totalorder %s230, 3
      %s232 = scalar_select %p231, %s230, 3
      %s233 = smul.addr %s232, 8
      %s234 = scalar_lea.vmem %s5, %s233
      %s235 = smul.u32 2, %s17
      %p236 = scmp.lt.s32.totalorder %s235, 3
      %s237 = scalar_select %p236, %s235, 3
      %s238 = smul.addr %s237, 3
      %s239 = smul.addr %s238, 4
      %s240 = scalar_lea.vmem %s0, %s239
      %s241 = smul.u32 2, %s17
      %s242 = smul.u32 2, %s17
      %p243 = scmp.lt.s32.totalorder %s242, 3
      %s244 = scalar_select %p243, %s242, 3
      %s245 = smul.addr %s244, 8
      %s246 = scalar_lea.vmem %s4, %s245
      %s247 = smul.u32 2, %s17
      %s248 = smul.u32 2, %s17
      %p249 = scmp.lt.s32.totalorder %s248, 3
      %s250 = scalar_select %p249, %s248, 3
      %s251 = smul.addr %s250, 8
      %s252 = scalar_lea.vmem %s5, %s251
      %s253 = smul.u32 2, %s17
      %v255 = vld [vmem:[%s240] sm:$0xff]
      %v256 = vld [vmem:[%s240 + $0x8] sm:$0xf]
      %v257 = vld [vmem:[%s240 + $0xc] sm:$0xff]
      %v258 = vld [vmem:[%s240 + $0x14] sm:$0xf]
      %v259 = vld [vmem:[%s1] sm:$0xf]
      %v260 = vld [vmem:[%s1 + $0x4] sm:$0xf]
      %v261 = vld [vmem:[%s1 + $0x8] sm:$0xf]
      %v262 = vld [vmem:[%s1 + $0xc] sm:$0xf]
      %v263 = vld [vmem:[%s1 + $0x10] sm:$0xf]
      %v264 = vld [vmem:[%s1 + $0x14] sm:$0xf]
      %v265 = vld [vmem:[%s1 + $0x18] sm:$0xf]
      %v266 = vld [vmem:[%s1 + $0x1c] sm:$0xf]
      %v267 = vld [vmem:[%s1 + $0x20] sm:$0xf]
      %v268 = vld [vmem:[%s1 + $0x24] sm:$0xf]
      %v269 = vld [vmem:[%s1 + $0x28] sm:$0xf]
      %v270 = vld [vmem:[%s1 + $0x2c] sm:$0xf]
      %v271 = vld [vmem:[%s1 + $0x30] sm:$0xf]
      %v272 = vld [vmem:[%s1 + $0x34] sm:$0xf]
      %v273 = vld [vmem:[%s1 + $0x38] sm:$0xf]
      %v274 = vld [vmem:[%s1 + $0x3c] sm:$0xf]
      %v275 = vld [vmem:[%s1 + $0x40] sm:$0xf]
      %v276 = vld [vmem:[%s1 + $0x44] sm:$0xf]
      %v277 = vld [vmem:[%s1 + $0x48] sm:$0xf]
      %v278 = vld [vmem:[%s1 + $0x4c] sm:$0xf]
      %v279 = vld [vmem:[%s1 + $0x50] sm:$0xf]
      %v280 = vld [vmem:[%s1 + $0x54] sm:$0xf]
      %v281 = vld [vmem:[%s1 + $0x58] sm:$0xf]
      %v282 = vld [vmem:[%s1 + $0x5c] sm:$0xf]
      %v283 = vld [vmem:[%s1 + $0x60] sm:$0xf]
      %v284 = vld [vmem:[%s1 + $0x64] sm:$0xf]
      %v285 = vld [vmem:[%s1 + $0x68] sm:$0xf]
      %v286 = vld [vmem:[%s1 + $0x6c] sm:$0xf]
      %v287 = vld [vmem:[%s1 + $0x70] sm:$0xf]
      %v288 = vld [vmem:[%s1 + $0x74] sm:$0xf]
      %v289 = vld [vmem:[%s1 + $0x78] sm:$0xf]
      %v290 = vld [vmem:[%s1 + $0x7c] sm:$0xf]
      %v291 = vld [vmem:[%s1 + $0x80] sm:$0xf]
      %v292 = vld [vmem:[%s1 + $0x84] sm:$0xf]
      %v293 = vld [vmem:[%s1 + $0x88] sm:$0xf]
      %v294 = vld [vmem:[%s1 + $0x8c] sm:$0xf]
      %v295 = vld [vmem:[%s2] sm:$0x1]
      %v297 = vperm.slane %v295, 0
      %v303 = vunpack.c.l.b16 %v255
      %v304 = vunpack.c.h.b16 %v255
      %v305 = vunpack.c.l.b16 %v256
      %v306 = vunpack.c.l.b16 %v257
      %v307 = vunpack.c.h.b16 %v257
      %v308 = vunpack.c.l.b16 %v258
      %v309 = vpack.c.b16 %v306, %v303
      %v310 = vpack.c.b16 %v307, %v304
      %v311 = vpack.c.b16 %v308, %v305
      %v350 = vunpack.c.l.b16 %v259
      %v351 = vunpack.c.l.b16 %v260
      %v352 = vunpack.c.l.b16 %v261
      %v353 = vunpack.c.l.b16 %v262
      %v354 = vunpack.c.l.b16 %v263
      %v355 = vunpack.c.l.b16 %v264
      %v356 = vunpack.c.l.b16 %v265
      %v357 = vunpack.c.l.b16 %v266
      %v358 = vunpack.c.l.b16 %v267
      %v359 = vunpack.c.l.b16 %v268
      %v360 = vunpack.c.l.b16 %v269
      %v361 = vunpack.c.l.b16 %v270
      %v362 = vunpack.c.l.b16 %v271
      %v363 = vunpack.c.l.b16 %v272
      %v364 = vunpack.c.l.b16 %v273
      %v365 = vunpack.c.l.b16 %v274
      %v366 = vunpack.c.l.b16 %v275
      %v367 = vunpack.c.l.b16 %v276
      %v368 = vunpack.c.l.b16 %v277
      %v369 = vunpack.c.l.b16 %v278
      %v370 = vunpack.c.l.b16 %v279
      %v371 = vunpack.c.l.b16 %v280
      %v372 = vunpack.c.l.b16 %v281
      %v373 = vunpack.c.l.b16 %v282
      %v374 = vunpack.c.l.b16 %v283
      %v375 = vunpack.c.l.b16 %v284
      %v376 = vunpack.c.l.b16 %v285
      %v377 = vunpack.c.l.b16 %v286
      %v378 = vunpack.c.l.b16 %v287
      %v379 = vunpack.c.l.b16 %v288
      %v380 = vunpack.c.l.b16 %v289
      %v381 = vunpack.c.l.b16 %v290
      %v382 = vunpack.c.l.b16 %v291
      %v383 = vunpack.c.l.b16 %v292
      %v384 = vunpack.c.l.b16 %v293
      %v385 = vunpack.c.l.b16 %v294
      %v386 = vpack.c.b16 %v351, %v350
      %v387 = vpack.c.b16 %v353, %v352
      %v388 = vpack.c.b16 %v355, %v354
      %v389 = vpack.c.b16 %v357, %v356
      %v390 = vpack.c.b16 %v359, %v358
      %v391 = vpack.c.b16 %v361, %v360
      %v392 = vpack.c.b16 %v363, %v362
      %v393 = vpack.c.b16 %v365, %v364
      %v394 = vpack.c.b16 %v367, %v366
      %v395 = vpack.c.b16 %v369, %v368
      %v396 = vpack.c.b16 %v371, %v370
      %v397 = vpack.c.b16 %v373, %v372
      %v398 = vpack.c.b16 %v375, %v374
      %v399 = vpack.c.b16 %v377, %v376
      %v400 = vpack.c.b16 %v379, %v378
      %v401 = vpack.c.b16 %v381, %v380
      %v402 = vpack.c.b16 %v383, %v382
      %v403 = vpack.c.b16 %v385, %v384
      %vm422 = vcmask 261120
      %v424 = vsel %vm422, %v311, 0
      %426 = vmatpush.bf16.msra.mxu0 %v393
      %427 = vmatpush.bf16.msra.mxu0 %v392
      %428 = vmatpush.bf16.msra.mxu0 %v391
      %429 = vmatpush.bf16.msra.mxu0 %v390
      %430 = vmatpush.bf16.msra.mxu0 %v389
      %431 = vmatpush.bf16.msra.mxu0 %v388
      %432 = vmatpush.bf16.msra.mxu0 %v387
      %433 = vmatpush.bf16.msra.mxu0 %v386
      %434 = vmatmul.bf16.gmra.mxu0 %v309
      %v435 = vpop.f32.mrf.mxu0
      %v436 = vadd.f32 %v297, %v435
      %v437 = vpop.f32.mrf.mxu0
      %v438 = vadd.f32 %v297, %v437
      %439 = vdwg.mxu0
      %440 = vmatpush.bf16.msra.mxu0 %v401
      %441 = vmatpush.bf16.msra.mxu0 %v400
      %442 = vmatpush.bf16.msra.mxu0 %v399
      %443 = vmatpush.bf16.msra.mxu0 %v398
      %444 = vmatpush.bf16.msra.mxu0 %v397
      %445 = vmatpush.bf16.msra.mxu0 %v396
      %446 = vmatpush.bf16.msra.mxu0 %v395
      %447 = vmatpush.bf16.msra.mxu0 %v394
      %448 = vmatmul.bf16.gmra.mxu0 %v310
      %v449 = vpop.f32.mrf.mxu0
      %v450 = vadd.f32 %v436, %v449
      %v451 = vpop.f32.mrf.mxu0
      %v452 = vadd.f32 %v438, %v451
      %453 = vdwg.mxu0
      %454 = vmatpush.bf16.msra.mxu0 0
      %455 = vmatpush.bf16.msra.mxu0 0
      %456 = vmatpush.bf16.msra.mxu0 0
      %457 = vmatpush.bf16.msra.mxu0 0
      %458 = vmatpush.bf16.msra.mxu0 0
      %459 = vmatpush.bf16.msra.mxu0 0
      %460 = vmatpush.bf16.msra.mxu0 %v403
      %461 = vmatpush.bf16.msra.mxu0 %v402
      %462 = vmatmul.bf16.gmra.mxu0 %v424
      %v463 = vpop.f32.mrf.mxu0
      %v464 = vadd.f32 %v450, %v463
      %v465 = vpop.f32.mrf.mxu0
      %v466 = vadd.f32 %v452, %v465
      %467 = vdwg.mxu0
      %v468 = vsel %vm422, %v464, 0.0
      %v469 = vsel %vm422, %v466, 0.0
      %v470 = vadd.f32 %v468, %v469
      %v471 = vrot.slane %v470, 4
      %v472 = vadd.f32 %v470, %v471
      %v473 = vrot.slane %v472, 2
      %v474 = vadd.f32 %v472, %v473
      %v475 = vrot.slane %v474, 1
      %v476 = vadd.f32 %v474, %v475
      %v477 = vrcp.pop 16.0
      %v478 = vmul.f32 16.0, %v477
      %v479 = vsub.f32 1.0, %v478
      %v480 = vmul.f32 %v477, %v479
      %v481 = vadd.f32 %v477, %v480
      %vm482 = vweird.f32 %v477
      %v483 = vsel %vm482, %v477, %v481
      %v484 = vmul.f32 %v476, %v483
      %v485 = vsub.f32 %v464, %v484
      %v486 = vsub.f32 %v466, %v484
      %v487 = vmul.f32 %v485, %v485
      %v488 = vmul.f32 %v486, %v486
      %v489 = vsel %vm422, %v487, 0.0
      %v490 = vsel %vm422, %v488, 0.0
      %v491 = vadd.f32 %v489, %v490
      %v492 = vrot.slane %v491, 4
      %v493 = vadd.f32 %v491, %v492
      %v494 = vrot.slane %v493, 2
      %v495 = vadd.f32 %v493, %v494
      %v496 = vrot.slane %v495, 1
      %v497 = vadd.f32 %v495, %v496
      %v498 = vmul.f32 %v497, %v483
      %v499 = vadd.f32 %v498, 1e-05
      %v500 = vrsqrt.pop %v499
      %v501 = vmul.f32 %v500, %v499
      %v502 = vmul.f32 %v501, %v500
      %v503 = vmul.f32 0.5, %v502
      %v504 = vsub.f32 1.5, %v503
      %v505 = vmul.f32 %v500, %v504
      %vm506 = vweird.f32 %v499
      %vm507 = vweird.f32 %v500
      %vm508 = vmor %vm506, %vm507
      %v509 = vsel %vm508, %v500, %v505
      %v510 = vmul.f32 %v485, %v509
      %v511 = vmul.f32 %v486, %v509
      %s512 = sld [smem:[#allocation2]]
      %vm513 = vcmp.ge.f32.partialorder %v510, 0.0
      %vm514 = vcmp.ge.f32.partialorder %v511, 0.0
      %v515 = vstv %s512
      %v516 = vmul.f32 %v515, %v510
      %v517 = vmul.f32 %v515, %v511
      %v518 = vsel %vm513, %v510, %v516
      %v519 = vsel %vm514, %v511, %v517
      %v520 = vld [vmem:[%s246] sm:$0xff]
      %v521 = vld [vmem:[%s246 + $0x8] sm:$0xff]
      %v522 = vadd.f32 %v518, %v520
      %v523 = vadd.f32 %v519, %v521
      %524 = vst.msk [vmem:[%s252] sm:$0xff] %vm422, %v522
      %525 = vst.msk [vmem:[%s252 + $0x8] sm:$0xff] %vm422, %v523
      %s526 = smul.u32 2, %s17
      %p527 = scmp.lt.s32.totalorder %s526, 3
      %s528 = scalar_select %p527, %s526, 3
      %s529 = smul.addr %s528, 8
      %s530 = scalar_lea.vmem %s5, %s529
      // Predicated region
      $region41: #{reconstruction_forward.18} parent=39 // pred_check
        %p531 = pneg %p150
      $region42: #{reconstruction_forward.18} parent=39 // pred_check_branch
        %533 = sbr.rel (%p531) target = $region44
      $region43: #{reconstruction_forward.18} parent=39 // pred_region
        %s534 = smul.u32 2, %s17
      $region44: #{reconstruction_forward.18} parent=39 // pred_fallthru
        _
    $region40: #{reconstruction_forward.18} parent=5 // pred_fallthru
      _
    %p535 = scmp.le.s32.totalorder 2, %s12
    // Predicated region
    $region45: #{reconstruction_forward.18} parent=5 // pred_check
      %p536 = pneg %p535
    $region46: #{reconstruction_forward.18} parent=5 // pred_check_branch
      %538 = sbr.rel (%p536) target = $region48
    $region47: #{reconstruction_forward.18} parent=5 // pred_region
      %s539 = ssub.s32 %s12, 2
      // Predicated region
      $region49: #{reconstruction_forward.18} parent=47 // pred_check
        %p540 = pneg %p156
      $region50: #{reconstruction_forward.18} parent=47 // pred_check_branch
        %542 = sbr.rel (%p540) target = $region52
      $region51: #{reconstruction_forward.18} parent=47 // pred_region
        %s543 = smul.u32 2, %s18
        %p544 = scmp.lt.s32.totalorder %s543, 3
        %s545 = scalar_select %p544, %s543, 3
        %s546 = smul.addr %s545, 8
        %s547 = scalar_lea.vmem %s5, %s546
      $region52: #{reconstruction_forward.18} parent=47 // pred_fallthru
        _
    $region48: #{reconstruction_forward.18} parent=5 // pred_fallthru
      _
  $region6: #{reconstruction_forward.18} parent=0 // loop_footer
    %s16 = sadd.s32 1, %s12
  $region7: #{reconstruction_forward.18} parent=0 // loop_footer_branch
    %11 = sbr.rel target = $region3
  $region8: #{reconstruction_forward.18} parent=0 // loop_exit
    _

// kernel: reconstruction_forward.20
$region0: #{reconstruction_forward.20}
  #allocation0 [shape = 'u32[]', space=smem, size = 0x4, offset = 0x4, fixed_abs, tag = 'smem constant byte address 0x4 - core index']
  #allocation1 [shape = 'u32[72,128]{1,0:T(1,128)}', space=vmem, size = 0x9000, scoped, tag = 'internal scratch']
  #allocation2 [shape = 'f32[1]{0:T(128)S(6)}', space=smem, size = 0x200, scoped, tag = 'scoped memory for reconstruction_forward.20']
  %s0 = inlined_call_operand.vmem [shape: bf16[32,288], index: 0, kind: input, shape index: {}]
  %s1 = inlined_call_operand.vmem [shape: bf16[288,64], index: 1, kind: input, shape index: {}]
  %s2 = inlined_call_operand.vmem [shape: f32[1,64], index: 2, kind: input, shape index: {}]
  %s3 = inlined_call_operand.<no memory space> [shape: f32[1], index: 3, kind: input, shape index: {}]
  %s4 = inlined_call_operand.vmem [shape: f32[32,64], index: 4, kind: output, shape index: {}]
  %s5 = sld [smem:[#allocation0]]
  $region49: #{reconstruction_forward.20} parent=0
    _
  %s7 = ssub.s32 1, %s5
  %s8 = scalar_select 0, %s7, %s5
  %9 = sst [smem:[#allocation2]] %s3
  loop: start=0, step=1, limit=4
  $region2: #{reconstruction_forward.20} parent=0 // loop_pre_header
    _
  $region3: #{reconstruction_forward.20} parent=0 // loop_header
    %s11 = sphi 0, %s15
    %p12 = scmp.ge.s32.totalorder %s11, 4
    %s21 = sphi 0, %s23
    %s24 = sphi 0, %s21
    %s25 = sphi 0, %s24
    %s41 = sphi 0, %s25
    %s45 = sphi 0, %s45
    %s47 = sphi 0, %s45
    %s48 = sphi 0, %s47
    %s62 = sphi 0, %s48
    %s66 = sphi 0, %s66
    %s68 = sphi 0, %s66
    %s69 = sphi 0, %s68
    %s83 = sphi 0, %s69
    %s87 = sphi 0, %s87
    %s89 = sphi 0, %s87
    %s90 = sphi 0, %s89
    %s104 = sphi 0, %s90
    %s110 = sphi 0, %s112
    %s113 = sphi 0, %s110
    %s114 = sphi 0, %s113
    %s130 = sphi 0, %s114
  $region4: #{reconstruction_forward.20} parent=0 // loop_header_branch
    %14 = sbr.rel (%p12) target = $region8
  $region5: #{reconstruction_forward.20} parent=0 // loop_body
    %s16 = ssub.s32 %s11, 1
    %s17 = ssub.s32 %s11, 2
    %s18 = sadd.s32 %s11, 1
    %s19 = ssub.s32 %s11, %s18
    %p20 = scmp.eq.s32.totalorder %s19, 0
    %s22 = sadd.s32 %s21, 1
    %s23 = scalar_select %p20, %s21, %s22
    %p26 = pneg %p20
    %p27 = scmp.eq.s32.totalorder %s11, 1
    %p28 = por %p26, %p27
    %p29 = scmp.ne.s32.totalorder %s21, %s24
    %p30 = scmp.eq.s32.totalorder %s11, 0
    %p31 = por %p29, %p30
    %p32 = scmp.ne.s32.totalorder %s21, %s24
    %p33 = scmp.eq.s32.totalorder %s16, 1
    %p34 = por %p32, %p33
    %p35 = scmp.ne.s32.totalorder %s24, %s25
    %p36 = scmp.eq.s32.totalorder %s16, 0
    %p37 = por %p35, %p36
    %p38 = scmp.ne.s32.totalorder %s24, %s25
    %p39 = scmp.eq.s32.totalorder %s17, 1
    %p40 = por %p38, %p39
    %p42 = scmp.ne.s32.totalorder %s25, %s41
    %p43 = scmp.eq.s32.totalorder %s17, 0
    %p44 = por %p42, %p43
    %s46 = sadd.s32 %s45, 1
    %p49 = scmp.eq.s32.totalorder %s11, 1
    %p50 = scmp.ne.s32.totalorder %s45, %s47
    %p51 = scmp.eq.s32.totalorder %s11, 0
    %p52 = por %p50, %p51
    %p53 = scmp.ne.s32.totalorder %s45, %s47
    %p54 = scmp.eq.s32.totalorder %s16, 1
    %p55 = por %p53, %p54
    %p56 = scmp.ne.s32.totalorder %s47, %s48
    %p57 = scmp.eq.s32.totalorder %s16, 0
    %p58 = por %p56, %p57
    %p59 = scmp.ne.s32.totalorder %s47, %s48
    %p60 = scmp.eq.s32.totalorder %s17, 1
    %p61 = por %p59, %p60
    %p63 = scmp.ne.s32.totalorder %s48, %s62
    %p64 = scmp.eq.s32.totalorder %s17, 0
    %p65 = por %p63, %p64
    %s67 = sadd.s32 %s66, 1
    %p70 = scmp.eq.s32.totalorder %s11, 1
    %p71 = scmp.ne.s32.totalorder %s66, %s68
    %p72 = scmp.eq.s32.totalorder %s11, 0
    %p73 = por %p71, %p72
    %p74 = scmp.ne.s32.totalorder %s66, %s68
    %p75 = scmp.eq.s32.totalorder %s16, 1
    %p76 = por %p74, %p75
    %p77 = scmp.ne.s32.totalorder %s68, %s69
    %p78 = scmp.eq.s32.totalorder %s16, 0
    %p79 = por %p77, %p78
    %p80 = scmp.ne.s32.totalorder %s68, %s69
    %p81 = scmp.eq.s32.totalorder %s17, 1
    %p82 = por %p80, %p81
    %p84 = scmp.ne.s32.totalorder %s69, %s83
    %p85 = scmp.eq.s32.totalorder %s17, 0
    %p86 = por %p84, %p85
    %s88 = sadd.s32 %s87, 1
    %p91 = scmp.eq.s32.totalorder %s11, 1
    %p92 = scmp.ne.s32.totalorder %s87, %s89
    %p93 = scmp.eq.s32.totalorder %s11, 0
    %p94 = por %p92, %p93
    %p95 = scmp.ne.s32.totalorder %s87, %s89
    %p96 = scmp.eq.s32.totalorder %s16, 1
    %p97 = por %p95, %p96
    %p98 = scmp.ne.s32.totalorder %s89, %s90
    %p99 = scmp.eq.s32.totalorder %s16, 0
    %p100 = por %p98, %p99
    %p101 = scmp.ne.s32.totalorder %s89, %s90
    %p102 = scmp.eq.s32.totalorder %s17, 1
    %p103 = por %p101, %p102
    %p105 = scmp.ne.s32.totalorder %s90, %s104
    %p106 = scmp.eq.s32.totalorder %s17, 0
    %p107 = por %p105, %p106
    %s108 = ssub.s32 %s11, %s18
    %p109 = scmp.eq.s32.totalorder %s108, 0
    %s111 = sadd.s32 %s110, 1
    %s112 = scalar_select %p109, %s110, %s111
    %p115 = pneg %p109
    %p116 = scmp.eq.s32.totalorder %s11, 1
    %p117 = por %p115, %p116
    %p118 = scmp.ne.s32.totalorder %s110, %s113
    %p119 = scmp.eq.s32.totalorder %s11, 0
    %p120 = por %p118, %p119
    %p121 = scmp.ne.s32.totalorder %s110, %s113
    %p122 = scmp.eq.s32.totalorder %s16, 1
    %p123 = por %p121, %p122
    %p124 = scmp.ne.s32.totalorder %s113, %s114
    %p125 = scmp.eq.s32.totalorder %s16, 0
    %p126 = por %p124, %p125
    %p127 = scmp.ne.s32.totalorder %s113, %s114
    %p128 = scmp.eq.s32.totalorder %s17, 1
    %p129 = por %p127, %p128
    %p131 = scmp.ne.s32.totalorder %s114, %s130
    %p132 = scmp.eq.s32.totalorder %s17, 0
    %p133 = por %p131, %p132
    %p134 = scmp.le.s32.totalorder 1, %s11
    %p135 = scmp.lt.s32.totalorder %s11, 3
    %p136 = pnand %p134, %p135
    %p137 = pneg %p136
    // Predicated region
    $region9: #{reconstruction_forward.20} parent=5 // pred_check
      _
    $region10: #{reconstruction_forward.20} parent=5 // pred_check_branch
      %139 = sbr.rel (%p136) target = $region12
    $region11: #{reconstruction_forward.20} parent=5 // pred_region
      %s140 = ssub.s32 %s11, 1
      // Predicated region
      $region13: #{reconstruction_forward.20} parent=11 // pred_check
        %p141 = pneg %p58
      $region14: #{reconstruction_forward.20} parent=11 // pred_check_branch
        %143 = sbr.rel (%p141) target = $region16
      $region15: #{reconstruction_forward.20} parent=11 // pred_region
        _
      $region16: #{reconstruction_forward.20} parent=11 // pred_fallthru
        _
      // Predicated region
      $region17: #{reconstruction_forward.20} parent=11 // pred_check
        %p144 = pneg %p79
      $region18: #{reconstruction_forward.20} parent=11 // pred_check_branch
        %146 = sbr.rel (%p144) target = $region20
      $region19: #{reconstruction_forward.20} parent=11 // pred_region
        _
      $region20: #{reconstruction_forward.20} parent=11 // pred_fallthru
        _
      // Predicated region
      $region21: #{reconstruction_forward.20} parent=11 // pred_check
        %p147 = pneg %p100
      $region22: #{reconstruction_forward.20} parent=11 // pred_check_branch
        %149 = sbr.rel (%p147) target = $region24
      $region23: #{reconstruction_forward.20} parent=11 // pred_region
        _
      $region24: #{reconstruction_forward.20} parent=11 // pred_fallthru
        _
    $region12: #{reconstruction_forward.20} parent=5 // pred_fallthru
      _
    %p150 = scmp.lt.s32.totalorder %s11, 2
    // Predicated region
    $region25: #{reconstruction_forward.20} parent=5 // pred_check
      %p151 = pneg %p150
    $region26: #{reconstruction_forward.20} parent=5 // pred_check_branch
      %153 = sbr.rel (%p151) target = $region28
    $region27: #{reconstruction_forward.20} parent=5 // pred_region
      // Predicated region
      $region29: #{reconstruction_forward.20} parent=27 // pred_check
        %p154 = pneg %p31
      $region30: #{reconstruction_forward.20} parent=27 // pred_check_branch
        %156 = sbr.rel (%p154) target = $region32
      $region31: #{reconstruction_forward.20} parent=27 // pred_region
        %s157 = smul.u32 2, %s11
        %p158 = scmp.lt.s32.totalorder %s157, 3
        %s159 = scalar_select %p158, %s157, 3
        %s160 = smul.addr %s159, 3
        %s161 = smul.addr %s160, 4
        %s162 = scalar_lea.vmem %s0, %s161
        %s163 = smul.u32 2, %s11
      $region32: #{reconstruction_forward.20} parent=27 // pred_fallthru
        _
    $region28: #{reconstruction_forward.20} parent=5 // pred_fallthru
      _
    %p164 = scmp.le.s32.totalorder 1, %s11
    %p165 = scmp.lt.s32.totalorder %s11, 3
    %p166 = pnand %p164, %p165
    %p167 = pneg %p166
    // Predicated region
    $region33: #{reconstruction_forward.20} parent=5 // pred_check
      _
    $region34: #{reconstruction_forward.20} parent=5 // pred_check_branch
      %169 = sbr.rel (%p166) target = $region36
    $region35: #{reconstruction_forward.20} parent=5 // pred_region
      %s170 = ssub.s32 %s11, 1
      %s171 = smul.u32 2, %s16
      %p172 = scmp.lt.s32.totalorder %s171, 3
      %s173 = scalar_select %p172, %s171, 3
      %s174 = smul.addr %s173, 3
      %s175 = smul.addr %s174, 4
      %s176 = scalar_lea.vmem %s0, %s175
      %p177 = pneg %p37
      %p178 = pneg %p34
      %p179 = pneg %p58
      %p180 = pneg %p55
      %p181 = pneg %p79
      %p182 = pneg %p76
      %p183 = pneg %p100
      %p184 = pneg %p97
      %p185 = pneg %p126
      %p186 = pneg %p123
      %s187 = smul.u32 2, %s16
      %p188 = scmp.lt.s32.totalorder %s187, 3
      %s189 = scalar_select %p188, %s187, 3
      %s190 = smul.addr %s189, 8
      %s191 = scalar_lea.vmem %s4, %s190
      %s192 = smul.u32 2, %s16
      %p193 = scmp.lt.s32.totalorder %s192, 3
      %s194 = scalar_select %p193, %s192, 3
      %s195 = smul.addr %s194, 3
      %s196 = smul.addr %s195, 4
      %s197 = scalar_lea.vmem %s0, %s196
      %s198 = smul.u32 2, %s16
      %s199 = smul.u32 2, %s16
      %p200 = scmp.lt.s32.totalorder %s199, 3
      %s201 = scalar_select %p200, %s199, 3
      %s202 = smul.addr %s201, 8
      %s203 = scalar_lea.vmem %s4, %s202
      %s204 = smul.u32 2, %s16
      %v206 = vld [vmem:[%s197] sm:$0xff]
      %v207 = vld [vmem:[%s197 + $0x8] sm:$0xf]
      %v208 = vld [vmem:[%s197 + $0xc] sm:$0xff]
      %v209 = vld [vmem:[%s197 + $0x14] sm:$0xf]
      %v210 = vld [vmem:[%s1] sm:$0xf]
      %v211 = vld [vmem:[%s1 + $0x4] sm:$0xf]
      %v212 = vld [vmem:[%s1 + $0x8] sm:$0xf]
      %v213 = vld [vmem:[%s1 + $0xc] sm:$0xf]
      %v214 = vld [vmem:[%s1 + $0x10] sm:$0xf]
      %v215 = vld [vmem:[%s1 + $0x14] sm:$0xf]
      %v216 = vld [vmem:[%s1 + $0x18] sm:$0xf]
      %v217 = vld [vmem:[%s1 + $0x1c] sm:$0xf]
      %v218 = vld [vmem:[%s1 + $0x20] sm:$0xf]
      %v219 = vld [vmem:[%s1 + $0x24] sm:$0xf]
      %v220 = vld [vmem:[%s1 + $0x28] sm:$0xf]
      %v221 = vld [vmem:[%s1 + $0x2c] sm:$0xf]
      %v222 = vld [vmem:[%s1 + $0x30] sm:$0xf]
      %v223 = vld [vmem:[%s1 + $0x34] sm:$0xf]
      %v224 = vld [vmem:[%s1 + $0x38] sm:$0xf]
      %v225 = vld [vmem:[%s1 + $0x3c] sm:$0xf]
      %v226 = vld [vmem:[%s1 + $0x40] sm:$0xf]
      %v227 = vld [vmem:[%s1 + $0x44] sm:$0xf]
      %v228 = vld [vmem:[%s1 + $0x48] sm:$0xf]
      %v229 = vld [vmem:[%s1 + $0x4c] sm:$0xf]
      %v230 = vld [vmem:[%s1 + $0x50] sm:$0xf]
      %v231 = vld [vmem:[%s1 + $0x54] sm:$0xf]
      %v232 = vld [vmem:[%s1 + $0x58] sm:$0xf]
      %v233 = vld [vmem:[%s1 + $0x5c] sm:$0xf]
      %v234 = vld [vmem:[%s1 + $0x60] sm:$0xf]
      %v235 = vld [vmem:[%s1 + $0x64] sm:$0xf]
      %v236 = vld [vmem:[%s1 + $0x68] sm:$0xf]
      %v237 = vld [vmem:[%s1 + $0x6c] sm:$0xf]
      %v238 = vld [vmem:[%s1 + $0x70] sm:$0xf]
      %v239 = vld [vmem:[%s1 + $0x74] sm:$0xf]
      %v240 = vld [vmem:[%s1 + $0x78] sm:$0xf]
      %v241 = vld [vmem:[%s1 + $0x7c] sm:$0xf]
      %v242 = vld [vmem:[%s1 + $0x80] sm:$0xf]
      %v243 = vld [vmem:[%s1 + $0x84] sm:$0xf]
      %v244 = vld [vmem:[%s1 + $0x88] sm:$0xf]
      %v245 = vld [vmem:[%s1 + $0x8c] sm:$0xf]
      %v246 = vld [vmem:[%s2] sm:$0x1]
      %v248 = vperm.slane %v246, 0
      %v254 = vunpack.c.l.b16 %v206
      %v255 = vunpack.c.h.b16 %v206
      %v256 = vunpack.c.l.b16 %v207
      %v257 = vunpack.c.l.b16 %v208
      %v258 = vunpack.c.h.b16 %v208
      %v259 = vunpack.c.l.b16 %v209
      %v260 = vpack.c.b16 %v257, %v254
      %v261 = vpack.c.b16 %v258, %v255
      %v262 = vpack.c.b16 %v259, %v256
      %v301 = vunpack.c.l.b16 %v210
      %v302 = vunpack.c.l.b16 %v211
      %v303 = vunpack.c.l.b16 %v212
      %v304 = vunpack.c.l.b16 %v213
      %v305 = vunpack.c.l.b16 %v214
      %v306 = vunpack.c.l.b16 %v215
      %v307 = vunpack.c.l.b16 %v216
      %v308 = vunpack.c.l.b16 %v217
      %v309 = vunpack.c.l.b16 %v218
      %v310 = vunpack.c.l.b16 %v219
      %v311 = vunpack.c.l.b16 %v220
      %v312 = vunpack.c.l.b16 %v221
      %v313 = vunpack.c.l.b16 %v222
      %v314 = vunpack.c.l.b16 %v223
      %v315 = vunpack.c.l.b16 %v224
      %v316 = vunpack.c.l.b16 %v225
      %v317 = vunpack.c.l.b16 %v226
      %v318 = vunpack.c.l.b16 %v227
      %v319 = vunpack.c.l.b16 %v228
      %v320 = vunpack.c.l.b16 %v229
      %v321 = vunpack.c.l.b16 %v230
      %v322 = vunpack.c.l.b16 %v231
      %v323 = vunpack.c.l.b16 %v232
      %v324 = vunpack.c.l.b16 %v233
      %v325 = vunpack.c.l.b16 %v234
      %v326 = vunpack.c.l.b16 %v235
      %v327 = vunpack.c.l.b16 %v236
      %v328 = vunpack.c.l.b16 %v237
      %v329 = vunpack.c.l.b16 %v238
      %v330 = vunpack.c.l.b16 %v239
      %v331 = vunpack.c.l.b16 %v240
      %v332 = vunpack.c.l.b16 %v241
      %v333 = vunpack.c.l.b16 %v242
      %v334 = vunpack.c.l.b16 %v243
      %v335 = vunpack.c.l.b16 %v244
      %v336 = vunpack.c.l.b16 %v245
      %v337 = vpack.c.b16 %v302, %v301
      %v338 = vpack.c.b16 %v304, %v303
      %v339 = vpack.c.b16 %v306, %v305
      %v340 = vpack.c.b16 %v308, %v307
      %v341 = vpack.c.b16 %v310, %v309
      %v342 = vpack.c.b16 %v312, %v311
      %v343 = vpack.c.b16 %v314, %v313
      %v344 = vpack.c.b16 %v316, %v315
      %v345 = vpack.c.b16 %v318, %v317
      %v346 = vpack.c.b16 %v320, %v319
      %v347 = vpack.c.b16 %v322, %v321
      %v348 = vpack.c.b16 %v324, %v323
      %v349 = vpack.c.b16 %v326, %v325
      %v350 = vpack.c.b16 %v328, %v327
      %v351 = vpack.c.b16 %v330, %v329
      %v352 = vpack.c.b16 %v332, %v331
      %v353 = vpack.c.b16 %v334, %v333
      %v354 = vpack.c.b16 %v336, %v335
      %vm373 = vcmask 261120
      %v375 = vsel %vm373, %v262, 0
      %377 = vmatpush.bf16.msra.mxu0 %v344
      %378 = vmatpush.bf16.msra.mxu0 %v343
      %379 = vmatpush.bf16.msra.mxu0 %v342
      %380 = vmatpush.bf16.msra.mxu0 %v341
      %381 = vmatpush.bf16.msra.mxu0 %v340
      %382 = vmatpush.bf16.msra.mxu0 %v339
      %383 = vmatpush.bf16.msra.mxu0 %v338
      %384 = vmatpush.bf16.msra.mxu0 %v337
      %385 = vmatmul.bf16.gmra.mxu0 %v260
      %v386 = vpop.f32.mrf.mxu0
      %v387 = vadd.f32 %v248, %v386
      %v388 = vpop.f32.mrf.mxu0
      %v389 = vadd.f32 %v248, %v388
      %390 = vdwg.mxu0
      %391 = vmatpush.bf16.msra.mxu0 %v352
      %392 = vmatpush.bf16.msra.mxu0 %v351
      %393 = vmatpush.bf16.msra.mxu0 %v350
      %394 = vmatpush.bf16.msra.mxu0 %v349
      %395 = vmatpush.bf16.msra.mxu0 %v348
      %396 = vmatpush.bf16.msra.mxu0 %v347
      %397 = vmatpush.bf16.msra.mxu0 %v346
      %398 = vmatpush.bf16.msra.mxu0 %v345
      %399 = vmatmul.bf16.gmra.mxu0 %v261
      %v400 = vpop.f32.mrf.mxu0
      %v401 = vadd.f32 %v387, %v400
      %v402 = vpop.f32.mrf.mxu0
      %v403 = vadd.f32 %v389, %v402
      %404 = vdwg.mxu0
      %405 = vmatpush.bf16.msra.mxu0 0
      %406 = vmatpush.bf16.msra.mxu0 0
      %407 = vmatpush.bf16.msra.mxu0 0
      %408 = vmatpush.bf16.msra.mxu0 0
      %409 = vmatpush.bf16.msra.mxu0 0
      %410 = vmatpush.bf16.msra.mxu0 0
      %411 = vmatpush.bf16.msra.mxu0 %v354
      %412 = vmatpush.bf16.msra.mxu0 %v353
      %413 = vmatmul.bf16.gmra.mxu0 %v375
      %v414 = vpop.f32.mrf.mxu0
      %v415 = vadd.f32 %v401, %v414
      %v416 = vpop.f32.mrf.mxu0
      %v417 = vadd.f32 %v403, %v416
      %418 = vdwg.mxu0
      %vm419 = vcmask 523264
      %v420 = vsel %vm419, %v415, 0.0
      %v421 = vsel %vm419, %v417, 0.0
      %v422 = vadd.f32 %v420, %v421
      %v423 = vrot.slane %v422, 4
      %v424 = vadd.f32 %v422, %v423
      %v425 = vrot.slane %v424, 2
      %v426 = vadd.f32 %v424, %v425
      %v427 = vrot.slane %v426, 1
      %v428 = vadd.f32 %v426, %v427
      %v429 = vrcp.pop 16.0
      %v430 = vmul.f32 16.0, %v429
      %v431 = vsub.f32 1.0, %v430
      %v432 = vmul.f32 %v429, %v431
      %v433 = vadd.f32 %v429, %v432
      %vm434 = vweird.f32 %v429
      %v435 = vsel %vm434, %v429, %v433
      %v436 = vmul.f32 %v428, %v435
      %v437 = vsub.f32 %v415, %v436
      %v438 = vsub.f32 %v417, %v436
      %v439 = vmul.f32 %v437, %v437
      %v440 = vmul.f32 %v438, %v438
      %v441 = vsel %vm419, %v439, 0.0
      %v442 = vsel %vm419, %v440, 0.0
      %v443 = vadd.f32 %v441, %v442
      %v444 = vrot.slane %v443, 4
      %v445 = vadd.f32 %v443, %v444
      %v446 = vrot.slane %v445, 2
      %v447 = vadd.f32 %v445, %v446
      %v448 = vrot.slane %v447, 1
      %v449 = vadd.f32 %v447, %v448
      %v450 = vmul.f32 %v449, %v435
      %v451 = vadd.f32 %v450, 1e-05
      %v452 = vrsqrt.pop %v451
      %v453 = vmul.f32 %v452, %v451
      %v454 = vmul.f32 %v453, %v452
      %v455 = vmul.f32 0.5, %v454
      %v456 = vsub.f32 1.5, %v455
      %v457 = vmul.f32 %v452, %v456
      %vm458 = vweird.f32 %v451
      %vm459 = vweird.f32 %v452
      %vm460 = vmor %vm458, %vm459
      %v461 = vsel %vm460, %v452, %v457
      %v462 = vmul.f32 %v437, %v461
      %v463 = vmul.f32 %v438, %v461
      %s464 = sld [smem:[#allocation2]]
      %vm465 = vcmp.ge.f32.partialorder %v462, 0.0
      %vm466 = vcmp.ge.f32.partialorder %v463, 0.0
      %v467 = vstv %s464
      %v468 = vmul.f32 %v467, %v462
      %v469 = vmul.f32 %v467, %v463
      %v470 = vsel %vm465, %v462, %v468
      %v471 = vsel %vm466, %v463, %v469
      %472 = vst.msk [vmem:[%s203] sm:$0xff] %vm419, %v470
      %473 = vst.msk [vmem:[%s203 + $0x8] sm:$0xff] %vm419, %v471
      %s474 = smul.u32 2, %s16
      %p475 = scmp.lt.s32.totalorder %s474, 3
      %s476 = scalar_select %p475, %s474, 3
      %s477 = smul.addr %s476, 8
      %s478 = scalar_lea.vmem %s4, %s477
      // Predicated region
      $region37: #{reconstruction_forward.20} parent=35 // pred_check
        %p479 = pneg %p123
      $region38: #{reconstruction_forward.20} parent=35 // pred_check_branch
        %481 = sbr.rel (%p479) target = $region40
      $region39: #{reconstruction_forward.20} parent=35 // pred_region
        %s482 = smul.u32 2, %s16
      $region40: #{reconstruction_forward.20} parent=35 // pred_fallthru
        _
    $region36: #{reconstruction_forward.20} parent=5 // pred_fallthru
      _
    %p483 = scmp.le.s32.totalorder 2, %s11
    // Predicated region
    $region41: #{reconstruction_forward.20} parent=5 // pred_check
      %p484 = pneg %p483
    $region42: #{reconstruction_forward.20} parent=5 // pred_check_branch
      %486 = sbr.rel (%p484) target = $region44
    $region43: #{reconstruction_forward.20} parent=5 // pred_region
      %s487 = ssub.s32 %s11, 2
      // Predicated region
      $region45: #{reconstruction_forward.20} parent=43 // pred_check
        %p488 = pneg %p129
      $region46: #{reconstruction_forward.20} parent=43 // pred_check_branch
        %490 = sbr.rel (%p488) target = $region48
      $region47: #{reconstruction_forward.20} parent=43 // pred_region
        %s491 = smul.u32 2, %s17
        %p492 = scmp.lt.s32.totalorder %s491, 3
        %s493 = scalar_select %p492, %s491, 3
        %s494 = smul.addr %s493, 8
        %s495 = scalar_lea.vmem %s4, %s494
      $region48: #{reconstruction_forward.20} parent=43 // pred_fallthru
        _
    $region44: #{reconstruction_forward.20} parent=5 // pred_fallthru
      _
  $region6: #{reconstruction_forward.20} parent=0 // loop_footer
    %s15 = sadd.s32 1, %s11
  $region7: #{reconstruction_forward.20} parent=0 // loop_footer_branch
    %10 = sbr.rel target = $region3
  $region8: #{reconstruction_forward.20} parent=0 // loop_exit
    _

// kernel: reconstruction_forward.19
$region0: #{reconstruction_forward.19}
  #allocation0 [shape = 'u32[]', space=smem, size = 0x4, offset = 0x4, fixed_abs, tag = 'smem constant byte address 0x4 - core index']
  #allocation1 [shape = 'u32[72,128]{1,0:T(1,128)}', space=vmem, size = 0x9000, scoped, tag = 'internal scratch']
  %s0 = inlined_call_operand.vmem [shape: bf16[32,32], index: 0, kind: input, shape index: {}]
  %s1 = inlined_call_operand.vmem [shape: bf16[32,64], index: 1, kind: input, shape index: {}]
  %s2 = inlined_call_operand.vmem [shape: f32[1,64], index: 2, kind: input, shape index: {}]
  %s3 = inlined_call_operand.vmem [shape: f32[32,64], index: 3, kind: output, shape index: {}]
  %s4 = sld [smem:[#allocation0]]
  $region45: #{reconstruction_forward.19} parent=0
    _
  %s6 = ssub.s32 1, %s4
  %s7 = scalar_select 0, %s6, %s4
  loop: start=0, step=1, limit=4
  $region2: #{reconstruction_forward.19} parent=0 // loop_pre_header
    _
  $region3: #{reconstruction_forward.19} parent=0 // loop_header
    %s9 = sphi 0, %s13
    %p10 = scmp.ge.s32.totalorder %s9, 4
    %s19 = sphi 0, %s21
    %s22 = sphi 0, %s19
    %s23 = sphi 0, %s22
    %s39 = sphi 0, %s23
    %s43 = sphi 0, %s43
    %s45 = sphi 0, %s43
    %s46 = sphi 0, %s45
    %s60 = sphi 0, %s46
    %s64 = sphi 0, %s64
    %s66 = sphi 0, %s64
    %s67 = sphi 0, %s66
    %s81 = sphi 0, %s67
    %s87 = sphi 0, %s89
    %s90 = sphi 0, %s87
    %s91 = sphi 0, %s90
    %s107 = sphi 0, %s91
  $region4: #{reconstruction_forward.19} parent=0 // loop_header_branch
    %12 = sbr.rel (%p10) target = $region8
  $region5: #{reconstruction_forward.19} parent=0 // loop_body
    %s14 = ssub.s32 %s9, 1
    %s15 = ssub.s32 %s9, 2
    %s16 = sadd.s32 %s9, 1
    %s17 = ssub.s32 %s9, %s16
    %p18 = scmp.eq.s32.totalorder %s17, 0
    %s20 = sadd.s32 %s19, 1
    %s21 = scalar_select %p18, %s19, %s20
    %p24 = pneg %p18
    %p25 = scmp.eq.s32.totalorder %s9, 1
    %p26 = por %p24, %p25
    %p27 = scmp.ne.s32.totalorder %s19, %s22
    %p28 = scmp.eq.s32.totalorder %s9, 0
    %p29 = por %p27, %p28
    %p30 = scmp.ne.s32.totalorder %s19, %s22
    %p31 = scmp.eq.s32.totalorder %s14, 1
    %p32 = por %p30, %p31
    %p33 = scmp.ne.s32.totalorder %s22, %s23
    %p34 = scmp.eq.s32.totalorder %s14, 0
    %p35 = por %p33, %p34
    %p36 = scmp.ne.s32.totalorder %s22, %s23
    %p37 = scmp.eq.s32.totalorder %s15, 1
    %p38 = por %p36, %p37
    %p40 = scmp.ne.s32.totalorder %s23, %s39
    %p41 = scmp.eq.s32.totalorder %s15, 0
    %p42 = por %p40, %p41
    %s44 = sadd.s32 %s43, 1
    %p47 = scmp.eq.s32.totalorder %s9, 1
    %p48 = scmp.ne.s32.totalorder %s43, %s45
    %p49 = scmp.eq.s32.totalorder %s9, 0
    %p50 = por %p48, %p49
    %p51 = scmp.ne.s32.totalorder %s43, %s45
    %p52 = scmp.eq.s32.totalorder %s14, 1
    %p53 = por %p51, %p52
    %p54 = scmp.ne.s32.totalorder %s45, %s46
    %p55 = scmp.eq.s32.totalorder %s14, 0
    %p56 = por %p54, %p55
    %p57 = scmp.ne.s32.totalorder %s45, %s46
    %p58 = scmp.eq.s32.totalorder %s15, 1
    %p59 = por %p57, %p58
    %p61 = scmp.ne.s32.totalorder %s46, %s60
    %p62 = scmp.eq.s32.totalorder %s15, 0
    %p63 = por %p61, %p62
    %s65 = sadd.s32 %s64, 1
    %p68 = scmp.eq.s32.totalorder %s9, 1
    %p69 = scmp.ne.s32.totalorder %s64, %s66
    %p70 = scmp.eq.s32.totalorder %s9, 0
    %p71 = por %p69, %p70
    %p72 = scmp.ne.s32.totalorder %s64, %s66
    %p73 = scmp.eq.s32.totalorder %s14, 1
    %p74 = por %p72, %p73
    %p75 = scmp.ne.s32.totalorder %s66, %s67
    %p76 = scmp.eq.s32.totalorder %s14, 0
    %p77 = por %p75, %p76
    %p78 = scmp.ne.s32.totalorder %s66, %s67
    %p79 = scmp.eq.s32.totalorder %s15, 1
    %p80 = por %p78, %p79
    %p82 = scmp.ne.s32.totalorder %s67, %s81
    %p83 = scmp.eq.s32.totalorder %s15, 0
    %p84 = por %p82, %p83
    %s85 = ssub.s32 %s9, %s16
    %p86 = scmp.eq.s32.totalorder %s85, 0
    %s88 = sadd.s32 %s87, 1
    %s89 = scalar_select %p86, %s87, %s88
    %p92 = pneg %p86
    %p93 = scmp.eq.s32.totalorder %s9, 1
    %p94 = por %p92, %p93
    %p95 = scmp.ne.s32.totalorder %s87, %s90
    %p96 = scmp.eq.s32.totalorder %s9, 0
    %p97 = por %p95, %p96
    %p98 = scmp.ne.s32.totalorder %s87, %s90
    %p99 = scmp.eq.s32.totalorder %s14, 1
    %p100 = por %p98, %p99
    %p101 = scmp.ne.s32.totalorder %s90, %s91
    %p102 = scmp.eq.s32.totalorder %s14, 0
    %p103 = por %p101, %p102
    %p104 = scmp.ne.s32.totalorder %s90, %s91
    %p105 = scmp.eq.s32.totalorder %s15, 1
    %p106 = por %p104, %p105
    %p108 = scmp.ne.s32.totalorder %s91, %s107
    %p109 = scmp.eq.s32.totalorder %s15, 0
    %p110 = por %p108, %p109
    %p111 = scmp.le.s32.totalorder 1, %s9
    %p112 = scmp.lt.s32.totalorder %s9, 3
    %p113 = pnand %p111, %p112
    %p114 = pneg %p113
    // Predicated region
    $region9: #{reconstruction_forward.19} parent=5 // pred_check
      _
    $region10: #{reconstruction_forward.19} parent=5 // pred_check_branch
      %116 = sbr.rel (%p113) target = $region12
    $region11: #{reconstruction_forward.19} parent=5 // pred_region
      %s117 = ssub.s32 %s9, 1
      // Predicated region
      $region13: #{reconstruction_forward.19} parent=11 // pred_check
        %p118 = pneg %p56
      $region14: #{reconstruction_forward.19} parent=11 // pred_check_branch
        %120 = sbr.rel (%p118) target = $region16
      $region15: #{reconstruction_forward.19} parent=11 // pred_region
        _
      $region16: #{reconstruction_forward.19} parent=11 // pred_fallthru
        _
      // Predicated region
      $region17: #{reconstruction_forward.19} parent=11 // pred_check
        %p121 = pneg %p77
      $region18: #{reconstruction_forward.19} parent=11 // pred_check_branch
        %123 = sbr.rel (%p121) target = $region20
      $region19: #{reconstruction_forward.19} parent=11 // pred_region
        _
      $region20: #{reconstruction_forward.19} parent=11 // pred_fallthru
        _
    $region12: #{reconstruction_forward.19} parent=5 // pred_fallthru
      _
    %p124 = scmp.lt.s32.totalorder %s9, 2
    // Predicated region
    $region21: #{reconstruction_forward.19} parent=5 // pred_check
      %p125 = pneg %p124
    $region22: #{reconstruction_forward.19} parent=5 // pred_check_branch
      %127 = sbr.rel (%p125) target = $region24
    $region23: #{reconstruction_forward.19} parent=5 // pred_region
      // Predicated region
      $region25: #{reconstruction_forward.19} parent=23 // pred_check
        %p128 = pneg %p29
      $region26: #{reconstruction_forward.19} parent=23 // pred_check_branch
        %130 = sbr.rel (%p128) target = $region28
      $region27: #{reconstruction_forward.19} parent=23 // pred_region
        %s131 = smul.u32 2, %s9
        %p132 = scmp.lt.s32.totalorder %s131, 3
        %s133 = scalar_select %p132, %s131, 3
        %s134 = smul.addr %s133, 4
        %s135 = scalar_lea.vmem %s0, %s134
        %s136 = smul.u32 2, %s9
      $region28: #{reconstruction_forward.19} parent=23 // pred_fallthru
        _
    $region24: #{reconstruction_forward.19} parent=5 // pred_fallthru
      _
    %p137 = scmp.le.s32.totalorder 1, %s9
    %p138 = scmp.lt.s32.totalorder %s9, 3
    %p139 = pnand %p137, %p138
    %p140 = pneg %p139
    // Predicated region
    $region29: #{reconstruction_forward.19} parent=5 // pred_check
      _
    $region30: #{reconstruction_forward.19} parent=5 // pred_check_branch
      %142 = sbr.rel (%p139) target = $region32
    $region31: #{reconstruction_forward.19} parent=5 // pred_region
      %s143 = ssub.s32 %s9, 1
      %s144 = smul.u32 2, %s14
      %p145 = scmp.lt.s32.totalorder %s144, 3
      %s146 = scalar_select %p145, %s144, 3
      %s147 = smul.addr %s146, 4
      %s148 = scalar_lea.vmem %s0, %s147
      %p149 = pneg %p35
      %p150 = pneg %p32
      %p151 = pneg %p56
      %p152 = pneg %p53
      %p153 = pneg %p77
      %p154 = pneg %p74
      %p155 = pneg %p103
      %p156 = pneg %p100
      %s157 = smul.u32 2, %s14
      %p158 = scmp.lt.s32.totalorder %s157, 3
      %s159 = scalar_select %p158, %s157, 3
      %s160 = smul.addr %s159, 8
      %s161 = scalar_lea.vmem %s3, %s160
      %s162 = smul.u32 2, %s14
      %p163 = scmp.lt.s32.totalorder %s162, 3
      %s164 = scalar_select %p163, %s162, 3
      %s165 = smul.addr %s164, 4
      %s166 = scalar_lea.vmem %s0, %s165
      %s167 = smul.u32 2, %s14
      %s168 = smul.u32 2, %s14
      %p169 = scmp.lt.s32.totalorder %s168, 3
      %s170 = scalar_select %p169, %s168, 3
      %s171 = smul.addr %s170, 8
      %s172 = scalar_lea.vmem %s3, %s171
      %s173 = smul.u32 2, %s14
      %v175 = vld [vmem:[%s166] sm:$0xf]
      %v176 = vld [vmem:[%s166 + $0x4] sm:$0xf]
      %v177 = vld [vmem:[%s1] sm:$0xf]
      %v178 = vld [vmem:[%s1 + $0x4] sm:$0xf]
      %v179 = vld [vmem:[%s1 + $0x8] sm:$0xf]
      %v180 = vld [vmem:[%s1 + $0xc] sm:$0xf]
      %v181 = vld [vmem:[%s2] sm:$0x1]
      %v183 = vperm.slane %v181, 0
      %v187 = vunpack.c.l.b16 %v175
      %v188 = vunpack.c.l.b16 %v176
      %v189 = vpack.c.b16 %v188, %v187
      %v194 = vunpack.c.l.b16 %v177
      %v195 = vunpack.c.l.b16 %v178
      %v196 = vunpack.c.l.b16 %v179
      %v197 = vunpack.c.l.b16 %v180
      %v198 = vpack.c.b16 %v195, %v194
      %v199 = vpack.c.b16 %v197, %v196
      %vm202 = vcmask 261120
      %v204 = vsel %vm202, %v189, 0
      %206 = vmatpush.bf16.msra.mxu0 0
      %207 = vmatpush.bf16.msra.mxu0 0
      %208 = vmatpush.bf16.msra.mxu0 0
      %209 = vmatpush.bf16.msra.mxu0 0
      %210 = vmatpush.bf16.msra.mxu0 0
      %211 = vmatpush.bf16.msra.mxu0 0
      %212 = vmatpush.bf16.msra.mxu0 %v199
      %213 = vmatpush.bf16.msra.mxu0 %v198
      %214 = vmatmul.bf16.gmra.mxu0 %v204
      %v215 = vpop.f32.mrf.mxu0
      %v216 = vadd.f32 %v183, %v215
      %v217 = vpop.f32.mrf.mxu0
      %v218 = vadd.f32 %v183, %v217
      %219 = vdwg.mxu0
      %vm220 = vcmask 523264
      %221 = vst.msk [vmem:[%s172] sm:$0xff] %vm220, %v216
      %222 = vst.msk [vmem:[%s172 + $0x8] sm:$0xff] %vm220, %v218
      %s223 = smul.u32 2, %s14
      %p224 = scmp.lt.s32.totalorder %s223, 3
      %s225 = scalar_select %p224, %s223, 3
      %s226 = smul.addr %s225, 8
      %s227 = scalar_lea.vmem %s3, %s226
      // Predicated region
      $region33: #{reconstruction_forward.19} parent=31 // pred_check
        %p228 = pneg %p100
      $region34: #{reconstruction_forward.19} parent=31 // pred_check_branch
        %230 = sbr.rel (%p228) target = $region36
      $region35: #{reconstruction_forward.19} parent=31 // pred_region
        %s231 = smul.u32 2, %s14
      $region36: #{reconstruction_forward.19} parent=31 // pred_fallthru
        _
    $region32: #{reconstruction_forward.19} parent=5 // pred_fallthru
      _
    %p232 = scmp.le.s32.totalorder 2, %s9
    // Predicated region
    $region37: #{reconstruction_forward.19} parent=5 // pred_check
      %p233 = pneg %p232
    $region38: #{reconstruction_forward.19} parent=5 // pred_check_branch
      %235 = sbr.rel (%p233) target = $region40
    $region39: #{reconstruction_forward.19} parent=5 // pred_region
      %s236 = ssub.s32 %s9, 2
      // Predicated region
      $region41: #{reconstruction_forward.19} parent=39 // pred_check
        %p237 = pneg %p106
      $region42: #{reconstruction_forward.19} parent=39 // pred_check_branch
        %239 = sbr.rel (%p237) target = $region44
      $region43: #{reconstruction_forward.19} parent=39 // pred_region
        %s240 = smul.u32 2, %s15
        %p241 = scmp.lt.s32.totalorder %s240, 3
        %s242 = scalar_select %p241, %s240, 3
        %s243 = smul.addr %s242, 8
        %s244 = scalar_lea.vmem %s3, %s243
      $region44: #{reconstruction_forward.19} parent=39 // pred_fallthru
        _
    $region40: #{reconstruction_forward.19} parent=5 // pred_fallthru
      _
  $region6: #{reconstruction_forward.19} parent=0 // loop_footer
    %s13 = sadd.s32 1, %s9
  $region7: #{reconstruction_forward.19} parent=0 // loop_footer_branch
    %8 = sbr.rel target = $region3
  $region8: #{reconstruction_forward.19} parent=0 // loop_exit
    _

// kernel: reconstruction_forward.21
$region0: #{reconstruction_forward.21}
  #allocation0 [shape = 'u32[]', space=smem, size = 0x4, offset = 0x4, fixed_abs, tag = 'smem constant byte address 0x4 - core index']
  #allocation1 [shape = 'u32[72,128]{1,0:T(1,128)}', space=vmem, size = 0x9000, scoped, tag = 'internal scratch']
  #allocation2 [shape = 'f32[1]{0:T(128)S(6)}', space=smem, size = 0x200, scoped, tag = 'scoped memory for reconstruction_forward.21']
  %s0 = inlined_call_operand.vmem [shape: bf16[32,576], index: 0, kind: input, shape index: {}]
  %s1 = inlined_call_operand.vmem [shape: bf16[576,64], index: 1, kind: input, shape index: {}]
  %s2 = inlined_call_operand.vmem [shape: f32[1,64], index: 2, kind: input, shape index: {}]
  %s3 = inlined_call_operand.<no memory space> [shape: f32[1], index: 3, kind: input, shape index: {}]
  %s4 = inlined_call_operand.vmem [shape: f32[32,64], index: 4, kind: input, shape index: {}]
  %s5 = inlined_call_operand.vmem [shape: f32[32,64], index: 5, kind: output, shape index: {}]
  %s6 = sld [smem:[#allocation0]]
  $region53: #{reconstruction_forward.21} parent=0
    _
  %s8 = ssub.s32 1, %s6
  %s9 = scalar_select 0, %s8, %s6
  %10 = sst [smem:[#allocation2]] %s3
  loop: start=0, step=1, limit=4
  $region2: #{reconstruction_forward.21} parent=0 // loop_pre_header
    _
  $region3: #{reconstruction_forward.21} parent=0 // loop_header
    %s12 = sphi 0, %s16
    %p13 = scmp.ge.s32.totalorder %s12, 4
    %s22 = sphi 0, %s24
    %s25 = sphi 0, %s22
    %s26 = sphi 0, %s25
    %s42 = sphi 0, %s26
    %s46 = sphi 0, %s46
    %s48 = sphi 0, %s46
    %s49 = sphi 0, %s48
    %s63 = sphi 0, %s49
    %s67 = sphi 0, %s67
    %s69 = sphi 0, %s67
    %s70 = sphi 0, %s69
    %s84 = sphi 0, %s70
    %s88 = sphi 0, %s88
    %s90 = sphi 0, %s88
    %s91 = sphi 0, %s90
    %s105 = sphi 0, %s91
    %s111 = sphi 0, %s113
    %s114 = sphi 0, %s111
    %s115 = sphi 0, %s114
    %s131 = sphi 0, %s115
    %s137 = sphi 0, %s139
    %s140 = sphi 0, %s137
    %s141 = sphi 0, %s140
    %s157 = sphi 0, %s141
  $region4: #{reconstruction_forward.21} parent=0 // loop_header_branch
    %15 = sbr.rel (%p13) target = $region8
  $region5: #{reconstruction_forward.21} parent=0 // loop_body
    %s17 = ssub.s32 %s12, 1
    %s18 = ssub.s32 %s12, 2
    %s19 = sadd.s32 %s12, 1
    %s20 = ssub.s32 %s12, %s19
    %p21 = scmp.eq.s32.totalorder %s20, 0
    %s23 = sadd.s32 %s22, 1
    %s24 = scalar_select %p21, %s22, %s23
    %p27 = pneg %p21
    %p28 = scmp.eq.s32.totalorder %s12, 1
    %p29 = por %p27, %p28
    %p30 = scmp.ne.s32.totalorder %s22, %s25
    %p31 = scmp.eq.s32.totalorder %s12, 0
    %p32 = por %p30, %p31
    %p33 = scmp.ne.s32.totalorder %s22, %s25
    %p34 = scmp.eq.s32.totalorder %s17, 1
    %p35 = por %p33, %p34
    %p36 = scmp.ne.s32.totalorder %s25, %s26
    %p37 = scmp.eq.s32.totalorder %s17, 0
    %p38 = por %p36, %p37
    %p39 = scmp.ne.s32.totalorder %s25, %s26
    %p40 = scmp.eq.s32.totalorder %s18, 1
    %p41 = por %p39, %p40
    %p43 = scmp.ne.s32.totalorder %s26, %s42
    %p44 = scmp.eq.s32.totalorder %s18, 0
    %p45 = por %p43, %p44
    %s47 = sadd.s32 %s46, 1
    %p50 = scmp.eq.s32.totalorder %s12, 1
    %p51 = scmp.ne.s32.totalorder %s46, %s48
    %p52 = scmp.eq.s32.totalorder %s12, 0
    %p53 = por %p51, %p52
    %p54 = scmp.ne.s32.totalorder %s46, %s48
    %p55 = scmp.eq.s32.totalorder %s17, 1
    %p56 = por %p54, %p55
    %p57 = scmp.ne.s32.totalorder %s48, %s49
    %p58 = scmp.eq.s32.totalorder %s17, 0
    %p59 = por %p57, %p58
    %p60 = scmp.ne.s32.totalorder %s48, %s49
    %p61 = scmp.eq.s32.totalorder %s18, 1
    %p62 = por %p60, %p61
    %p64 = scmp.ne.s32.totalorder %s49, %s63
    %p65 = scmp.eq.s32.totalorder %s18, 0
    %p66 = por %p64, %p65
    %s68 = sadd.s32 %s67, 1
    %p71 = scmp.eq.s32.totalorder %s12, 1
    %p72 = scmp.ne.s32.totalorder %s67, %s69
    %p73 = scmp.eq.s32.totalorder %s12, 0
    %p74 = por %p72, %p73
    %p75 = scmp.ne.s32.totalorder %s67, %s69
    %p76 = scmp.eq.s32.totalorder %s17, 1
    %p77 = por %p75, %p76
    %p78 = scmp.ne.s32.totalorder %s69, %s70
    %p79 = scmp.eq.s32.totalorder %s17, 0
    %p80 = por %p78, %p79
    %p81 = scmp.ne.s32.totalorder %s69, %s70
    %p82 = scmp.eq.s32.totalorder %s18, 1
    %p83 = por %p81, %p82
    %p85 = scmp.ne.s32.totalorder %s70, %s84
    %p86 = scmp.eq.s32.totalorder %s18, 0
    %p87 = por %p85, %p86
    %s89 = sadd.s32 %s88, 1
    %p92 = scmp.eq.s32.totalorder %s12, 1
    %p93 = scmp.ne.s32.totalorder %s88, %s90
    %p94 = scmp.eq.s32.totalorder %s12, 0
    %p95 = por %p93, %p94
    %p96 = scmp.ne.s32.totalorder %s88, %s90
    %p97 = scmp.eq.s32.totalorder %s17, 1
    %p98 = por %p96, %p97
    %p99 = scmp.ne.s32.totalorder %s90, %s91
    %p100 = scmp.eq.s32.totalorder %s17, 0
    %p101 = por %p99, %p100
    %p102 = scmp.ne.s32.totalorder %s90, %s91
    %p103 = scmp.eq.s32.totalorder %s18, 1
    %p104 = por %p102, %p103
    %p106 = scmp.ne.s32.totalorder %s91, %s105
    %p107 = scmp.eq.s32.totalorder %s18, 0
    %p108 = por %p106, %p107
    %s109 = ssub.s32 %s12, %s19
    %p110 = scmp.eq.s32.totalorder %s109, 0
    %s112 = sadd.s32 %s111, 1
    %s113 = scalar_select %p110, %s111, %s112
    %p116 = pneg %p110
    %p117 = scmp.eq.s32.totalorder %s12, 1
    %p118 = por %p116, %p117
    %p119 = scmp.ne.s32.totalorder %s111, %s114
    %p120 = scmp.eq.s32.totalorder %s12, 0
    %p121 = por %p119, %p120
    %p122 = scmp.ne.s32.totalorder %s111, %s114
    %p123 = scmp.eq.s32.totalorder %s17, 1
    %p124 = por %p122, %p123
    %p125 = scmp.ne.s32.totalorder %s114, %s115
    %p126 = scmp.eq.s32.totalorder %s17, 0
    %p127 = por %p125, %p126
    %p128 = scmp.ne.s32.totalorder %s114, %s115
    %p129 = scmp.eq.s32.totalorder %s18, 1
    %p130 = por %p128, %p129
    %p132 = scmp.ne.s32.totalorder %s115, %s131
    %p133 = scmp.eq.s32.totalorder %s18, 0
    %p134 = por %p132, %p133
    %s135 = ssub.s32 %s12, %s19
    %p136 = scmp.eq.s32.totalorder %s135, 0
    %s138 = sadd.s32 %s137, 1
    %s139 = scalar_select %p136, %s137, %s138
    %p142 = pneg %p136
    %p143 = scmp.eq.s32.totalorder %s12, 1
    %p144 = por %p142, %p143
    %p145 = scmp.ne.s32.totalorder %s137, %s140
    %p146 = scmp.eq.s32.totalorder %s12, 0
    %p147 = por %p145, %p146
    %p148 = scmp.ne.s32.totalorder %s137, %s140
    %p149 = scmp.eq.s32.totalorder %s17, 1
    %p150 = por %p148, %p149
    %p151 = scmp.ne.s32.totalorder %s140, %s141
    %p152 = scmp.eq.s32.totalorder %s17, 0
    %p153 = por %p151, %p152
    %p154 = scmp.ne.s32.totalorder %s140, %s141
    %p155 = scmp.eq.s32.totalorder %s18, 1
    %p156 = por %p154, %p155
    %p158 = scmp.ne.s32.totalorder %s141, %s157
    %p159 = scmp.eq.s32.totalorder %s18, 0
    %p160 = por %p158, %p159
    %p161 = scmp.le.s32.totalorder 1, %s12
    %p162 = scmp.lt.s32.totalorder %s12, 3
    %p163 = pnand %p161, %p162
    %p164 = pneg %p163
    // Predicated region
    $region9: #{reconstruction_forward.21} parent=5 // pred_check
      _
    $region10: #{reconstruction_forward.21} parent=5 // pred_check_branch
      %166 = sbr.rel (%p163) target = $region12
    $region11: #{reconstruction_forward.21} parent=5 // pred_region
      %s167 = ssub.s32 %s12, 1
      // Predicated region
      $region13: #{reconstruction_forward.21} parent=11 // pred_check
        %p168 = pneg %p59
      $region14: #{reconstruction_forward.21} parent=11 // pred_check_branch
        %170 = sbr.rel (%p168) target = $region16
      $region15: #{reconstruction_forward.21} parent=11 // pred_region
        _
      $region16: #{reconstruction_forward.21} parent=11 // pred_fallthru
        _
      // Predicated region
      $region17: #{reconstruction_forward.21} parent=11 // pred_check
        %p171 = pneg %p80
      $region18: #{reconstruction_forward.21} parent=11 // pred_check_branch
        %173 = sbr.rel (%p171) target = $region20
      $region19: #{reconstruction_forward.21} parent=11 // pred_region
        _
      $region20: #{reconstruction_forward.21} parent=11 // pred_fallthru
        _
      // Predicated region
      $region21: #{reconstruction_forward.21} parent=11 // pred_check
        %p174 = pneg %p101
      $region22: #{reconstruction_forward.21} parent=11 // pred_check_branch
        %176 = sbr.rel (%p174) target = $region24
      $region23: #{reconstruction_forward.21} parent=11 // pred_region
        _
      $region24: #{reconstruction_forward.21} parent=11 // pred_fallthru
        _
    $region12: #{reconstruction_forward.21} parent=5 // pred_fallthru
      _
    %p177 = scmp.lt.s32.totalorder %s12, 2
    // Predicated region
    $region25: #{reconstruction_forward.21} parent=5 // pred_check
      %p178 = pneg %p177
    $region26: #{reconstruction_forward.21} parent=5 // pred_check_branch
      %180 = sbr.rel (%p178) target = $region28
    $region27: #{reconstruction_forward.21} parent=5 // pred_region
      // Predicated region
      $region29: #{reconstruction_forward.21} parent=27 // pred_check
        %p181 = pneg %p32
      $region30: #{reconstruction_forward.21} parent=27 // pred_check_branch
        %183 = sbr.rel (%p181) target = $region32
      $region31: #{reconstruction_forward.21} parent=27 // pred_region
        %s184 = smul.u32 2, %s12
        %p185 = scmp.lt.s32.totalorder %s184, 3
        %s186 = scalar_select %p185, %s184, 3
        %s187 = smul.addr %s186, 5
        %s188 = smul.addr %s187, 4
        %s189 = scalar_lea.vmem %s0, %s188
        %s190 = smul.u32 2, %s12
      $region32: #{reconstruction_forward.21} parent=27 // pred_fallthru
        _
      // Predicated region
      $region33: #{reconstruction_forward.21} parent=27 // pred_check
        %p191 = pneg %p121
      $region34: #{reconstruction_forward.21} parent=27 // pred_check_branch
        %193 = sbr.rel (%p191) target = $region36
      $region35: #{reconstruction_forward.21} parent=27 // pred_region
        %s194 = smul.u32 2, %s12
        %p195 = scmp.lt.s32.totalorder %s194, 3
        %s196 = scalar_select %p195, %s194, 3
        %s197 = smul.addr %s196, 8
        %s198 = scalar_lea.vmem %s4, %s197
        %s199 = smul.u32 2, %s12
      $region36: #{reconstruction_forward.21} parent=27 // pred_fallthru
        _
    $region28: #{reconstruction_forward.21} parent=5 // pred_fallthru
      _
    %p200 = scmp.le.s32.totalorder 1, %s12
    %p201 = scmp.lt.s32.totalorder %s12, 3
    %p202 = pnand %p200, %p201
    %p203 = pneg %p202
    // Predicated region
    $region37: #{reconstruction_forward.21} parent=5 // pred_check
      _
    $region38: #{reconstruction_forward.21} parent=5 // pred_check_branch
      %205 = sbr.rel (%p202) target = $region40
    $region39: #{reconstruction_forward.21} parent=5 // pred_region
      %s206 = ssub.s32 %s12, 1
      %s207 = smul.u32 2, %s17
      %p208 = scmp.lt.s32.totalorder %s207, 3
      %s209 = scalar_select %p208, %s207, 3
      %s210 = smul.addr %s209, 5
      %s211 = smul.addr %s210, 4
      %s212 = scalar_lea.vmem %s0, %s211
      %p213 = pneg %p38
      %p214 = pneg %p35
      %p215 = pneg %p59
      %p216 = pneg %p56
      %p217 = pneg %p80
      %p218 = pneg %p77
      %p219 = pneg %p101
      %p220 = pneg %p98
      %s221 = smul.u32 2, %s17
      %p222 = scmp.lt.s32.totalorder %s221, 3
      %s223 = scalar_select %p222, %s221, 3
      %s224 = smul.addr %s223, 8
      %s225 = scalar_lea.vmem %s4, %s224
      %p226 = pneg %p127
      %p227 = pneg %p124
      %p228 = pneg %p153
      %p229 = pneg %p150
      %s230 = smul.u32 2, %s17
      %p231 = scmp.lt.s32.totalorder %s230, 3
      %s232 = scalar_select %p231, %s230, 3
      %s233 = smul.addr %s232, 8
      %s234 = scalar_lea.vmem %s5, %s233
      %s235 = smul.u32 2, %s17
      %p236 = scmp.lt.s32.totalorder %s235, 3
      %s237 = scalar_select %p236, %s235, 3
      %s238 = smul.addr %s237, 5
      %s239 = smul.addr %s238, 4
      %s240 = scalar_lea.vmem %s0, %s239
      %s241 = smul.u32 2, %s17
      %s242 = smul.u32 2, %s17
      %p243 = scmp.lt.s32.totalorder %s242, 3
      %s244 = scalar_select %p243, %s242, 3
      %s245 = smul.addr %s244, 8
      %s246 = scalar_lea.vmem %s4, %s245
      %s247 = smul.u32 2, %s17
      %s248 = smul.u32 2, %s17
      %p249 = scmp.lt.s32.totalorder %s248, 3
      %s250 = scalar_select %p249, %s248, 3
      %s251 = smul.addr %s250, 8
      %s252 = scalar_lea.vmem %s5, %s251
      %s253 = smul.u32 2, %s17
      %v255 = vld [vmem:[%s240] sm:$0xff]
      %v256 = vld [vmem:[%s240 + $0x8] sm:$0xff]
      %v257 = vld [vmem:[%s240 + $0x10] sm:$0xf]
      %v258 = vld [vmem:[%s240 + $0x14] sm:$0xff]
      %v259 = vld [vmem:[%s240 + $0x1c] sm:$0xff]
      %v260 = vld [vmem:[%s240 + $0x24] sm:$0xf]
      %v261 = vld [vmem:[%s1] sm:$0xf]
      %v262 = vld [vmem:[%s1 + $0x4] sm:$0xf]
      %v263 = vld [vmem:[%s1 + $0x8] sm:$0xf]
      %v264 = vld [vmem:[%s1 + $0xc] sm:$0xf]
      %v265 = vld [vmem:[%s1 + $0x10] sm:$0xf]
      %v266 = vld [vmem:[%s1 + $0x14] sm:$0xf]
      %v267 = vld [vmem:[%s1 + $0x18] sm:$0xf]
      %v268 = vld [vmem:[%s1 + $0x1c] sm:$0xf]
      %v269 = vld [vmem:[%s1 + $0x20] sm:$0xf]
      %v270 = vld [vmem:[%s1 + $0x24] sm:$0xf]
      %v271 = vld [vmem:[%s1 + $0x28] sm:$0xf]
      %v272 = vld [vmem:[%s1 + $0x2c] sm:$0xf]
      %v273 = vld [vmem:[%s1 + $0x30] sm:$0xf]
      %v274 = vld [vmem:[%s1 + $0x34] sm:$0xf]
      %v275 = vld [vmem:[%s1 + $0x38] sm:$0xf]
      %v276 = vld [vmem:[%s1 + $0x3c] sm:$0xf]
      %v277 = vld [vmem:[%s1 + $0x40] sm:$0xf]
      %v278 = vld [vmem:[%s1 + $0x44] sm:$0xf]
      %v279 = vld [vmem:[%s1 + $0x48] sm:$0xf]
      %v280 = vld [vmem:[%s1 + $0x4c] sm:$0xf]
      %v281 = vld [vmem:[%s1 + $0x50] sm:$0xf]
      %v282 = vld [vmem:[%s1 + $0x54] sm:$0xf]
      %v283 = vld [vmem:[%s1 + $0x58] sm:$0xf]
      %v284 = vld [vmem:[%s1 + $0x5c] sm:$0xf]
      %v285 = vld [vmem:[%s1 + $0x60] sm:$0xf]
      %v286 = vld [vmem:[%s1 + $0x64] sm:$0xf]
      %v287 = vld [vmem:[%s1 + $0x68] sm:$0xf]
      %v288 = vld [vmem:[%s1 + $0x6c] sm:$0xf]
      %v289 = vld [vmem:[%s1 + $0x70] sm:$0xf]
      %v290 = vld [vmem:[%s1 + $0x74] sm:$0xf]
      %v291 = vld [vmem:[%s1 + $0x78] sm:$0xf]
      %v292 = vld [vmem:[%s1 + $0x7c] sm:$0xf]
      %v293 = vld [vmem:[%s1 + $0x80] sm:$0xf]
      %v294 = vld [vmem:[%s1 + $0x84] sm:$0xf]
      %v295 = vld [vmem:[%s1 + $0x88] sm:$0xf]
      %v296 = vld [vmem:[%s1 + $0x8c] sm:$0xf]
      %v297 = vld [vmem:[%s1 + $0x90] sm:$0xf]
      %v298 = vld [vmem:[%s1 + $0x94] sm:$0xf]
      %v299 = vld [vmem:[%s1 + $0x98] sm:$0xf]
      %v300 = vld [vmem:[%s1 + $0x9c] sm:$0xf]
      %v301 = vld [vmem:[%s1 + $0xa0] sm:$0xf]
      %v302 = vld [vmem:[%s1 + $0xa4] sm:$0xf]
      %v303 = vld [vmem:[%s1 + $0xa8] sm:$0xf]
      %v304 = vld [vmem:[%s1 + $0xac] sm:$0xf]
      %v305 = vld [vmem:[%s1 + $0xb0] sm:$0xf]
      %v306 = vld [vmem:[%s1 + $0xb4] sm:$0xf]
      %v307 = vld [vmem:[%s1 + $0xb8] sm:$0xf]
      %v308 = vld [vmem:[%s1 + $0xbc] sm:$0xf]
      %v309 = vld [vmem:[%s1 + $0xc0] sm:$0xf]
      %v310 = vld [vmem:[%s1 + $0xc4] sm:$0xf]
      %v311 = vld [vmem:[%s1 + $0xc8] sm:$0xf]
      %v312 = vld [vmem:[%s1 + $0xcc] sm:$0xf]
      %v313 = vld [vmem:[%s1 + $0xd0] sm:$0xf]
      %v314 = vld [vmem:[%s1 + $0xd4] sm:$0xf]
      %v315 = vld [vmem:[%s1 + $0xd8] sm:$0xf]
      %v316 = vld [vmem:[%s1 + $0xdc] sm:$0xf]
      %v317 = vld [vmem:[%s1 + $0xe0] sm:$0xf]
      %v318 = vld [vmem:[%s1 + $0xe4] sm:$0xf]
      %v319 = vld [vmem:[%s1 + $0xe8] sm:$0xf]
      %v320 = vld [vmem:[%s1 + $0xec] sm:$0xf]
      %v321 = vld [vmem:[%s1 + $0xf0] sm:$0xf]
      %v322 = vld [vmem:[%s1 + $0xf4] sm:$0xf]
      %v323 = vld [vmem:[%s1 + $0xf8] sm:$0xf]
      %v324 = vld [vmem:[%s1 + $0xfc] sm:$0xf]
      %v325 = vld [vmem:[%s1 + $0x100] sm:$0xf]
      %v326 = vld [vmem:[%s1 + $0x104] sm:$0xf]
      %v327 = vld [vmem:[%s1 + $0x108] sm:$0xf]
      %v328 = vld [vmem:[%s1 + $0x10c] sm:$0xf]
      %v329 = vld [vmem:[%s1 + $0x110] sm:$0xf]
      %v330 = vld [vmem:[%s1 + $0x114] sm:$0xf]
      %v331 = vld [vmem:[%s1 + $0x118] sm:$0xf]
      %v332 = vld [vmem:[%s1 + $0x11c] sm:$0xf]
      %v333 = vld [vmem:[%s2] sm:$0x1]
      %v335 = vperm.slane %v333, 0
      %v343 = vunpack.c.l.b16 %v255
      %v344 = vunpack.c.h.b16 %v255
      %v345 = vunpack.c.l.b16 %v256
      %v346 = vunpack.c.h.b16 %v256
      %v347 = vunpack.c.l.b16 %v257
      %v348 = vunpack.c.l.b16 %v258
      %v349 = vunpack.c.h.b16 %v258
      %v350 = vunpack.c.l.b16 %v259
      %v351 = vunpack.c.h.b16 %v259
      %v352 = vunpack.c.l.b16 %v260
      %v353 = vpack.c.b16 %v348, %v343
      %v354 = vpack.c.b16 %v349, %v344
      %v355 = vpack.c.b16 %v350, %v345
      %v356 = vpack.c.b16 %v351, %v346
      %v357 = vpack.c.b16 %v352, %v347
      %v434 = vunpack.c.l.b16 %v261
      %v435 = vunpack.c.l.b16 %v262
      %v436 = vunpack.c.l.b16 %v263
      %v437 = vunpack.c.l.b16 %v264
      %v438 = vunpack.c.l.b16 %v265
      %v439 = vunpack.c.l.b16 %v266
      %v440 = vunpack.c.l.b16 %v267
      %v441 = vunpack.c.l.b16 %v268
      %v442 = vunpack.c.l.b16 %v269
      %v443 = vunpack.c.l.b16 %v270
      %v444 = vunpack.c.l.b16 %v271
      %v445 = vunpack.c.l.b16 %v272
      %v446 = vunpack.c.l.b16 %v273
      %v447 = vunpack.c.l.b16 %v274
      %v448 = vunpack.c.l.b16 %v275
      %v449 = vunpack.c.l.b16 %v276
      %v450 = vunpack.c.l.b16 %v277
      %v451 = vunpack.c.l.b16 %v278
      %v452 = vunpack.c.l.b16 %v279
      %v453 = vunpack.c.l.b16 %v280
      %v454 = vunpack.c.l.b16 %v281
      %v455 = vunpack.c.l.b16 %v282
      %v456 = vunpack.c.l.b16 %v283
      %v457 = vunpack.c.l.b16 %v284
      %v458 = vunpack.c.l.b16 %v285
      %v459 = vunpack.c.l.b16 %v286
      %v460 = vunpack.c.l.b16 %v287
      %v461 = vunpack.c.l.b16 %v288
      %v462 = vunpack.c.l.b16 %v289
      %v463 = vunpack.c.l.b16 %v290
      %v464 = vunpack.c.l.b16 %v291
      %v465 = vunpack.c.l.b16 %v292
      %v466 = vunpack.c.l.b16 %v293
      %v467 = vunpack.c.l.b16 %v294
      %v468 = vunpack.c.l.b16 %v295
      %v469 = vunpack.c.l.b16 %v296
      %v470 = vunpack.c.l.b16 %v297
      %v471 = vunpack.c.l.b16 %v298
      %v472 = vunpack.c.l.b16 %v299
      %v473 = vunpack.c.l.b16 %v300
      %v474 = vunpack.c.l.b16 %v301
      %v475 = vunpack.c.l.b16 %v302
      %v476 = vunpack.c.l.b16 %v303
      %v477 = vunpack.c.l.b16 %v304
      %v478 = vunpack.c.l.b16 %v305
      %v479 = vunpack.c.l.b16 %v306
      %v480 = vunpack.c.l.b16 %v307
      %v481 = vunpack.c.l.b16 %v308
      %v482 = vunpack.c.l.b16 %v309
      %v483 = vunpack.c.l.b16 %v310
      %v484 = vunpack.c.l.b16 %v311
      %v485 = vunpack.c.l.b16 %v312
      %v486 = vunpack.c.l.b16 %v313
      %v487 = vunpack.c.l.b16 %v314
      %v488 = vunpack.c.l.b16 %v315
      %v489 = vunpack.c.l.b16 %v316
      %v490 = vunpack.c.l.b16 %v317
      %v491 = vunpack.c.l.b16 %v318
      %v492 = vunpack.c.l.b16 %v319
      %v493 = vunpack.c.l.b16 %v320
      %v494 = vunpack.c.l.b16 %v321
      %v495 = vunpack.c.l.b16 %v322
      %v496 = vunpack.c.l.b16 %v323
      %v497 = vunpack.c.l.b16 %v324
      %v498 = vunpack.c.l.b16 %v325
      %v499 = vunpack.c.l.b16 %v326
      %v500 = vunpack.c.l.b16 %v327
      %v501 = vunpack.c.l.b16 %v328
      %v502 = vunpack.c.l.b16 %v329
      %v503 = vunpack.c.l.b16 %v330
      %v504 = vunpack.c.l.b16 %v331
      %v505 = vunpack.c.l.b16 %v332
      %v506 = vpack.c.b16 %v435, %v434
      %v507 = vpack.c.b16 %v437, %v436
      %v508 = vpack.c.b16 %v439, %v438
      %v509 = vpack.c.b16 %v441, %v440
      %v510 = vpack.c.b16 %v443, %v442
      %v511 = vpack.c.b16 %v445, %v444
      %v512 = vpack.c.b16 %v447, %v446
      %v513 = vpack.c.b16 %v449, %v448
      %v514 = vpack.c.b16 %v451, %v450
      %v515 = vpack.c.b16 %v453, %v452
      %v516 = vpack.c.b16 %v455, %v454
      %v517 = vpack.c.b16 %v457, %v456
      %v518 = vpack.c.b16 %v459, %v458
      %v519 = vpack.c.b16 %v461, %v460
      %v520 = vpack.c.b16 %v463, %v462
      %v521 = vpack.c.b16 %v465, %v464
      %v522 = vpack.c.b16 %v467, %v466
      %v523 = vpack.c.b16 %v469, %v468
      %v524 = vpack.c.b16 %v471, %v470
      %v525 = vpack.c.b16 %v473, %v472
      %v526 = vpack.c.b16 %v475, %v474
      %v527 = vpack.c.b16 %v477, %v476
      %v528 = vpack.c.b16 %v479, %v478
      %v529 = vpack.c.b16 %v481, %v480
      %v530 = vpack.c.b16 %v483, %v482
      %v531 = vpack.c.b16 %v485, %v484
      %v532 = vpack.c.b16 %v487, %v486
      %v533 = vpack.c.b16 %v489, %v488
      %v534 = vpack.c.b16 %v491, %v490
      %v535 = vpack.c.b16 %v493, %v492
      %v536 = vpack.c.b16 %v495, %v494
      %v537 = vpack.c.b16 %v497, %v496
      %v538 = vpack.c.b16 %v499, %v498
      %v539 = vpack.c.b16 %v501, %v500
      %v540 = vpack.c.b16 %v503, %v502
      %v541 = vpack.c.b16 %v505, %v504
      %vm578 = vcmask 523264
      %v580 = vsel %vm578, %v357, 0
      %582 = vmatpush.bf16.msra.mxu0 %v513
      %583 = vmatpush.bf16.msra.mxu0 %v512
      %584 = vmatpush.bf16.msra.mxu0 %v511
      %585 = vmatpush.bf16.msra.mxu0 %v510
      %586 = vmatpush.bf16.msra.mxu0 %v509
      %587 = vmatpush.bf16.msra.mxu0 %v508
      %588 = vmatpush.bf16.msra.mxu0 %v507
      %589 = vmatpush.bf16.msra.mxu0 %v506
      %590 = vmatmul.bf16.gmra.mxu0 %v353
      %v591 = vpop.f32.mrf.mxu0
      %v592 = vadd.f32 %v335, %v591
      %v593 = vpop.f32.mrf.mxu0
      %v594 = vadd.f32 %v335, %v593
      %595 = vdwg.mxu0
      %596 = vmatpush.bf16.msra.mxu0 %v521
      %597 = vmatpush.bf16.msra.mxu0 %v520
      %598 = vmatpush.bf16.msra.mxu0 %v519
      %599 = vmatpush.bf16.msra.mxu0 %v518
      %600 = vmatpush.bf16.msra.mxu0 %v517
      %601 = vmatpush.bf16.msra.mxu0 %v516
      %602 = vmatpush.bf16.msra.mxu0 %v515
      %603 = vmatpush.bf16.msra.mxu0 %v514
      %604 = vmatmul.bf16.gmra.mxu0 %v354
      %v605 = vpop.f32.mrf.mxu0
      %v606 = vadd.f32 %v592, %v605
      %v607 = vpop.f32.mrf.mxu0
      %v608 = vadd.f32 %v594, %v607
      %609 = vdwg.mxu0
      %610 = vmatpush.bf16.msra.mxu0 %v529
      %611 = vmatpush.bf16.msra.mxu0 %v528
      %612 = vmatpush.bf16.msra.mxu0 %v527
      %613 = vmatpush.bf16.msra.mxu0 %v526
      %614 = vmatpush.bf16.msra.mxu0 %v525
      %615 = vmatpush.bf16.msra.mxu0 %v524
      %616 = vmatpush.bf16.msra.mxu0 %v523
      %617 = vmatpush.bf16.msra.mxu0 %v522
      %618 = vmatmul.bf16.gmra.mxu0 %v355
      %v619 = vpop.f32.mrf.mxu0
      %v620 = vadd.f32 %v606, %v619
      %v621 = vpop.f32.mrf.mxu0
      %v622 = vadd.f32 %v608, %v621
      %623 = vdwg.mxu0
      %624 = vmatpush.bf16.msra.mxu0 %v537
      %625 = vmatpush.bf16.msra.mxu0 %v536
      %626 = vmatpush.bf16.msra.mxu0 %v535
      %627 = vmatpush.bf16.msra.mxu0 %v534
      %628 = vmatpush.bf16.msra.mxu0 %v533
      %629 = vmatpush.bf16.msra.mxu0 %v532
      %630 = vmatpush.bf16.msra.mxu0 %v531
      %631 = vmatpush.bf16.msra.mxu0 %v530
      %632 = vmatmul.bf16.gmra.mxu0 %v356
      %v633 = vpop.f32.mrf.mxu0
      %v634 = vadd.f32 %v620, %v633
      %v635 = vpop.f32.mrf.mxu0
      %v636 = vadd.f32 %v622, %v635
      %637 = vdwg.mxu0
      %638 = vmatpush.bf16.msra.mxu0 0
      %639 = vmatpush.bf16.msra.mxu0 0
      %640 = vmatpush.bf16.msra.mxu0 0
      %641 = vmatpush.bf16.msra.mxu0 0
      %642 = vmatpush.bf16.msra.mxu0 %v541
      %643 = vmatpush.bf16.msra.mxu0 %v540
      %644 = vmatpush.bf16.msra.mxu0 %v539
      %645 = vmatpush.bf16.msra.mxu0 %v538
      %646 = vmatmul.bf16.gmra.mxu0 %v580
      %v647 = vpop.f32.mrf.mxu0
      %v648 = vadd.f32 %v634, %v647
      %v649 = vpop.f32.mrf.mxu0
      %v650 = vadd.f32 %v636, %v649
      %651 = vdwg.mxu0
      %v652 = vsel %vm578, %v648, 0.0
      %v653 = vsel %vm578, %v650, 0.0
      %v654 = vadd.f32 %v652, %v653
      %v655 = vrot.slane %v654, 4
      %v656 = vadd.f32 %v654, %v655
      %v657 = vrot.slane %v656, 2
      %v658 = vadd.f32 %v656, %v657
      %v659 = vrot.slane %v658, 1
      %v660 = vadd.f32 %v658, %v659
      %v661 = vrcp.pop 16.0
      %v662 = vmul.f32 16.0, %v661
      %v663 = vsub.f32 1.0, %v662
      %v664 = vmul.f32 %v661, %v663
      %v665 = vadd.f32 %v661, %v664
      %vm666 = vweird.f32 %v661
      %v667 = vsel %vm666, %v661, %v665
      %v668 = vmul.f32 %v660, %v667
      %v669 = vsub.f32 %v648, %v668
      %v670 = vsub.f32 %v650, %v668
      %v671 = vmul.f32 %v669, %v669
      %v672 = vmul.f32 %v670, %v670
      %v673 = vsel %vm578, %v671, 0.0
      %v674 = vsel %vm578, %v672, 0.0
      %v675 = vadd.f32 %v673, %v674
      %v676 = vrot.slane %v675, 4
      %v677 = vadd.f32 %v675, %v676
      %v678 = vrot.slane %v677, 2
      %v679 = vadd.f32 %v677, %v678
      %v680 = vrot.slane %v679, 1
      %v681 = vadd.f32 %v679, %v680
      %v682 = vmul.f32 %v681, %v667
      %v683 = vadd.f32 %v682, 1e-05
      %v684 = vrsqrt.pop %v683
      %v685 = vmul.f32 %v684, %v683
      %v686 = vmul.f32 %v685, %v684
      %v687 = vmul.f32 0.5, %v686
      %v688 = vsub.f32 1.5, %v687
      %v689 = vmul.f32 %v684, %v688
      %vm690 = vweird.f32 %v683
      %vm691 = vweird.f32 %v684
      %vm692 = vmor %vm690, %vm691
      %v693 = vsel %vm692, %v684, %v689
      %v694 = vmul.f32 %v669, %v693
      %v695 = vmul.f32 %v670, %v693
      %s696 = sld [smem:[#allocation2]]
      %vm697 = vcmp.ge.f32.partialorder %v694, 0.0
      %vm698 = vcmp.ge.f32.partialorder %v695, 0.0
      %v699 = vstv %s696
      %v700 = vmul.f32 %v699, %v694
      %v701 = vmul.f32 %v699, %v695
      %v702 = vsel %vm697, %v694, %v700
      %v703 = vsel %vm698, %v695, %v701
      %v704 = vld [vmem:[%s246] sm:$0xff]
      %v705 = vld [vmem:[%s246 + $0x8] sm:$0xff]
      %v706 = vadd.f32 %v702, %v704
      %v707 = vadd.f32 %v703, %v705
      %708 = vst.msk [vmem:[%s252] sm:$0xff] %vm578, %v706
      %709 = vst.msk [vmem:[%s252 + $0x8] sm:$0xff] %vm578, %v707
      %s710 = smul.u32 2, %s17
      %p711 = scmp.lt.s32.totalorder %s710, 3
      %s712 = scalar_select %p711, %s710, 3
      %s713 = smul.addr %s712, 8
      %s714 = scalar_lea.vmem %s5, %s713
      // Predicated region
      $region41: #{reconstruction_forward.21} parent=39 // pred_check
        %p715 = pneg %p150
      $region42: #{reconstruction_forward.21} parent=39 // pred_check_branch
        %717 = sbr.rel (%p715) target = $region44
      $region43: #{reconstruction_forward.21} parent=39 // pred_region
        %s718 = smul.u32 2, %s17
      $region44: #{reconstruction_forward.21} parent=39 // pred_fallthru
        _
    $region40: #{reconstruction_forward.21} parent=5 // pred_fallthru
      _
    %p719 = scmp.le.s32.totalorder 2, %s12
    // Predicated region
    $region45: #{reconstruction_forward.21} parent=5 // pred_check
      %p720 = pneg %p719
    $region46: #{reconstruction_forward.21} parent=5 // pred_check_branch
      %722 = sbr.rel (%p720) target = $region48
    $region47: #{reconstruction_forward.21} parent=5 // pred_region
      %s723 = ssub.s32 %s12, 2
      // Predicated region
      $region49: #{reconstruction_forward.21} parent=47 // pred_check
        %p724 = pneg %p156
      $region50: #{reconstruction_forward.21} parent=47 // pred_check_branch
        %726 = sbr.rel (%p724) target = $region52
      $region51: #{reconstruction_forward.21} parent=47 // pred_region
        %s727 = smul.u32 2, %s18
        %p728 = scmp.lt.s32.totalorder %s727, 3
        %s729 = scalar_select %p728, %s727, 3
        %s730 = smul.addr %s729, 8
        %s731 = scalar_lea.vmem %s5, %s730
      $region52: #{reconstruction_forward.21} parent=47 // pred_fallthru
        _
    $region48: #{reconstruction_forward.21} parent=5 // pred_fallthru
      _
  $region6: #{reconstruction_forward.21} parent=0 // loop_footer
    %s16 = sadd.s32 1, %s12
  $region7: #{reconstruction_forward.21} parent=0 // loop_footer_branch
    %11 = sbr.rel target = $region3
  $region8: #{reconstruction_forward.21} parent=0 // loop_exit
    _

// kernel: reconstruction_forward.22
$region0: #{reconstruction_forward.22}
  #allocation0 [shape = 'u32[]', space=smem, size = 0x4, offset = 0x4, fixed_abs, tag = 'smem constant byte address 0x4 - core index']
  #allocation1 [shape = 'u32[72,128]{1,0:T(1,128)}', space=vmem, size = 0x9000, scoped, tag = 'internal scratch']
  #allocation2 [shape = 'f32[1]{0:T(128)S(6)}', space=smem, size = 0x200, scoped, tag = 'scoped memory for reconstruction_forward.22']
  %s0 = inlined_call_operand.vmem [shape: bf16[32,384], index: 0, kind: input, shape index: {}]
  %s1 = inlined_call_operand.vmem [shape: bf16[384,64], index: 1, kind: input, shape index: {}]
  %s2 = inlined_call_operand.vmem [shape: f32[1,64], index: 2, kind: input, shape index: {}]
  %s3 = inlined_call_operand.<no memory space> [shape: f32[1], index: 3, kind: input, shape index: {}]
  %s4 = inlined_call_operand.vmem [shape: f32[32,64], index: 4, kind: output, shape index: {}]
  %s5 = sld [smem:[#allocation0]]
  $region49: #{reconstruction_forward.22} parent=0
    _
  %s7 = ssub.s32 1, %s5
  %s8 = scalar_select 0, %s7, %s5
  %9 = sst [smem:[#allocation2]] %s3
  loop: start=0, step=1, limit=4
  $region2: #{reconstruction_forward.22} parent=0 // loop_pre_header
    _
  $region3: #{reconstruction_forward.22} parent=0 // loop_header
    %s11 = sphi 0, %s15
    %p12 = scmp.ge.s32.totalorder %s11, 4
    %s21 = sphi 0, %s23
    %s24 = sphi 0, %s21
    %s25 = sphi 0, %s24
    %s41 = sphi 0, %s25
    %s45 = sphi 0, %s45
    %s47 = sphi 0, %s45
    %s48 = sphi 0, %s47
    %s62 = sphi 0, %s48
    %s66 = sphi 0, %s66
    %s68 = sphi 0, %s66
    %s69 = sphi 0, %s68
    %s83 = sphi 0, %s69
    %s87 = sphi 0, %s87
    %s89 = sphi 0, %s87
    %s90 = sphi 0, %s89
    %s104 = sphi 0, %s90
    %s110 = sphi 0, %s112
    %s113 = sphi 0, %s110
    %s114 = sphi 0, %s113
    %s130 = sphi 0, %s114
  $region4: #{reconstruction_forward.22} parent=0 // loop_header_branch
    %14 = sbr.rel (%p12) target = $region8
  $region5: #{reconstruction_forward.22} parent=0 // loop_body
    %s16 = ssub.s32 %s11, 1
    %s17 = ssub.s32 %s11, 2
    %s18 = sadd.s32 %s11, 1
    %s19 = ssub.s32 %s11, %s18
    %p20 = scmp.eq.s32.totalorder %s19, 0
    %s22 = sadd.s32 %s21, 1
    %s23 = scalar_select %p20, %s21, %s22
    %p26 = pneg %p20
    %p27 = scmp.eq.s32.totalorder %s11, 1
    %p28 = por %p26, %p27
    %p29 = scmp.ne.s32.totalorder %s21, %s24
    %p30 = scmp.eq.s32.totalorder %s11, 0
    %p31 = por %p29, %p30
    %p32 = scmp.ne.s32.totalorder %s21, %s24
    %p33 = scmp.eq.s32.totalorder %s16, 1
    %p34 = por %p32, %p33
    %p35 = scmp.ne.s32.totalorder %s24, %s25
    %p36 = scmp.eq.s32.totalorder %s16, 0
    %p37 = por %p35, %p36
    %p38 = scmp.ne.s32.totalorder %s24, %s25
    %p39 = scmp.eq.s32.totalorder %s17, 1
    %p40 = por %p38, %p39
    %p42 = scmp.ne.s32.totalorder %s25, %s41
    %p43 = scmp.eq.s32.totalorder %s17, 0
    %p44 = por %p42, %p43
    %s46 = sadd.s32 %s45, 1
    %p49 = scmp.eq.s32.totalorder %s11, 1
    %p50 = scmp.ne.s32.totalorder %s45, %s47
    %p51 = scmp.eq.s32.totalorder %s11, 0
    %p52 = por %p50, %p51
    %p53 = scmp.ne.s32.totalorder %s45, %s47
    %p54 = scmp.eq.s32.totalorder %s16, 1
    %p55 = por %p53, %p54
    %p56 = scmp.ne.s32.totalorder %s47, %s48
    %p57 = scmp.eq.s32.totalorder %s16, 0
    %p58 = por %p56, %p57
    %p59 = scmp.ne.s32.totalorder %s47, %s48
    %p60 = scmp.eq.s32.totalorder %s17, 1
    %p61 = por %p59, %p60
    %p63 = scmp.ne.s32.totalorder %s48, %s62
    %p64 = scmp.eq.s32.totalorder %s17, 0
    %p65 = por %p63, %p64
    %s67 = sadd.s32 %s66, 1
    %p70 = scmp.eq.s32.totalorder %s11, 1
    %p71 = scmp.ne.s32.totalorder %s66, %s68
    %p72 = scmp.eq.s32.totalorder %s11, 0
    %p73 = por %p71, %p72
    %p74 = scmp.ne.s32.totalorder %s66, %s68
    %p75 = scmp.eq.s32.totalorder %s16, 1
    %p76 = por %p74, %p75
    %p77 = scmp.ne.s32.totalorder %s68, %s69
    %p78 = scmp.eq.s32.totalorder %s16, 0
    %p79 = por %p77, %p78
    %p80 = scmp.ne.s32.totalorder %s68, %s69
    %p81 = scmp.eq.s32.totalorder %s17, 1
    %p82 = por %p80, %p81
    %p84 = scmp.ne.s32.totalorder %s69, %s83
    %p85 = scmp.eq.s32.totalorder %s17, 0
    %p86 = por %p84, %p85
    %s88 = sadd.s32 %s87, 1
    %p91 = scmp.eq.s32.totalorder %s11, 1
    %p92 = scmp.ne.s32.totalorder %s87, %s89
    %p93 = scmp.eq.s32.totalorder %s11, 0
    %p94 = por %p92, %p93
    %p95 = scmp.ne.s32.totalorder %s87, %s89
    %p96 = scmp.eq.s32.totalorder %s16, 1
    %p97 = por %p95, %p96
    %p98 = scmp.ne.s32.totalorder %s89, %s90
    %p99 = scmp.eq.s32.totalorder %s16, 0
    %p100 = por %p98, %p99
    %p101 = scmp.ne.s32.totalorder %s89, %s90
    %p102 = scmp.eq.s32.totalorder %s17, 1
    %p103 = por %p101, %p102
    %p105 = scmp.ne.s32.totalorder %s90, %s104
    %p106 = scmp.eq.s32.totalorder %s17, 0
    %p107 = por %p105, %p106
    %s108 = ssub.s32 %s11, %s18
    %p109 = scmp.eq.s32.totalorder %s108, 0
    %s111 = sadd.s32 %s110, 1
    %s112 = scalar_select %p109, %s110, %s111
    %p115 = pneg %p109
    %p116 = scmp.eq.s32.totalorder %s11, 1
    %p117 = por %p115, %p116
    %p118 = scmp.ne.s32.totalorder %s110, %s113
    %p119 = scmp.eq.s32.totalorder %s11, 0
    %p120 = por %p118, %p119
    %p121 = scmp.ne.s32.totalorder %s110, %s113
    %p122 = scmp.eq.s32.totalorder %s16, 1
    %p123 = por %p121, %p122
    %p124 = scmp.ne.s32.totalorder %s113, %s114
    %p125 = scmp.eq.s32.totalorder %s16, 0
    %p126 = por %p124, %p125
    %p127 = scmp.ne.s32.totalorder %s113, %s114
    %p128 = scmp.eq.s32.totalorder %s17, 1
    %p129 = por %p127, %p128
    %p131 = scmp.ne.s32.totalorder %s114, %s130
    %p132 = scmp.eq.s32.totalorder %s17, 0
    %p133 = por %p131, %p132
    %p134 = scmp.le.s32.totalorder 1, %s11
    %p135 = scmp.lt.s32.totalorder %s11, 3
    %p136 = pnand %p134, %p135
    %p137 = pneg %p136
    // Predicated region
    $region9: #{reconstruction_forward.22} parent=5 // pred_check
      _
    $region10: #{reconstruction_forward.22} parent=5 // pred_check_branch
      %139 = sbr.rel (%p136) target = $region12
    $region11: #{reconstruction_forward.22} parent=5 // pred_region
      %s140 = ssub.s32 %s11, 1
      // Predicated region
      $region13: #{reconstruction_forward.22} parent=11 // pred_check
        %p141 = pneg %p58
      $region14: #{reconstruction_forward.22} parent=11 // pred_check_branch
        %143 = sbr.rel (%p141) target = $region16
      $region15: #{reconstruction_forward.22} parent=11 // pred_region
        _
      $region16: #{reconstruction_forward.22} parent=11 // pred_fallthru
        _
      // Predicated region
      $region17: #{reconstruction_forward.22} parent=11 // pred_check
        %p144 = pneg %p79
      $region18: #{reconstruction_forward.22} parent=11 // pred_check_branch
        %146 = sbr.rel (%p144) target = $region20
      $region19: #{reconstruction_forward.22} parent=11 // pred_region
        _
      $region20: #{reconstruction_forward.22} parent=11 // pred_fallthru
        _
      // Predicated region
      $region21: #{reconstruction_forward.22} parent=11 // pred_check
        %p147 = pneg %p100
      $region22: #{reconstruction_forward.22} parent=11 // pred_check_branch
        %149 = sbr.rel (%p147) target = $region24
      $region23: #{reconstruction_forward.22} parent=11 // pred_region
        _
      $region24: #{reconstruction_forward.22} parent=11 // pred_fallthru
        _
    $region12: #{reconstruction_forward.22} parent=5 // pred_fallthru
      _
    %p150 = scmp.lt.s32.totalorder %s11, 2
    // Predicated region
    $region25: #{reconstruction_forward.22} parent=5 // pred_check
      %p151 = pneg %p150
    $region26: #{reconstruction_forward.22} parent=5 // pred_check_branch
      %153 = sbr.rel (%p151) target = $region28
    $region27: #{reconstruction_forward.22} parent=5 // pred_region
      // Predicated region
      $region29: #{reconstruction_forward.22} parent=27 // pred_check
        %p154 = pneg %p31
      $region30: #{reconstruction_forward.22} parent=27 // pred_check_branch
        %156 = sbr.rel (%p154) target = $region32
      $region31: #{reconstruction_forward.22} parent=27 // pred_region
        %s157 = smul.u32 2, %s11
        %p158 = scmp.lt.s32.totalorder %s157, 3
        %s159 = scalar_select %p158, %s157, 3
        %s160 = smul.addr %s159, 3
        %s161 = smul.addr %s160, 4
        %s162 = scalar_lea.vmem %s0, %s161
        %s163 = smul.u32 2, %s11
      $region32: #{reconstruction_forward.22} parent=27 // pred_fallthru
        _
    $region28: #{reconstruction_forward.22} parent=5 // pred_fallthru
      _
    %p164 = scmp.le.s32.totalorder 1, %s11
    %p165 = scmp.lt.s32.totalorder %s11, 3
    %p166 = pnand %p164, %p165
    %p167 = pneg %p166
    // Predicated region
    $region33: #{reconstruction_forward.22} parent=5 // pred_check
      _
    $region34: #{reconstruction_forward.22} parent=5 // pred_check_branch
      %169 = sbr.rel (%p166) target = $region36
    $region35: #{reconstruction_forward.22} parent=5 // pred_region
      %s170 = ssub.s32 %s11, 1
      %s171 = smul.u32 2, %s16
      %p172 = scmp.lt.s32.totalorder %s171, 3
      %s173 = scalar_select %p172, %s171, 3
      %s174 = smul.addr %s173, 3
      %s175 = smul.addr %s174, 4
      %s176 = scalar_lea.vmem %s0, %s175
      %p177 = pneg %p37
      %p178 = pneg %p34
      %p179 = pneg %p58
      %p180 = pneg %p55
      %p181 = pneg %p79
      %p182 = pneg %p76
      %p183 = pneg %p100
      %p184 = pneg %p97
      %p185 = pneg %p126
      %p186 = pneg %p123
      %s187 = smul.u32 2, %s16
      %p188 = scmp.lt.s32.totalorder %s187, 3
      %s189 = scalar_select %p188, %s187, 3
      %s190 = smul.addr %s189, 8
      %s191 = scalar_lea.vmem %s4, %s190
      %s192 = smul.u32 2, %s16
      %p193 = scmp.lt.s32.totalorder %s192, 3
      %s194 = scalar_select %p193, %s192, 3
      %s195 = smul.addr %s194, 3
      %s196 = smul.addr %s195, 4
      %s197 = scalar_lea.vmem %s0, %s196
      %s198 = smul.u32 2, %s16
      %s199 = smul.u32 2, %s16
      %p200 = scmp.lt.s32.totalorder %s199, 3
      %s201 = scalar_select %p200, %s199, 3
      %s202 = smul.addr %s201, 8
      %s203 = scalar_lea.vmem %s4, %s202
      %s204 = smul.u32 2, %s16
      %v205 = vld [vmem:[%s197] sm:$0xff]
      %v206 = vld [vmem:[%s197 + $0x8] sm:$0xf]
      %v207 = vld [vmem:[%s197 + $0xc] sm:$0xff]
      %v208 = vld [vmem:[%s197 + $0x14] sm:$0xf]
      %v209 = vld [vmem:[%s1] sm:$0xf]
      %v210 = vld [vmem:[%s1 + $0x4] sm:$0xf]
      %v211 = vld [vmem:[%s1 + $0x8] sm:$0xf]
      %v212 = vld [vmem:[%s1 + $0xc] sm:$0xf]
      %v213 = vld [vmem:[%s1 + $0x10] sm:$0xf]
      %v214 = vld [vmem:[%s1 + $0x14] sm:$0xf]
      %v215 = vld [vmem:[%s1 + $0x18] sm:$0xf]
      %v216 = vld [vmem:[%s1 + $0x1c] sm:$0xf]
      %v217 = vld [vmem:[%s1 + $0x20] sm:$0xf]
      %v218 = vld [vmem:[%s1 + $0x24] sm:$0xf]
      %v219 = vld [vmem:[%s1 + $0x28] sm:$0xf]
      %v220 = vld [vmem:[%s1 + $0x2c] sm:$0xf]
      %v221 = vld [vmem:[%s1 + $0x30] sm:$0xf]
      %v222 = vld [vmem:[%s1 + $0x34] sm:$0xf]
      %v223 = vld [vmem:[%s1 + $0x38] sm:$0xf]
      %v224 = vld [vmem:[%s1 + $0x3c] sm:$0xf]
      %v225 = vld [vmem:[%s1 + $0x40] sm:$0xf]
      %v226 = vld [vmem:[%s1 + $0x44] sm:$0xf]
      %v227 = vld [vmem:[%s1 + $0x48] sm:$0xf]
      %v228 = vld [vmem:[%s1 + $0x4c] sm:$0xf]
      %v229 = vld [vmem:[%s1 + $0x50] sm:$0xf]
      %v230 = vld [vmem:[%s1 + $0x54] sm:$0xf]
      %v231 = vld [vmem:[%s1 + $0x58] sm:$0xf]
      %v232 = vld [vmem:[%s1 + $0x5c] sm:$0xf]
      %v233 = vld [vmem:[%s1 + $0x60] sm:$0xf]
      %v234 = vld [vmem:[%s1 + $0x64] sm:$0xf]
      %v235 = vld [vmem:[%s1 + $0x68] sm:$0xf]
      %v236 = vld [vmem:[%s1 + $0x6c] sm:$0xf]
      %v237 = vld [vmem:[%s1 + $0x70] sm:$0xf]
      %v238 = vld [vmem:[%s1 + $0x74] sm:$0xf]
      %v239 = vld [vmem:[%s1 + $0x78] sm:$0xf]
      %v240 = vld [vmem:[%s1 + $0x7c] sm:$0xf]
      %v241 = vld [vmem:[%s1 + $0x80] sm:$0xf]
      %v242 = vld [vmem:[%s1 + $0x84] sm:$0xf]
      %v243 = vld [vmem:[%s1 + $0x88] sm:$0xf]
      %v244 = vld [vmem:[%s1 + $0x8c] sm:$0xf]
      %v245 = vld [vmem:[%s1 + $0x90] sm:$0xf]
      %v246 = vld [vmem:[%s1 + $0x94] sm:$0xf]
      %v247 = vld [vmem:[%s1 + $0x98] sm:$0xf]
      %v248 = vld [vmem:[%s1 + $0x9c] sm:$0xf]
      %v249 = vld [vmem:[%s1 + $0xa0] sm:$0xf]
      %v250 = vld [vmem:[%s1 + $0xa4] sm:$0xf]
      %v251 = vld [vmem:[%s1 + $0xa8] sm:$0xf]
      %v252 = vld [vmem:[%s1 + $0xac] sm:$0xf]
      %v253 = vld [vmem:[%s1 + $0xb0] sm:$0xf]
      %v254 = vld [vmem:[%s1 + $0xb4] sm:$0xf]
      %v255 = vld [vmem:[%s1 + $0xb8] sm:$0xf]
      %v256 = vld [vmem:[%s1 + $0xbc] sm:$0xf]
      %v257 = vld [vmem:[%s2] sm:$0x1]
      %v259 = vperm.slane %v257, 0
      %v265 = vunpack.c.l.b16 %v205
      %v266 = vunpack.c.h.b16 %v205
      %v267 = vunpack.c.l.b16 %v206
      %v268 = vunpack.c.l.b16 %v207
      %v269 = vunpack.c.h.b16 %v207
      %v270 = vunpack.c.l.b16 %v208
      %v271 = vpack.c.b16 %v268, %v265
      %v272 = vpack.c.b16 %v269, %v266
      %v273 = vpack.c.b16 %v270, %v267
      %v325 = vunpack.c.l.b16 %v209
      %v326 = vunpack.c.l.b16 %v210
      %v327 = vunpack.c.l.b16 %v211
      %v328 = vunpack.c.l.b16 %v212
      %v329 = vunpack.c.l.b16 %v213
      %v330 = vunpack.c.l.b16 %v214
      %v331 = vunpack.c.l.b16 %v215
      %v332 = vunpack.c.l.b16 %v216
      %v333 = vunpack.c.l.b16 %v217
      %v334 = vunpack.c.l.b16 %v218
      %v335 = vunpack.c.l.b16 %v219
      %v336 = vunpack.c.l.b16 %v220
      %v337 = vunpack.c.l.b16 %v221
      %v338 = vunpack.c.l.b16 %v222
      %v339 = vunpack.c.l.b16 %v223
      %v340 = vunpack.c.l.b16 %v224
      %v341 = vunpack.c.l.b16 %v225
      %v342 = vunpack.c.l.b16 %v226
      %v343 = vunpack.c.l.b16 %v227
      %v344 = vunpack.c.l.b16 %v228
      %v345 = vunpack.c.l.b16 %v229
      %v346 = vunpack.c.l.b16 %v230
      %v347 = vunpack.c.l.b16 %v231
      %v348 = vunpack.c.l.b16 %v232
      %v349 = vunpack.c.l.b16 %v233
      %v350 = vunpack.c.l.b16 %v234
      %v351 = vunpack.c.l.b16 %v235
      %v352 = vunpack.c.l.b16 %v236
      %v353 = vunpack.c.l.b16 %v237
      %v354 = vunpack.c.l.b16 %v238
      %v355 = vunpack.c.l.b16 %v239
      %v356 = vunpack.c.l.b16 %v240
      %v357 = vunpack.c.l.b16 %v241
      %v358 = vunpack.c.l.b16 %v242
      %v359 = vunpack.c.l.b16 %v243
      %v360 = vunpack.c.l.b16 %v244
      %v361 = vunpack.c.l.b16 %v245
      %v362 = vunpack.c.l.b16 %v246
      %v363 = vunpack.c.l.b16 %v247
      %v364 = vunpack.c.l.b16 %v248
      %v365 = vunpack.c.l.b16 %v249
      %v366 = vunpack.c.l.b16 %v250
      %v367 = vunpack.c.l.b16 %v251
      %v368 = vunpack.c.l.b16 %v252
      %v369 = vunpack.c.l.b16 %v253
      %v370 = vunpack.c.l.b16 %v254
      %v371 = vunpack.c.l.b16 %v255
      %v372 = vunpack.c.l.b16 %v256
      %v373 = vpack.c.b16 %v326, %v325
      %v374 = vpack.c.b16 %v328, %v327
      %v375 = vpack.c.b16 %v330, %v329
      %v376 = vpack.c.b16 %v332, %v331
      %v377 = vpack.c.b16 %v334, %v333
      %v378 = vpack.c.b16 %v336, %v335
      %v379 = vpack.c.b16 %v338, %v337
      %v380 = vpack.c.b16 %v340, %v339
      %v381 = vpack.c.b16 %v342, %v341
      %v382 = vpack.c.b16 %v344, %v343
      %v383 = vpack.c.b16 %v346, %v345
      %v384 = vpack.c.b16 %v348, %v347
      %v385 = vpack.c.b16 %v350, %v349
      %v386 = vpack.c.b16 %v352, %v351
      %v387 = vpack.c.b16 %v354, %v353
      %v388 = vpack.c.b16 %v356, %v355
      %v389 = vpack.c.b16 %v358, %v357
      %v390 = vpack.c.b16 %v360, %v359
      %v391 = vpack.c.b16 %v362, %v361
      %v392 = vpack.c.b16 %v364, %v363
      %v393 = vpack.c.b16 %v366, %v365
      %v394 = vpack.c.b16 %v368, %v367
      %v395 = vpack.c.b16 %v370, %v369
      %v396 = vpack.c.b16 %v372, %v371
      %421 = vmatpush.bf16.msra.mxu0 %v380
      %422 = vmatpush.bf16.msra.mxu0 %v379
      %423 = vmatpush.bf16.msra.mxu0 %v378
      %424 = vmatpush.bf16.msra.mxu0 %v377
      %425 = vmatpush.bf16.msra.mxu0 %v376
      %426 = vmatpush.bf16.msra.mxu0 %v375
      %427 = vmatpush.bf16.msra.mxu0 %v374
      %428 = vmatpush.bf16.msra.mxu0 %v373
      %429 = vmatmul.bf16.gmra.mxu0 %v271
      %v430 = vpop.f32.mrf.mxu0
      %v431 = vadd.f32 %v259, %v430
      %v432 = vpop.f32.mrf.mxu0
      %v433 = vadd.f32 %v259, %v432
      %434 = vdwg.mxu0
      %435 = vmatpush.bf16.msra.mxu0 %v388
      %436 = vmatpush.bf16.msra.mxu0 %v387
      %437 = vmatpush.bf16.msra.mxu0 %v386
      %438 = vmatpush.bf16.msra.mxu0 %v385
      %439 = vmatpush.bf16.msra.mxu0 %v384
      %440 = vmatpush.bf16.msra.mxu0 %v383
      %441 = vmatpush.bf16.msra.mxu0 %v382
      %442 = vmatpush.bf16.msra.mxu0 %v381
      %443 = vmatmul.bf16.gmra.mxu0 %v272
      %v444 = vpop.f32.mrf.mxu0
      %v445 = vadd.f32 %v431, %v444
      %v446 = vpop.f32.mrf.mxu0
      %v447 = vadd.f32 %v433, %v446
      %448 = vdwg.mxu0
      %449 = vmatpush.bf16.msra.mxu0 %v396
      %450 = vmatpush.bf16.msra.mxu0 %v395
      %451 = vmatpush.bf16.msra.mxu0 %v394
      %452 = vmatpush.bf16.msra.mxu0 %v393
      %453 = vmatpush.bf16.msra.mxu0 %v392
      %454 = vmatpush.bf16.msra.mxu0 %v391
      %455 = vmatpush.bf16.msra.mxu0 %v390
      %456 = vmatpush.bf16.msra.mxu0 %v389
      %457 = vmatmul.bf16.gmra.mxu0 %v273
      %v458 = vpop.f32.mrf.mxu0
      %v459 = vadd.f32 %v445, %v458
      %v460 = vpop.f32.mrf.mxu0
      %v461 = vadd.f32 %v447, %v460
      %462 = vdwg.mxu0
      %vm463 = vcmask 523264
      %v464 = vsel %vm463, %v459, 0.0
      %v465 = vsel %vm463, %v461, 0.0
      %v466 = vadd.f32 %v464, %v465
      %v467 = vrot.slane %v466, 4
      %v468 = vadd.f32 %v466, %v467
      %v469 = vrot.slane %v468, 2
      %v470 = vadd.f32 %v468, %v469
      %v471 = vrot.slane %v470, 1
      %v472 = vadd.f32 %v470, %v471
      %v473 = vrcp.pop 16.0
      %v474 = vmul.f32 16.0, %v473
      %v475 = vsub.f32 1.0, %v474
      %v476 = vmul.f32 %v473, %v475
      %v477 = vadd.f32 %v473, %v476
      %vm478 = vweird.f32 %v473
      %v479 = vsel %vm478, %v473, %v477
      %v480 = vmul.f32 %v472, %v479
      %482 = vrot.lane.b32.xlu0 %v480, 112
      %v483 = vpop.permute.xlu0 %482
      %v485 = vadd.f32 %v480, %v483
      %486 = vrot.lane.b32.xlu0 %v480, 96
      %v487 = vpop.permute.xlu0 %486
      %v489 = vadd.f32 %v485, %v487
      %490 = vrot.lane.b32.xlu0 %v480, 80
      %v491 = vpop.permute.xlu0 %490
      %v493 = vadd.f32 %v489, %v491
      %v494 = vmul.f32 %v493, 0.25
      %496 = vrot.lane.b32.xlu0 %v494, 16
      %v497 = vpop.permute.xlu0 %496
      %499 = vrot.lane.b32.xlu0 %v494, 32
      %v500 = vpop.permute.xlu0 %499
      %502 = vrot.lane.b32.xlu0 %v494, 48
      %v503 = vpop.permute.xlu0 %502
      %vm505 = vcmask 130048
      %v506 = vsel %vm505, %v494, %v497
      %vm507 = vcmask 261120
      %v508 = vsel %vm507, %v506, %v500
      %vm509 = vcmask 392192
      %v510 = vsel %vm509, %v508, %v503
      %v511 = vperm.slane %v510, 0
      %v512 = vsub.f32 %v459, %v511
      %v513 = vsub.f32 %v461, %v511
      %v514 = vmul.f32 %v512, %v512
      %v515 = vmul.f32 %v513, %v513
      %v516 = vsel %vm463, %v514, 0.0
      %v517 = vsel %vm463, %v515, 0.0
      %v518 = vadd.f32 %v516, %v517
      %v519 = vrot.slane %v518, 4
      %v520 = vadd.f32 %v518, %v519
      %v521 = vrot.slane %v520, 2
      %v522 = vadd.f32 %v520, %v521
      %v523 = vrot.slane %v522, 1
      %v524 = vadd.f32 %v522, %v523
      %v525 = vmul.f32 %v524, %v479
      %527 = vrot.lane.b32.xlu0 %v525, 112
      %v528 = vpop.permute.xlu0 %527
      %v530 = vadd.f32 %v525, %v528
      %531 = vrot.lane.b32.xlu0 %v525, 96
      %v532 = vpop.permute.xlu0 %531
      %v534 = vadd.f32 %v530, %v532
      %535 = vrot.lane.b32.xlu0 %v525, 80
      %v536 = vpop.permute.xlu0 %535
      %v538 = vadd.f32 %v534, %v536
      %v539 = vmul.f32 %v538, 0.25
      %541 = vrot.lane.b32.xlu0 %v539, 16
      %v542 = vpop.permute.xlu0 %541
      %544 = vrot.lane.b32.xlu0 %v539, 32
      %v545 = vpop.permute.xlu0 %544
      %547 = vrot.lane.b32.xlu0 %v539, 48
      %v548 = vpop.permute.xlu0 %547
      %v550 = vsel %vm505, %v539, %v542
      %v551 = vsel %vm507, %v550, %v545
      %v552 = vsel %vm509, %v551, %v548
      %v553 = vadd.f32 %v552, 1e-05
      %v554 = vrsqrt.pop %v553
      %v555 = vmul.f32 %v554, %v553
      %v556 = vmul.f32 %v555, %v554
      %v557 = vmul.f32 0.5, %v556
      %v558 = vsub.f32 1.5, %v557
      %v559 = vmul.f32 %v554, %v558
      %vm560 = vweird.f32 %v553
      %vm561 = vweird.f32 %v554
      %vm562 = vmor %vm560, %vm561
      %v563 = vsel %vm562, %v554, %v559
      %v564 = vperm.slane %v563, 0
      %v565 = vmul.f32 %v512, %v564
      %v566 = vmul.f32 %v513, %v564
      %s567 = sld [smem:[#allocation2]]
      %vm568 = vcmp.ge.f32.partialorder %v565, 0.0
      %vm569 = vcmp.ge.f32.partialorder %v566, 0.0
      %v570 = vstv %s567
      %v571 = vmul.f32 %v570, %v565
      %v572 = vmul.f32 %v570, %v566
      %v573 = vsel %vm568, %v565, %v571
      %v574 = vsel %vm569, %v566, %v572
      %575 = vst.msk [vmem:[%s203] sm:$0xff] %vm463, %v573
      %576 = vst.msk [vmem:[%s203 + $0x8] sm:$0xff] %vm463, %v574
      %s577 = smul.u32 2, %s16
      %p578 = scmp.lt.s32.totalorder %s577, 3
      %s579 = scalar_select %p578, %s577, 3
      %s580 = smul.addr %s579, 8
      %s581 = scalar_lea.vmem %s4, %s580
      // Predicated region
      $region37: #{reconstruction_forward.22} parent=35 // pred_check
        %p582 = pneg %p123
      $region38: #{reconstruction_forward.22} parent=35 // pred_check_branch
        %584 = sbr.rel (%p582) target = $region40
      $region39: #{reconstruction_forward.22} parent=35 // pred_region
        %s585 = smul.u32 2, %s16
      $region40: #{reconstruction_forward.22} parent=35 // pred_fallthru
        _
    $region36: #{reconstruction_forward.22} parent=5 // pred_fallthru
      _
    %p586 = scmp.le.s32.totalorder 2, %s11
    // Predicated region
    $region41: #{reconstruction_forward.22} parent=5 // pred_check
      %p587 = pneg %p586
    $region42: #{reconstruction_forward.22} parent=5 // pred_check_branch
      %589 = sbr.rel (%p587) target = $region44
    $region43: #{reconstruction_forward.22} parent=5 // pred_region
      %s590 = ssub.s32 %s11, 2
      // Predicated region
      $region45: #{reconstruction_forward.22} parent=43 // pred_check
        %p591 = pneg %p129
      $region46: #{reconstruction_forward.22} parent=43 // pred_check_branch
        %593 = sbr.rel (%p591) target = $region48
      $region47: #{reconstruction_forward.22} parent=43 // pred_region
        %s594 = smul.u32 2, %s17
        %p595 = scmp.lt.s32.totalorder %s594, 3
        %s596 = scalar_select %p595, %s594, 3
        %s597 = smul.addr %s596, 8
        %s598 = scalar_lea.vmem %s4, %s597
      $region48: #{reconstruction_forward.22} parent=43 // pred_fallthru
        _
    $region44: #{reconstruction_forward.22} parent=5 // pred_fallthru
      _
  $region6: #{reconstruction_forward.22} parent=0 // loop_footer
    %s15 = sadd.s32 1, %s11
  $region7: #{reconstruction_forward.22} parent=0 // loop_footer_branch
    %10 = sbr.rel target = $region3
  $region8: #{reconstruction_forward.22} parent=0 // loop_exit
    _

// kernel: reconstruction_forward.24
$region0: #{reconstruction_forward.24}
  #allocation0 [shape = 'u32[]', space=smem, size = 0x4, offset = 0x4, fixed_abs, tag = 'smem constant byte address 0x4 - core index']
  #allocation1 [shape = 'u32[72,128]{1,0:T(1,128)}', space=vmem, size = 0x9000, scoped, tag = 'internal scratch']
  #allocation2 [shape = 'f32[1]{0:T(128)S(6)}', space=smem, size = 0x200, scoped, tag = 'scoped memory for reconstruction_forward.24']
  %s0 = inlined_call_operand.vmem [shape: f32[128,128], index: 0, kind: input, shape index: {}]
  %s1 = inlined_call_operand.vmem [shape: f32[4,128], index: 1, kind: input, shape index: {}]
  %s2 = inlined_call_operand.vmem [shape: f32[1,4], index: 2, kind: input, shape index: {}]
  %s3 = inlined_call_operand.<no memory space> [shape: f32[1], index: 3, kind: input, shape index: {}]
  %s4 = inlined_call_operand.vmem [shape: f32[128,4], index: 4, kind: output, shape index: {}]
  %s5 = sld [smem:[#allocation0]]
  $region49: #{reconstruction_forward.24} parent=0
    _
  %s7 = ssub.s32 1, %s5
  %s8 = scalar_select 0, %s7, %s5
  %9 = sst [smem:[#allocation2]] %s3
  loop: start=0, step=1, limit=4
  $region2: #{reconstruction_forward.24} parent=0 // loop_pre_header
    _
  $region3: #{reconstruction_forward.24} parent=0 // loop_header
    %s11 = sphi 0, %s15
    %p12 = scmp.ge.s32.totalorder %s11, 4
    %s21 = sphi 0, %s23
    %s24 = sphi 0, %s21
    %s25 = sphi 0, %s24
    %s41 = sphi 0, %s25
    %s45 = sphi 0, %s45
    %s47 = sphi 0, %s45
    %s48 = sphi 0, %s47
    %s62 = sphi 0, %s48
    %s66 = sphi 0, %s66
    %s68 = sphi 0, %s66
    %s69 = sphi 0, %s68
    %s83 = sphi 0, %s69
    %s87 = sphi 0, %s87
    %s89 = sphi 0, %s87
    %s90 = sphi 0, %s89
    %s104 = sphi 0, %s90
    %s110 = sphi 0, %s112
    %s113 = sphi 0, %s110
    %s114 = sphi 0, %s113
    %s130 = sphi 0, %s114
  $region4: #{reconstruction_forward.24} parent=0 // loop_header_branch
    %14 = sbr.rel (%p12) target = $region8
  $region5: #{reconstruction_forward.24} parent=0 // loop_body
    %s16 = ssub.s32 %s11, 1
    %s17 = ssub.s32 %s11, 2
    %s18 = sadd.s32 %s11, 1
    %s19 = ssub.s32 %s11, %s18
    %p20 = scmp.eq.s32.totalorder %s19, 0
    %s22 = sadd.s32 %s21, 1
    %s23 = scalar_select %p20, %s21, %s22
    %p26 = pneg %p20
    %p27 = scmp.eq.s32.totalorder %s11, 1
    %p28 = por %p26, %p27
    %p29 = scmp.ne.s32.totalorder %s21, %s24
    %p30 = scmp.eq.s32.totalorder %s11, 0
    %p31 = por %p29, %p30
    %p32 = scmp.ne.s32.totalorder %s21, %s24
    %p33 = scmp.eq.s32.totalorder %s16, 1
    %p34 = por %p32, %p33
    %p35 = scmp.ne.s32.totalorder %s24, %s25
    %p36 = scmp.eq.s32.totalorder %s16, 0
    %p37 = por %p35, %p36
    %p38 = scmp.ne.s32.totalorder %s24, %s25
    %p39 = scmp.eq.s32.totalorder %s17, 1
    %p40 = por %p38, %p39
    %p42 = scmp.ne.s32.totalorder %s25, %s41
    %p43 = scmp.eq.s32.totalorder %s17, 0
    %p44 = por %p42, %p43
    %s46 = sadd.s32 %s45, 1
    %p49 = scmp.eq.s32.totalorder %s11, 1
    %p50 = scmp.ne.s32.totalorder %s45, %s47
    %p51 = scmp.eq.s32.totalorder %s11, 0
    %p52 = por %p50, %p51
    %p53 = scmp.ne.s32.totalorder %s45, %s47
    %p54 = scmp.eq.s32.totalorder %s16, 1
    %p55 = por %p53, %p54
    %p56 = scmp.ne.s32.totalorder %s47, %s48
    %p57 = scmp.eq.s32.totalorder %s16, 0
    %p58 = por %p56, %p57
    %p59 = scmp.ne.s32.totalorder %s47, %s48
    %p60 = scmp.eq.s32.totalorder %s17, 1
    %p61 = por %p59, %p60
    %p63 = scmp.ne.s32.totalorder %s48, %s62
    %p64 = scmp.eq.s32.totalorder %s17, 0
    %p65 = por %p63, %p64
    %s67 = sadd.s32 %s66, 1
    %p70 = scmp.eq.s32.totalorder %s11, 1
    %p71 = scmp.ne.s32.totalorder %s66, %s68
    %p72 = scmp.eq.s32.totalorder %s11, 0
    %p73 = por %p71, %p72
    %p74 = scmp.ne.s32.totalorder %s66, %s68
    %p75 = scmp.eq.s32.totalorder %s16, 1
    %p76 = por %p74, %p75
    %p77 = scmp.ne.s32.totalorder %s68, %s69
    %p78 = scmp.eq.s32.totalorder %s16, 0
    %p79 = por %p77, %p78
    %p80 = scmp.ne.s32.totalorder %s68, %s69
    %p81 = scmp.eq.s32.totalorder %s17, 1
    %p82 = por %p80, %p81
    %p84 = scmp.ne.s32.totalorder %s69, %s83
    %p85 = scmp.eq.s32.totalorder %s17, 0
    %p86 = por %p84, %p85
    %s88 = sadd.s32 %s87, 1
    %p91 = scmp.eq.s32.totalorder %s11, 1
    %p92 = scmp.ne.s32.totalorder %s87, %s89
    %p93 = scmp.eq.s32.totalorder %s11, 0
    %p94 = por %p92, %p93
    %p95 = scmp.ne.s32.totalorder %s87, %s89
    %p96 = scmp.eq.s32.totalorder %s16, 1
    %p97 = por %p95, %p96
    %p98 = scmp.ne.s32.totalorder %s89, %s90
    %p99 = scmp.eq.s32.totalorder %s16, 0
    %p100 = por %p98, %p99
    %p101 = scmp.ne.s32.totalorder %s89, %s90
    %p102 = scmp.eq.s32.totalorder %s17, 1
    %p103 = por %p101, %p102
    %p105 = scmp.ne.s32.totalorder %s90, %s104
    %p106 = scmp.eq.s32.totalorder %s17, 0
    %p107 = por %p105, %p106
    %s108 = ssub.s32 %s11, %s18
    %p109 = scmp.eq.s32.totalorder %s108, 0
    %s111 = sadd.s32 %s110, 1
    %s112 = scalar_select %p109, %s110, %s111
    %p115 = pneg %p109
    %p116 = scmp.eq.s32.totalorder %s11, 1
    %p117 = por %p115, %p116
    %p118 = scmp.ne.s32.totalorder %s110, %s113
    %p119 = scmp.eq.s32.totalorder %s11, 0
    %p120 = por %p118, %p119
    %p121 = scmp.ne.s32.totalorder %s110, %s113
    %p122 = scmp.eq.s32.totalorder %s16, 1
    %p123 = por %p121, %p122
    %p124 = scmp.ne.s32.totalorder %s113, %s114
    %p125 = scmp.eq.s32.totalorder %s16, 0
    %p126 = por %p124, %p125
    %p127 = scmp.ne.s32.totalorder %s113, %s114
    %p128 = scmp.eq.s32.totalorder %s17, 1
    %p129 = por %p127, %p128
    %p131 = scmp.ne.s32.totalorder %s114, %s130
    %p132 = scmp.eq.s32.totalorder %s17, 0
    %p133 = por %p131, %p132
    %p134 = scmp.le.s32.totalorder 1, %s11
    %p135 = scmp.lt.s32.totalorder %s11, 3
    %p136 = pnand %p134, %p135
    %p137 = pneg %p136
    // Predicated region
    $region9: #{reconstruction_forward.24} parent=5 // pred_check
      _
    $region10: #{reconstruction_forward.24} parent=5 // pred_check_branch
      %139 = sbr.rel (%p136) target = $region12
    $region11: #{reconstruction_forward.24} parent=5 // pred_region
      %s140 = ssub.s32 %s11, 1
      // Predicated region
      $region13: #{reconstruction_forward.24} parent=11 // pred_check
        %p141 = pneg %p58
      $region14: #{reconstruction_forward.24} parent=11 // pred_check_branch
        %143 = sbr.rel (%p141) target = $region16
      $region15: #{reconstruction_forward.24} parent=11 // pred_region
        _
      $region16: #{reconstruction_forward.24} parent=11 // pred_fallthru
        _
      // Predicated region
      $region17: #{reconstruction_forward.24} parent=11 // pred_check
        %p144 = pneg %p79
      $region18: #{reconstruction_forward.24} parent=11 // pred_check_branch
        %146 = sbr.rel (%p144) target = $region20
      $region19: #{reconstruction_forward.24} parent=11 // pred_region
        _
      $region20: #{reconstruction_forward.24} parent=11 // pred_fallthru
        _
      // Predicated region
      $region21: #{reconstruction_forward.24} parent=11 // pred_check
        %p147 = pneg %p100
      $region22: #{reconstruction_forward.24} parent=11 // pred_check_branch
        %149 = sbr.rel (%p147) target = $region24
      $region23: #{reconstruction_forward.24} parent=11 // pred_region
        _
      $region24: #{reconstruction_forward.24} parent=11 // pred_fallthru
        _
    $region12: #{reconstruction_forward.24} parent=5 // pred_fallthru
      _
    %p150 = scmp.lt.s32.totalorder %s11, 2
    // Predicated region
    $region25: #{reconstruction_forward.24} parent=5 // pred_check
      %p151 = pneg %p150
    $region26: #{reconstruction_forward.24} parent=5 // pred_check_branch
      %153 = sbr.rel (%p151) target = $region28
    $region27: #{reconstruction_forward.24} parent=5 // pred_region
      // Predicated region
      $region29: #{reconstruction_forward.24} parent=27 // pred_check
        %p154 = pneg %p31
      $region30: #{reconstruction_forward.24} parent=27 // pred_check_branch
        %156 = sbr.rel (%p154) target = $region32
      $region31: #{reconstruction_forward.24} parent=27 // pred_region
        %s157 = smul.u32 8, %s11
        %p158 = scmp.lt.s32.totalorder %s157, 15
        %s159 = scalar_select %p158, %s157, 15
        %s160 = smul.addr %s159, 8
        %s161 = scalar_lea.vmem %s0, %s160
        %s162 = smul.u32 8, %s11
      $region32: #{reconstruction_forward.24} parent=27 // pred_fallthru
        _
    $region28: #{reconstruction_forward.24} parent=5 // pred_fallthru
      _
    %p163 = scmp.le.s32.totalorder 1, %s11
    %p164 = scmp.lt.s32.totalorder %s11, 3
    %p165 = pnand %p163, %p164
    %p166 = pneg %p165
    // Predicated region
    $region33: #{reconstruction_forward.24} parent=5 // pred_check
      _
    $region34: #{reconstruction_forward.24} parent=5 // pred_check_branch
      %168 = sbr.rel (%p165) target = $region36
    $region35: #{reconstruction_forward.24} parent=5 // pred_region
      %s169 = ssub.s32 %s11, 1
      %s170 = smul.u32 8, %s16
      %p171 = scmp.lt.s32.totalorder %s170, 15
      %s172 = scalar_select %p171, %s170, 15
      %s173 = smul.addr %s172, 8
      %s174 = scalar_lea.vmem %s0, %s173
      %p175 = pneg %p37
      %p176 = pneg %p34
      %p177 = pneg %p58
      %p178 = pneg %p55
      %p179 = pneg %p79
      %p180 = pneg %p76
      %p181 = pneg %p100
      %p182 = pneg %p97
      %p183 = pneg %p126
      %p184 = pneg %p123
      %s185 = smul.u32 8, %s16
      %p186 = scmp.lt.s32.totalorder %s185, 15
      %s187 = scalar_select %p186, %s185, 15
      %s188 = smul.addr %s187, 8
      %s189 = scalar_lea.vmem %s4, %s188
      %s190 = smul.u32 8, %s16
      %p191 = scmp.lt.s32.totalorder %s190, 15
      %s192 = scalar_select %p191, %s190, 15
      %s193 = smul.addr %s192, 8
      %s194 = scalar_lea.vmem %s0, %s193
      %s195 = smul.u32 8, %s16
      %s196 = smul.u32 8, %s16
      %p197 = scmp.lt.s32.totalorder %s196, 15
      %s198 = scalar_select %p197, %s196, 15
      %s199 = smul.addr %s198, 8
      %s200 = scalar_lea.vmem %s4, %s199
      %s201 = smul.u32 8, %s16
      %v202 = vld [vmem:[%s194] sm:$0xff]
      %v203 = vld [vmem:[%s194 + $0x8] sm:$0xff]
      %v204 = vld [vmem:[%s194 + $0x10] sm:$0xff]
      %v205 = vld [vmem:[%s194 + $0x18] sm:$0xff]
      %v206 = vld [vmem:[%s194 + $0x20] sm:$0xff]
      %v207 = vld [vmem:[%s194 + $0x28] sm:$0xff]
      %v208 = vld [vmem:[%s194 + $0x30] sm:$0xff]
      %v209 = vld [vmem:[%s194 + $0x38] sm:$0xff]
      %v210 = vld [vmem:[%s1] sm:$0x1]
      %v211 = vperm.slane %v210, 0
      %v212 = vmul.f32 %v202, %v211
      %v213 = vmul.f32 %v203, %v211
      %v214 = vmul.f32 %v204, %v211
      %v215 = vmul.f32 %v205, %v211
      %v216 = vmul.f32 %v206, %v211
      %v217 = vmul.f32 %v207, %v211
      %v218 = vmul.f32 %v208, %v211
      %v219 = vmul.f32 %v209, %v211
      %220 = vadd.xlane.f32.xlu0 %v212
      %v221 = vpop.xlane.xlu0 %220
      %222 = vadd.xlane.f32.xlu0 %v213
      %v223 = vpop.xlane.xlu0 %222
      %224 = vadd.xlane.f32.xlu0 %v214
      %v225 = vpop.xlane.xlu0 %224
      %226 = vadd.xlane.f32.xlu0 %v215
      %v227 = vpop.xlane.xlu0 %226
      %228 = vadd.xlane.f32.xlu0 %v216
      %v229 = vpop.xlane.xlu0 %228
      %230 = vadd.xlane.f32.xlu0 %v217
      %v231 = vpop.xlane.xlu0 %230
      %232 = vadd.xlane.f32.xlu0 %v218
      %v233 = vpop.xlane.xlu0 %232
      %234 = vadd.xlane.f32.xlu0 %v219
      %v235 = vpop.xlane.xlu0 %234
      %v236 = vld [vmem:[%s1 + $0x1] sm:$0x1]
      %v237 = vperm.slane %v236, 0
      %v238 = vmul.f32 %v202, %v237
      %v239 = vmul.f32 %v203, %v237
      %v240 = vmul.f32 %v204, %v237
      %v241 = vmul.f32 %v205, %v237
      %v242 = vmul.f32 %v206, %v237
      %v243 = vmul.f32 %v207, %v237
      %v244 = vmul.f32 %v208, %v237
      %v245 = vmul.f32 %v209, %v237
      %246 = vadd.xlane.f32.xlu0 %v238
      %v247 = vpop.xlane.xlu0 %246
      %248 = vadd.xlane.f32.xlu0 %v239
      %v249 = vpop.xlane.xlu0 %248
      %250 = vadd.xlane.f32.xlu0 %v240
      %v251 = vpop.xlane.xlu0 %250
      %252 = vadd.xlane.f32.xlu0 %v241
      %v253 = vpop.xlane.xlu0 %252
      %254 = vadd.xlane.f32.xlu0 %v242
      %v255 = vpop.xlane.xlu0 %254
      %256 = vadd.xlane.f32.xlu0 %v243
      %v257 = vpop.xlane.xlu0 %256
      %258 = vadd.xlane.f32.xlu0 %v244
      %v259 = vpop.xlane.xlu0 %258
      %260 = vadd.xlane.f32.xlu0 %v245
      %v261 = vpop.xlane.xlu0 %260
      %v262 = vld [vmem:[%s1 + $0x2] sm:$0x1]
      %v263 = vperm.slane %v262, 0
      %v264 = vmul.f32 %v202, %v263
      %v265 = vmul.f32 %v203, %v263
      %v266 = vmul.f32 %v204, %v263
      %v267 = vmul.f32 %v205, %v263
      %v268 = vmul.f32 %v206, %v263
      %v269 = vmul.f32 %v207, %v263
      %v270 = vmul.f32 %v208, %v263
      %v271 = vmul.f32 %v209, %v263
      %272 = vadd.xlane.f32.xlu0 %v264
      %v273 = vpop.xlane.xlu0 %272
      %274 = vadd.xlane.f32.xlu0 %v265
      %v275 = vpop.xlane.xlu0 %274
      %276 = vadd.xlane.f32.xlu0 %v266
      %v277 = vpop.xlane.xlu0 %276
      %278 = vadd.xlane.f32.xlu0 %v267
      %v279 = vpop.xlane.xlu0 %278
      %280 = vadd.xlane.f32.xlu0 %v268
      %v281 = vpop.xlane.xlu0 %280
      %282 = vadd.xlane.f32.xlu0 %v269
      %v283 = vpop.xlane.xlu0 %282
      %284 = vadd.xlane.f32.xlu0 %v270
      %v285 = vpop.xlane.xlu0 %284
      %286 = vadd.xlane.f32.xlu0 %v271
      %v287 = vpop.xlane.xlu0 %286
      %v288 = vld [vmem:[%s1 + $0x3] sm:$0x1]
      %v289 = vperm.slane %v288, 0
      %v290 = vmul.f32 %v202, %v289
      %v291 = vmul.f32 %v203, %v289
      %v292 = vmul.f32 %v204, %v289
      %v293 = vmul.f32 %v205, %v289
      %v294 = vmul.f32 %v206, %v289
      %v295 = vmul.f32 %v207, %v289
      %v296 = vmul.f32 %v208, %v289
      %v297 = vmul.f32 %v209, %v289
      %298 = vadd.xlane.f32.xlu0 %v290
      %v299 = vpop.xlane.xlu0 %298
      %300 = vadd.xlane.f32.xlu0 %v291
      %v301 = vpop.xlane.xlu0 %300
      %302 = vadd.xlane.f32.xlu0 %v292
      %v303 = vpop.xlane.xlu0 %302
      %304 = vadd.xlane.f32.xlu0 %v293
      %v305 = vpop.xlane.xlu0 %304
      %306 = vadd.xlane.f32.xlu0 %v294
      %v307 = vpop.xlane.xlu0 %306
      %308 = vadd.xlane.f32.xlu0 %v295
      %v309 = vpop.xlane.xlu0 %308
      %310 = vadd.xlane.f32.xlu0 %v296
      %v311 = vpop.xlane.xlu0 %310
      %312 = vadd.xlane.f32.xlu0 %v297
      %v313 = vpop.xlane.xlu0 %312
      %vm314 = vcmask 7168
      %v315 = vsel %vm314, %v221, %v247
      %v316 = vsel %vm314, %v223, %v249
      %v317 = vsel %vm314, %v225, %v251
      %v318 = vsel %vm314, %v227, %v253
      %v319 = vsel %vm314, %v229, %v255
      %v320 = vsel %vm314, %v231, %v257
      %v321 = vsel %vm314, %v233, %v259
      %v322 = vsel %vm314, %v235, %v261
      %vm323 = vcmask 15360
      %v324 = vsel %vm323, %v315, %v273
      %v325 = vsel %vm323, %v316, %v275
      %v326 = vsel %vm323, %v317, %v277
      %v327 = vsel %vm323, %v318, %v279
      %v328 = vsel %vm323, %v319, %v281
      %v329 = vsel %vm323, %v320, %v283
      %v330 = vsel %vm323, %v321, %v285
      %v331 = vsel %vm323, %v322, %v287
      %vm332 = vcmask 23552
      %v333 = vsel %vm332, %v324, %v299
      %v334 = vsel %vm332, %v325, %v301
      %v335 = vsel %vm332, %v326, %v303
      %v336 = vsel %vm332, %v327, %v305
      %v337 = vsel %vm332, %v328, %v307
      %v338 = vsel %vm332, %v329, %v309
      %v339 = vsel %vm332, %v330, %v311
      %v340 = vsel %vm332, %v331, %v313
      %v341 = vld [vmem:[%s2] sm:$0x1]
      %v343 = vperm.slane %v341, 0
      %v345 = vadd.f32 %v333, %v343
      %v346 = vadd.f32 %v334, %v343
      %v347 = vadd.f32 %v335, %v343
      %v348 = vadd.f32 %v336, %v343
      %v349 = vadd.f32 %v337, %v343
      %v350 = vadd.f32 %v338, %v343
      %v351 = vadd.f32 %v339, %v343
      %v352 = vadd.f32 %v340, %v343
      %vm353 = vcmask 31744
      %v354 = vsel %vm353, %v345, 0.0
      %v355 = vsel %vm353, %v346, 0.0
      %v356 = vadd.f32 %v354, %v355
      %v357 = vsel %vm353, %v347, 0.0
      %v358 = vadd.f32 %v356, %v357
      %v359 = vsel %vm353, %v348, 0.0
      %v360 = vadd.f32 %v358, %v359
      %v361 = vsel %vm353, %v349, 0.0
      %v362 = vadd.f32 %v360, %v361
      %v363 = vsel %vm353, %v350, 0.0
      %v364 = vadd.f32 %v362, %v363
      %v365 = vsel %vm353, %v351, 0.0
      %v366 = vadd.f32 %v364, %v365
      %v367 = vsel %vm353, %v352, 0.0
      %v368 = vadd.f32 %v366, %v367
      %v369 = vrot.slane %v368, 4
      %v370 = vadd.f32 %v368, %v369
      %v371 = vrot.slane %v370, 2
      %v372 = vadd.f32 %v370, %v371
      %v373 = vrot.slane %v372, 1
      %v374 = vadd.f32 %v372, %v373
      %v375 = vrcp.pop 64.0
      %v376 = vmul.f32 64.0, %v375
      %v377 = vsub.f32 1.0, %v376
      %v378 = vmul.f32 %v375, %v377
      %v379 = vadd.f32 %v375, %v378
      %vm380 = vweird.f32 %v375
      %v381 = vsel %vm380, %v375, %v379
      %v382 = vmul.f32 %v374, %v381
      %384 = vrot.lane.b32.xlu0 %v382, 127
      %v385 = vpop.permute.xlu0 %384
      %v387 = vadd.f32 %v382, %v385
      %388 = vrot.lane.b32.xlu0 %v382, 126
      %v389 = vpop.permute.xlu0 %388
      %v391 = vadd.f32 %v387, %v389
      %392 = vrot.lane.b32.xlu0 %v382, 125
      %v393 = vpop.permute.xlu0 %392
      %v395 = vadd.f32 %v391, %v393
      %v396 = vmul.f32 %v395, 0.25
      %398 = vrot.lane.b32.xlu0 %v396, 1
      %v399 = vpop.permute.xlu0 %398
      %401 = vrot.lane.b32.xlu0 %v396, 2
      %v402 = vpop.permute.xlu0 %401
      %404 = vrot.lane.b32.xlu0 %v396, 3
      %v405 = vpop.permute.xlu0 %404
      %v407 = vsel %vm314, %v396, %v399
      %v408 = vsel %vm323, %v407, %v402
      %v409 = vsel %vm332, %v408, %v405
      %v410 = vperm.slane %v409, 0
      %v411 = vsub.f32 %v345, %v410
      %v412 = vsub.f32 %v346, %v410
      %v413 = vsub.f32 %v347, %v410
      %v414 = vsub.f32 %v348, %v410
      %v415 = vsub.f32 %v349, %v410
      %v416 = vsub.f32 %v350, %v410
      %v417 = vsub.f32 %v351, %v410
      %v418 = vsub.f32 %v352, %v410
      %v419 = vmul.f32 %v411, %v411
      %v420 = vmul.f32 %v412, %v412
      %v421 = vmul.f32 %v413, %v413
      %v422 = vmul.f32 %v414, %v414
      %v423 = vmul.f32 %v415, %v415
      %v424 = vmul.f32 %v416, %v416
      %v425 = vmul.f32 %v417, %v417
      %v426 = vmul.f32 %v418, %v418
      %v427 = vsel %vm353, %v419, 0.0
      %v428 = vsel %vm353, %v420, 0.0
      %v429 = vadd.f32 %v427, %v428
      %v430 = vsel %vm353, %v421, 0.0
      %v431 = vadd.f32 %v429, %v430
      %v432 = vsel %vm353, %v422, 0.0
      %v433 = vadd.f32 %v431, %v432
      %v434 = vsel %vm353, %v423, 0.0
      %v435 = vadd.f32 %v433, %v434
      %v436 = vsel %vm353, %v424, 0.0
      %v437 = vadd.f32 %v435, %v436
      %v438 = vsel %vm353, %v425, 0.0
      %v439 = vadd.f32 %v437, %v438
      %v440 = vsel %vm353, %v426, 0.0
      %v441 = vadd.f32 %v439, %v440
      %v442 = vrot.slane %v441, 4
      %v443 = vadd.f32 %v441, %v442
      %v444 = vrot.slane %v443, 2
      %v445 = vadd.f32 %v443, %v444
      %v446 = vrot.slane %v445, 1
      %v447 = vadd.f32 %v445, %v446
      %v448 = vmul.f32 %v447, %v381
      %450 = vrot.lane.b32.xlu0 %v448, 127
      %v451 = vpop.permute.xlu0 %450
      %v453 = vadd.f32 %v448, %v451
      %454 = vrot.lane.b32.xlu0 %v448, 126
      %v455 = vpop.permute.xlu0 %454
      %v457 = vadd.f32 %v453, %v455
      %458 = vrot.lane.b32.xlu0 %v448, 125
      %v459 = vpop.permute.xlu0 %458
      %v461 = vadd.f32 %v457, %v459
      %v462 = vmul.f32 %v461, 0.25
      %464 = vrot.lane.b32.xlu0 %v462, 1
      %v465 = vpop.permute.xlu0 %464
      %467 = vrot.lane.b32.xlu0 %v462, 2
      %v468 = vpop.permute.xlu0 %467
      %470 = vrot.lane.b32.xlu0 %v462, 3
      %v471 = vpop.permute.xlu0 %470
      %v473 = vsel %vm314, %v462, %v465
      %v474 = vsel %vm323, %v473, %v468
      %v475 = vsel %vm332, %v474, %v471
      %v476 = vadd.f32 %v475, 1e-05
      %v477 = vrsqrt.pop %v476
      %v478 = vmul.f32 %v477, %v476
      %v479 = vmul.f32 %v478, %v477
      %v480 = vmul.f32 0.5, %v479
      %v481 = vsub.f32 1.5, %v480
      %v482 = vmul.f32 %v477, %v481
      %vm483 = vweird.f32 %v476
      %vm484 = vweird.f32 %v477
      %vm485 = vmor %vm483, %vm484
      %v486 = vsel %vm485, %v477, %v482
      %v487 = vperm.slane %v486, 0
      %v488 = vmul.f32 %v411, %v487
      %v489 = vmul.f32 %v412, %v487
      %v490 = vmul.f32 %v413, %v487
      %v491 = vmul.f32 %v414, %v487
      %v492 = vmul.f32 %v415, %v487
      %v493 = vmul.f32 %v416, %v487
      %v494 = vmul.f32 %v417, %v487
      %v495 = vmul.f32 %v418, %v487
      %s496 = sld [smem:[#allocation2]]
      %vm497 = vcmp.ge.f32.partialorder %v488, 0.0
      %vm498 = vcmp.ge.f32.partialorder %v489, 0.0
      %vm499 = vcmp.ge.f32.partialorder %v490, 0.0
      %vm500 = vcmp.ge.f32.partialorder %v491, 0.0
      %vm501 = vcmp.ge.f32.partialorder %v492, 0.0
      %vm502 = vcmp.ge.f32.partialorder %v493, 0.0
      %vm503 = vcmp.ge.f32.partialorder %v494, 0.0
      %vm504 = vcmp.ge.f32.partialorder %v495, 0.0
      %v505 = vstv %s496
      %v506 = vmul.f32 %v505, %v488
      %v507 = vmul.f32 %v505, %v489
      %v508 = vmul.f32 %v505, %v490
      %v509 = vmul.f32 %v505, %v491
      %v510 = vmul.f32 %v505, %v492
      %v511 = vmul.f32 %v505, %v493
      %v512 = vmul.f32 %v505, %v494
      %v513 = vmul.f32 %v505, %v495
      %v514 = vsel %vm497, %v488, %v506
      %v515 = vsel %vm498, %v489, %v507
      %v516 = vsel %vm499, %v490, %v508
      %v517 = vsel %vm500, %v491, %v509
      %v518 = vsel %vm501, %v492, %v510
      %v519 = vsel %vm502, %v493, %v511
      %v520 = vsel %vm503, %v494, %v512
      %v521 = vsel %vm504, %v495, %v513
      %522 = vst.msk [vmem:[%s200] sm:$0xff] %vm353, %v514
      %523 = vst.msk [vmem:[%s200 + $0x8] sm:$0xff] %vm353, %v515
      %524 = vst.msk [vmem:[%s200 + $0x10] sm:$0xff] %vm353, %v516
      %525 = vst.msk [vmem:[%s200 + $0x18] sm:$0xff] %vm353, %v517
      %526 = vst.msk [vmem:[%s200 + $0x20] sm:$0xff] %vm353, %v518
      %527 = vst.msk [vmem:[%s200 + $0x28] sm:$0xff] %vm353, %v519
      %528 = vst.msk [vmem:[%s200 + $0x30] sm:$0xff] %vm353, %v520
      %529 = vst.msk [vmem:[%s200 + $0x38] sm:$0xff] %vm353, %v521
      %s530 = smul.u32 8, %s16
      %p531 = scmp.lt.s32.totalorder %s530, 15
      %s532 = scalar_select %p531, %s530, 15
      %s533 = smul.addr %s532, 8
      %s534 = scalar_lea.vmem %s4, %s533
      // Predicated region
      $region37: #{reconstruction_forward.24} parent=35 // pred_check
        %p535 = pneg %p123
      $region38: #{reconstruction_forward.24} parent=35 // pred_check_branch
        %537 = sbr.rel (%p535) target = $region40
      $region39: #{reconstruction_forward.24} parent=35 // pred_region
        %s538 = smul.u32 8, %s16
      $region40: #{reconstruction_forward.24} parent=35 // pred_fallthru
        _
    $region36: #{reconstruction_forward.24} parent=5 // pred_fallthru
      _
    %p539 = scmp.le.s32.totalorder 2, %s11
    // Predicated region
    $region41: #{reconstruction_forward.24} parent=5 // pred_check
      %p540 = pneg %p539
    $region42: #{reconstruction_forward.24} parent=5 // pred_check_branch
      %542 = sbr.rel (%p540) target = $region44
    $region43: #{reconstruction_forward.24} parent=5 // pred_region
      %s543 = ssub.s32 %s11, 2
      // Predicated region
      $region45: #{reconstruction_forward.24} parent=43 // pred_check
        %p544 = pneg %p129
      $region46: #{reconstruction_forward.24} parent=43 // pred_check_branch
        %546 = sbr.rel (%p544) target = $region48
      $region47: #{reconstruction_forward.24} parent=43 // pred_region
        %s547 = smul.u32 8, %s17
        %p548 = scmp.lt.s32.totalorder %s547, 15
        %s549 = scalar_select %p548, %s547, 15
        %s550 = smul.addr %s549, 8
        %s551 = scalar_lea.vmem %s4, %s550
      $region48: #{reconstruction_forward.24} parent=43 // pred_fallthru
        _
    $region44: #{reconstruction_forward.24} parent=5 // pred_fallthru
      _
  $region6: #{reconstruction_forward.24} parent=0 // loop_footer
    %s15 = sadd.s32 1, %s11
  $region7: #{reconstruction_forward.24} parent=0 // loop_footer_branch
    %10 = sbr.rel target = $region3
  $region8: #{reconstruction_forward.24} parent=0 // loop_exit
    _

// kernel: reconstruction_forward.25
$region0: #{reconstruction_forward.25}
  #allocation0 [shape = 'u32[]', space=smem, size = 0x4, offset = 0x4, fixed_abs, tag = 'smem constant byte address 0x4 - core index']
  #allocation1 [shape = 'u32[72,128]{1,0:T(1,128)}', space=vmem, size = 0x9000, scoped, tag = 'internal scratch']
  #allocation2 [shape = 'f32[1,1]{1,0:T(1,128)S(1)}', space=vmem, size = 0x200, scoped, tag = 'scoped memory for reconstruction_forward.25']
  %s0 = inlined_call_operand.vmem [shape: f32[512,9], index: 0, kind: input, shape index: {}]
  %s1 = inlined_call_operand.vmem [shape: f32[1,9], index: 1, kind: input, shape index: {}]
  %s2 = inlined_call_operand.<no memory space> [shape: f32[1,1], index: 2, kind: input, shape index: {}]
  %s3 = inlined_call_operand.vmem [shape: f32[512,1], index: 3, kind: input, shape index: {}]
  %s4 = inlined_call_operand.vmem [shape: f32[512,1], index: 4, kind: output, shape index: {}]
  %s5 = sld [smem:[#allocation0]]
  $region49: #{reconstruction_forward.25} parent=0
    _
  %s7 = ssub.s32 1, %s5
  %s8 = scalar_select 0, %s7, %s5
  %v9 = vstv %s2
  %10 = vst [vmem:[#allocation2] sm:$0x1] %v9
  loop: start=0, step=1, limit=4
  $region2: #{reconstruction_forward.25} parent=0 // loop_pre_header
    _
  $region3: #{reconstruction_forward.25} parent=0 // loop_header
    %s12 = sphi 0, %s16
    %p13 = scmp.ge.s32.totalorder %s12, 4
    %s22 = sphi 0, %s24
    %s25 = sphi 0, %s22
    %s26 = sphi 0, %s25
    %s42 = sphi 0, %s26
    %s46 = sphi 0, %s46
    %s48 = sphi 0, %s46
    %s49 = sphi 0, %s48
    %s63 = sphi 0, %s49
    %s67 = sphi 0, %s67
    %s69 = sphi 0, %s67
    %s70 = sphi 0, %s69
    %s84 = sphi 0, %s70
    %s90 = sphi 0, %s92
    %s93 = sphi 0, %s90
    %s94 = sphi 0, %s93
    %s110 = sphi 0, %s94
    %s116 = sphi 0, %s118
    %s119 = sphi 0, %s116
    %s120 = sphi 0, %s119
    %s136 = sphi 0, %s120
  $region4: #{reconstruction_forward.25} parent=0 // loop_header_branch
    %15 = sbr.rel (%p13) target = $region8
  $region5: #{reconstruction_forward.25} parent=0 // loop_body
    %s17 = ssub.s32 %s12, 1
    %s18 = ssub.s32 %s12, 2
    %s19 = sadd.s32 %s12, 1
    %s20 = ssub.s32 %s12, %s19
    %p21 = scmp.eq.s32.totalorder %s20, 0
    %s23 = sadd.s32 %s22, 1
    %s24 = scalar_select %p21, %s22, %s23
    %p27 = pneg %p21
    %p28 = scmp.eq.s32.totalorder %s12, 1
    %p29 = por %p27, %p28
    %p30 = scmp.ne.s32.totalorder %s22, %s25
    %p31 = scmp.eq.s32.totalorder %s12, 0
    %p32 = por %p30, %p31
    %p33 = scmp.ne.s32.totalorder %s22, %s25
    %p34 = scmp.eq.s32.totalorder %s17, 1
    %p35 = por %p33, %p34
    %p36 = scmp.ne.s32.totalorder %s25, %s26
    %p37 = scmp.eq.s32.totalorder %s17, 0
    %p38 = por %p36, %p37
    %p39 = scmp.ne.s32.totalorder %s25, %s26
    %p40 = scmp.eq.s32.totalorder %s18, 1
    %p41 = por %p39, %p40
    %p43 = scmp.ne.s32.totalorder %s26, %s42
    %p44 = scmp.eq.s32.totalorder %s18, 0
    %p45 = por %p43, %p44
    %s47 = sadd.s32 %s46, 1
    %p50 = scmp.eq.s32.totalorder %s12, 1
    %p51 = scmp.ne.s32.totalorder %s46, %s48
    %p52 = scmp.eq.s32.totalorder %s12, 0
    %p53 = por %p51, %p52
    %p54 = scmp.ne.s32.totalorder %s46, %s48
    %p55 = scmp.eq.s32.totalorder %s17, 1
    %p56 = por %p54, %p55
    %p57 = scmp.ne.s32.totalorder %s48, %s49
    %p58 = scmp.eq.s32.totalorder %s17, 0
    %p59 = por %p57, %p58
    %p60 = scmp.ne.s32.totalorder %s48, %s49
    %p61 = scmp.eq.s32.totalorder %s18, 1
    %p62 = por %p60, %p61
    %p64 = scmp.ne.s32.totalorder %s49, %s63
    %p65 = scmp.eq.s32.totalorder %s18, 0
    %p66 = por %p64, %p65
    %s68 = sadd.s32 %s67, 1
    %p71 = scmp.eq.s32.totalorder %s12, 1
    %p72 = scmp.ne.s32.totalorder %s67, %s69
    %p73 = scmp.eq.s32.totalorder %s12, 0
    %p74 = por %p72, %p73
    %p75 = scmp.ne.s32.totalorder %s67, %s69
    %p76 = scmp.eq.s32.totalorder %s17, 1
    %p77 = por %p75, %p76
    %p78 = scmp.ne.s32.totalorder %s69, %s70
    %p79 = scmp.eq.s32.totalorder %s17, 0
    %p80 = por %p78, %p79
    %p81 = scmp.ne.s32.totalorder %s69, %s70
    %p82 = scmp.eq.s32.totalorder %s18, 1
    %p83 = por %p81, %p82
    %p85 = scmp.ne.s32.totalorder %s70, %s84
    %p86 = scmp.eq.s32.totalorder %s18, 0
    %p87 = por %p85, %p86
    %s88 = ssub.s32 %s12, %s19
    %p89 = scmp.eq.s32.totalorder %s88, 0
    %s91 = sadd.s32 %s90, 1
    %s92 = scalar_select %p89, %s90, %s91
    %p95 = pneg %p89
    %p96 = scmp.eq.s32.totalorder %s12, 1
    %p97 = por %p95, %p96
    %p98 = scmp.ne.s32.totalorder %s90, %s93
    %p99 = scmp.eq.s32.totalorder %s12, 0
    %p100 = por %p98, %p99
    %p101 = scmp.ne.s32.totalorder %s90, %s93
    %p102 = scmp.eq.s32.totalorder %s17, 1
    %p103 = por %p101, %p102
    %p104 = scmp.ne.s32.totalorder %s93, %s94
    %p105 = scmp.eq.s32.totalorder %s17, 0
    %p106 = por %p104, %p105
    %p107 = scmp.ne.s32.totalorder %s93, %s94
    %p108 = scmp.eq.s32.totalorder %s18, 1
    %p109 = por %p107, %p108
    %p111 = scmp.ne.s32.totalorder %s94, %s110
    %p112 = scmp.eq.s32.totalorder %s18, 0
    %p113 = por %p111, %p112
    %s114 = ssub.s32 %s12, %s19
    %p115 = scmp.eq.s32.totalorder %s114, 0
    %s117 = sadd.s32 %s116, 1
    %s118 = scalar_select %p115, %s116, %s117
    %p121 = pneg %p115
    %p122 = scmp.eq.s32.totalorder %s12, 1
    %p123 = por %p121, %p122
    %p124 = scmp.ne.s32.totalorder %s116, %s119
    %p125 = scmp.eq.s32.totalorder %s12, 0
    %p126 = por %p124, %p125
    %p127 = scmp.ne.s32.totalorder %s116, %s119
    %p128 = scmp.eq.s32.totalorder %s17, 1
    %p129 = por %p127, %p128
    %p130 = scmp.ne.s32.totalorder %s119, %s120
    %p131 = scmp.eq.s32.totalorder %s17, 0
    %p132 = por %p130, %p131
    %p133 = scmp.ne.s32.totalorder %s119, %s120
    %p134 = scmp.eq.s32.totalorder %s18, 1
    %p135 = por %p133, %p134
    %p137 = scmp.ne.s32.totalorder %s120, %s136
    %p138 = scmp.eq.s32.totalorder %s18, 0
    %p139 = por %p137, %p138
    %p140 = scmp.le.s32.totalorder 1, %s12
    %p141 = scmp.lt.s32.totalorder %s12, 3
    %p142 = pnand %p140, %p141
    %p143 = pneg %p142
    // Predicated region
    $region9: #{reconstruction_forward.25} parent=5 // pred_check
      _
    $region10: #{reconstruction_forward.25} parent=5 // pred_check_branch
      %145 = sbr.rel (%p142) target = $region12
    $region11: #{reconstruction_forward.25} parent=5 // pred_region
      %s146 = ssub.s32 %s12, 1
      // Predicated region
      $region13: #{reconstruction_forward.25} parent=11 // pred_check
        %p147 = pneg %p59
      $region14: #{reconstruction_forward.25} parent=11 // pred_check_branch
        %149 = sbr.rel (%p147) target = $region16
      $region15: #{reconstruction_forward.25} parent=11 // pred_region
        _
      $region16: #{reconstruction_forward.25} parent=11 // pred_fallthru
        _
      // Predicated region
      $region17: #{reconstruction_forward.25} parent=11 // pred_check
        %p150 = pneg %p80
      $region18: #{reconstruction_forward.25} parent=11 // pred_check_branch
        %152 = sbr.rel (%p150) target = $region20
      $region19: #{reconstruction_forward.25} parent=11 // pred_region
        _
      $region20: #{reconstruction_forward.25} parent=11 // pred_fallthru
        _
    $region12: #{reconstruction_forward.25} parent=5 // pred_fallthru
      _
    %p153 = scmp.lt.s32.totalorder %s12, 2
    // Predicated region
    $region21: #{reconstruction_forward.25} parent=5 // pred_check
      %p154 = pneg %p153
    $region22: #{reconstruction_forward.25} parent=5 // pred_check_branch
      %156 = sbr.rel (%p154) target = $region24
    $region23: #{reconstruction_forward.25} parent=5 // pred_region
      // Predicated region
      $region25: #{reconstruction_forward.25} parent=23 // pred_check
        %p157 = pneg %p32
      $region26: #{reconstruction_forward.25} parent=23 // pred_check_branch
        %159 = sbr.rel (%p157) target = $region28
      $region27: #{reconstruction_forward.25} parent=23 // pred_region
        %s160 = smul.u32 32, %s12
        %p161 = scmp.lt.s32.totalorder %s160, 63
        %s162 = scalar_select %p161, %s160, 63
        %s163 = smul.addr %s162, 8
        %s164 = scalar_lea.vmem %s0, %s163
        %s165 = smul.u32 32, %s12
      $region28: #{reconstruction_forward.25} parent=23 // pred_fallthru
        _
      // Predicated region
      $region29: #{reconstruction_forward.25} parent=23 // pred_check
        %p166 = pneg %p100
      $region30: #{reconstruction_forward.25} parent=23 // pred_check_branch
        %168 = sbr.rel (%p166) target = $region32
      $region31: #{reconstruction_forward.25} parent=23 // pred_region
        %s169 = smul.u32 32, %s12
        %p170 = scmp.lt.s32.totalorder %s169, 63
        %s171 = scalar_select %p170, %s169, 63
        %s172 = smul.addr %s171, 8
        %s173 = scalar_lea.vmem %s3, %s172
        %s174 = smul.u32 32, %s12
      $region32: #{reconstruction_forward.25} parent=23 // pred_fallthru
        _
    $region24: #{reconstruction_forward.25} parent=5 // pred_fallthru
      _
    %p175 = scmp.le.s32.totalorder 1, %s12
    %p176 = scmp.lt.s32.totalorder %s12, 3
    %p177 = pnand %p175, %p176
    %p178 = pneg %p177
    // Predicated region
    $region33: #{reconstruction_forward.25} parent=5 // pred_check
      _
    $region34: #{reconstruction_forward.25} parent=5 // pred_check_branch
      %180 = sbr.rel (%p177) target = $region36
    $region35: #{reconstruction_forward.25} parent=5 // pred_region
      %s181 = ssub.s32 %s12, 1
      %s182 = smul.u32 32, %s17
      %p183 = scmp.lt.s32.totalorder %s182, 63
      %s184 = scalar_select %p183, %s182, 63
      %s185 = smul.addr %s184, 8
      %s186 = scalar_lea.vmem %s0, %s185
      %p187 = pneg %p38
      %p188 = pneg %p35
      %p189 = pneg %p59
      %p190 = pneg %p56
      %p191 = pneg %p80
      %p192 = pneg %p77
      %s193 = smul.u32 32, %s17
      %p194 = scmp.lt.s32.totalorder %s193, 63
      %s195 = scalar_select %p194, %s193, 63
      %s196 = smul.addr %s195, 8
      %s197 = scalar_lea.vmem %s3, %s196
      %p198 = pneg %p106
      %p199 = pneg %p103
      %p200 = pneg %p132
      %p201 = pneg %p129
      %s202 = smul.u32 32, %s17
      %p203 = scmp.lt.s32.totalorder %s202, 63
      %s204 = scalar_select %p203, %s202, 63
      %s205 = smul.addr %s204, 8
      %s206 = scalar_lea.vmem %s4, %s205
      %s207 = smul.u32 32, %s17
      %p208 = scmp.lt.s32.totalorder %s207, 63
      %s209 = scalar_select %p208, %s207, 63
      %s210 = smul.addr %s209, 8
      %s211 = scalar_lea.vmem %s0, %s210
      %s212 = smul.u32 32, %s17
      %s213 = smul.u32 32, %s17
      %p214 = scmp.lt.s32.totalorder %s213, 63
      %s215 = scalar_select %p214, %s213, 63
      %s216 = smul.addr %s215, 8
      %s217 = scalar_lea.vmem %s3, %s216
      %s218 = smul.u32 32, %s17
      %s219 = smul.u32 32, %s17
      %p220 = scmp.lt.s32.totalorder %s219, 63
      %s221 = scalar_select %p220, %s219, 63
      %s222 = smul.addr %s221, 8
      %s223 = scalar_lea.vmem %s4, %s222
      %s224 = smul.u32 32, %s17
      %v225 = vld [vmem:[%s211] sm:$0xff]
      %v226 = vld [vmem:[%s211 + $0x8] sm:$0xff]
      %v227 = vld [vmem:[%s211 + $0x10] sm:$0xff]
      %v228 = vld [vmem:[%s211 + $0x18] sm:$0xff]
      %v229 = vld [vmem:[%s211 + $0x20] sm:$0xff]
      %v230 = vld [vmem:[%s211 + $0x28] sm:$0xff]
      %v231 = vld [vmem:[%s211 + $0x30] sm:$0xff]
      %v232 = vld [vmem:[%s211 + $0x38] sm:$0xff]
      %v233 = vld [vmem:[%s211 + $0x40] sm:$0xff]
      %v234 = vld [vmem:[%s211 + $0x48] sm:$0xff]
      %v235 = vld [vmem:[%s211 + $0x50] sm:$0xff]
      %v236 = vld [vmem:[%s211 + $0x58] sm:$0xff]
      %v237 = vld [vmem:[%s211 + $0x60] sm:$0xff]
      %v238 = vld [vmem:[%s211 + $0x68] sm:$0xff]
      %v239 = vld [vmem:[%s211 + $0x70] sm:$0xff]
      %v240 = vld [vmem:[%s211 + $0x78] sm:$0xff]
      %v241 = vld [vmem:[%s211 + $0x80] sm:$0xff]
      %v242 = vld [vmem:[%s211 + $0x88] sm:$0xff]
      %v243 = vld [vmem:[%s211 + $0x90] sm:$0xff]
      %v244 = vld [vmem:[%s211 + $0x98] sm:$0xff]
      %v245 = vld [vmem:[%s211 + $0xa0] sm:$0xff]
      %v246 = vld [vmem:[%s211 + $0xa8] sm:$0xff]
      %v247 = vld [vmem:[%s211 + $0xb0] sm:$0xff]
      %v248 = vld [vmem:[%s211 + $0xb8] sm:$0xff]
      %v249 = vld [vmem:[%s211 + $0xc0] sm:$0xff]
      %v250 = vld [vmem:[%s211 + $0xc8] sm:$0xff]
      %v251 = vld [vmem:[%s211 + $0xd0] sm:$0xff]
      %v252 = vld [vmem:[%s211 + $0xd8] sm:$0xff]
      %v253 = vld [vmem:[%s211 + $0xe0] sm:$0xff]
      %v254 = vld [vmem:[%s211 + $0xe8] sm:$0xff]
      %v255 = vld [vmem:[%s211 + $0xf0] sm:$0xff]
      %v256 = vld [vmem:[%s211 + $0xf8] sm:$0xff]
      %v257 = vld [vmem:[%s1] sm:$0x1]
      %v259 = vperm.slane %v257, 0
      %v261 = vmul.f32 %v225, %v259
      %v262 = vmul.f32 %v226, %v259
      %v263 = vmul.f32 %v227, %v259
      %v264 = vmul.f32 %v228, %v259
      %v265 = vmul.f32 %v229, %v259
      %v266 = vmul.f32 %v230, %v259
      %v267 = vmul.f32 %v231, %v259
      %v268 = vmul.f32 %v232, %v259
      %v269 = vmul.f32 %v233, %v259
      %v270 = vmul.f32 %v234, %v259
      %v271 = vmul.f32 %v235, %v259
      %v272 = vmul.f32 %v236, %v259
      %v273 = vmul.f32 %v237, %v259
      %v274 = vmul.f32 %v238, %v259
      %v275 = vmul.f32 %v239, %v259
      %v276 = vmul.f32 %v240, %v259
      %v277 = vmul.f32 %v241, %v259
      %v278 = vmul.f32 %v242, %v259
      %v279 = vmul.f32 %v243, %v259
      %v280 = vmul.f32 %v244, %v259
      %v281 = vmul.f32 %v245, %v259
      %v282 = vmul.f32 %v246, %v259
      %v283 = vmul.f32 %v247, %v259
      %v284 = vmul.f32 %v248, %v259
      %v285 = vmul.f32 %v249, %v259
      %v286 = vmul.f32 %v250, %v259
      %v287 = vmul.f32 %v251, %v259
      %v288 = vmul.f32 %v252, %v259
      %v289 = vmul.f32 %v253, %v259
      %v290 = vmul.f32 %v254, %v259
      %v291 = vmul.f32 %v255, %v259
      %v292 = vmul.f32 %v256, %v259
      %vm293 = vcmask 72704
      %v294 = vsel %vm293, %v261, 0.0
      %295 = vadd.xlane.f32.xlu0 %v294
      %v296 = vpop.xlane.xlu0 %295
      %v297 = vsel %vm293, %v262, 0.0
      %298 = vadd.xlane.f32.xlu0 %v297
      %v299 = vpop.xlane.xlu0 %298
      %v300 = vsel %vm293, %v263, 0.0
      %301 = vadd.xlane.f32.xlu0 %v300
      %v302 = vpop.xlane.xlu0 %301
      %v303 = vsel %vm293, %v264, 0.0
      %304 = vadd.xlane.f32.xlu0 %v303
      %v305 = vpop.xlane.xlu0 %304
      %v306 = vsel %vm293, %v265, 0.0
      %307 = vadd.xlane.f32.xlu0 %v306
      %v308 = vpop.xlane.xlu0 %307
      %v309 = vsel %vm293, %v266, 0.0
      %310 = vadd.xlane.f32.xlu0 %v309
      %v311 = vpop.xlane.xlu0 %310
      %v312 = vsel %vm293, %v267, 0.0
      %313 = vadd.xlane.f32.xlu0 %v312
      %v314 = vpop.xlane.xlu0 %313
      %v315 = vsel %vm293, %v268, 0.0
      %316 = vadd.xlane.f32.xlu0 %v315
      %v317 = vpop.xlane.xlu0 %316
      %v318 = vsel %vm293, %v269, 0.0
      %319 = vadd.xlane.f32.xlu0 %v318
      %v320 = vpop.xlane.xlu0 %319
      %v321 = vsel %vm293, %v270, 0.0
      %322 = vadd.xlane.f32.xlu0 %v321
      %v323 = vpop.xlane.xlu0 %322
      %v324 = vsel %vm293, %v271, 0.0
      %325 = vadd.xlane.f32.xlu0 %v324
      %v326 = vpop.xlane.xlu0 %325
      %v327 = vsel %vm293, %v272, 0.0
      %328 = vadd.xlane.f32.xlu0 %v327
      %v329 = vpop.xlane.xlu0 %328
      %v330 = vsel %vm293, %v273, 0.0
      %331 = vadd.xlane.f32.xlu0 %v330
      %v332 = vpop.xlane.xlu0 %331
      %v333 = vsel %vm293, %v274, 0.0
      %334 = vadd.xlane.f32.xlu0 %v333
      %v335 = vpop.xlane.xlu0 %334
      %v336 = vsel %vm293, %v275, 0.0
      %337 = vadd.xlane.f32.xlu0 %v336
      %v338 = vpop.xlane.xlu0 %337
      %v339 = vsel %vm293, %v276, 0.0
      %340 = vadd.xlane.f32.xlu0 %v339
      %v341 = vpop.xlane.xlu0 %340
      %v342 = vsel %vm293, %v277, 0.0
      %343 = vadd.xlane.f32.xlu0 %v342
      %v344 = vpop.xlane.xlu0 %343
      %v345 = vsel %vm293, %v278, 0.0
      %346 = vadd.xlane.f32.xlu0 %v345
      %v347 = vpop.xlane.xlu0 %346
      %v348 = vsel %vm293, %v279, 0.0
      %349 = vadd.xlane.f32.xlu0 %v348
      %v350 = vpop.xlane.xlu0 %349
      %v351 = vsel %vm293, %v280, 0.0
      %352 = vadd.xlane.f32.xlu0 %v351
      %v353 = vpop.xlane.xlu0 %352
      %v354 = vsel %vm293, %v281, 0.0
      %355 = vadd.xlane.f32.xlu0 %v354
      %v356 = vpop.xlane.xlu0 %355
      %v357 = vsel %vm293, %v282, 0.0
      %358 = vadd.xlane.f32.xlu0 %v357
      %v359 = vpop.xlane.xlu0 %358
      %v360 = vsel %vm293, %v283, 0.0
      %361 = vadd.xlane.f32.xlu0 %v360
      %v362 = vpop.xlane.xlu0 %361
      %v363 = vsel %vm293, %v284, 0.0
      %364 = vadd.xlane.f32.xlu0 %v363
      %v365 = vpop.xlane.xlu0 %364
      %v366 = vsel %vm293, %v285, 0.0
      %367 = vadd.xlane.f32.xlu0 %v366
      %v368 = vpop.xlane.xlu0 %367
      %v369 = vsel %vm293, %v286, 0.0
      %370 = vadd.xlane.f32.xlu0 %v369
      %v371 = vpop.xlane.xlu0 %370
      %v372 = vsel %vm293, %v287, 0.0
      %373 = vadd.xlane.f32.xlu0 %v372
      %v374 = vpop.xlane.xlu0 %373
      %v375 = vsel %vm293, %v288, 0.0
      %376 = vadd.xlane.f32.xlu0 %v375
      %v377 = vpop.xlane.xlu0 %376
      %v378 = vsel %vm293, %v289, 0.0
      %379 = vadd.xlane.f32.xlu0 %v378
      %v380 = vpop.xlane.xlu0 %379
      %v381 = vsel %vm293, %v290, 0.0
      %382 = vadd.xlane.f32.xlu0 %v381
      %v383 = vpop.xlane.xlu0 %382
      %v384 = vsel %vm293, %v291, 0.0
      %385 = vadd.xlane.f32.xlu0 %v384
      %v386 = vpop.xlane.xlu0 %385
      %v387 = vsel %vm293, %v292, 0.0
      %388 = vadd.xlane.f32.xlu0 %v387
      %v389 = vpop.xlane.xlu0 %388
      %v390 = vld [vmem:[#allocation2] sm:$0x1]
      %v392 = vperm.slane %v390, 0
      %v394 = vadd.f32 %v296, %v392
      %v395 = vadd.f32 %v299, %v392
      %v396 = vadd.f32 %v302, %v392
      %v397 = vadd.f32 %v305, %v392
      %v398 = vadd.f32 %v308, %v392
      %v399 = vadd.f32 %v311, %v392
      %v400 = vadd.f32 %v314, %v392
      %v401 = vadd.f32 %v317, %v392
      %v402 = vadd.f32 %v320, %v392
      %v403 = vadd.f32 %v323, %v392
      %v404 = vadd.f32 %v326, %v392
      %v405 = vadd.f32 %v329, %v392
      %v406 = vadd.f32 %v332, %v392
      %v407 = vadd.f32 %v335, %v392
      %v408 = vadd.f32 %v338, %v392
      %v409 = vadd.f32 %v341, %v392
      %v410 = vadd.f32 %v344, %v392
      %v411 = vadd.f32 %v347, %v392
      %v412 = vadd.f32 %v350, %v392
      %v413 = vadd.f32 %v353, %v392
      %v414 = vadd.f32 %v356, %v392
      %v415 = vadd.f32 %v359, %v392
      %v416 = vadd.f32 %v362, %v392
      %v417 = vadd.f32 %v365, %v392
      %v418 = vadd.f32 %v368, %v392
      %v419 = vadd.f32 %v371, %v392
      %v420 = vadd.f32 %v374, %v392
      %v421 = vadd.f32 %v377, %v392
      %v422 = vadd.f32 %v380, %v392
      %v423 = vadd.f32 %v383, %v392
      %v424 = vadd.f32 %v386, %v392
      %v425 = vadd.f32 %v389, %v392
      %v426 = vld [vmem:[%s217] sm:$0xff]
      %v427 = vld [vmem:[%s217 + $0x8] sm:$0xff]
      %v428 = vld [vmem:[%s217 + $0x10] sm:$0xff]
      %v429 = vld [vmem:[%s217 + $0x18] sm:$0xff]
      %v430 = vld [vmem:[%s217 + $0x20] sm:$0xff]
      %v431 = vld [vmem:[%s217 + $0x28] sm:$0xff]
      %v432 = vld [vmem:[%s217 + $0x30] sm:$0xff]
      %v433 = vld [vmem:[%s217 + $0x38] sm:$0xff]
      %v434 = vld [vmem:[%s217 + $0x40] sm:$0xff]
      %v435 = vld [vmem:[%s217 + $0x48] sm:$0xff]
      %v436 = vld [vmem:[%s217 + $0x50] sm:$0xff]
      %v437 = vld [vmem:[%s217 + $0x58] sm:$0xff]
      %v438 = vld [vmem:[%s217 + $0x60] sm:$0xff]
      %v439 = vld [vmem:[%s217 + $0x68] sm:$0xff]
      %v440 = vld [vmem:[%s217 + $0x70] sm:$0xff]
      %v441 = vld [vmem:[%s217 + $0x78] sm:$0xff]
      %v442 = vld [vmem:[%s217 + $0x80] sm:$0xff]
      %v443 = vld [vmem:[%s217 + $0x88] sm:$0xff]
      %v444 = vld [vmem:[%s217 + $0x90] sm:$0xff]
      %v445 = vld [vmem:[%s217 + $0x98] sm:$0xff]
      %v446 = vld [vmem:[%s217 + $0xa0] sm:$0xff]
      %v447 = vld [vmem:[%s217 + $0xa8] sm:$0xff]
      %v448 = vld [vmem:[%s217 + $0xb0] sm:$0xff]
      %v449 = vld [vmem:[%s217 + $0xb8] sm:$0xff]
      %v450 = vld [vmem:[%s217 + $0xc0] sm:$0xff]
      %v451 = vld [vmem:[%s217 + $0xc8] sm:$0xff]
      %v452 = vld [vmem:[%s217 + $0xd0] sm:$0xff]
      %v453 = vld [vmem:[%s217 + $0xd8] sm:$0xff]
      %v454 = vld [vmem:[%s217 + $0xe0] sm:$0xff]
      %v455 = vld [vmem:[%s217 + $0xe8] sm:$0xff]
      %v456 = vld [vmem:[%s217 + $0xf0] sm:$0xff]
      %v457 = vld [vmem:[%s217 + $0xf8] sm:$0xff]
      %v458 = vadd.f32 %v394, %v426
      %v459 = vadd.f32 %v395, %v427
      %v460 = vadd.f32 %v396, %v428
      %v461 = vadd.f32 %v397, %v429
      %v462 = vadd.f32 %v398, %v430
      %v463 = vadd.f32 %v399, %v431
      %v464 = vadd.f32 %v400, %v432
      %v465 = vadd.f32 %v401, %v433
      %v466 = vadd.f32 %v402, %v434
      %v467 = vadd.f32 %v403, %v435
      %v468 = vadd.f32 %v404, %v436
      %v469 = vadd.f32 %v405, %v437
      %v470 = vadd.f32 %v406, %v438
      %v471 = vadd.f32 %v407, %v439
      %v472 = vadd.f32 %v408, %v440
      %v473 = vadd.f32 %v409, %v441
      %v474 = vadd.f32 %v410, %v442
      %v475 = vadd.f32 %v411, %v443
      %v476 = vadd.f32 %v412, %v444
      %v477 = vadd.f32 %v413, %v445
      %v478 = vadd.f32 %v414, %v446
      %v479 = vadd.f32 %v415, %v447
      %v480 = vadd.f32 %v416, %v448
      %v481 = vadd.f32 %v417, %v449
      %v482 = vadd.f32 %v418, %v450
      %v483 = vadd.f32 %v419, %v451
      %v484 = vadd.f32 %v420, %v452
      %v485 = vadd.f32 %v421, %v453
      %v486 = vadd.f32 %v422, %v454
      %v487 = vadd.f32 %v423, %v455
      %v488 = vadd.f32 %v424, %v456
      %v489 = vadd.f32 %v425, %v457
      %vm490 = vcmask 7168
      %491 = vst.msk [vmem:[%s223] sm:$0xff] %vm490, %v458
      %492 = vst.msk [vmem:[%s223 + $0x8] sm:$0xff] %vm490, %v459
      %493 = vst.msk [vmem:[%s223 + $0x10] sm:$0xff] %vm490, %v460
      %494 = vst.msk [vmem:[%s223 + $0x18] sm:$0xff] %vm490, %v461
      %495 = vst.msk [vmem:[%s223 + $0x20] sm:$0xff] %vm490, %v462
      %496 = vst.msk [vmem:[%s223 + $0x28] sm:$0xff] %vm490, %v463
      %497 = vst.msk [vmem:[%s223 + $0x30] sm:$0xff] %vm490, %v464
      %498 = vst.msk [vmem:[%s223 + $0x38] sm:$0xff] %vm490, %v465
      %499 = vst.msk [vmem:[%s223 + $0x40] sm:$0xff] %vm490, %v466
      %500 = vst.msk [vmem:[%s223 + $0x48] sm:$0xff] %vm490, %v467
      %501 = vst.msk [vmem:[%s223 + $0x50] sm:$0xff] %vm490, %v468
      %502 = vst.msk [vmem:[%s223 + $0x58] sm:$0xff] %vm490, %v469
      %503 = vst.msk [vmem:[%s223 + $0x60] sm:$0xff] %vm490, %v470
      %504 = vst.msk [vmem:[%s223 + $0x68] sm:$0xff] %vm490, %v471
      %505 = vst.msk [vmem:[%s223 + $0x70] sm:$0xff] %vm490, %v472
      %506 = vst.msk [vmem:[%s223 + $0x78] sm:$0xff] %vm490, %v473
      %507 = vst.msk [vmem:[%s223 + $0x80] sm:$0xff] %vm490, %v474
      %508 = vst.msk [vmem:[%s223 + $0x88] sm:$0xff] %vm490, %v475
      %509 = vst.msk [vmem:[%s223 + $0x90] sm:$0xff] %vm490, %v476
      %510 = vst.msk [vmem:[%s223 + $0x98] sm:$0xff] %vm490, %v477
      %511 = vst.msk [vmem:[%s223 + $0xa0] sm:$0xff] %vm490, %v478
      %512 = vst.msk [vmem:[%s223 + $0xa8] sm:$0xff] %vm490, %v479
      %513 = vst.msk [vmem:[%s223 + $0xb0] sm:$0xff] %vm490, %v480
      %514 = vst.msk [vmem:[%s223 + $0xb8] sm:$0xff] %vm490, %v481
      %515 = vst.msk [vmem:[%s223 + $0xc0] sm:$0xff] %vm490, %v482
      %516 = vst.msk [vmem:[%s223 + $0xc8] sm:$0xff] %vm490, %v483
      %517 = vst.msk [vmem:[%s223 + $0xd0] sm:$0xff] %vm490, %v484
      %518 = vst.msk [vmem:[%s223 + $0xd8] sm:$0xff] %vm490, %v485
      %519 = vst.msk [vmem:[%s223 + $0xe0] sm:$0xff] %vm490, %v486
      %520 = vst.msk [vmem:[%s223 + $0xe8] sm:$0xff] %vm490, %v487
      %521 = vst.msk [vmem:[%s223 + $0xf0] sm:$0xff] %vm490, %v488
      %522 = vst.msk [vmem:[%s223 + $0xf8] sm:$0xff] %vm490, %v489
      %s523 = smul.u32 32, %s17
      %p524 = scmp.lt.s32.totalorder %s523, 63
      %s525 = scalar_select %p524, %s523, 63
      %s526 = smul.addr %s525, 8
      %s527 = scalar_lea.vmem %s4, %s526
      // Predicated region
      $region37: #{reconstruction_forward.25} parent=35 // pred_check
        %p528 = pneg %p129
      $region38: #{reconstruction_forward.25} parent=35 // pred_check_branch
        %530 = sbr.rel (%p528) target = $region40
      $region39: #{reconstruction_forward.25} parent=35 // pred_region
        %s531 = smul.u32 32, %s17
      $region40: #{reconstruction_forward.25} parent=35 // pred_fallthru
        _
    $region36: #{reconstruction_forward.25} parent=5 // pred_fallthru
      _
    %p532 = scmp.le.s32.totalorder 2, %s12
    // Predicated region
    $region41: #{reconstruction_forward.25} parent=5 // pred_check
      %p533 = pneg %p532
    $region42: #{reconstruction_forward.25} parent=5 // pred_check_branch
      %535 = sbr.rel (%p533) target = $region44
    $region43: #{reconstruction_forward.25} parent=5 // pred_region
      %s536 = ssub.s32 %s12, 2
      // Predicated region
      $region45: #{reconstruction_forward.25} parent=43 // pred_check
        %p537 = pneg %p135
      $region46: #{reconstruction_forward.25} parent=43 // pred_check_branch
        %539 = sbr.rel (%p537) target = $region48
      $region47: #{reconstruction_forward.25} parent=43 // pred_region
        %s540 = smul.u32 32, %s18
        %p541 = scmp.lt.s32.totalorder %s540, 63
        %s542 = scalar_select %p541, %s540, 63
        %s543 = smul.addr %s542, 8
        %s544 = scalar_lea.vmem %s4, %s543
      $region48: #{reconstruction_forward.25} parent=43 // pred_fallthru
        _
    $region44: #{reconstruction_forward.25} parent=5 // pred_fallthru
      _
  $region6: #{reconstruction_forward.25} parent=0 // loop_footer
    %s16 = sadd.s32 1, %s12
  $region7: #{reconstruction_forward.25} parent=0 // loop_footer_branch
    %11 = sbr.rel target = $region3
  $region8: #{reconstruction_forward.25} parent=0 // loop_exit
    _

</llo_original>
